<compile_context>
chip_gen: v7x
topology: tpu7x:2x2x1
jax: 0.10.0
libtpu: 0.0.40
codegen_flags: <defaults>
</compile_context>

<pallas_src>
import functools

import jax
import jax.numpy as jnp
from jax.experimental import pallas as pl
from jax.experimental.pallas import tpu as pltpu

_MXU_DTYPE = jnp.bfloat16      # matmul operand dtype (MXU native)
_ACT_DTYPE = jnp.bfloat16      # inter-layer activation dtype


# --------------------------------------------------------------------------
# Generation-aware VMEM limit & tiling helpers
# --------------------------------------------------------------------------
@functools.lru_cache(maxsize=1)
def _vmem_limit_bytes():
    """v5e/v6e have 128 MiB physical VMEM, v7x 64 MiB; stay well below either."""
    try:
        cap = int(getattr(pltpu.get_tpu_info(), "vmem_capacity_bytes",
                          128 * 1024 * 1024))
    except Exception:                      # CPU / interpret fallback
        cap = 128 * 1024 * 1024
    return max(32 * 1024 * 1024, min((cap * 3) // 4, 96 * 1024 * 1024))


def _divisors_desc(n):
    return [d for d in range(n, 0, -1) if n % d == 0]


def _conv_tile_bytes(tile_h, w_out, c_out, out_bytes, meta):
    """Rough per-grid-step live set: bf16 tiles/patches + f32 accumulator + dbl buffers."""
    total = tile_h * w_out * c_out * 4                       # f32 accumulator
    total += 2 * tile_h * w_out * c_out * out_bytes          # output block (dbl buf)
    for m in meta:
        kh, kw = m["kh"], m["kw"]
        hp, wp = tile_h + kh - 1, w_out + kw - 1
        for cx in m["cs"]:
            total += 2 * tile_h * w_out * cx * 2             # input block (dbl buf)
            total += 2 * (kh - 1) * w_out * cx * 2           # halo block (dbl buf)
            total += hp * wp * cx * 2                        # padded tile copy
        if m["pmax"]:
            total += hp * wp * 2                             # max channel
        total += tile_h * w_out * kw * m["cin_total"] * 2    # one live im2col patch
        total += 2 * kh * kw * m["cin_total"] * c_out * 2    # weights (dbl buf)
    return total


def _pick_tile_h(h_out, w_out, c_out, out_bytes, meta, budget):
    for th in _divisors_desc(h_out):
        if _conv_tile_bytes(th, w_out, c_out, out_bytes, meta) <= budget:
            return th
    return 1


def _build_halo(x, t_tiles, tile_h, ph_t, ph_b):
    """Halo rows per output row-tile: (N, T*(ph_t+ph_b), W, C), zeros outside image."""
    n, h_in, w_d, c = x.shape
    nh = ph_t + ph_b
    t = jnp.arange(t_tiles, dtype=jnp.int32)[:, None]
    rows = []
    if ph_t > 0:
        rows.append(t * tile_h - ph_t + jnp.arange(ph_t, dtype=jnp.int32)[None, :])
    if ph_b > 0:
        rows.append(t * tile_h + tile_h + jnp.arange(ph_b, dtype=jnp.int32)[None, :])
    idx = jnp.concatenate(rows, axis=1)                     # (T, nh)
    valid = (idx >= 0) & (idx < h_in)
    idx_c = jnp.clip(idx, 0, h_in - 1)
    halo = x[:, idx_c]                                      # (N, T, nh, W, C)
    halo = jnp.where(valid[None, :, :, None, None], halo, jnp.zeros([], x.dtype))
    return halo.reshape(n, t_tiles * nh, w_d, c)


# --------------------------------------------------------------------------
# Fused multi-group convolution kernel
# --------------------------------------------------------------------------
def conv2d_fused(groups, bias, *, out_hw, relu=False, sigmoid=False,
                 out_dtype=_ACT_DTYPE):
    """Sum of grouped 2-D convolutions + bias (+ReLU/+sigmoid), row-tiled over H.

    groups: list of dicts with keys:
        xs  : list of NHWC activations, all spatially (h_out, w_out); their channels
              are concatenated inside the kernel (fused skip-concat).
        w   : (kh, kw, sum(channels) (+1 if prepend_max), c_out) f32 weights.
        kh, kw, ph_t (top pad rows), pw_l (left pad cols), prepend_max.
    """
    h_out, w_out = out_hw
    n_batch = int(groups[0]["xs"][0].shape[0])
    c_out = int(bias.shape[-1])
    out_bytes = jnp.dtype(out_dtype).itemsize
    vmem_limit = _vmem_limit_bytes()

    # ---- static plan ---------------------------------------------------------
    meta = []
    for g in groups:
        kh, kw = int(g["kh"]), int(g["kw"])
        ph_t = int(g.get("ph_t", (kh - 1) // 2))
        pw_l = int(g.get("pw_l", (kw - 1) // 2))
        pmax = bool(g.get("prepend_max", False))
        cs = [int(x.shape[-1]) for x in g["xs"]]
        cin_total = sum(cs) + (1 if pmax else 0)
        assert not (pmax and len(g["xs"]) != 1)
        assert g["w"].shape == (kh, kw, cin_total, c_out), g["w"].shape
        for x in g["xs"]:
            assert x.shape[1] == h_out and x.shape[2] == w_out, x.shape
        meta.append(dict(kh=kh, kw=kw, ph_t=ph_t, ph_b=kh - 1 - ph_t,
                         pw_l=pw_l, pw_r=kw - 1 - pw_l, pmax=pmax,
                         cs=cs, cin_total=cin_total, nh=kh - 1))

    tile_h = _pick_tile_h(h_out, w_out, c_out, out_bytes, meta,
                          budget=(vmem_limit * 3) // 5)
    t_tiles = h_out // tile_h

    # ---- operands & BlockSpecs ------------------------------------------------
    args, in_specs, plan = [], [], []
    for g, m in zip(groups, meta):
        has_halos = []
        for x in g["xs"]:
            xb = x.astype(_ACT_DTYPE)
            c = int(xb.shape[-1])
            args.append(xb)
            in_specs.append(pl.BlockSpec((1, tile_h, w_out, c),
                                         lambda n, t: (n, t, 0, 0)))
            has_halo = m["nh"] > 0
            if has_halo:
                args.append(_build_halo(xb, t_tiles, tile_h, m["ph_t"], m["ph_b"]))
                in_specs.append(pl.BlockSpec((1, m["nh"], w_out, c),
                                             lambda n, t: (n, t, 0, 0)))
            has_halos.append(has_halo)
        wq = g["w"].astype(_MXU_DTYPE).reshape(m["kh"], m["kw"] * m["cin_total"],
                                               c_out)
        args.append(wq)
        in_specs.append(pl.BlockSpec(wq.shape, lambda n, t: (0, 0, 0)))
        plan.append(has_halos)
    args.append(bias.reshape(1, c_out).astype(jnp.float32))
    in_specs.append(pl.BlockSpec((1, c_out), lambda n, t: (0, 0)))

    # ---- kernel ----------------------------------------------------------------
    def kernel(*refs):
        p = 0
        acc = None
        for m, has_halos in zip(meta, plan):
            kh, kw = m["kh"], m["kw"]
            # assemble padded bf16 tiles of this group (halo rows + zero columns)
            tiles = []
            for has_halo in has_halos:
                xv = refs[p][0]; p += 1                        # (tile_h, W, c)
                if has_halo:
                    hv = refs[p][0]; p += 1                    # (kh-1, W, c)
                    parts = []
                    if m["ph_t"] > 0:
                        parts.append(hv[:m["ph_t"]])
                    parts.append(xv)
                    if m["ph_b"] > 0:
                        parts.append(hv[m["ph_t"]:])
                    xv = jnp.concatenate(parts, axis=0)
                tiles.append(xv)
            if m["pmax"]:                                      # fused torch.max + cat
                tiles = [jnp.max(tiles[0], axis=-1, keepdims=True)] + tiles
            if m["pw_l"] > 0 or m["pw_r"] > 0:                 # in-kernel zero W-pad
                padded = []
                for xv in tiles:
                    parts = []
                    if m["pw_l"] > 0:
                        parts.append(jnp.zeros((xv.shape[0], m["pw_l"], xv.shape[2]),
                                               xv.dtype))
                    parts.append(xv)
                    if m["pw_r"] > 0:
                        parts.append(jnp.zeros((xv.shape[0], m["pw_r"], xv.shape[2]),
                                               xv.dtype))
                    padded.append(jnp.concatenate(parts, axis=1)
                                  if len(parts) > 1 else parts[0])
                tiles = padded
            w_ref = refs[p]; p += 1
            k_total = kw * m["cin_total"]
            # kw-folded im2col: kh matmuls with K = kw * Cin_total (f32 accumulate)
            for i in range(kh):
                parts = [tv[i:i + tile_h, j:j + w_out, :]
                         for j in range(kw) for tv in tiles]
                pat = parts[0] if len(parts) == 1 else jnp.concatenate(parts, axis=-1)
                pat = pat.reshape(tile_h * w_out, k_total)
                part = jnp.dot(pat, w_ref[i], preferred_element_type=jnp.float32)
                acc = part if acc is None else acc + part
        b_ref = refs[p]; p += 1
        o_ref = refs[p]
        acc = acc + b_ref[...]                                 # f32 epilogue
        if relu:
            acc = jnp.maximum(acc, 0.0)
        if sigmoid:
            acc = 1.0 / (1.0 + jnp.exp(-acc))
        o_ref[0] = acc.reshape(tile_h, w_out, c_out).astype(o_ref.dtype)

    return pl.pallas_call(
        kernel,
        out_shape=jax.ShapeDtypeStruct((n_batch, h_out, w_out, c_out), out_dtype),
        grid_spec=pltpu.PrefetchScalarGridSpec(
            num_scalar_prefetch=0,
            grid=(n_batch, t_tiles),
            in_specs=in_specs,
            out_specs=pl.BlockSpec((1, tile_h, w_out, c_out),
                                   lambda n, t: (n, t, 0, 0))),
        compiler_params=pltpu.CompilerParams(
            dimension_semantics=("parallel", "parallel"),
            vmem_limit_bytes=vmem_limit),
    )(*args)


def conv_same(xs, w, b, kh, kw, *, prepend_max=False, relu=False, sigmoid=False,
              out_dtype=_ACT_DTYPE):
    """Stride-1 'same' conv over the channel concat of xs (optionally + max channel)."""
    h, wd = int(xs[0].shape[1]), int(xs[0].shape[2])
    group = dict(xs=xs, w=w, kh=kh, kw=kw, ph_t=(kh - 1) // 2, pw_l=(kw - 1) // 2,
                 prepend_max=prepend_max)
    return conv2d_fused([group], b, out_hw=(h, wd), relu=relu, sigmoid=sigmoid,
                        out_dtype=out_dtype)


def conv_stride2_3x3(y, w, b, *, relu=True):
    """3x3 / stride-2 / pad-1 conv via exact polyphase decomposition (4 groups)."""
    n, h, wd, c = y.shape
    # TODO(synk): odd H/W needs one extra zero halo row/col (PyTorch ceil semantics).
    assert h % 2 == 0 and wd % 2 == 0, "stride-2 path assumes even H, W"
    ho, wo = h // 2, wd // 2
    groups = [
        dict(xs=[y[:, 1::2, 1::2, :]], w=w[0::2, 0::2], kh=2, kw=2, ph_t=1, pw_l=1),
        dict(xs=[y[:, 1::2, 0::2, :]], w=w[0::2, 1::2], kh=2, kw=1, ph_t=1, pw_l=0),
        dict(xs=[y[:, 0::2, 1::2, :]], w=w[1::2, 0::2], kh=1, kw=2, ph_t=0, pw_l=1),
        dict(xs=[y[:, 0::2, 0::2, :]], w=w[1::2, 1::2], kh=1, kw=1, ph_t=0, pw_l=0),
    ]
    return conv2d_fused(groups, b, out_hw=(ho, wo), relu=relu)


# --------------------------------------------------------------------------
# Separable bilinear resize (align_corners=True), transpose-free
# --------------------------------------------------------------------------
def _interp_matrix(n_out, n_in):
    src = jnp.arange(n_out, dtype=jnp.float32) * ((n_in - 1) / max(n_out - 1, 1))
    i0 = jnp.clip(jnp.floor(src).astype(jnp.int32), 0, max(n_in - 2, 0))
    t = src - i0.astype(jnp.float32)
    a0 = jax.nn.one_hot(i0, n_in, dtype=jnp.float32) * (1.0 - t)[:, None]
    a1 = jax.nn.one_hot(jnp.minimum(i0 + 1, n_in - 1), n_in,
                        dtype=jnp.float32) * t[:, None]
    return a0 + a1


def _resize_w_pallas(x, w_new):
    """(N,H,Win,C) -> (N,H,Wnew,C): per-row (Wnew,Win)@(Win,C) matmuls, no transpose."""
    x = x.astype(_ACT_DTYPE)
    n, h, w_in, c = x.shape
    mat = _interp_matrix(w_new, w_in).astype(_MXU_DTYPE)
    vmem_limit = _vmem_limit_bytes()
    budget = (vmem_limit * 3) // 5

    def step_bytes(rt):
        return (2 * rt * w_in * c * 2 + 2 * rt * w_new * c * 2
                + w_new * c * 4 + 2 * w_new * w_in * 2)

    rt = 1
    for d in _divisors_desc(h):
        if d <= 8 and step_bytes(d) <= budget:
            rt = d
            break

    def kernel(m_ref, x_ref, o_ref):
        for r in range(rt):                       # static unrolled per-row matmul
            o_ref[0, r] = jnp.dot(m_ref[...], x_ref[0, r],
                                  preferred_element_type=jnp.float32
                                  ).astype(o_ref.dtype)

    return pl.pallas_call(
        kernel,
        out_shape=jax.ShapeDtypeStruct((n, h, w_new, c), x.dtype),
        grid_spec=pltpu.PrefetchScalarGridSpec(
            num_scalar_prefetch=0,
            grid=(n, h // rt),
            in_specs=[pl.BlockSpec((w_new, w_in), lambda i, t: (0, 0)),
                      pl.BlockSpec((1, rt, w_in, c), lambda i, t: (i, t, 0, 0))],
            out_specs=pl.BlockSpec((1, rt, w_new, c), lambda i, t: (i, t, 0, 0))),
        compiler_params=pltpu.CompilerParams(
            dimension_semantics=("parallel", "parallel"),
            vmem_limit_bytes=vmem_limit),
    )(mat, x)


def _resize_h_pallas(x, h_new):
    """(N,Hin,W,C) -> (N,Hnew,W,C): one (Hnew,Hin)@(Hin,W*C) matmul per lane tile."""
    x = x.astype(_ACT_DTYPE)
    n, h_in, w, c = x.shape
    mat = _interp_matrix(h_new, h_in).astype(_MXU_DTYPE)
    l_total = w * c
    xf = x.reshape(n, h_in, l_total)
    vmem_limit = _vmem_limit_bytes()
    budget = (vmem_limit * 3) // 5

    def step_bytes(tl):
        return 2 * h_in * tl * 2 + 2 * h_new * tl * 2 + h_new * tl * 4 \
            + 2 * h_new * h_in * 2

    cands = [d for d in _divisors_desc(l_total) if d % 128 == 0] or [l_total]
    fits = [d for d in cands if step_bytes(d) <= budget]
    tl = max(fits) if fits else min(cands)

    def kernel(m_ref, x_ref, o_ref):
        o_ref[0] = jnp.dot(m_ref[...], x_ref[0],
                           preferred_element_type=jnp.float32).astype(o_ref.dtype)

    out = pl.pallas_call(
        kernel,
        out_shape=jax.ShapeDtypeStruct((n, h_new, l_total), x.dtype),
        grid_spec=pltpu.PrefetchScalarGridSpec(
            num_scalar_prefetch=0,
            grid=(n, l_total // tl),
            in_specs=[pl.BlockSpec((h_new, h_in), lambda i, l: (0, 0)),
                      pl.BlockSpec((1, h_in, tl), lambda i, l: (i, 0, l))],
            out_specs=pl.BlockSpec((1, h_new, tl), lambda i, l: (i, 0, l))),
        compiler_params=pltpu.CompilerParams(
            dimension_semantics=("parallel", "parallel"),
            vmem_limit_bytes=vmem_limit),
    )(mat, xf)
    return out.reshape(n, h_new, w, c)


def bilinear_resize(x, h_new, w_new):
    # W-axis first (fewer rows at half height), then H; exactly separable.
    return _resize_h_pallas(_resize_w_pallas(x, w_new), h_new)


# --------------------------------------------------------------------------
# Full forward pass (mirrors ImgEnhanceNet.forward)
# --------------------------------------------------------------------------
def img_enhance_net(params, x_nchw):
    x = jnp.transpose(x_nchw, (0, 2, 3, 1)).astype(_ACT_DTYPE)    # NHWC bf16
    _, h, w, _ = x.shape

    w0, b0 = params["conv0"]
    wc, bc = params["conv"]
    w1, b1 = params["conv1"]
    w2, b2 = params["conv2"]
    w3, b3 = params["conv3"]
    w4, b4 = params["conv4"]
    w6, b6 = params["conv6"]
    w8, b8 = params["conv8"]
    w9, b9 = params["conv9"]

    # torch.max + cat fused as an in-kernel prepended max channel (Cin = 3 + 1).
    x0 = conv_same([x], w0, b0, 3, 3, prepend_max=True, relu=True)
    y = conv_same([x], wc, bc, 9, 9, prepend_max=True)            # no relu
    y = conv_same([y], w1, b1, 3, 3, relu=True)
    x1 = y
    y = conv_stride2_3x3(y, w2, b2)                               # relu inside
    y = conv_same([y], w3, b3, 3, 3, relu=True)
    y = bilinear_resize(y, h, w)                                  # align_corners=True
    y = conv_same([y], w4, b4, 3, 3, relu=True)
    # skip concats fused in-kernel: one matmul chain with full K = 3*128 / 3*96.
    y = conv_same([y, x1], w6, b6, 3, 3, relu=True)
    y = conv_same([y, x0], w8, b8, 3, 3)                          # no relu
    y = conv_same([y], w9, b9, 3, 3, sigmoid=True, out_dtype=jnp.float32)

    out = jnp.transpose(y, (0, 3, 1, 2))                          # NHWC -> NCHW
    return out[:, 0:3], out[:, 3:4]


# --------------------------------------------------------------------------
# Pure-JAX f32 reference (for correctness checks only)
# --------------------------------------------------------------------------
def _conv_ref(x, w, b, stride=1, padding="SAME"):
    y = jax.lax.conv_general_dilated(
        x, w, window_strides=(stride, stride), padding=padding,
        dimension_numbers=("NHWC", "HWIO", "NHWC"),
        precision=jax.lax.Precision.HIGHEST)
    return y + b.reshape(1, 1, 1, -1)


def img_enhance_net_ref(params, x_nchw):
    x = jnp.transpose(x_nchw, (0, 2, 3, 1)).astype(jnp.float32)
    h, w = x.shape[1], x.shape[2]
    w0, b0 = params["conv0"]; wc, bc = params["conv"]
    w1, b1 = params["conv1"]; w2, b2 = params["conv2"]
    w3, b3 = params["conv3"]; w4, b4 = params["conv4"]
    w6, b6 = params["conv6"]; w8, b8 = params["conv8"]
    w9, b9 = params["conv9"]
    xc = jnp.concatenate([jnp.max(x, axis=-1, keepdims=True), x], axis=-1)
    x0 = jax.nn.relu(_conv_ref(xc, w0, b0))
    y = _conv_ref(xc, wc, bc)
    y = jax.nn.relu(_conv_ref(y, w1, b1))
    x1 = y
    y = jax.nn.relu(_conv_ref(y, w2, b2, stride=2, padding=[(1, 1), (1, 1)]))
    y = jax.nn.relu(_conv_ref(y, w3, b3))
    a = _interp_matrix(h, y.shape[1])
    bm = _interp_matrix(w, y.shape[2])
    y = jnp.einsum("oh,nhwc->nowc", a, y, precision=jax.lax.Precision.HIGHEST)
    y = jnp.einsum("pw,nowc->nopc", bm, y, precision=jax.lax.Precision.HIGHEST)
    y = jax.nn.relu(_conv_ref(y, w4, b4))
    y = jax.nn.relu(_conv_ref(jnp.concatenate([y, x1], axis=-1), w6, b6))
    y = _conv_ref(jnp.concatenate([y, x0], axis=-1), w8, b8)
    y = jax.nn.sigmoid(_conv_ref(y, w9, b9))
    out = jnp.transpose(y, (0, 3, 1, 2))
    return out[:, 0:3], out[:, 3:4]


# --------------------------------------------------------------------------
# Init + self-checks + main
# --------------------------------------------------------------------------
def _init_conv(key, kh, kw, cin, cout):
    kw_key, kb_key = jax.random.split(key)
    bound = 1.0 / float(cin * kh * kw) ** 0.5
    w = jax.random.uniform(kw_key, (kh, kw, cin, cout), jnp.float32, -bound, bound)
    b = jax.random.uniform(kb_key, (cout,), jnp.float32, -bound, bound)
    return w, b


def _max_rel(a, b):
    return float(jnp.max(jnp.abs(a.astype(jnp.float32) - b)) /
                 (jnp.max(jnp.abs(b)) + 1e-6))


def _unit_checks(key):
    k1, k2, k3, k4, k5, k6 = jax.random.split(key, 6)
    # (a) 9x9 'same' conv with fused max-prepend.
    xa = jax.random.normal(k1, (1, 16, 16, 3), jnp.float32)
    wa = jax.random.normal(k2, (9, 9, 4, 16), jnp.float32) * 0.2
    ba = jax.random.normal(k3, (16,), jnp.float32) * 0.2
    got = conv_same([xa], wa, ba, 9, 9, prepend_max=True)
    xc = jnp.concatenate([jnp.max(xa, axis=-1, keepdims=True), xa], axis=-1)
    assert _max_rel(got, _conv_ref(xc, wa, ba)) < 0.05
    # (b) 3x3 'same' conv over an in-kernel channel concat (skip-concat fusion).
    xb1 = jax.random.normal(k1, (1, 16, 16, 8), jnp.float32)
    xb2 = jax.random.normal(k2, (1, 16, 16, 8), jnp.float32)
    wb = jax.random.normal(k4, (3, 3, 16, 16), jnp.float32) * 0.2
    got = conv_same([xb1, xb2], wb, ba, 3, 3, relu=True)
    ref = jax.nn.relu(_conv_ref(jnp.concatenate([xb1, xb2], axis=-1), wb, ba))
    assert _max_rel(got, ref) < 0.05
    # (c) 3x3 stride-2 pad-1 polyphase conv.
    wcv = jax.random.normal(k5, (3, 3, 8, 16), jnp.float32) * 0.2
    got = conv_stride2_3x3(xb1, wcv, ba)
    ref = jax.nn.relu(_conv_ref(xb1, wcv, ba, stride=2, padding=[(1, 1), (1, 1)]))
    assert _max_rel(got, ref) < 0.05
    # (d) bilinear align_corners=True upsample.
    xd = jax.random.normal(k6, (1, 8, 8, 128), jnp.float32)
    got = bilinear_resize(xd, 16, 16)
    a, bmat = _interp_matrix(16, 8), _interp_matrix(16, 8)
    ref = jnp.einsum("pw,nowc->nopc", bmat, jnp.einsum("oh,nhwc->nowc", a, xd))
    assert _max_rel(got, ref) < 0.05


if __name__ == "__main__":
    key = jax.random.PRNGKey(0)
    k_in, k_par, k_unit = jax.random.split(key, 3)

    conv_specs = {
        "conv0": (3, 3, 4, 32),
        "conv":  (9, 9, 4, 64),
        "conv1": (3, 3, 64, 64),
        "conv2": (3, 3, 64, 128),
        "conv3": (3, 3, 128, 128),
        "conv4": (3, 3, 128, 64),
        "conv6": (3, 3, 128, 64),
        "conv8": (3, 3, 96, 64),
        "conv9": (3, 3, 64, 4),
    }
    keys = jax.random.split(k_par, len(conv_specs))
    params = {name: _init_conv(k, *spec)
              for (name, spec), k in zip(conv_specs.items(), keys)}

    # The module takes a 3-channel image (channel-max + cat makes Cin = 4).
    x = jax.random.normal(k_in, (2, 3, 16, 16), jnp.float32)

    _unit_checks(k_unit)

    R, I = jax.jit(img_enhance_net)(params, x)
    (R, I) = jax.block_until_ready((R, I))

    assert R.shape == (2, 3, 16, 16), R.shape
    assert I.shape == (2, 1, 16, 16), I.shape
    assert bool(jnp.all((R >= 0) & (R <= 1))) and bool(jnp.all((I >= 0) & (I <= 1)))

    # End-to-end check vs the f32 reference (bf16 activations -> loose tolerance).
    R_ref, I_ref = jax.jit(img_enhance_net_ref)(params, x)
    assert float(jnp.max(jnp.abs(R - R_ref))) < 3e-2
    assert float(jnp.max(jnp.abs(I - I_ref))) < 3e-2

    print("KERNEL_OK")
</pallas_src>

<mosaic_0001>
module attributes {stable_mosaic.version = 11 : i64} {
  func.func @kernel(%arg0: i32, %arg1: i32, %arg2: memref<1x16x16x3xbf16, #tpu.memory_space<vmem>>, %arg3: memref<1x8x16x3xbf16, #tpu.memory_space<vmem>>, %arg4: memref<9x36x16xbf16, #tpu.memory_space<vmem>>, %arg5: memref<1x16xf32, #tpu.memory_space<vmem>>, %arg6: memref<1x16x16x16xbf16, #tpu.memory_space<vmem>>) attributes {dimension_semantics = [#tpu.dimension_semantics<parallel>, #tpu.dimension_semantics<parallel>], iteration_bounds = array<i64: 1, 1>, scalar_prefetch = 0 : i64, scratch_operands = 0 : i64, tpu.core_type = #tpu.core_type<tc>, window_params = [{transform_indices = @transform_0, window_bounds = array<i64: 1, 16, 16, 3>}, {transform_indices = @transform_1, window_bounds = array<i64: 1, 8, 16, 3>}, {pipeline_mode = #tpu.pipeline_mode<synchronous>, transform_indices = @transform_2, window_bounds = array<i64: 9, 36, 16>}, {pipeline_mode = #tpu.pipeline_mode<synchronous>, transform_indices = @transform_3, window_bounds = array<i64: 1, 16>}, {transform_indices = @transform_4, window_bounds = array<i64: 1, 16, 16, 16>}]} {
    %c0 = arith.constant 0 : index
    %c0_0 = arith.constant 0 : index
    %c0_1 = arith.constant 0 : index
    %c0_2 = arith.constant 0 : index
    %0 = vector.load %arg2[%c0, %c0_0, %c0_1, %c0_2] : memref<1x16x16x3xbf16, #tpu.memory_space<vmem>>, vector<1x16x16x3xbf16>
    %1 = vector.shape_cast %0 : vector<1x16x16x3xbf16> to vector<16x16x3xbf16>
    %c0_3 = arith.constant 0 : index
    %c0_4 = arith.constant 0 : index
    %c0_5 = arith.constant 0 : index
    %c0_6 = arith.constant 0 : index
    %2 = vector.load %arg3[%c0_3, %c0_4, %c0_5, %c0_6] : memref<1x8x16x3xbf16, #tpu.memory_space<vmem>>, vector<1x8x16x3xbf16>
    %3 = vector.shape_cast %2 : vector<1x8x16x3xbf16> to vector<8x16x3xbf16>
    %4 = vector.extract_strided_slice %3 {offsets = [0, 0, 0], sizes = [4, 16, 3], strides = [1, 1, 1]} : vector<8x16x3xbf16> to vector<4x16x3xbf16>
    %5 = vector.extract_strided_slice %3 {offsets = [4, 0, 0], sizes = [4, 16, 3], strides = [1, 1, 1]} : vector<8x16x3xbf16> to vector<4x16x3xbf16>
    %6 = tpu.concatenate %4, %1, %5 in 0 : vector<4x16x3xbf16>, vector<16x16x3xbf16>, vector<4x16x3xbf16> -> vector<24x16x3xbf16>
    %cst = arith.constant dense<0xFF80> : vector<24x16xbf16>
    %7 = vector.multi_reduction <maximumf>, %6, %cst [2] : vector<24x16x3xbf16> to vector<24x16xbf16>
    %8 = vector.shape_cast %7 : vector<24x16xbf16> to vector<24x16x1xbf16>
    %cst_7 = arith.constant 0.000000e+00 : bf16
    %9 = vector.broadcast %cst_7 : bf16 to vector<24x4x1xbf16>
    %cst_8 = arith.constant 0.000000e+00 : bf16
    %10 = vector.broadcast %cst_8 : bf16 to vector<24x4x1xbf16>
    %11 = tpu.concatenate %9, %8, %10 in 1 : vector<24x4x1xbf16>, vector<24x16x1xbf16>, vector<24x4x1xbf16> -> vector<24x24x1xbf16>
    %cst_9 = arith.constant 0.000000e+00 : bf16
    %12 = vector.broadcast %cst_9 : bf16 to vector<24x4x3xbf16>
    %cst_10 = arith.constant 0.000000e+00 : bf16
    %13 = vector.broadcast %cst_10 : bf16 to vector<24x4x3xbf16>
    %14 = tpu.concatenate %12, %6, %13 in 1 : vector<24x4x3xbf16>, vector<24x16x3xbf16>, vector<24x4x3xbf16> -> vector<24x24x3xbf16>
    %15 = vector.extract_strided_slice %11 {offsets = [0, 0, 0], sizes = [16, 16, 1], strides = [1, 1, 1]} : vector<24x24x1xbf16> to vector<16x16x1xbf16>
    %16 = vector.extract_strided_slice %14 {offsets = [0, 0, 0], sizes = [16, 16, 3], strides = [1, 1, 1]} : vector<24x24x3xbf16> to vector<16x16x3xbf16>
    %17 = vector.extract_strided_slice %11 {offsets = [0, 1, 0], sizes = [16, 16, 1], strides = [1, 1, 1]} : vector<24x24x1xbf16> to vector<16x16x1xbf16>
    %18 = vector.extract_strided_slice %14 {offsets = [0, 1, 0], sizes = [16, 16, 3], strides = [1, 1, 1]} : vector<24x24x3xbf16> to vector<16x16x3xbf16>
    %19 = vector.extract_strided_slice %11 {offsets = [0, 2, 0], sizes = [16, 16, 1], strides = [1, 1, 1]} : vector<24x24x1xbf16> to vector<16x16x1xbf16>
    %20 = vector.extract_strided_slice %14 {offsets = [0, 2, 0], sizes = [16, 16, 3], strides = [1, 1, 1]} : vector<24x24x3xbf16> to vector<16x16x3xbf16>
    %21 = vector.extract_strided_slice %11 {offsets = [0, 3, 0], sizes = [16, 16, 1], strides = [1, 1, 1]} : vector<24x24x1xbf16> to vector<16x16x1xbf16>
    %22 = vector.extract_strided_slice %14 {offsets = [0, 3, 0], sizes = [16, 16, 3], strides = [1, 1, 1]} : vector<24x24x3xbf16> to vector<16x16x3xbf16>
    %23 = vector.extract_strided_slice %11 {offsets = [0, 4, 0], sizes = [16, 16, 1], strides = [1, 1, 1]} : vector<24x24x1xbf16> to vector<16x16x1xbf16>
    %24 = vector.extract_strided_slice %14 {offsets = [0, 4, 0], sizes = [16, 16, 3], strides = [1, 1, 1]} : vector<24x24x3xbf16> to vector<16x16x3xbf16>
    %25 = vector.extract_strided_slice %11 {offsets = [0, 5, 0], sizes = [16, 16, 1], strides = [1, 1, 1]} : vector<24x24x1xbf16> to vector<16x16x1xbf16>
    %26 = vector.extract_strided_slice %14 {offsets = [0, 5, 0], sizes = [16, 16, 3], strides = [1, 1, 1]} : vector<24x24x3xbf16> to vector<16x16x3xbf16>
    %27 = vector.extract_strided_slice %11 {offsets = [0, 6, 0], sizes = [16, 16, 1], strides = [1, 1, 1]} : vector<24x24x1xbf16> to vector<16x16x1xbf16>
    %28 = vector.extract_strided_slice %14 {offsets = [0, 6, 0], sizes = [16, 16, 3], strides = [1, 1, 1]} : vector<24x24x3xbf16> to vector<16x16x3xbf16>
    %29 = vector.extract_strided_slice %11 {offsets = [0, 7, 0], sizes = [16, 16, 1], strides = [1, 1, 1]} : vector<24x24x1xbf16> to vector<16x16x1xbf16>
    %30 = vector.extract_strided_slice %14 {offsets = [0, 7, 0], sizes = [16, 16, 3], strides = [1, 1, 1]} : vector<24x24x3xbf16> to vector<16x16x3xbf16>
    %31 = vector.extract_strided_slice %11 {offsets = [0, 8, 0], sizes = [16, 16, 1], strides = [1, 1, 1]} : vector<24x24x1xbf16> to vector<16x16x1xbf16>
    %32 = vector.extract_strided_slice %14 {offsets = [0, 8, 0], sizes = [16, 16, 3], strides = [1, 1, 1]} : vector<24x24x3xbf16> to vector<16x16x3xbf16>
    %33 = tpu.concatenate %15, %16, %17, %18, %19, %20, %21, %22, %23, %24, %25, %26, %27, %28, %29, %30 in 2 : vector<16x16x1xbf16>, vector<16x16x3xbf16>, vector<16x16x1xbf16>, vector<16x16x3xbf16>, vector<16x16x1xbf16>, vector<16x16x3xbf16>, vector<16x16x1xbf16>, vector<16x16x3xbf16>, vector<16x16x1xbf16>, vector<16x16x3xbf16>, vector<16x16x1xbf16>, vector<16x16x3xbf16>, vector<16x16x1xbf16>, vector<16x16x3xbf16>, vector<16x16x1xbf16>, vector<16x16x3xbf16> -> vector<16x16x32xbf16>
    %34 = tpu.concatenate %31, %32 in 2 : vector<16x16x1xbf16>, vector<16x16x3xbf16> -> vector<16x16x4xbf16>
    %35 = tpu.concatenate %33, %34 in 2 : vector<16x16x32xbf16>, vector<16x16x4xbf16> -> vector<16x16x36xbf16>
    %36 = vector.shape_cast %35 : vector<16x16x36xbf16> to vector<256x36xbf16>
    %c0_11 = arith.constant 0 : index
    %c0_12 = arith.constant 0 : index
    %c0_13 = arith.constant 0 : index
    %37 = vector.load %arg4[%c0_11, %c0_12, %c0_13] : memref<9x36x16xbf16, #tpu.memory_space<vmem>>, vector<1x36x16xbf16>
    %38 = vector.shape_cast %37 : vector<1x36x16xbf16> to vector<36x16xbf16>
    %cst_14 = arith.constant dense<0.000000e+00> : vector<256x16xf32>
    %39 = tpu.matmul %36, %38, %cst_14 {dimension_numbers = #tpu.dot_dimension_numbers<[1], [0], [0], [1], [0, 0, 1, 1], [], []>} : vector<256x36xbf16>, vector<36x16xbf16>, vector<256x16xf32> -> vector<256x16xf32>
    %40 = vector.extract_strided_slice %11 {offsets = [1, 0, 0], sizes = [16, 16, 1], strides = [1, 1, 1]} : vector<24x24x1xbf16> to vector<16x16x1xbf16>
    %41 = vector.extract_strided_slice %14 {offsets = [1, 0, 0], sizes = [16, 16, 3], strides = [1, 1, 1]} : vector<24x24x3xbf16> to vector<16x16x3xbf16>
    %42 = vector.extract_strided_slice %11 {offsets = [1, 1, 0], sizes = [16, 16, 1], strides = [1, 1, 1]} : vector<24x24x1xbf16> to vector<16x16x1xbf16>
    %43 = vector.extract_strided_slice %14 {offsets = [1, 1, 0], sizes = [16, 16, 3], strides = [1, 1, 1]} : vector<24x24x3xbf16> to vector<16x16x3xbf16>
    %44 = vector.extract_strided_slice %11 {offsets = [1, 2, 0], sizes = [16, 16, 1], strides = [1, 1, 1]} : vector<24x24x1xbf16> to vector<16x16x1xbf16>
    %45 = vector.extract_strided_slice %14 {offsets = [1, 2, 0], sizes = [16, 16, 3], strides = [1, 1, 1]} : vector<24x24x3xbf16> to vector<16x16x3xbf16>
    %46 = vector.extract_strided_slice %11 {offsets = [1, 3, 0], sizes = [16, 16, 1], strides = [1, 1, 1]} : vector<24x24x1xbf16> to vector<16x16x1xbf16>
    %47 = vector.extract_strided_slice %14 {offsets = [1, 3, 0], sizes = [16, 16, 3], strides = [1, 1, 1]} : vector<24x24x3xbf16> to vector<16x16x3xbf16>
    %48 = vector.extract_strided_slice %11 {offsets = [1, 4, 0], sizes = [16, 16, 1], strides = [1, 1, 1]} : vector<24x24x1xbf16> to vector<16x16x1xbf16>
    %49 = vector.extract_strided_slice %14 {offsets = [1, 4, 0], sizes = [16, 16, 3], strides = [1, 1, 1]} : vector<24x24x3xbf16> to vector<16x16x3xbf16>
    %50 = vector.extract_strided_slice %11 {offsets = [1, 5, 0], sizes = [16, 16, 1], strides = [1, 1, 1]} : vector<24x24x1xbf16> to vector<16x16x1xbf16>
    %51 = vector.extract_strided_slice %14 {offsets = [1, 5, 0], sizes = [16, 16, 3], strides = [1, 1, 1]} : vector<24x24x3xbf16> to vector<16x16x3xbf16>
    %52 = vector.extract_strided_slice %11 {offsets = [1, 6, 0], sizes = [16, 16, 1], strides = [1, 1, 1]} : vector<24x24x1xbf16> to vector<16x16x1xbf16>
    %53 = vector.extract_strided_slice %14 {offsets = [1, 6, 0], sizes = [16, 16, 3], strides = [1, 1, 1]} : vector<24x24x3xbf16> to vector<16x16x3xbf16>
    %54 = vector.extract_strided_slice %11 {offsets = [1, 7, 0], sizes = [16, 16, 1], strides = [1, 1, 1]} : vector<24x24x1xbf16> to vector<16x16x1xbf16>
    %55 = vector.extract_strided_slice %14 {offsets = [1, 7, 0], sizes = [16, 16, 3], strides = [1, 1, 1]} : vector<24x24x3xbf16> to vector<16x16x3xbf16>
    %56 = vector.extract_strided_slice %11 {offsets = [1, 8, 0], sizes = [16, 16, 1], strides = [1, 1, 1]} : vector<24x24x1xbf16> to vector<16x16x1xbf16>
    %57 = vector.extract_strided_slice %14 {offsets = [1, 8, 0], sizes = [16, 16, 3], strides = [1, 1, 1]} : vector<24x24x3xbf16> to vector<16x16x3xbf16>
    %58 = tpu.concatenate %40, %41, %42, %43, %44, %45, %46, %47, %48, %49, %50, %51, %52, %53, %54, %55 in 2 : vector<16x16x1xbf16>, vector<16x16x3xbf16>, vector<16x16x1xbf16>, vector<16x16x3xbf16>, vector<16x16x1xbf16>, vector<16x16x3xbf16>, vector<16x16x1xbf16>, vector<16x16x3xbf16>, vector<16x16x1xbf16>, vector<16x16x3xbf16>, vector<16x16x1xbf16>, vector<16x16x3xbf16>, vector<16x16x1xbf16>, vector<16x16x3xbf16>, vector<16x16x1xbf16>, vector<16x16x3xbf16> -> vector<16x16x32xbf16>
    %59 = tpu.concatenate %56, %57 in 2 : vector<16x16x1xbf16>, vector<16x16x3xbf16> -> vector<16x16x4xbf16>
    %60 = tpu.concatenate %58, %59 in 2 : vector<16x16x32xbf16>, vector<16x16x4xbf16> -> vector<16x16x36xbf16>
    %61 = vector.shape_cast %60 : vector<16x16x36xbf16> to vector<256x36xbf16>
    %c1 = arith.constant 1 : index
    %c0_15 = arith.constant 0 : index
    %c0_16 = arith.constant 0 : index
    %62 = vector.load %arg4[%c1, %c0_15, %c0_16] : memref<9x36x16xbf16, #tpu.memory_space<vmem>>, vector<1x36x16xbf16>
    %63 = vector.shape_cast %62 : vector<1x36x16xbf16> to vector<36x16xbf16>
    %cst_17 = arith.constant dense<0.000000e+00> : vector<256x16xf32>
    %64 = tpu.matmul %61, %63, %cst_17 {dimension_numbers = #tpu.dot_dimension_numbers<[1], [0], [0], [1], [0, 0, 1, 1], [], []>} : vector<256x36xbf16>, vector<36x16xbf16>, vector<256x16xf32> -> vector<256x16xf32>
    %65 = arith.addf %39, %64 : vector<256x16xf32>
    %66 = vector.extract_strided_slice %11 {offsets = [2, 0, 0], sizes = [16, 16, 1], strides = [1, 1, 1]} : vector<24x24x1xbf16> to vector<16x16x1xbf16>
    %67 = vector.extract_strided_slice %14 {offsets = [2, 0, 0], sizes = [16, 16, 3], strides = [1, 1, 1]} : vector<24x24x3xbf16> to vector<16x16x3xbf16>
    %68 = vector.extract_strided_slice %11 {offsets = [2, 1, 0], sizes = [16, 16, 1], strides = [1, 1, 1]} : vector<24x24x1xbf16> to vector<16x16x1xbf16>
    %69 = vector.extract_strided_slice %14 {offsets = [2, 1, 0], sizes = [16, 16, 3], strides = [1, 1, 1]} : vector<24x24x3xbf16> to vector<16x16x3xbf16>
    %70 = vector.extract_strided_slice %11 {offsets = [2, 2, 0], sizes = [16, 16, 1], strides = [1, 1, 1]} : vector<24x24x1xbf16> to vector<16x16x1xbf16>
    %71 = vector.extract_strided_slice %14 {offsets = [2, 2, 0], sizes = [16, 16, 3], strides = [1, 1, 1]} : vector<24x24x3xbf16> to vector<16x16x3xbf16>
    %72 = vector.extract_strided_slice %11 {offsets = [2, 3, 0], sizes = [16, 16, 1], strides = [1, 1, 1]} : vector<24x24x1xbf16> to vector<16x16x1xbf16>
    %73 = vector.extract_strided_slice %14 {offsets = [2, 3, 0], sizes = [16, 16, 3], strides = [1, 1, 1]} : vector<24x24x3xbf16> to vector<16x16x3xbf16>
    %74 = vector.extract_strided_slice %11 {offsets = [2, 4, 0], sizes = [16, 16, 1], strides = [1, 1, 1]} : vector<24x24x1xbf16> to vector<16x16x1xbf16>
    %75 = vector.extract_strided_slice %14 {offsets = [2, 4, 0], sizes = [16, 16, 3], strides = [1, 1, 1]} : vector<24x24x3xbf16> to vector<16x16x3xbf16>
    %76 = vector.extract_strided_slice %11 {offsets = [2, 5, 0], sizes = [16, 16, 1], strides = [1, 1, 1]} : vector<24x24x1xbf16> to vector<16x16x1xbf16>
    %77 = vector.extract_strided_slice %14 {offsets = [2, 5, 0], sizes = [16, 16, 3], strides = [1, 1, 1]} : vector<24x24x3xbf16> to vector<16x16x3xbf16>
    %78 = vector.extract_strided_slice %11 {offsets = [2, 6, 0], sizes = [16, 16, 1], strides = [1, 1, 1]} : vector<24x24x1xbf16> to vector<16x16x1xbf16>
    %79 = vector.extract_strided_slice %14 {offsets = [2, 6, 0], sizes = [16, 16, 3], strides = [1, 1, 1]} : vector<24x24x3xbf16> to vector<16x16x3xbf16>
    %80 = vector.extract_strided_slice %11 {offsets = [2, 7, 0], sizes = [16, 16, 1], strides = [1, 1, 1]} : vector<24x24x1xbf16> to vector<16x16x1xbf16>
    %81 = vector.extract_strided_slice %14 {offsets = [2, 7, 0], sizes = [16, 16, 3], strides = [1, 1, 1]} : vector<24x24x3xbf16> to vector<16x16x3xbf16>
    %82 = vector.extract_strided_slice %11 {offsets = [2, 8, 0], sizes = [16, 16, 1], strides = [1, 1, 1]} : vector<24x24x1xbf16> to vector<16x16x1xbf16>
    %83 = vector.extract_strided_slice %14 {offsets = [2, 8, 0], sizes = [16, 16, 3], strides = [1, 1, 1]} : vector<24x24x3xbf16> to vector<16x16x3xbf16>
    %84 = tpu.concatenate %66, %67, %68, %69, %70, %71, %72, %73, %74, %75, %76, %77, %78, %79, %80, %81 in 2 : vector<16x16x1xbf16>, vector<16x16x3xbf16>, vector<16x16x1xbf16>, vector<16x16x3xbf16>, vector<16x16x1xbf16>, vector<16x16x3xbf16>, vector<16x16x1xbf16>, vector<16x16x3xbf16>, vector<16x16x1xbf16>, vector<16x16x3xbf16>, vector<16x16x1xbf16>, vector<16x16x3xbf16>, vector<16x16x1xbf16>, vector<16x16x3xbf16>, vector<16x16x1xbf16>, vector<16x16x3xbf16> -> vector<16x16x32xbf16>
    %85 = tpu.concatenate %82, %83 in 2 : vector<16x16x1xbf16>, vector<16x16x3xbf16> -> vector<16x16x4xbf16>
    %86 = tpu.concatenate %84, %85 in 2 : vector<16x16x32xbf16>, vector<16x16x4xbf16> -> vector<16x16x36xbf16>
    %87 = vector.shape_cast %86 : vector<16x16x36xbf16> to vector<256x36xbf16>
    %c2 = arith.constant 2 : index
    %c0_18 = arith.constant 0 : index
    %c0_19 = arith.constant 0 : index
    %88 = vector.load %arg4[%c2, %c0_18, %c0_19] : memref<9x36x16xbf16, #tpu.memory_space<vmem>>, vector<1x36x16xbf16>
    %89 = vector.shape_cast %88 : vector<1x36x16xbf16> to vector<36x16xbf16>
    %cst_20 = arith.constant dense<0.000000e+00> : vector<256x16xf32>
    %90 = tpu.matmul %87, %89, %cst_20 {dimension_numbers = #tpu.dot_dimension_numbers<[1], [0], [0], [1], [0, 0, 1, 1], [], []>} : vector<256x36xbf16>, vector<36x16xbf16>, vector<256x16xf32> -> vector<256x16xf32>
    %91 = arith.addf %65, %90 : vector<256x16xf32>
    %92 = vector.extract_strided_slice %11 {offsets = [3, 0, 0], sizes = [16, 16, 1], strides = [1, 1, 1]} : vector<24x24x1xbf16> to vector<16x16x1xbf16>
    %93 = vector.extract_strided_slice %14 {offsets = [3, 0, 0], sizes = [16, 16, 3], strides = [1, 1, 1]} : vector<24x24x3xbf16> to vector<16x16x3xbf16>
    %94 = vector.extract_strided_slice %11 {offsets = [3, 1, 0], sizes = [16, 16, 1], strides = [1, 1, 1]} : vector<24x24x1xbf16> to vector<16x16x1xbf16>
    %95 = vector.extract_strided_slice %14 {offsets = [3, 1, 0], sizes = [16, 16, 3], strides = [1, 1, 1]} : vector<24x24x3xbf16> to vector<16x16x3xbf16>
    %96 = vector.extract_strided_slice %11 {offsets = [3, 2, 0], sizes = [16, 16, 1], strides = [1, 1, 1]} : vector<24x24x1xbf16> to vector<16x16x1xbf16>
    %97 = vector.extract_strided_slice %14 {offsets = [3, 2, 0], sizes = [16, 16, 3], strides = [1, 1, 1]} : vector<24x24x3xbf16> to vector<16x16x3xbf16>
    %98 = vector.extract_strided_slice %11 {offsets = [3, 3, 0], sizes = [16, 16, 1], strides = [1, 1, 1]} : vector<24x24x1xbf16> to vector<16x16x1xbf16>
    %99 = vector.extract_strided_slice %14 {offsets = [3, 3, 0], sizes = [16, 16, 3], strides = [1, 1, 1]} : vector<24x24x3xbf16> to vector<16x16x3xbf16>
    %100 = vector.extract_strided_slice %11 {offsets = [3, 4, 0], sizes = [16, 16, 1], strides = [1, 1, 1]} : vector<24x24x1xbf16> to vector<16x16x1xbf16>
    %101 = vector.extract_strided_slice %14 {offsets = [3, 4, 0], sizes = [16, 16, 3], strides = [1, 1, 1]} : vector<24x24x3xbf16> to vector<16x16x3xbf16>
    %102 = vector.extract_strided_slice %11 {offsets = [3, 5, 0], sizes = [16, 16, 1], strides = [1, 1, 1]} : vector<24x24x1xbf16> to vector<16x16x1xbf16>
    %103 = vector.extract_strided_slice %14 {offsets = [3, 5, 0], sizes = [16, 16, 3], strides = [1, 1, 1]} : vector<24x24x3xbf16> to vector<16x16x3xbf16>
    %104 = vector.extract_strided_slice %11 {offsets = [3, 6, 0], sizes = [16, 16, 1], strides = [1, 1, 1]} : vector<24x24x1xbf16> to vector<16x16x1xbf16>
    %105 = vector.extract_strided_slice %14 {offsets = [3, 6, 0], sizes = [16, 16, 3], strides = [1, 1, 1]} : vector<24x24x3xbf16> to vector<16x16x3xbf16>
    %106 = vector.extract_strided_slice %11 {offsets = [3, 7, 0], sizes = [16, 16, 1], strides = [1, 1, 1]} : vector<24x24x1xbf16> to vector<16x16x1xbf16>
    %107 = vector.extract_strided_slice %14 {offsets = [3, 7, 0], sizes = [16, 16, 3], strides = [1, 1, 1]} : vector<24x24x3xbf16> to vector<16x16x3xbf16>
    %108 = vector.extract_strided_slice %11 {offsets = [3, 8, 0], sizes = [16, 16, 1], strides = [1, 1, 1]} : vector<24x24x1xbf16> to vector<16x16x1xbf16>
    %109 = vector.extract_strided_slice %14 {offsets = [3, 8, 0], sizes = [16, 16, 3], strides = [1, 1, 1]} : vector<24x24x3xbf16> to vector<16x16x3xbf16>
    %110 = tpu.concatenate %92, %93, %94, %95, %96, %97, %98, %99, %100, %101, %102, %103, %104, %105, %106, %107 in 2 : vector<16x16x1xbf16>, vector<16x16x3xbf16>, vector<16x16x1xbf16>, vector<16x16x3xbf16>, vector<16x16x1xbf16>, vector<16x16x3xbf16>, vector<16x16x1xbf16>, vector<16x16x3xbf16>, vector<16x16x1xbf16>, vector<16x16x3xbf16>, vector<16x16x1xbf16>, vector<16x16x3xbf16>, vector<16x16x1xbf16>, vector<16x16x3xbf16>, vector<16x16x1xbf16>, vector<16x16x3xbf16> -> vector<16x16x32xbf16>
    %111 = tpu.concatenate %108, %109 in 2 : vector<16x16x1xbf16>, vector<16x16x3xbf16> -> vector<16x16x4xbf16>
    %112 = tpu.concatenate %110, %111 in 2 : vector<16x16x32xbf16>, vector<16x16x4xbf16> -> vector<16x16x36xbf16>
    %113 = vector.shape_cast %112 : vector<16x16x36xbf16> to vector<256x36xbf16>
    %c3 = arith.constant 3 : index
    %c0_21 = arith.constant 0 : index
    %c0_22 = arith.constant 0 : index
    %114 = vector.load %arg4[%c3, %c0_21, %c0_22] : memref<9x36x16xbf16, #tpu.memory_space<vmem>>, vector<1x36x16xbf16>
    %115 = vector.shape_cast %114 : vector<1x36x16xbf16> to vector<36x16xbf16>
    %cst_23 = arith.constant dense<0.000000e+00> : vector<256x16xf32>
    %116 = tpu.matmul %113, %115, %cst_23 {dimension_numbers = #tpu.dot_dimension_numbers<[1], [0], [0], [1], [0, 0, 1, 1], [], []>} : vector<256x36xbf16>, vector<36x16xbf16>, vector<256x16xf32> -> vector<256x16xf32>
    %117 = arith.addf %91, %116 : vector<256x16xf32>
    %118 = vector.extract_strided_slice %11 {offsets = [4, 0, 0], sizes = [16, 16, 1], strides = [1, 1, 1]} : vector<24x24x1xbf16> to vector<16x16x1xbf16>
    %119 = vector.extract_strided_slice %14 {offsets = [4, 0, 0], sizes = [16, 16, 3], strides = [1, 1, 1]} : vector<24x24x3xbf16> to vector<16x16x3xbf16>
    %120 = vector.extract_strided_slice %11 {offsets = [4, 1, 0], sizes = [16, 16, 1], strides = [1, 1, 1]} : vector<24x24x1xbf16> to vector<16x16x1xbf16>
    %121 = vector.extract_strided_slice %14 {offsets = [4, 1, 0], sizes = [16, 16, 3], strides = [1, 1, 1]} : vector<24x24x3xbf16> to vector<16x16x3xbf16>
    %122 = vector.extract_strided_slice %11 {offsets = [4, 2, 0], sizes = [16, 16, 1], strides = [1, 1, 1]} : vector<24x24x1xbf16> to vector<16x16x1xbf16>
    %123 = vector.extract_strided_slice %14 {offsets = [4, 2, 0], sizes = [16, 16, 3], strides = [1, 1, 1]} : vector<24x24x3xbf16> to vector<16x16x3xbf16>
    %124 = vector.extract_strided_slice %11 {offsets = [4, 3, 0], sizes = [16, 16, 1], strides = [1, 1, 1]} : vector<24x24x1xbf16> to vector<16x16x1xbf16>
    %125 = vector.extract_strided_slice %14 {offsets = [4, 3, 0], sizes = [16, 16, 3], strides = [1, 1, 1]} : vector<24x24x3xbf16> to vector<16x16x3xbf16>
    %126 = vector.extract_strided_slice %11 {offsets = [4, 4, 0], sizes = [16, 16, 1], strides = [1, 1, 1]} : vector<24x24x1xbf16> to vector<16x16x1xbf16>
    %127 = vector.extract_strided_slice %14 {offsets = [4, 4, 0], sizes = [16, 16, 3], strides = [1, 1, 1]} : vector<24x24x3xbf16> to vector<16x16x3xbf16>
    %128 = vector.extract_strided_slice %11 {offsets = [4, 5, 0], sizes = [16, 16, 1], strides = [1, 1, 1]} : vector<24x24x1xbf16> to vector<16x16x1xbf16>
    %129 = vector.extract_strided_slice %14 {offsets = [4, 5, 0], sizes = [16, 16, 3], strides = [1, 1, 1]} : vector<24x24x3xbf16> to vector<16x16x3xbf16>
    %130 = vector.extract_strided_slice %11 {offsets = [4, 6, 0], sizes = [16, 16, 1], strides = [1, 1, 1]} : vector<24x24x1xbf16> to vector<16x16x1xbf16>
    %131 = vector.extract_strided_slice %14 {offsets = [4, 6, 0], sizes = [16, 16, 3], strides = [1, 1, 1]} : vector<24x24x3xbf16> to vector<16x16x3xbf16>
    %132 = vector.extract_strided_slice %11 {offsets = [4, 7, 0], sizes = [16, 16, 1], strides = [1, 1, 1]} : vector<24x24x1xbf16> to vector<16x16x1xbf16>
    %133 = vector.extract_strided_slice %14 {offsets = [4, 7, 0], sizes = [16, 16, 3], strides = [1, 1, 1]} : vector<24x24x3xbf16> to vector<16x16x3xbf16>
    %134 = vector.extract_strided_slice %11 {offsets = [4, 8, 0], sizes = [16, 16, 1], strides = [1, 1, 1]} : vector<24x24x1xbf16> to vector<16x16x1xbf16>
    %135 = vector.extract_strided_slice %14 {offsets = [4, 8, 0], sizes = [16, 16, 3], strides = [1, 1, 1]} : vector<24x24x3xbf16> to vector<16x16x3xbf16>
    %136 = tpu.concatenate %118, %119, %120, %121, %122, %123, %124, %125, %126, %127, %128, %129, %130, %131, %132, %133 in 2 : vector<16x16x1xbf16>, vector<16x16x3xbf16>, vector<16x16x1xbf16>, vector<16x16x3xbf16>, vector<16x16x1xbf16>, vector<16x16x3xbf16>, vector<16x16x1xbf16>, vector<16x16x3xbf16>, vector<16x16x1xbf16>, vector<16x16x3xbf16>, vector<16x16x1xbf16>, vector<16x16x3xbf16>, vector<16x16x1xbf16>, vector<16x16x3xbf16>, vector<16x16x1xbf16>, vector<16x16x3xbf16> -> vector<16x16x32xbf16>
    %137 = tpu.concatenate %134, %135 in 2 : vector<16x16x1xbf16>, vector<16x16x3xbf16> -> vector<16x16x4xbf16>
    %138 = tpu.concatenate %136, %137 in 2 : vector<16x16x32xbf16>, vector<16x16x4xbf16> -> vector<16x16x36xbf16>
    %139 = vector.shape_cast %138 : vector<16x16x36xbf16> to vector<256x36xbf16>
    %c4 = arith.constant 4 : index
    %c0_24 = arith.constant 0 : index
    %c0_25 = arith.constant 0 : index
    %140 = vector.load %arg4[%c4, %c0_24, %c0_25] : memref<9x36x16xbf16, #tpu.memory_space<vmem>>, vector<1x36x16xbf16>
    %141 = vector.shape_cast %140 : vector<1x36x16xbf16> to vector<36x16xbf16>
    %cst_26 = arith.constant dense<0.000000e+00> : vector<256x16xf32>
    %142 = tpu.matmul %139, %141, %cst_26 {dimension_numbers = #tpu.dot_dimension_numbers<[1], [0], [0], [1], [0, 0, 1, 1], [], []>} : vector<256x36xbf16>, vector<36x16xbf16>, vector<256x16xf32> -> vector<256x16xf32>
    %143 = arith.addf %117, %142 : vector<256x16xf32>
    %144 = vector.extract_strided_slice %11 {offsets = [5, 0, 0], sizes = [16, 16, 1], strides = [1, 1, 1]} : vector<24x24x1xbf16> to vector<16x16x1xbf16>
    %145 = vector.extract_strided_slice %14 {offsets = [5, 0, 0], sizes = [16, 16, 3], strides = [1, 1, 1]} : vector<24x24x3xbf16> to vector<16x16x3xbf16>
    %146 = vector.extract_strided_slice %11 {offsets = [5, 1, 0], sizes = [16, 16, 1], strides = [1, 1, 1]} : vector<24x24x1xbf16> to vector<16x16x1xbf16>
    %147 = vector.extract_strided_slice %14 {offsets = [5, 1, 0], sizes = [16, 16, 3], strides = [1, 1, 1]} : vector<24x24x3xbf16> to vector<16x16x3xbf16>
    %148 = vector.extract_strided_slice %11 {offsets = [5, 2, 0], sizes = [16, 16, 1], strides = [1, 1, 1]} : vector<24x24x1xbf16> to vector<16x16x1xbf16>
    %149 = vector.extract_strided_slice %14 {offsets = [5, 2, 0], sizes = [16, 16, 3], strides = [1, 1, 1]} : vector<24x24x3xbf16> to vector<16x16x3xbf16>
    %150 = vector.extract_strided_slice %11 {offsets = [5, 3, 0], sizes = [16, 16, 1], strides = [1, 1, 1]} : vector<24x24x1xbf16> to vector<16x16x1xbf16>
    %151 = vector.extract_strided_slice %14 {offsets = [5, 3, 0], sizes = [16, 16, 3], strides = [1, 1, 1]} : vector<24x24x3xbf16> to vector<16x16x3xbf16>
    %152 = vector.extract_strided_slice %11 {offsets = [5, 4, 0], sizes = [16, 16, 1], strides = [1, 1, 1]} : vector<24x24x1xbf16> to vector<16x16x1xbf16>
    %153 = vector.extract_strided_slice %14 {offsets = [5, 4, 0], sizes = [16, 16, 3], strides = [1, 1, 1]} : vector<24x24x3xbf16> to vector<16x16x3xbf16>
    %154 = vector.extract_strided_slice %11 {offsets = [5, 5, 0], sizes = [16, 16, 1], strides = [1, 1, 1]} : vector<24x24x1xbf16> to vector<16x16x1xbf16>
    %155 = vector.extract_strided_slice %14 {offsets = [5, 5, 0], sizes = [16, 16, 3], strides = [1, 1, 1]} : vector<24x24x3xbf16> to vector<16x16x3xbf16>
    %156 = vector.extract_strided_slice %11 {offsets = [5, 6, 0], sizes = [16, 16, 1], strides = [1, 1, 1]} : vector<24x24x1xbf16> to vector<16x16x1xbf16>
    %157 = vector.extract_strided_slice %14 {offsets = [5, 6, 0], sizes = [16, 16, 3], strides = [1, 1, 1]} : vector<24x24x3xbf16> to vector<16x16x3xbf16>
    %158 = vector.extract_strided_slice %11 {offsets = [5, 7, 0], sizes = [16, 16, 1], strides = [1, 1, 1]} : vector<24x24x1xbf16> to vector<16x16x1xbf16>
    %159 = vector.extract_strided_slice %14 {offsets = [5, 7, 0], sizes = [16, 16, 3], strides = [1, 1, 1]} : vector<24x24x3xbf16> to vector<16x16x3xbf16>
    %160 = vector.extract_strided_slice %11 {offsets = [5, 8, 0], sizes = [16, 16, 1], strides = [1, 1, 1]} : vector<24x24x1xbf16> to vector<16x16x1xbf16>
    %161 = vector.extract_strided_slice %14 {offsets = [5, 8, 0], sizes = [16, 16, 3], strides = [1, 1, 1]} : vector<24x24x3xbf16> to vector<16x16x3xbf16>
    %162 = tpu.concatenate %144, %145, %146, %147, %148, %149, %150, %151, %152, %153, %154, %155, %156, %157, %158, %159 in 2 : vector<16x16x1xbf16>, vector<16x16x3xbf16>, vector<16x16x1xbf16>, vector<16x16x3xbf16>, vector<16x16x1xbf16>, vector<16x16x3xbf16>, vector<16x16x1xbf16>, vector<16x16x3xbf16>, vector<16x16x1xbf16>, vector<16x16x3xbf16>, vector<16x16x1xbf16>, vector<16x16x3xbf16>, vector<16x16x1xbf16>, vector<16x16x3xbf16>, vector<16x16x1xbf16>, vector<16x16x3xbf16> -> vector<16x16x32xbf16>
    %163 = tpu.concatenate %160, %161 in 2 : vector<16x16x1xbf16>, vector<16x16x3xbf16> -> vector<16x16x4xbf16>
    %164 = tpu.concatenate %162, %163 in 2 : vector<16x16x32xbf16>, vector<16x16x4xbf16> -> vector<16x16x36xbf16>
    %165 = vector.shape_cast %164 : vector<16x16x36xbf16> to vector<256x36xbf16>
    %c5 = arith.constant 5 : index
    %c0_27 = arith.constant 0 : index
    %c0_28 = arith.constant 0 : index
    %166 = vector.load %arg4[%c5, %c0_27, %c0_28] : memref<9x36x16xbf16, #tpu.memory_space<vmem>>, vector<1x36x16xbf16>
    %167 = vector.shape_cast %166 : vector<1x36x16xbf16> to vector<36x16xbf16>
    %cst_29 = arith.constant dense<0.000000e+00> : vector<256x16xf32>
    %168 = tpu.matmul %165, %167, %cst_29 {dimension_numbers = #tpu.dot_dimension_numbers<[1], [0], [0], [1], [0, 0, 1, 1], [], []>} : vector<256x36xbf16>, vector<36x16xbf16>, vector<256x16xf32> -> vector<256x16xf32>
    %169 = arith.addf %143, %168 : vector<256x16xf32>
    %170 = vector.extract_strided_slice %11 {offsets = [6, 0, 0], sizes = [16, 16, 1], strides = [1, 1, 1]} : vector<24x24x1xbf16> to vector<16x16x1xbf16>
    %171 = vector.extract_strided_slice %14 {offsets = [6, 0, 0], sizes = [16, 16, 3], strides = [1, 1, 1]} : vector<24x24x3xbf16> to vector<16x16x3xbf16>
    %172 = vector.extract_strided_slice %11 {offsets = [6, 1, 0], sizes = [16, 16, 1], strides = [1, 1, 1]} : vector<24x24x1xbf16> to vector<16x16x1xbf16>
    %173 = vector.extract_strided_slice %14 {offsets = [6, 1, 0], sizes = [16, 16, 3], strides = [1, 1, 1]} : vector<24x24x3xbf16> to vector<16x16x3xbf16>
    %174 = vector.extract_strided_slice %11 {offsets = [6, 2, 0], sizes = [16, 16, 1], strides = [1, 1, 1]} : vector<24x24x1xbf16> to vector<16x16x1xbf16>
    %175 = vector.extract_strided_slice %14 {offsets = [6, 2, 0], sizes = [16, 16, 3], strides = [1, 1, 1]} : vector<24x24x3xbf16> to vector<16x16x3xbf16>
    %176 = vector.extract_strided_slice %11 {offsets = [6, 3, 0], sizes = [16, 16, 1], strides = [1, 1, 1]} : vector<24x24x1xbf16> to vector<16x16x1xbf16>
    %177 = vector.extract_strided_slice %14 {offsets = [6, 3, 0], sizes = [16, 16, 3], strides = [1, 1, 1]} : vector<24x24x3xbf16> to vector<16x16x3xbf16>
    %178 = vector.extract_strided_slice %11 {offsets = [6, 4, 0], sizes = [16, 16, 1], strides = [1, 1, 1]} : vector<24x24x1xbf16> to vector<16x16x1xbf16>
    %179 = vector.extract_strided_slice %14 {offsets = [6, 4, 0], sizes = [16, 16, 3], strides = [1, 1, 1]} : vector<24x24x3xbf16> to vector<16x16x3xbf16>
    %180 = vector.extract_strided_slice %11 {offsets = [6, 5, 0], sizes = [16, 16, 1], strides = [1, 1, 1]} : vector<24x24x1xbf16> to vector<16x16x1xbf16>
    %181 = vector.extract_strided_slice %14 {offsets = [6, 5, 0], sizes = [16, 16, 3], strides = [1, 1, 1]} : vector<24x24x3xbf16> to vector<16x16x3xbf16>
    %182 = vector.extract_strided_slice %11 {offsets = [6, 6, 0], sizes = [16, 16, 1], strides = [1, 1, 1]} : vector<24x24x1xbf16> to vector<16x16x1xbf16>
    %183 = vector.extract_strided_slice %14 {offsets = [6, 6, 0], sizes = [16, 16, 3], strides = [1, 1, 1]} : vector<24x24x3xbf16> to vector<16x16x3xbf16>
    %184 = vector.extract_strided_slice %11 {offsets = [6, 7, 0], sizes = [16, 16, 1], strides = [1, 1, 1]} : vector<24x24x1xbf16> to vector<16x16x1xbf16>
    %185 = vector.extract_strided_slice %14 {offsets = [6, 7, 0], sizes = [16, 16, 3], strides = [1, 1, 1]} : vector<24x24x3xbf16> to vector<16x16x3xbf16>
    %186 = vector.extract_strided_slice %11 {offsets = [6, 8, 0], sizes = [16, 16, 1], strides = [1, 1, 1]} : vector<24x24x1xbf16> to vector<16x16x1xbf16>
    %187 = vector.extract_strided_slice %14 {offsets = [6, 8, 0], sizes = [16, 16, 3], strides = [1, 1, 1]} : vector<24x24x3xbf16> to vector<16x16x3xbf16>
    %188 = tpu.concatenate %170, %171, %172, %173, %174, %175, %176, %177, %178, %179, %180, %181, %182, %183, %184, %185 in 2 : vector<16x16x1xbf16>, vector<16x16x3xbf16>, vector<16x16x1xbf16>, vector<16x16x3xbf16>, vector<16x16x1xbf16>, vector<16x16x3xbf16>, vector<16x16x1xbf16>, vector<16x16x3xbf16>, vector<16x16x1xbf16>, vector<16x16x3xbf16>, vector<16x16x1xbf16>, vector<16x16x3xbf16>, vector<16x16x1xbf16>, vector<16x16x3xbf16>, vector<16x16x1xbf16>, vector<16x16x3xbf16> -> vector<16x16x32xbf16>
    %189 = tpu.concatenate %186, %187 in 2 : vector<16x16x1xbf16>, vector<16x16x3xbf16> -> vector<16x16x4xbf16>
    %190 = tpu.concatenate %188, %189 in 2 : vector<16x16x32xbf16>, vector<16x16x4xbf16> -> vector<16x16x36xbf16>
    %191 = vector.shape_cast %190 : vector<16x16x36xbf16> to vector<256x36xbf16>
    %c6 = arith.constant 6 : index
    %c0_30 = arith.constant 0 : index
    %c0_31 = arith.constant 0 : index
    %192 = vector.load %arg4[%c6, %c0_30, %c0_31] : memref<9x36x16xbf16, #tpu.memory_space<vmem>>, vector<1x36x16xbf16>
    %193 = vector.shape_cast %192 : vector<1x36x16xbf16> to vector<36x16xbf16>
    %cst_32 = arith.constant dense<0.000000e+00> : vector<256x16xf32>
    %194 = tpu.matmul %191, %193, %cst_32 {dimension_numbers = #tpu.dot_dimension_numbers<[1], [0], [0], [1], [0, 0, 1, 1], [], []>} : vector<256x36xbf16>, vector<36x16xbf16>, vector<256x16xf32> -> vector<256x16xf32>
    %195 = arith.addf %169, %194 : vector<256x16xf32>
    %196 = vector.extract_strided_slice %11 {offsets = [7, 0, 0], sizes = [16, 16, 1], strides = [1, 1, 1]} : vector<24x24x1xbf16> to vector<16x16x1xbf16>
    %197 = vector.extract_strided_slice %14 {offsets = [7, 0, 0], sizes = [16, 16, 3], strides = [1, 1, 1]} : vector<24x24x3xbf16> to vector<16x16x3xbf16>
    %198 = vector.extract_strided_slice %11 {offsets = [7, 1, 0], sizes = [16, 16, 1], strides = [1, 1, 1]} : vector<24x24x1xbf16> to vector<16x16x1xbf16>
    %199 = vector.extract_strided_slice %14 {offsets = [7, 1, 0], sizes = [16, 16, 3], strides = [1, 1, 1]} : vector<24x24x3xbf16> to vector<16x16x3xbf16>
    %200 = vector.extract_strided_slice %11 {offsets = [7, 2, 0], sizes = [16, 16, 1], strides = [1, 1, 1]} : vector<24x24x1xbf16> to vector<16x16x1xbf16>
    %201 = vector.extract_strided_slice %14 {offsets = [7, 2, 0], sizes = [16, 16, 3], strides = [1, 1, 1]} : vector<24x24x3xbf16> to vector<16x16x3xbf16>
    %202 = vector.extract_strided_slice %11 {offsets = [7, 3, 0], sizes = [16, 16, 1], strides = [1, 1, 1]} : vector<24x24x1xbf16> to vector<16x16x1xbf16>
    %203 = vector.extract_strided_slice %14 {offsets = [7, 3, 0], sizes = [16, 16, 3], strides = [1, 1, 1]} : vector<24x24x3xbf16> to vector<16x16x3xbf16>
    %204 = vector.extract_strided_slice %11 {offsets = [7, 4, 0], sizes = [16, 16, 1], strides = [1, 1, 1]} : vector<24x24x1xbf16> to vector<16x16x1xbf16>
    %205 = vector.extract_strided_slice %14 {offsets = [7, 4, 0], sizes = [16, 16, 3], strides = [1, 1, 1]} : vector<24x24x3xbf16> to vector<16x16x3xbf16>
    %206 = vector.extract_strided_slice %11 {offsets = [7, 5, 0], sizes = [16, 16, 1], strides = [1, 1, 1]} : vector<24x24x1xbf16> to vector<16x16x1xbf16>
    %207 = vector.extract_strided_slice %14 {offsets = [7, 5, 0], sizes = [16, 16, 3], strides = [1, 1, 1]} : vector<24x24x3xbf16> to vector<16x16x3xbf16>
    %208 = vector.extract_strided_slice %11 {offsets = [7, 6, 0], sizes = [16, 16, 1], strides = [1, 1, 1]} : vector<24x24x1xbf16> to vector<16x16x1xbf16>
    %209 = vector.extract_strided_slice %14 {offsets = [7, 6, 0], sizes = [16, 16, 3], strides = [1, 1, 1]} : vector<24x24x3xbf16> to vector<16x16x3xbf16>
    %210 = vector.extract_strided_slice %11 {offsets = [7, 7, 0], sizes = [16, 16, 1], strides = [1, 1, 1]} : vector<24x24x1xbf16> to vector<16x16x1xbf16>
    %211 = vector.extract_strided_slice %14 {offsets = [7, 7, 0], sizes = [16, 16, 3], strides = [1, 1, 1]} : vector<24x24x3xbf16> to vector<16x16x3xbf16>
    %212 = vector.extract_strided_slice %11 {offsets = [7, 8, 0], sizes = [16, 16, 1], strides = [1, 1, 1]} : vector<24x24x1xbf16> to vector<16x16x1xbf16>
    %213 = vector.extract_strided_slice %14 {offsets = [7, 8, 0], sizes = [16, 16, 3], strides = [1, 1, 1]} : vector<24x24x3xbf16> to vector<16x16x3xbf16>
    %214 = tpu.concatenate %196, %197, %198, %199, %200, %201, %202, %203, %204, %205, %206, %207, %208, %209, %210, %211 in 2 : vector<16x16x1xbf16>, vector<16x16x3xbf16>, vector<16x16x1xbf16>, vector<16x16x3xbf16>, vector<16x16x1xbf16>, vector<16x16x3xbf16>, vector<16x16x1xbf16>, vector<16x16x3xbf16>, vector<16x16x1xbf16>, vector<16x16x3xbf16>, vector<16x16x1xbf16>, vector<16x16x3xbf16>, vector<16x16x1xbf16>, vector<16x16x3xbf16>, vector<16x16x1xbf16>, vector<16x16x3xbf16> -> vector<16x16x32xbf16>
    %215 = tpu.concatenate %212, %213 in 2 : vector<16x16x1xbf16>, vector<16x16x3xbf16> -> vector<16x16x4xbf16>
    %216 = tpu.concatenate %214, %215 in 2 : vector<16x16x32xbf16>, vector<16x16x4xbf16> -> vector<16x16x36xbf16>
    %217 = vector.shape_cast %216 : vector<16x16x36xbf16> to vector<256x36xbf16>
    %c7 = arith.constant 7 : index
    %c0_33 = arith.constant 0 : index
    %c0_34 = arith.constant 0 : index
    %218 = vector.load %arg4[%c7, %c0_33, %c0_34] : memref<9x36x16xbf16, #tpu.memory_space<vmem>>, vector<1x36x16xbf16>
    %219 = vector.shape_cast %218 : vector<1x36x16xbf16> to vector<36x16xbf16>
    %cst_35 = arith.constant dense<0.000000e+00> : vector<256x16xf32>
    %220 = tpu.matmul %217, %219, %cst_35 {dimension_numbers = #tpu.dot_dimension_numbers<[1], [0], [0], [1], [0, 0, 1, 1], [], []>} : vector<256x36xbf16>, vector<36x16xbf16>, vector<256x16xf32> -> vector<256x16xf32>
    %221 = arith.addf %195, %220 : vector<256x16xf32>
    %222 = vector.extract_strided_slice %11 {offsets = [8, 0, 0], sizes = [16, 16, 1], strides = [1, 1, 1]} : vector<24x24x1xbf16> to vector<16x16x1xbf16>
    %223 = vector.extract_strided_slice %14 {offsets = [8, 0, 0], sizes = [16, 16, 3], strides = [1, 1, 1]} : vector<24x24x3xbf16> to vector<16x16x3xbf16>
    %224 = vector.extract_strided_slice %11 {offsets = [8, 1, 0], sizes = [16, 16, 1], strides = [1, 1, 1]} : vector<24x24x1xbf16> to vector<16x16x1xbf16>
    %225 = vector.extract_strided_slice %14 {offsets = [8, 1, 0], sizes = [16, 16, 3], strides = [1, 1, 1]} : vector<24x24x3xbf16> to vector<16x16x3xbf16>
    %226 = vector.extract_strided_slice %11 {offsets = [8, 2, 0], sizes = [16, 16, 1], strides = [1, 1, 1]} : vector<24x24x1xbf16> to vector<16x16x1xbf16>
    %227 = vector.extract_strided_slice %14 {offsets = [8, 2, 0], sizes = [16, 16, 3], strides = [1, 1, 1]} : vector<24x24x3xbf16> to vector<16x16x3xbf16>
    %228 = vector.extract_strided_slice %11 {offsets = [8, 3, 0], sizes = [16, 16, 1], strides = [1, 1, 1]} : vector<24x24x1xbf16> to vector<16x16x1xbf16>
    %229 = vector.extract_strided_slice %14 {offsets = [8, 3, 0], sizes = [16, 16, 3], strides = [1, 1, 1]} : vector<24x24x3xbf16> to vector<16x16x3xbf16>
    %230 = vector.extract_strided_slice %11 {offsets = [8, 4, 0], sizes = [16, 16, 1], strides = [1, 1, 1]} : vector<24x24x1xbf16> to vector<16x16x1xbf16>
    %231 = vector.extract_strided_slice %14 {offsets = [8, 4, 0], sizes = [16, 16, 3], strides = [1, 1, 1]} : vector<24x24x3xbf16> to vector<16x16x3xbf16>
    %232 = vector.extract_strided_slice %11 {offsets = [8, 5, 0], sizes = [16, 16, 1], strides = [1, 1, 1]} : vector<24x24x1xbf16> to vector<16x16x1xbf16>
    %233 = vector.extract_strided_slice %14 {offsets = [8, 5, 0], sizes = [16, 16, 3], strides = [1, 1, 1]} : vector<24x24x3xbf16> to vector<16x16x3xbf16>
    %234 = vector.extract_strided_slice %11 {offsets = [8, 6, 0], sizes = [16, 16, 1], strides = [1, 1, 1]} : vector<24x24x1xbf16> to vector<16x16x1xbf16>
    %235 = vector.extract_strided_slice %14 {offsets = [8, 6, 0], sizes = [16, 16, 3], strides = [1, 1, 1]} : vector<24x24x3xbf16> to vector<16x16x3xbf16>
    %236 = vector.extract_strided_slice %11 {offsets = [8, 7, 0], sizes = [16, 16, 1], strides = [1, 1, 1]} : vector<24x24x1xbf16> to vector<16x16x1xbf16>
    %237 = vector.extract_strided_slice %14 {offsets = [8, 7, 0], sizes = [16, 16, 3], strides = [1, 1, 1]} : vector<24x24x3xbf16> to vector<16x16x3xbf16>
    %238 = vector.extract_strided_slice %11 {offsets = [8, 8, 0], sizes = [16, 16, 1], strides = [1, 1, 1]} : vector<24x24x1xbf16> to vector<16x16x1xbf16>
    %239 = vector.extract_strided_slice %14 {offsets = [8, 8, 0], sizes = [16, 16, 3], strides = [1, 1, 1]} : vector<24x24x3xbf16> to vector<16x16x3xbf16>
    %240 = tpu.concatenate %222, %223, %224, %225, %226, %227, %228, %229, %230, %231, %232, %233, %234, %235, %236, %237 in 2 : vector<16x16x1xbf16>, vector<16x16x3xbf16>, vector<16x16x1xbf16>, vector<16x16x3xbf16>, vector<16x16x1xbf16>, vector<16x16x3xbf16>, vector<16x16x1xbf16>, vector<16x16x3xbf16>, vector<16x16x1xbf16>, vector<16x16x3xbf16>, vector<16x16x1xbf16>, vector<16x16x3xbf16>, vector<16x16x1xbf16>, vector<16x16x3xbf16>, vector<16x16x1xbf16>, vector<16x16x3xbf16> -> vector<16x16x32xbf16>
    %241 = tpu.concatenate %238, %239 in 2 : vector<16x16x1xbf16>, vector<16x16x3xbf16> -> vector<16x16x4xbf16>
    %242 = tpu.concatenate %240, %241 in 2 : vector<16x16x32xbf16>, vector<16x16x4xbf16> -> vector<16x16x36xbf16>
    %243 = vector.shape_cast %242 : vector<16x16x36xbf16> to vector<256x36xbf16>
    %c8 = arith.constant 8 : index
    %c0_36 = arith.constant 0 : index
    %c0_37 = arith.constant 0 : index
    %244 = vector.load %arg4[%c8, %c0_36, %c0_37] : memref<9x36x16xbf16, #tpu.memory_space<vmem>>, vector<1x36x16xbf16>
    %245 = vector.shape_cast %244 : vector<1x36x16xbf16> to vector<36x16xbf16>
    %cst_38 = arith.constant dense<0.000000e+00> : vector<256x16xf32>
    %246 = tpu.matmul %243, %245, %cst_38 {dimension_numbers = #tpu.dot_dimension_numbers<[1], [0], [0], [1], [0, 0, 1, 1], [], []>} : vector<256x36xbf16>, vector<36x16xbf16>, vector<256x16xf32> -> vector<256x16xf32>
    %247 = arith.addf %221, %246 : vector<256x16xf32>
    %c0_39 = arith.constant 0 : index
    %c0_40 = arith.constant 0 : index
    %248 = vector.load %arg5[%c0_39, %c0_40] : memref<1x16xf32, #tpu.memory_space<vmem>>, vector<1x16xf32>
    %249 = vector.broadcast %248 : vector<1x16xf32> to vector<256x16xf32>
    %250 = arith.addf %247, %249 : vector<256x16xf32>
    %251 = vector.shape_cast %250 : vector<256x16xf32> to vector<16x16x16xf32>
    %252 = arith.truncf %251 : vector<16x16x16xf32> to vector<16x16x16xbf16>
    %c0_41 = arith.constant 0 : index
    %c0_42 = arith.constant 0 : index
    %c0_43 = arith.constant 0 : index
    %c0_44 = arith.constant 0 : index
    %253 = vector.load %arg6[%c0_41, %c0_42, %c0_43, %c0_44] : memref<1x16x16x16xbf16, #tpu.memory_space<vmem>>, vector<1x16x16x16xbf16>
    %254 = vector.shape_cast %253 : vector<1x16x16x16xbf16> to vector<16x16x16xbf16>
    %255 = vector.shape_cast %252 : vector<16x16x16xbf16> to vector<1x16x16x16xbf16>
    tpu.vector_store %arg6[%c0_41, %c0_42, %c0_43, %c0_44], %255 {strides = array<i32>} : memref<1x16x16x16xbf16, #tpu.memory_space<vmem>>, vector<1x16x16x16xbf16>,
    return
  }
  func.func @transform_0(%arg0: i32, %arg1: i32) -> (i32, i32, i32, i32) {
    %c0_i32 = arith.constant 0 : i32
    %c0_i32_0 = arith.constant 0 : i32
    %c0_i32_1 = arith.constant 0 : i32
    return %arg0, %arg1, %c0_i32, %c0_i32_0 : i32, i32, i32, i32
  }
  func.func @transform_1(%arg0: i32, %arg1: i32) -> (i32, i32, i32, i32) {
    %c0_i32 = arith.constant 0 : i32
    %c0_i32_0 = arith.constant 0 : i32
    %c0_i32_1 = arith.constant 0 : i32
    return %arg0, %arg1, %c0_i32, %c0_i32_0 : i32, i32, i32, i32
  }
  func.func @transform_2(%arg0: i32, %arg1: i32) -> (i32, i32, i32) {
    %c0_i32 = arith.constant 0 : i32
    %c0_i32_0 = arith.constant 0 : i32
    %c0_i32_1 = arith.constant 0 : i32
    %c0_i32_2 = arith.constant 0 : i32
    return %c0_i32, %c0_i32_0, %c0_i32_1 : i32, i32, i32
  }
  func.func @transform_3(%arg0: i32, %arg1: i32) -> (i32, i32) {
    %c0_i32 = arith.constant 0 : i32
    %c0_i32_0 = arith.constant 0 : i32
    %c0_i32_1 = arith.constant 0 : i32
    return %c0_i32, %c0_i32_0 : i32, i32
  }
  func.func @transform_4(%arg0: i32, %arg1: i32) -> (i32, i32, i32, i32) {
    %c0_i32 = arith.constant 0 : i32
    %c0_i32_0 = arith.constant 0 : i32
    %c0_i32_1 = arith.constant 0 : i32
    return %arg0, %arg1, %c0_i32, %c0_i32_0 : i32, i32, i32, i32
  }
}

</mosaic_0001>

<llo_original>
// kernel: tpu_custom_call.1
$region0: #{tpu_custom_call.1}
  #allocation0 [shape = 'u32[]', space=smem, size = 0x4, offset = 0x4, fixed_abs, tag = 'smem constant byte address 0x4 - core index']
  #allocation1 [shape = 'u32[144,128]{1,0:T(1,128)}', space=vmem, size = 0x12000, scoped, tag = 'internal scratch']
  %s0 = inlined_call_operand.hbm [shape: bf16[1,16,16,3], index: 0, kind: input, shape index: {}]
  %s1 = inlined_call_operand.hbm [shape: bf16[1,8,16,3], index: 1, kind: input, shape index: {}]
  %s2 = inlined_call_operand.hbm [shape: bf16[9,36,16], index: 2, kind: input, shape index: {}]
  %s3 = inlined_call_operand.hbm [shape: f32[1,16], index: 3, kind: input, shape index: {}]
  %s4 = inlined_call_operand.hbm [shape: bf16[1,16,16,16], index: 4, kind: output, shape index: {}]
  %s5 = sld [smem:[#allocation0]]
  $region42: #{tpu_custom_call.1} parent=0
    _
  %s7 = ssub.s32 1, %s5
  %s8 = scalar_select 0, %s7, %s5
  $region1: #{tpu_custom_call.1} parent=0
    #allocation2 [shape = 'u8[65536]{0}', space=vmem, size = 0x10000, scoped, tag = 'input window, operand 0, single buffered']
    #allocation3 [shape = 's32[1]{0}', space=sflag, size = 0x4, scoped, tag = 'scoped memory for tpu_custom_call.1']
    #allocation4 [shape = 's32[1]{0}', space=sflag, size = 0x4, scoped, tag = 'scoped memory for tpu_custom_call.1']
    #allocation5 [shape = 'u8[32768]{0}', space=vmem, size = 0x8000, scoped, tag = 'input window, operand 1, single buffered']
    #allocation6 [shape = 's32[1]{0}', space=sflag, size = 0x4, scoped, tag = 'scoped memory for tpu_custom_call.1']
    #allocation7 [shape = 'u8[92160]{0}', space=vmem, size = 0x16800, scoped, tag = 'input window, operand 2, single buffered']
    #allocation8 [shape = 'u8[512]{0}', space=vmem, size = 0x400, scoped, tag = 'input window, operand 3, single buffered']
    #allocation9 [shape = 's32[1]{0}', space=sflag, size = 0x4, scoped, tag = 'scoped memory for tpu_custom_call.1']
    #allocation10 [shape = 'u8[65536]{0}', space=vmem, size = 0x10000, scoped, tag = 'output window, operand 0, single buffered']
    %9 = vsyncpa [#allocation3], 0
    %10 = vsyncpa [#allocation6], 0
    %11 = vsyncpa [#allocation9], 0
    %12 = vsyncpa [#allocation4], 0
    // Predicated region
    $region2: #{tpu_custom_call.1} parent=1 // pred_check
      _
    $region3: #{tpu_custom_call.1} parent=1 // pred_check_branch
      %14 = sbr.rel (0) target = $region5
    $region4: #{tpu_custom_call.1} parent=1 // pred_region
      %s16 = ssub.s32 2048, 2048
      %17 = vsyncadd [#allocation3], %s16
      %s18 = sshll.u32 [#allocation2], 4
      %s19 = int_to_ptr.vmem [resolvable:$true] %s18
      %24 = dma.hbm_to_vmem [thread:$0]  %s0, 2048, %s19, [#allocation3], 64, 64, 4
    $region5: #{tpu_custom_call.1} parent=1 // pred_fallthru
      _
    // Predicated region
    $region6: #{tpu_custom_call.1} parent=1 // pred_check
      _
    $region7: #{tpu_custom_call.1} parent=1 // pred_check_branch
      %26 = sbr.rel (0) target = $region9
    $region8: #{tpu_custom_call.1} parent=1 // pred_region
      %s28 = ssub.s32 1024, 1024
      %29 = vsyncadd [#allocation6], %s28
      %s30 = sshll.u32 [#allocation5], 4
      %s31 = int_to_ptr.vmem [resolvable:$true] %s30
      %36 = dma.hbm_to_vmem [thread:$0]  %s1, 1024, %s31, [#allocation6], 64, 64, 4
    $region9: #{tpu_custom_call.1} parent=1 // pred_fallthru
      _
    // Predicated region
    $region10: #{tpu_custom_call.1} parent=1 // pred_check
      _
    $region11: #{tpu_custom_call.1} parent=1 // pred_check_branch
      %38 = sbr.rel (0) target = $region13
    $region12: #{tpu_custom_call.1} parent=1 // pred_region
      %s40 = ssub.s32 2880, 2880
      %41 = vsyncadd [#allocation6], %s40
      %s42 = sshll.u32 [#allocation7], 4
      %s43 = int_to_ptr.vmem [resolvable:$true] %s42
      %48 = dma.hbm_to_vmem [thread:$0]  %s2, 2880, %s43, [#allocation6], 64, 64, 4
    $region13: #{tpu_custom_call.1} parent=1 // pred_fallthru
      _
    // Predicated region
    $region14: #{tpu_custom_call.1} parent=1 // pred_check
      _
    $region15: #{tpu_custom_call.1} parent=1 // pred_check_branch
      %50 = sbr.rel (0) target = $region17
    $region16: #{tpu_custom_call.1} parent=1 // pred_region
      %s52 = ssub.s32 16, 16
      %53 = vsyncadd [#allocation9], %s52
      %s55 = sshll.u32 [#allocation8], 4
      %s56 = int_to_ptr.vmem [resolvable:$true] %s55
      %58 = dma.hbm_to_vmem [thread:$0]  %s3, 16, %s56, [#allocation9]
    $region17: #{tpu_custom_call.1} parent=1 // pred_fallthru
      _
    // Predicated region
    $region18: #{tpu_custom_call.1} parent=1 // pred_check
      _
    $region19: #{tpu_custom_call.1} parent=1 // pred_check_branch
      %60 = sbr.rel (0) target = $region21
    $region20: #{tpu_custom_call.1} parent=1 // pred_region
      %61 = dma.done [#allocation3], 2048
    $region21: #{tpu_custom_call.1} parent=1 // pred_fallthru
      _
    // Predicated region
    $region22: #{tpu_custom_call.1} parent=1 // pred_check
      _
    $region23: #{tpu_custom_call.1} parent=1 // pred_check_branch
      %63 = sbr.rel (0) target = $region25
    $region24: #{tpu_custom_call.1} parent=1 // pred_region
      %64 = dma.done [#allocation6], 1024
    $region25: #{tpu_custom_call.1} parent=1 // pred_fallthru
      _
    // Predicated region
    $region26: #{tpu_custom_call.1} parent=1 // pred_check
      _
    $region27: #{tpu_custom_call.1} parent=1 // pred_check_branch
      %66 = sbr.rel (0) target = $region29
    $region28: #{tpu_custom_call.1} parent=1 // pred_region
      %67 = dma.done [#allocation6], 2880
    $region29: #{tpu_custom_call.1} parent=1 // pred_fallthru
      _
    // Predicated region
    $region30: #{tpu_custom_call.1} parent=1 // pred_check
      _
    $region31: #{tpu_custom_call.1} parent=1 // pred_check_branch
      %69 = sbr.rel (0) target = $region33
    $region32: #{tpu_custom_call.1} parent=1 // pred_region
      %70 = dma.done [#allocation9], 16
    $region33: #{tpu_custom_call.1} parent=1 // pred_fallthru
      _
    %v73 = vld [vmem:[#allocation2] sm:$0xf]
    %v74 = vld [vmem:[#allocation2 + $0x4] sm:$0xf]
    %v75 = vld [vmem:[#allocation2 + $0x8] sm:$0xf]
    %v76 = vld [vmem:[#allocation2 + $0xc] sm:$0xf]
    %v77 = vld [vmem:[#allocation2 + $0x10] sm:$0xf]
    %v78 = vld [vmem:[#allocation2 + $0x14] sm:$0xf]
    %v79 = vld [vmem:[#allocation2 + $0x18] sm:$0xf]
    %v80 = vld [vmem:[#allocation2 + $0x1c] sm:$0xf]
    %v81 = vld [vmem:[#allocation2 + $0x20] sm:$0xf]
    %v82 = vld [vmem:[#allocation2 + $0x24] sm:$0xf]
    %v83 = vld [vmem:[#allocation2 + $0x28] sm:$0xf]
    %v84 = vld [vmem:[#allocation2 + $0x2c] sm:$0xf]
    %v85 = vld [vmem:[#allocation2 + $0x30] sm:$0xf]
    %v86 = vld [vmem:[#allocation2 + $0x34] sm:$0xf]
    %v87 = vld [vmem:[#allocation2 + $0x38] sm:$0xf]
    %v88 = vld [vmem:[#allocation2 + $0x3c] sm:$0xf]
    %v89 = vld [vmem:[#allocation2 + $0x40] sm:$0xf]
    %v90 = vld [vmem:[#allocation2 + $0x44] sm:$0xf]
    %v91 = vld [vmem:[#allocation2 + $0x48] sm:$0xf]
    %v92 = vld [vmem:[#allocation2 + $0x4c] sm:$0xf]
    %v93 = vld [vmem:[#allocation2 + $0x50] sm:$0xf]
    %v94 = vld [vmem:[#allocation2 + $0x54] sm:$0xf]
    %v95 = vld [vmem:[#allocation2 + $0x58] sm:$0xf]
    %v96 = vld [vmem:[#allocation2 + $0x5c] sm:$0xf]
    %v97 = vld [vmem:[#allocation2 + $0x60] sm:$0xf]
    %v98 = vld [vmem:[#allocation2 + $0x64] sm:$0xf]
    %v99 = vld [vmem:[#allocation2 + $0x68] sm:$0xf]
    %v100 = vld [vmem:[#allocation2 + $0x6c] sm:$0xf]
    %v101 = vld [vmem:[#allocation2 + $0x70] sm:$0xf]
    %v102 = vld [vmem:[#allocation2 + $0x74] sm:$0xf]
    %v103 = vld [vmem:[#allocation2 + $0x78] sm:$0xf]
    %v104 = vld [vmem:[#allocation2 + $0x7c] sm:$0xf]
    %v105 = vld [vmem:[#allocation5] sm:$0xf]
    %v106 = vld [vmem:[#allocation5 + $0x4] sm:$0xf]
    %v107 = vld [vmem:[#allocation5 + $0x8] sm:$0xf]
    %v108 = vld [vmem:[#allocation5 + $0xc] sm:$0xf]
    %v109 = vld [vmem:[#allocation5 + $0x10] sm:$0xf]
    %v110 = vld [vmem:[#allocation5 + $0x14] sm:$0xf]
    %v111 = vld [vmem:[#allocation5 + $0x18] sm:$0xf]
    %v112 = vld [vmem:[#allocation5 + $0x1c] sm:$0xf]
    %v113 = vld [vmem:[#allocation5 + $0x20] sm:$0xf]
    %v114 = vld [vmem:[#allocation5 + $0x24] sm:$0xf]
    %v115 = vld [vmem:[#allocation5 + $0x28] sm:$0xf]
    %v116 = vld [vmem:[#allocation5 + $0x2c] sm:$0xf]
    %v117 = vld [vmem:[#allocation5 + $0x30] sm:$0xf]
    %v118 = vld [vmem:[#allocation5 + $0x34] sm:$0xf]
    %v119 = vld [vmem:[#allocation5 + $0x38] sm:$0xf]
    %v120 = vld [vmem:[#allocation5 + $0x3c] sm:$0xf]
    %v169 = vunpack.c.l.b16 %v105
    %v170 = vunpack.c.l.b16 %v106
    %v171 = vunpack.c.l.b16 %v107
    %v172 = vunpack.c.l.b16 %v108
    %v173 = vunpack.c.l.b16 %v109
    %v174 = vunpack.c.l.b16 %v110
    %v175 = vunpack.c.l.b16 %v111
    %v176 = vunpack.c.l.b16 %v112
    %v177 = vunpack.c.l.b16 %v73
    %v178 = vunpack.c.l.b16 %v74
    %v179 = vunpack.c.l.b16 %v75
    %v180 = vunpack.c.l.b16 %v76
    %v181 = vunpack.c.l.b16 %v77
    %v182 = vunpack.c.l.b16 %v78
    %v183 = vunpack.c.l.b16 %v79
    %v184 = vunpack.c.l.b16 %v80
    %v185 = vunpack.c.l.b16 %v81
    %v186 = vunpack.c.l.b16 %v82
    %v187 = vunpack.c.l.b16 %v83
    %v188 = vunpack.c.l.b16 %v84
    %v189 = vunpack.c.l.b16 %v85
    %v190 = vunpack.c.l.b16 %v86
    %v191 = vunpack.c.l.b16 %v87
    %v192 = vunpack.c.l.b16 %v88
    %v193 = vunpack.c.l.b16 %v89
    %v194 = vunpack.c.l.b16 %v90
    %v195 = vunpack.c.l.b16 %v91
    %v196 = vunpack.c.l.b16 %v92
    %v197 = vunpack.c.l.b16 %v93
    %v198 = vunpack.c.l.b16 %v94
    %v199 = vunpack.c.l.b16 %v95
    %v200 = vunpack.c.l.b16 %v96
    %v201 = vunpack.c.l.b16 %v97
    %v202 = vunpack.c.l.b16 %v98
    %v203 = vunpack.c.l.b16 %v99
    %v204 = vunpack.c.l.b16 %v100
    %v205 = vunpack.c.l.b16 %v101
    %v206 = vunpack.c.l.b16 %v102
    %v207 = vunpack.c.l.b16 %v103
    %v208 = vunpack.c.l.b16 %v104
    %v209 = vunpack.c.l.b16 %v113
    %v210 = vunpack.c.l.b16 %v114
    %v211 = vunpack.c.l.b16 %v115
    %v212 = vunpack.c.l.b16 %v116
    %v213 = vunpack.c.l.b16 %v117
    %v214 = vunpack.c.l.b16 %v118
    %v215 = vunpack.c.l.b16 %v119
    %v216 = vunpack.c.l.b16 %v120
    %v217 = vpack.c.b16 %v170, %v169
    %v218 = vpack.c.b16 %v172, %v171
    %v219 = vpack.c.b16 %v174, %v173
    %v220 = vpack.c.b16 %v176, %v175
    %v221 = vpack.c.b16 %v178, %v177
    %v222 = vpack.c.b16 %v180, %v179
    %v223 = vpack.c.b16 %v182, %v181
    %v224 = vpack.c.b16 %v184, %v183
    %v225 = vpack.c.b16 %v186, %v185
    %v226 = vpack.c.b16 %v188, %v187
    %v227 = vpack.c.b16 %v190, %v189
    %v228 = vpack.c.b16 %v192, %v191
    %v229 = vpack.c.b16 %v194, %v193
    %v230 = vpack.c.b16 %v196, %v195
    %v231 = vpack.c.b16 %v198, %v197
    %v232 = vpack.c.b16 %v200, %v199
    %v233 = vpack.c.b16 %v202, %v201
    %v234 = vpack.c.b16 %v204, %v203
    %v235 = vpack.c.b16 %v206, %v205
    %v236 = vpack.c.b16 %v208, %v207
    %v237 = vpack.c.b16 %v210, %v209
    %v238 = vpack.c.b16 %v212, %v211
    %v239 = vpack.c.b16 %v214, %v213
    %v240 = vpack.c.b16 %v216, %v215
    %vm241 = vcmask 23552
    %v244 = vsel %vm241, %v217, 4286644096
    %246 = vmax.xlane.bf16.xlu0 %v244
    %v247 = vpop.xlane.xlu0 %246
    %v249 = vsel %vm241, %v218, 4286644096
    %251 = vmax.xlane.bf16.xlu0 %v249
    %v252 = vpop.xlane.xlu0 %251
    %v254 = vsel %vm241, %v219, 4286644096
    %256 = vmax.xlane.bf16.xlu0 %v254
    %v257 = vpop.xlane.xlu0 %256
    %v259 = vsel %vm241, %v220, 4286644096
    %261 = vmax.xlane.bf16.xlu0 %v259
    %v262 = vpop.xlane.xlu0 %261
    %v264 = vsel %vm241, %v221, 4286644096
    %266 = vmax.xlane.bf16.xlu0 %v264
    %v267 = vpop.xlane.xlu0 %266
    %v269 = vsel %vm241, %v222, 4286644096
    %271 = vmax.xlane.bf16.xlu0 %v269
    %v272 = vpop.xlane.xlu0 %271
    %v274 = vsel %vm241, %v223, 4286644096
    %276 = vmax.xlane.bf16.xlu0 %v274
    %v277 = vpop.xlane.xlu0 %276
    %v279 = vsel %vm241, %v224, 4286644096
    %281 = vmax.xlane.bf16.xlu0 %v279
    %v282 = vpop.xlane.xlu0 %281
    %v284 = vsel %vm241, %v225, 4286644096
    %286 = vmax.xlane.bf16.xlu0 %v284
    %v287 = vpop.xlane.xlu0 %286
    %v289 = vsel %vm241, %v226, 4286644096
    %291 = vmax.xlane.bf16.xlu0 %v289
    %v292 = vpop.xlane.xlu0 %291
    %v294 = vsel %vm241, %v227, 4286644096
    %296 = vmax.xlane.bf16.xlu0 %v294
    %v297 = vpop.xlane.xlu0 %296
    %v299 = vsel %vm241, %v228, 4286644096
    %301 = vmax.xlane.bf16.xlu0 %v299
    %v302 = vpop.xlane.xlu0 %301
    %v304 = vsel %vm241, %v229, 4286644096
    %306 = vmax.xlane.bf16.xlu0 %v304
    %v307 = vpop.xlane.xlu0 %306
    %v309 = vsel %vm241, %v230, 4286644096
    %311 = vmax.xlane.bf16.xlu0 %v309
    %v312 = vpop.xlane.xlu0 %311
    %v314 = vsel %vm241, %v231, 4286644096
    %316 = vmax.xlane.bf16.xlu0 %v314
    %v317 = vpop.xlane.xlu0 %316
    %v319 = vsel %vm241, %v232, 4286644096
    %321 = vmax.xlane.bf16.xlu0 %v319
    %v322 = vpop.xlane.xlu0 %321
    %v324 = vsel %vm241, %v233, 4286644096
    %326 = vmax.xlane.bf16.xlu0 %v324
    %v327 = vpop.xlane.xlu0 %326
    %v329 = vsel %vm241, %v234, 4286644096
    %331 = vmax.xlane.bf16.xlu0 %v329
    %v332 = vpop.xlane.xlu0 %331
    %v334 = vsel %vm241, %v235, 4286644096
    %336 = vmax.xlane.bf16.xlu0 %v334
    %v337 = vpop.xlane.xlu0 %336
    %v339 = vsel %vm241, %v236, 4286644096
    %341 = vmax.xlane.bf16.xlu0 %v339
    %v342 = vpop.xlane.xlu0 %341
    %v344 = vsel %vm241, %v237, 4286644096
    %346 = vmax.xlane.bf16.xlu0 %v344
    %v347 = vpop.xlane.xlu0 %346
    %v349 = vsel %vm241, %v238, 4286644096
    %351 = vmax.xlane.bf16.xlu0 %v349
    %v352 = vpop.xlane.xlu0 %351
    %v354 = vsel %vm241, %v239, 4286644096
    %356 = vmax.xlane.bf16.xlu0 %v354
    %v357 = vpop.xlane.xlu0 %356
    %v359 = vsel %vm241, %v240, 4286644096
    %361 = vmax.xlane.bf16.xlu0 %v359
    %v362 = vpop.xlane.xlu0 %361
    %v387 = vrot.slane %v247, 6
    %v388 = vrot.slane %v252, 6
    %v389 = vrot.slane %v257, 6
    %v390 = vrot.slane %v262, 6
    %v391 = vrot.slane %v267, 6
    %v392 = vrot.slane %v272, 6
    %v393 = vrot.slane %v277, 6
    %v394 = vrot.slane %v282, 6
    %v395 = vrot.slane %v287, 6
    %v396 = vrot.slane %v292, 6
    %v397 = vrot.slane %v297, 6
    %v398 = vrot.slane %v302, 6
    %v399 = vrot.slane %v307, 6
    %v400 = vrot.slane %v312, 6
    %v401 = vrot.slane %v317, 6
    %v402 = vrot.slane %v322, 6
    %v403 = vrot.slane %v327, 6
    %v404 = vrot.slane %v332, 6
    %v405 = vrot.slane %v337, 6
    %v406 = vrot.slane %v342, 6
    %v407 = vrot.slane %v347, 6
    %v408 = vrot.slane %v352, 6
    %v409 = vrot.slane %v357, 6
    %v410 = vrot.slane %v362, 6
    %vm411 = vcmask 1041408
    %v414 = vsel %vm411, 0, %v387
    %v416 = vsel %vm411, 0, %v388
    %v418 = vsel %vm411, 0, %v389
    %v420 = vsel %vm411, 0, %v390
    %v422 = vsel %vm411, 0, %v391
    %v424 = vsel %vm411, 0, %v392
    %v426 = vsel %vm411, 0, %v393
    %v428 = vsel %vm411, 0, %v394
    %v430 = vsel %vm411, 0, %v395
    %v432 = vsel %vm411, 0, %v396
    %v434 = vsel %vm411, 0, %v397
    %v436 = vsel %vm411, 0, %v398
    %v438 = vsel %vm411, 0, %v399
    %v440 = vsel %vm411, 0, %v400
    %v442 = vsel %vm411, 0, %v401
    %v444 = vsel %vm411, 0, %v402
    %v446 = vsel %vm411, 0, %v403
    %v448 = vsel %vm411, 0, %v404
    %v450 = vsel %vm411, 0, %v405
    %v452 = vsel %vm411, 0, %v406
    %v454 = vsel %vm411, 0, %v407
    %v456 = vsel %vm411, 0, %v408
    %v458 = vsel %vm411, 0, %v409
    %v460 = vsel %vm411, 0, %v410
    %v461 = vsel %vm411, %v387, 0
    %v462 = vsel %vm411, %v388, 0
    %v463 = vsel %vm411, %v389, 0
    %v464 = vsel %vm411, %v390, 0
    %v465 = vsel %vm411, %v391, 0
    %v466 = vsel %vm411, %v392, 0
    %v467 = vsel %vm411, %v393, 0
    %v468 = vsel %vm411, %v394, 0
    %v469 = vsel %vm411, %v395, 0
    %v470 = vsel %vm411, %v396, 0
    %v471 = vsel %vm411, %v397, 0
    %v472 = vsel %vm411, %v398, 0
    %v473 = vsel %vm411, %v399, 0
    %v474 = vsel %vm411, %v400, 0
    %v475 = vsel %vm411, %v401, 0
    %v476 = vsel %vm411, %v402, 0
    %v477 = vsel %vm411, %v403, 0
    %v478 = vsel %vm411, %v404, 0
    %v479 = vsel %vm411, %v405, 0
    %v480 = vsel %vm411, %v406, 0
    %v481 = vsel %vm411, %v407, 0
    %v482 = vsel %vm411, %v408, 0
    %v483 = vsel %vm411, %v409, 0
    %v484 = vsel %vm411, %v410, 0
    %v485 = vrot.slane %v217, 6
    %v486 = vrot.slane %v218, 6
    %v487 = vrot.slane %v219, 6
    %v488 = vrot.slane %v220, 6
    %v489 = vrot.slane %v221, 6
    %v490 = vrot.slane %v222, 6
    %v491 = vrot.slane %v223, 6
    %v492 = vrot.slane %v224, 6
    %v493 = vrot.slane %v225, 6
    %v494 = vrot.slane %v226, 6
    %v495 = vrot.slane %v227, 6
    %v496 = vrot.slane %v228, 6
    %v497 = vrot.slane %v229, 6
    %v498 = vrot.slane %v230, 6
    %v499 = vrot.slane %v231, 6
    %v500 = vrot.slane %v232, 6
    %v501 = vrot.slane %v233, 6
    %v502 = vrot.slane %v234, 6
    %v503 = vrot.slane %v235, 6
    %v504 = vrot.slane %v236, 6
    %v505 = vrot.slane %v237, 6
    %v506 = vrot.slane %v238, 6
    %v507 = vrot.slane %v239, 6
    %v508 = vrot.slane %v240, 6
    %v510 = vsel %vm411, 0, %v485
    %v512 = vsel %vm411, 0, %v486
    %v514 = vsel %vm411, 0, %v487
    %v516 = vsel %vm411, 0, %v488
    %v518 = vsel %vm411, 0, %v489
    %v520 = vsel %vm411, 0, %v490
    %v522 = vsel %vm411, 0, %v491
    %v524 = vsel %vm411, 0, %v492
    %v526 = vsel %vm411, 0, %v493
    %v528 = vsel %vm411, 0, %v494
    %v530 = vsel %vm411, 0, %v495
    %v532 = vsel %vm411, 0, %v496
    %v534 = vsel %vm411, 0, %v497
    %v536 = vsel %vm411, 0, %v498
    %v538 = vsel %vm411, 0, %v499
    %v540 = vsel %vm411, 0, %v500
    %v542 = vsel %vm411, 0, %v501
    %v544 = vsel %vm411, 0, %v502
    %v546 = vsel %vm411, 0, %v503
    %v548 = vsel %vm411, 0, %v504
    %v550 = vsel %vm411, 0, %v505
    %v552 = vsel %vm411, 0, %v506
    %v554 = vsel %vm411, 0, %v507
    %v556 = vsel %vm411, 0, %v508
    %v557 = vsel %vm411, %v485, 0
    %v558 = vsel %vm411, %v486, 0
    %v559 = vsel %vm411, %v487, 0
    %v560 = vsel %vm411, %v488, 0
    %v561 = vsel %vm411, %v489, 0
    %v562 = vsel %vm411, %v490, 0
    %v563 = vsel %vm411, %v491, 0
    %v564 = vsel %vm411, %v492, 0
    %v565 = vsel %vm411, %v493, 0
    %v566 = vsel %vm411, %v494, 0
    %v567 = vsel %vm411, %v495, 0
    %v568 = vsel %vm411, %v496, 0
    %v569 = vsel %vm411, %v497, 0
    %v570 = vsel %vm411, %v498, 0
    %v571 = vsel %vm411, %v499, 0
    %v572 = vsel %vm411, %v500, 0
    %v573 = vsel %vm411, %v501, 0
    %v574 = vsel %vm411, %v502, 0
    %v575 = vsel %vm411, %v503, 0
    %v576 = vsel %vm411, %v504, 0
    %v577 = vsel %vm411, %v505, 0
    %v578 = vsel %vm411, %v506, 0
    %v579 = vsel %vm411, %v507, 0
    %v580 = vsel %vm411, %v508, 0
    %597 = vrot.lane.b32.xlu0 %v510, 1
    %v598 = vpop.permute.xlu0 %597
    %599 = vrot.lane.b32.xlu0 %v512, 1
    %v600 = vpop.permute.xlu0 %599
    %601 = vrot.lane.b32.xlu0 %v514, 1
    %v602 = vpop.permute.xlu0 %601
    %603 = vrot.lane.b32.xlu0 %v516, 1
    %v604 = vpop.permute.xlu0 %603
    %605 = vrot.lane.b32.xlu0 %v518, 1
    %v606 = vpop.permute.xlu0 %605
    %607 = vrot.lane.b32.xlu0 %v520, 1
    %v608 = vpop.permute.xlu0 %607
    %609 = vrot.lane.b32.xlu0 %v522, 1
    %v610 = vpop.permute.xlu0 %609
    %611 = vrot.lane.b32.xlu0 %v524, 1
    %v612 = vpop.permute.xlu0 %611
    %613 = vrot.lane.b32.xlu0 %v526, 1
    %v614 = vpop.permute.xlu0 %613
    %615 = vrot.lane.b32.xlu0 %v528, 1
    %v616 = vpop.permute.xlu0 %615
    %617 = vrot.lane.b32.xlu0 %v530, 1
    %v618 = vpop.permute.xlu0 %617
    %619 = vrot.lane.b32.xlu0 %v532, 1
    %v620 = vpop.permute.xlu0 %619
    %621 = vrot.lane.b32.xlu0 %v534, 1
    %v622 = vpop.permute.xlu0 %621
    %623 = vrot.lane.b32.xlu0 %v536, 1
    %v624 = vpop.permute.xlu0 %623
    %625 = vrot.lane.b32.xlu0 %v538, 1
    %v626 = vpop.permute.xlu0 %625
    %627 = vrot.lane.b32.xlu0 %v540, 1
    %v628 = vpop.permute.xlu0 %627
    %vm629 = vsmask.f32 7424
    %v630 = vshrl.u32 %v414, 16
    %v632 = vshll.u32 %v414, 16
    %v634 = vrot.slane %v632, 1
    %v635 = vor.u32 %v630, %v634
    %v636 = vshll.u32 %v461, 16
    %v638 = vrot.slane %v636, 1
    %v639 = vsel %vm629, %v635, %v638
    %v640 = vshrl.u32 %v416, 16
    %v642 = vshll.u32 %v416, 16
    %v644 = vrot.slane %v642, 1
    %v645 = vor.u32 %v640, %v644
    %v646 = vshll.u32 %v462, 16
    %v648 = vrot.slane %v646, 1
    %v649 = vsel %vm629, %v645, %v648
    %v650 = vshrl.u32 %v418, 16
    %v652 = vshll.u32 %v418, 16
    %v654 = vrot.slane %v652, 1
    %v655 = vor.u32 %v650, %v654
    %v656 = vshll.u32 %v463, 16
    %v658 = vrot.slane %v656, 1
    %v659 = vsel %vm629, %v655, %v658
    %v660 = vshrl.u32 %v420, 16
    %v662 = vshll.u32 %v420, 16
    %v664 = vrot.slane %v662, 1
    %v665 = vor.u32 %v660, %v664
    %v666 = vshll.u32 %v464, 16
    %v668 = vrot.slane %v666, 1
    %v669 = vsel %vm629, %v665, %v668
    %v670 = vshrl.u32 %v422, 16
    %v672 = vshll.u32 %v422, 16
    %v674 = vrot.slane %v672, 1
    %v675 = vor.u32 %v670, %v674
    %v676 = vshll.u32 %v465, 16
    %v678 = vrot.slane %v676, 1
    %v679 = vsel %vm629, %v675, %v678
    %v680 = vshrl.u32 %v424, 16
    %v682 = vshll.u32 %v424, 16
    %v684 = vrot.slane %v682, 1
    %v685 = vor.u32 %v680, %v684
    %v686 = vshll.u32 %v466, 16
    %v688 = vrot.slane %v686, 1
    %v689 = vsel %vm629, %v685, %v688
    %v690 = vshrl.u32 %v426, 16
    %v692 = vshll.u32 %v426, 16
    %v694 = vrot.slane %v692, 1
    %v695 = vor.u32 %v690, %v694
    %v696 = vshll.u32 %v467, 16
    %v698 = vrot.slane %v696, 1
    %v699 = vsel %vm629, %v695, %v698
    %v700 = vshrl.u32 %v428, 16
    %v702 = vshll.u32 %v428, 16
    %v704 = vrot.slane %v702, 1
    %v705 = vor.u32 %v700, %v704
    %v706 = vshll.u32 %v468, 16
    %v708 = vrot.slane %v706, 1
    %v709 = vsel %vm629, %v705, %v708
    %v710 = vshrl.u32 %v430, 16
    %v712 = vshll.u32 %v430, 16
    %v714 = vrot.slane %v712, 1
    %v715 = vor.u32 %v710, %v714
    %v716 = vshll.u32 %v469, 16
    %v718 = vrot.slane %v716, 1
    %v719 = vsel %vm629, %v715, %v718
    %v720 = vshrl.u32 %v432, 16
    %v722 = vshll.u32 %v432, 16
    %v724 = vrot.slane %v722, 1
    %v725 = vor.u32 %v720, %v724
    %v726 = vshll.u32 %v470, 16
    %v728 = vrot.slane %v726, 1
    %v729 = vsel %vm629, %v725, %v728
    %v730 = vshrl.u32 %v434, 16
    %v732 = vshll.u32 %v434, 16
    %v734 = vrot.slane %v732, 1
    %v735 = vor.u32 %v730, %v734
    %v736 = vshll.u32 %v471, 16
    %v738 = vrot.slane %v736, 1
    %v739 = vsel %vm629, %v735, %v738
    %v740 = vshrl.u32 %v436, 16
    %v742 = vshll.u32 %v436, 16
    %v744 = vrot.slane %v742, 1
    %v745 = vor.u32 %v740, %v744
    %v746 = vshll.u32 %v472, 16
    %v748 = vrot.slane %v746, 1
    %v749 = vsel %vm629, %v745, %v748
    %v750 = vshrl.u32 %v438, 16
    %v752 = vshll.u32 %v438, 16
    %v754 = vrot.slane %v752, 1
    %v755 = vor.u32 %v750, %v754
    %v756 = vshll.u32 %v473, 16
    %v758 = vrot.slane %v756, 1
    %v759 = vsel %vm629, %v755, %v758
    %v760 = vshrl.u32 %v440, 16
    %v762 = vshll.u32 %v440, 16
    %v764 = vrot.slane %v762, 1
    %v765 = vor.u32 %v760, %v764
    %v766 = vshll.u32 %v474, 16
    %v768 = vrot.slane %v766, 1
    %v769 = vsel %vm629, %v765, %v768
    %v770 = vshrl.u32 %v442, 16
    %v772 = vshll.u32 %v442, 16
    %v774 = vrot.slane %v772, 1
    %v775 = vor.u32 %v770, %v774
    %v776 = vshll.u32 %v475, 16
    %v778 = vrot.slane %v776, 1
    %v779 = vsel %vm629, %v775, %v778
    %v780 = vshrl.u32 %v444, 16
    %v782 = vshll.u32 %v444, 16
    %v784 = vrot.slane %v782, 1
    %v785 = vor.u32 %v780, %v784
    %v786 = vshll.u32 %v476, 16
    %v788 = vrot.slane %v786, 1
    %v789 = vsel %vm629, %v785, %v788
    %790 = vrot.lane.b32.xlu0 %v639, 4
    %v791 = vpop.permute.xlu0 %790
    %792 = vrot.lane.b32.xlu0 %v649, 4
    %v793 = vpop.permute.xlu0 %792
    %794 = vrot.lane.b32.xlu0 %v659, 4
    %v795 = vpop.permute.xlu0 %794
    %796 = vrot.lane.b32.xlu0 %v669, 4
    %v797 = vpop.permute.xlu0 %796
    %798 = vrot.lane.b32.xlu0 %v679, 4
    %v799 = vpop.permute.xlu0 %798
    %800 = vrot.lane.b32.xlu0 %v689, 4
    %v801 = vpop.permute.xlu0 %800
    %802 = vrot.lane.b32.xlu0 %v699, 4
    %v803 = vpop.permute.xlu0 %802
    %804 = vrot.lane.b32.xlu0 %v709, 4
    %v805 = vpop.permute.xlu0 %804
    %806 = vrot.lane.b32.xlu0 %v719, 4
    %v807 = vpop.permute.xlu0 %806
    %808 = vrot.lane.b32.xlu0 %v729, 4
    %v809 = vpop.permute.xlu0 %808
    %810 = vrot.lane.b32.xlu0 %v739, 4
    %v811 = vpop.permute.xlu0 %810
    %812 = vrot.lane.b32.xlu0 %v749, 4
    %v813 = vpop.permute.xlu0 %812
    %814 = vrot.lane.b32.xlu0 %v759, 4
    %v815 = vpop.permute.xlu0 %814
    %816 = vrot.lane.b32.xlu0 %v769, 4
    %v817 = vpop.permute.xlu0 %816
    %818 = vrot.lane.b32.xlu0 %v779, 4
    %v819 = vpop.permute.xlu0 %818
    %820 = vrot.lane.b32.xlu0 %v789, 4
    %v821 = vpop.permute.xlu0 %820
    %v822 = vshrl.u32 %v510, 16
    %v824 = vshll.u32 %v510, 16
    %v826 = vrot.slane %v824, 1
    %v827 = vor.u32 %v822, %v826
    %v828 = vshll.u32 %v557, 16
    %v830 = vrot.slane %v828, 1
    %v831 = vsel %vm629, %v827, %v830
    %v832 = vshrl.u32 %v512, 16
    %v834 = vshll.u32 %v512, 16
    %v836 = vrot.slane %v834, 1
    %v837 = vor.u32 %v832, %v836
    %v838 = vshll.u32 %v558, 16
    %v840 = vrot.slane %v838, 1
    %v841 = vsel %vm629, %v837, %v840
    %v842 = vshrl.u32 %v514, 16
    %v844 = vshll.u32 %v514, 16
    %v846 = vrot.slane %v844, 1
    %v847 = vor.u32 %v842, %v846
    %v848 = vshll.u32 %v559, 16
    %v850 = vrot.slane %v848, 1
    %v851 = vsel %vm629, %v847, %v850
    %v852 = vshrl.u32 %v516, 16
    %v854 = vshll.u32 %v516, 16
    %v856 = vrot.slane %v854, 1
    %v857 = vor.u32 %v852, %v856
    %v858 = vshll.u32 %v560, 16
    %v860 = vrot.slane %v858, 1
    %v861 = vsel %vm629, %v857, %v860
    %v862 = vshrl.u32 %v518, 16
    %v864 = vshll.u32 %v518, 16
    %v866 = vrot.slane %v864, 1
    %v867 = vor.u32 %v862, %v866
    %v868 = vshll.u32 %v561, 16
    %v870 = vrot.slane %v868, 1
    %v871 = vsel %vm629, %v867, %v870
    %v872 = vshrl.u32 %v520, 16
    %v874 = vshll.u32 %v520, 16
    %v876 = vrot.slane %v874, 1
    %v877 = vor.u32 %v872, %v876
    %v878 = vshll.u32 %v562, 16
    %v880 = vrot.slane %v878, 1
    %v881 = vsel %vm629, %v877, %v880
    %v882 = vshrl.u32 %v522, 16
    %v884 = vshll.u32 %v522, 16
    %v886 = vrot.slane %v884, 1
    %v887 = vor.u32 %v882, %v886
    %v888 = vshll.u32 %v563, 16
    %v890 = vrot.slane %v888, 1
    %v891 = vsel %vm629, %v887, %v890
    %v892 = vshrl.u32 %v524, 16
    %v894 = vshll.u32 %v524, 16
    %v896 = vrot.slane %v894, 1
    %v897 = vor.u32 %v892, %v896
    %v898 = vshll.u32 %v564, 16
    %v900 = vrot.slane %v898, 1
    %v901 = vsel %vm629, %v897, %v900
    %v902 = vshrl.u32 %v526, 16
    %v904 = vshll.u32 %v526, 16
    %v906 = vrot.slane %v904, 1
    %v907 = vor.u32 %v902, %v906
    %v908 = vshll.u32 %v565, 16
    %v910 = vrot.slane %v908, 1
    %v911 = vsel %vm629, %v907, %v910
    %v912 = vshrl.u32 %v528, 16
    %v914 = vshll.u32 %v528, 16
    %v916 = vrot.slane %v914, 1
    %v917 = vor.u32 %v912, %v916
    %v918 = vshll.u32 %v566, 16
    %v920 = vrot.slane %v918, 1
    %v921 = vsel %vm629, %v917, %v920
    %v922 = vshrl.u32 %v530, 16
    %v924 = vshll.u32 %v530, 16
    %v926 = vrot.slane %v924, 1
    %v927 = vor.u32 %v922, %v926
    %v928 = vshll.u32 %v567, 16
    %v930 = vrot.slane %v928, 1
    %v931 = vsel %vm629, %v927, %v930
    %v932 = vshrl.u32 %v532, 16
    %v934 = vshll.u32 %v532, 16
    %v936 = vrot.slane %v934, 1
    %v937 = vor.u32 %v932, %v936
    %v938 = vshll.u32 %v568, 16
    %v940 = vrot.slane %v938, 1
    %v941 = vsel %vm629, %v937, %v940
    %v942 = vshrl.u32 %v534, 16
    %v944 = vshll.u32 %v534, 16
    %v946 = vrot.slane %v944, 1
    %v947 = vor.u32 %v942, %v946
    %v948 = vshll.u32 %v569, 16
    %v950 = vrot.slane %v948, 1
    %v951 = vsel %vm629, %v947, %v950
    %v952 = vshrl.u32 %v536, 16
    %v954 = vshll.u32 %v536, 16
    %v956 = vrot.slane %v954, 1
    %v957 = vor.u32 %v952, %v956
    %v958 = vshll.u32 %v570, 16
    %v960 = vrot.slane %v958, 1
    %v961 = vsel %vm629, %v957, %v960
    %v962 = vshrl.u32 %v538, 16
    %v964 = vshll.u32 %v538, 16
    %v966 = vrot.slane %v964, 1
    %v967 = vor.u32 %v962, %v966
    %v968 = vshll.u32 %v571, 16
    %v970 = vrot.slane %v968, 1
    %v971 = vsel %vm629, %v967, %v970
    %v972 = vshrl.u32 %v540, 16
    %v974 = vshll.u32 %v540, 16
    %v976 = vrot.slane %v974, 1
    %v977 = vor.u32 %v972, %v976
    %v978 = vshll.u32 %v572, 16
    %v980 = vrot.slane %v978, 1
    %v981 = vsel %vm629, %v977, %v980
    %982 = vrot.lane.b32.xlu0 %v831, 5
    %v983 = vpop.permute.xlu0 %982
    %984 = vrot.lane.b32.xlu0 %v841, 5
    %v985 = vpop.permute.xlu0 %984
    %986 = vrot.lane.b32.xlu0 %v851, 5
    %v987 = vpop.permute.xlu0 %986
    %988 = vrot.lane.b32.xlu0 %v861, 5
    %v989 = vpop.permute.xlu0 %988
    %990 = vrot.lane.b32.xlu0 %v871, 5
    %v991 = vpop.permute.xlu0 %990
    %992 = vrot.lane.b32.xlu0 %v881, 5
    %v993 = vpop.permute.xlu0 %992
    %994 = vrot.lane.b32.xlu0 %v891, 5
    %v995 = vpop.permute.xlu0 %994
    %996 = vrot.lane.b32.xlu0 %v901, 5
    %v997 = vpop.permute.xlu0 %996
    %998 = vrot.lane.b32.xlu0 %v911, 5
    %v999 = vpop.permute.xlu0 %998
    %1000 = vrot.lane.b32.xlu0 %v921, 5
    %v1001 = vpop.permute.xlu0 %1000
    %1002 = vrot.lane.b32.xlu0 %v931, 5
    %v1003 = vpop.permute.xlu0 %1002
    %1004 = vrot.lane.b32.xlu0 %v941, 5
    %v1005 = vpop.permute.xlu0 %1004
    %1006 = vrot.lane.b32.xlu0 %v951, 5
    %v1007 = vpop.permute.xlu0 %1006
    %1008 = vrot.lane.b32.xlu0 %v961, 5
    %v1009 = vpop.permute.xlu0 %1008
    %1010 = vrot.lane.b32.xlu0 %v971, 5
    %v1011 = vpop.permute.xlu0 %1010
    %1012 = vrot.lane.b32.xlu0 %v981, 5
    %v1013 = vpop.permute.xlu0 %1012
    %vm1046 = vcmask 1046528
    %v1047 = vrot.slane %v414, 1
    %v1048 = vrot.slane %v461, 1
    %v1049 = vsel %vm1046, %v1047, %v1048
    %v1050 = vrot.slane %v416, 1
    %v1051 = vrot.slane %v462, 1
    %v1052 = vsel %vm1046, %v1050, %v1051
    %v1053 = vrot.slane %v418, 1
    %v1054 = vrot.slane %v463, 1
    %v1055 = vsel %vm1046, %v1053, %v1054
    %v1056 = vrot.slane %v420, 1
    %v1057 = vrot.slane %v464, 1
    %v1058 = vsel %vm1046, %v1056, %v1057
    %v1059 = vrot.slane %v422, 1
    %v1060 = vrot.slane %v465, 1
    %v1061 = vsel %vm1046, %v1059, %v1060
    %v1062 = vrot.slane %v424, 1
    %v1063 = vrot.slane %v466, 1
    %v1064 = vsel %vm1046, %v1062, %v1063
    %v1065 = vrot.slane %v426, 1
    %v1066 = vrot.slane %v467, 1
    %v1067 = vsel %vm1046, %v1065, %v1066
    %v1068 = vrot.slane %v428, 1
    %v1069 = vrot.slane %v468, 1
    %v1070 = vsel %vm1046, %v1068, %v1069
    %v1071 = vrot.slane %v430, 1
    %v1072 = vrot.slane %v469, 1
    %v1073 = vsel %vm1046, %v1071, %v1072
    %v1074 = vrot.slane %v432, 1
    %v1075 = vrot.slane %v470, 1
    %v1076 = vsel %vm1046, %v1074, %v1075
    %v1077 = vrot.slane %v434, 1
    %v1078 = vrot.slane %v471, 1
    %v1079 = vsel %vm1046, %v1077, %v1078
    %v1080 = vrot.slane %v436, 1
    %v1081 = vrot.slane %v472, 1
    %v1082 = vsel %vm1046, %v1080, %v1081
    %v1083 = vrot.slane %v438, 1
    %v1084 = vrot.slane %v473, 1
    %v1085 = vsel %vm1046, %v1083, %v1084
    %v1086 = vrot.slane %v440, 1
    %v1087 = vrot.slane %v474, 1
    %v1088 = vsel %vm1046, %v1086, %v1087
    %v1089 = vrot.slane %v442, 1
    %v1090 = vrot.slane %v475, 1
    %v1091 = vsel %vm1046, %v1089, %v1090
    %v1092 = vrot.slane %v444, 1
    %v1093 = vrot.slane %v476, 1
    %v1094 = vsel %vm1046, %v1092, %v1093
    %1095 = vrot.lane.b32.xlu0 %v1049, 8
    %v1096 = vpop.permute.xlu0 %1095
    %1097 = vrot.lane.b32.xlu0 %v1052, 8
    %v1098 = vpop.permute.xlu0 %1097
    %1099 = vrot.lane.b32.xlu0 %v1055, 8
    %v1100 = vpop.permute.xlu0 %1099
    %1101 = vrot.lane.b32.xlu0 %v1058, 8
    %v1102 = vpop.permute.xlu0 %1101
    %1103 = vrot.lane.b32.xlu0 %v1061, 8
    %v1104 = vpop.permute.xlu0 %1103
    %1105 = vrot.lane.b32.xlu0 %v1064, 8
    %v1106 = vpop.permute.xlu0 %1105
    %1107 = vrot.lane.b32.xlu0 %v1067, 8
    %v1108 = vpop.permute.xlu0 %1107
    %1109 = vrot.lane.b32.xlu0 %v1070, 8
    %v1110 = vpop.permute.xlu0 %1109
    %1111 = vrot.lane.b32.xlu0 %v1073, 8
    %v1112 = vpop.permute.xlu0 %1111
    %1113 = vrot.lane.b32.xlu0 %v1076, 8
    %v1114 = vpop.permute.xlu0 %1113
    %1115 = vrot.lane.b32.xlu0 %v1079, 8
    %v1116 = vpop.permute.xlu0 %1115
    %1117 = vrot.lane.b32.xlu0 %v1082, 8
    %v1118 = vpop.permute.xlu0 %1117
    %1119 = vrot.lane.b32.xlu0 %v1085, 8
    %v1120 = vpop.permute.xlu0 %1119
    %1121 = vrot.lane.b32.xlu0 %v1088, 8
    %v1122 = vpop.permute.xlu0 %1121
    %1123 = vrot.lane.b32.xlu0 %v1091, 8
    %v1124 = vpop.permute.xlu0 %1123
    %1125 = vrot.lane.b32.xlu0 %v1094, 8
    %v1126 = vpop.permute.xlu0 %1125
    %v1143 = vrot.slane %v510, 1
    %v1144 = vrot.slane %v557, 1
    %v1145 = vsel %vm1046, %v1143, %v1144
    %v1146 = vrot.slane %v512, 1
    %v1147 = vrot.slane %v558, 1
    %v1148 = vsel %vm1046, %v1146, %v1147
    %v1149 = vrot.slane %v514, 1
    %v1150 = vrot.slane %v559, 1
    %v1151 = vsel %vm1046, %v1149, %v1150
    %v1152 = vrot.slane %v516, 1
    %v1153 = vrot.slane %v560, 1
    %v1154 = vsel %vm1046, %v1152, %v1153
    %v1155 = vrot.slane %v518, 1
    %v1156 = vrot.slane %v561, 1
    %v1157 = vsel %vm1046, %v1155, %v1156
    %v1158 = vrot.slane %v520, 1
    %v1159 = vrot.slane %v562, 1
    %v1160 = vsel %vm1046, %v1158, %v1159
    %v1161 = vrot.slane %v522, 1
    %v1162 = vrot.slane %v563, 1
    %v1163 = vsel %vm1046, %v1161, %v1162
    %v1164 = vrot.slane %v524, 1
    %v1165 = vrot.slane %v564, 1
    %v1166 = vsel %vm1046, %v1164, %v1165
    %v1167 = vrot.slane %v526, 1
    %v1168 = vrot.slane %v565, 1
    %v1169 = vsel %vm1046, %v1167, %v1168
    %v1170 = vrot.slane %v528, 1
    %v1171 = vrot.slane %v566, 1
    %v1172 = vsel %vm1046, %v1170, %v1171
    %v1173 = vrot.slane %v530, 1
    %v1174 = vrot.slane %v567, 1
    %v1175 = vsel %vm1046, %v1173, %v1174
    %v1176 = vrot.slane %v532, 1
    %v1177 = vrot.slane %v568, 1
    %v1178 = vsel %vm1046, %v1176, %v1177
    %v1179 = vrot.slane %v534, 1
    %v1180 = vrot.slane %v569, 1
    %v1181 = vsel %vm1046, %v1179, %v1180
    %v1182 = vrot.slane %v536, 1
    %v1183 = vrot.slane %v570, 1
    %v1184 = vsel %vm1046, %v1182, %v1183
    %v1185 = vrot.slane %v538, 1
    %v1186 = vrot.slane %v571, 1
    %v1187 = vsel %vm1046, %v1185, %v1186
    %v1188 = vrot.slane %v540, 1
    %v1189 = vrot.slane %v572, 1
    %v1190 = vsel %vm1046, %v1188, %v1189
    %1191 = vrot.lane.b32.xlu0 %v1145, 9
    %v1192 = vpop.permute.xlu0 %1191
    %1193 = vrot.lane.b32.xlu0 %v1148, 9
    %v1194 = vpop.permute.xlu0 %1193
    %1195 = vrot.lane.b32.xlu0 %v1151, 9
    %v1196 = vpop.permute.xlu0 %1195
    %1197 = vrot.lane.b32.xlu0 %v1154, 9
    %v1198 = vpop.permute.xlu0 %1197
    %1199 = vrot.lane.b32.xlu0 %v1157, 9
    %v1200 = vpop.permute.xlu0 %1199
    %1201 = vrot.lane.b32.xlu0 %v1160, 9
    %v1202 = vpop.permute.xlu0 %1201
    %1203 = vrot.lane.b32.xlu0 %v1163, 9
    %v1204 = vpop.permute.xlu0 %1203
    %1205 = vrot.lane.b32.xlu0 %v1166, 9
    %v1206 = vpop.permute.xlu0 %1205
    %1207 = vrot.lane.b32.xlu0 %v1169, 9
    %v1208 = vpop.permute.xlu0 %1207
    %1209 = vrot.lane.b32.xlu0 %v1172, 9
    %v1210 = vpop.permute.xlu0 %1209
    %1211 = vrot.lane.b32.xlu0 %v1175, 9
    %v1212 = vpop.permute.xlu0 %1211
    %1213 = vrot.lane.b32.xlu0 %v1178, 9
    %v1214 = vpop.permute.xlu0 %1213
    %1215 = vrot.lane.b32.xlu0 %v1181, 9
    %v1216 = vpop.permute.xlu0 %1215
    %1217 = vrot.lane.b32.xlu0 %v1184, 9
    %v1218 = vpop.permute.xlu0 %1217
    %1219 = vrot.lane.b32.xlu0 %v1187, 9
    %v1220 = vpop.permute.xlu0 %1219
    %1221 = vrot.lane.b32.xlu0 %v1190, 9
    %v1222 = vpop.permute.xlu0 %1221
    %vm1223 = vsmask.f32 6400
    %v1224 = vrot.slane %v630, 1
    %v1225 = vrot.slane %v632, 2
    %v1226 = vor.u32 %v1224, %v1225
    %v1227 = vshrl.u32 %v461, 16
    %v1229 = vrot.slane %v1227, 1
    %v1230 = vrot.slane %v636, 2
    %v1231 = vor.u32 %v1229, %v1230
    %v1232 = vsel %vm1223, %v1226, %v1231
    %v1233 = vrot.slane %v640, 1
    %v1234 = vrot.slane %v642, 2
    %v1235 = vor.u32 %v1233, %v1234
    %v1236 = vshrl.u32 %v462, 16
    %v1238 = vrot.slane %v1236, 1
    %v1239 = vrot.slane %v646, 2
    %v1240 = vor.u32 %v1238, %v1239
    %v1241 = vsel %vm1223, %v1235, %v1240
    %v1242 = vrot.slane %v650, 1
    %v1243 = vrot.slane %v652, 2
    %v1244 = vor.u32 %v1242, %v1243
    %v1245 = vshrl.u32 %v463, 16
    %v1247 = vrot.slane %v1245, 1
    %v1248 = vrot.slane %v656, 2
    %v1249 = vor.u32 %v1247, %v1248
    %v1250 = vsel %vm1223, %v1244, %v1249
    %v1251 = vrot.slane %v660, 1
    %v1252 = vrot.slane %v662, 2
    %v1253 = vor.u32 %v1251, %v1252
    %v1254 = vshrl.u32 %v464, 16
    %v1256 = vrot.slane %v1254, 1
    %v1257 = vrot.slane %v666, 2
    %v1258 = vor.u32 %v1256, %v1257
    %v1259 = vsel %vm1223, %v1253, %v1258
    %v1260 = vrot.slane %v670, 1
    %v1261 = vrot.slane %v672, 2
    %v1262 = vor.u32 %v1260, %v1261
    %v1263 = vshrl.u32 %v465, 16
    %v1265 = vrot.slane %v1263, 1
    %v1266 = vrot.slane %v676, 2
    %v1267 = vor.u32 %v1265, %v1266
    %v1268 = vsel %vm1223, %v1262, %v1267
    %v1269 = vrot.slane %v680, 1
    %v1270 = vrot.slane %v682, 2
    %v1271 = vor.u32 %v1269, %v1270
    %v1272 = vshrl.u32 %v466, 16
    %v1274 = vrot.slane %v1272, 1
    %v1275 = vrot.slane %v686, 2
    %v1276 = vor.u32 %v1274, %v1275
    %v1277 = vsel %vm1223, %v1271, %v1276
    %v1278 = vrot.slane %v690, 1
    %v1279 = vrot.slane %v692, 2
    %v1280 = vor.u32 %v1278, %v1279
    %v1281 = vshrl.u32 %v467, 16
    %v1283 = vrot.slane %v1281, 1
    %v1284 = vrot.slane %v696, 2
    %v1285 = vor.u32 %v1283, %v1284
    %v1286 = vsel %vm1223, %v1280, %v1285
    %v1287 = vrot.slane %v700, 1
    %v1288 = vrot.slane %v702, 2
    %v1289 = vor.u32 %v1287, %v1288
    %v1290 = vshrl.u32 %v468, 16
    %v1292 = vrot.slane %v1290, 1
    %v1293 = vrot.slane %v706, 2
    %v1294 = vor.u32 %v1292, %v1293
    %v1295 = vsel %vm1223, %v1289, %v1294
    %v1296 = vrot.slane %v710, 1
    %v1297 = vrot.slane %v712, 2
    %v1298 = vor.u32 %v1296, %v1297
    %v1299 = vshrl.u32 %v469, 16
    %v1301 = vrot.slane %v1299, 1
    %v1302 = vrot.slane %v716, 2
    %v1303 = vor.u32 %v1301, %v1302
    %v1304 = vsel %vm1223, %v1298, %v1303
    %v1305 = vrot.slane %v720, 1
    %v1306 = vrot.slane %v722, 2
    %v1307 = vor.u32 %v1305, %v1306
    %v1308 = vshrl.u32 %v470, 16
    %v1310 = vrot.slane %v1308, 1
    %v1311 = vrot.slane %v726, 2
    %v1312 = vor.u32 %v1310, %v1311
    %v1313 = vsel %vm1223, %v1307, %v1312
    %v1314 = vrot.slane %v730, 1
    %v1315 = vrot.slane %v732, 2
    %v1316 = vor.u32 %v1314, %v1315
    %v1317 = vshrl.u32 %v471, 16
    %v1319 = vrot.slane %v1317, 1
    %v1320 = vrot.slane %v736, 2
    %v1321 = vor.u32 %v1319, %v1320
    %v1322 = vsel %vm1223, %v1316, %v1321
    %v1323 = vrot.slane %v740, 1
    %v1324 = vrot.slane %v742, 2
    %v1325 = vor.u32 %v1323, %v1324
    %v1326 = vshrl.u32 %v472, 16
    %v1328 = vrot.slane %v1326, 1
    %v1329 = vrot.slane %v746, 2
    %v1330 = vor.u32 %v1328, %v1329
    %v1331 = vsel %vm1223, %v1325, %v1330
    %v1332 = vrot.slane %v750, 1
    %v1333 = vrot.slane %v752, 2
    %v1334 = vor.u32 %v1332, %v1333
    %v1335 = vshrl.u32 %v473, 16
    %v1337 = vrot.slane %v1335, 1
    %v1338 = vrot.slane %v756, 2
    %v1339 = vor.u32 %v1337, %v1338
    %v1340 = vsel %vm1223, %v1334, %v1339
    %v1341 = vrot.slane %v760, 1
    %v1342 = vrot.slane %v762, 2
    %v1343 = vor.u32 %v1341, %v1342
    %v1344 = vshrl.u32 %v474, 16
    %v1346 = vrot.slane %v1344, 1
    %v1347 = vrot.slane %v766, 2
    %v1348 = vor.u32 %v1346, %v1347
    %v1349 = vsel %vm1223, %v1343, %v1348
    %v1350 = vrot.slane %v770, 1
    %v1351 = vrot.slane %v772, 2
    %v1352 = vor.u32 %v1350, %v1351
    %v1353 = vshrl.u32 %v475, 16
    %v1355 = vrot.slane %v1353, 1
    %v1356 = vrot.slane %v776, 2
    %v1357 = vor.u32 %v1355, %v1356
    %v1358 = vsel %vm1223, %v1352, %v1357
    %v1359 = vrot.slane %v780, 1
    %v1360 = vrot.slane %v782, 2
    %v1361 = vor.u32 %v1359, %v1360
    %v1362 = vshrl.u32 %v476, 16
    %v1364 = vrot.slane %v1362, 1
    %v1365 = vrot.slane %v786, 2
    %v1366 = vor.u32 %v1364, %v1365
    %v1367 = vsel %vm1223, %v1361, %v1366
    %1368 = vrot.lane.b32.xlu0 %v1232, 12
    %v1369 = vpop.permute.xlu0 %1368
    %1370 = vrot.lane.b32.xlu0 %v1241, 12
    %v1371 = vpop.permute.xlu0 %1370
    %1372 = vrot.lane.b32.xlu0 %v1250, 12
    %v1373 = vpop.permute.xlu0 %1372
    %1374 = vrot.lane.b32.xlu0 %v1259, 12
    %v1375 = vpop.permute.xlu0 %1374
    %1376 = vrot.lane.b32.xlu0 %v1268, 12
    %v1377 = vpop.permute.xlu0 %1376
    %1378 = vrot.lane.b32.xlu0 %v1277, 12
    %v1379 = vpop.permute.xlu0 %1378
    %1380 = vrot.lane.b32.xlu0 %v1286, 12
    %v1381 = vpop.permute.xlu0 %1380
    %1382 = vrot.lane.b32.xlu0 %v1295, 12
    %v1383 = vpop.permute.xlu0 %1382
    %1384 = vrot.lane.b32.xlu0 %v1304, 12
    %v1385 = vpop.permute.xlu0 %1384
    %1386 = vrot.lane.b32.xlu0 %v1313, 12
    %v1387 = vpop.permute.xlu0 %1386
    %1388 = vrot.lane.b32.xlu0 %v1322, 12
    %v1389 = vpop.permute.xlu0 %1388
    %1390 = vrot.lane.b32.xlu0 %v1331, 12
    %v1391 = vpop.permute.xlu0 %1390
    %1392 = vrot.lane.b32.xlu0 %v1340, 12
    %v1393 = vpop.permute.xlu0 %1392
    %1394 = vrot.lane.b32.xlu0 %v1349, 12
    %v1395 = vpop.permute.xlu0 %1394
    %1396 = vrot.lane.b32.xlu0 %v1358, 12
    %v1397 = vpop.permute.xlu0 %1396
    %1398 = vrot.lane.b32.xlu0 %v1367, 12
    %v1399 = vpop.permute.xlu0 %1398
    %v1400 = vrot.slane %v822, 1
    %v1401 = vrot.slane %v824, 2
    %v1402 = vor.u32 %v1400, %v1401
    %v1403 = vshrl.u32 %v557, 16
    %v1405 = vrot.slane %v1403, 1
    %v1406 = vrot.slane %v828, 2
    %v1407 = vor.u32 %v1405, %v1406
    %v1408 = vsel %vm1223, %v1402, %v1407
    %v1409 = vrot.slane %v832, 1
    %v1410 = vrot.slane %v834, 2
    %v1411 = vor.u32 %v1409, %v1410
    %v1412 = vshrl.u32 %v558, 16
    %v1414 = vrot.slane %v1412, 1
    %v1415 = vrot.slane %v838, 2
    %v1416 = vor.u32 %v1414, %v1415
    %v1417 = vsel %vm1223, %v1411, %v1416
    %v1418 = vrot.slane %v842, 1
    %v1419 = vrot.slane %v844, 2
    %v1420 = vor.u32 %v1418, %v1419
    %v1421 = vshrl.u32 %v559, 16
    %v1423 = vrot.slane %v1421, 1
    %v1424 = vrot.slane %v848, 2
    %v1425 = vor.u32 %v1423, %v1424
    %v1426 = vsel %vm1223, %v1420, %v1425
    %v1427 = vrot.slane %v852, 1
    %v1428 = vrot.slane %v854, 2
    %v1429 = vor.u32 %v1427, %v1428
    %v1430 = vshrl.u32 %v560, 16
    %v1432 = vrot.slane %v1430, 1
    %v1433 = vrot.slane %v858, 2
    %v1434 = vor.u32 %v1432, %v1433
    %v1435 = vsel %vm1223, %v1429, %v1434
    %v1436 = vrot.slane %v862, 1
    %v1437 = vrot.slane %v864, 2
    %v1438 = vor.u32 %v1436, %v1437
    %v1439 = vshrl.u32 %v561, 16
    %v1441 = vrot.slane %v1439, 1
    %v1442 = vrot.slane %v868, 2
    %v1443 = vor.u32 %v1441, %v1442
    %v1444 = vsel %vm1223, %v1438, %v1443
    %v1445 = vrot.slane %v872, 1
    %v1446 = vrot.slane %v874, 2
    %v1447 = vor.u32 %v1445, %v1446
    %v1448 = vshrl.u32 %v562, 16
    %v1450 = vrot.slane %v1448, 1
    %v1451 = vrot.slane %v878, 2
    %v1452 = vor.u32 %v1450, %v1451
    %v1453 = vsel %vm1223, %v1447, %v1452
    %v1454 = vrot.slane %v882, 1
    %v1455 = vrot.slane %v884, 2
    %v1456 = vor.u32 %v1454, %v1455
    %v1457 = vshrl.u32 %v563, 16
    %v1459 = vrot.slane %v1457, 1
    %v1460 = vrot.slane %v888, 2
    %v1461 = vor.u32 %v1459, %v1460
    %v1462 = vsel %vm1223, %v1456, %v1461
    %v1463 = vrot.slane %v892, 1
    %v1464 = vrot.slane %v894, 2
    %v1465 = vor.u32 %v1463, %v1464
    %v1466 = vshrl.u32 %v564, 16
    %v1468 = vrot.slane %v1466, 1
    %v1469 = vrot.slane %v898, 2
    %v1470 = vor.u32 %v1468, %v1469
    %v1471 = vsel %vm1223, %v1465, %v1470
    %v1472 = vrot.slane %v902, 1
    %v1473 = vrot.slane %v904, 2
    %v1474 = vor.u32 %v1472, %v1473
    %v1475 = vshrl.u32 %v565, 16
    %v1477 = vrot.slane %v1475, 1
    %v1478 = vrot.slane %v908, 2
    %v1479 = vor.u32 %v1477, %v1478
    %v1480 = vsel %vm1223, %v1474, %v1479
    %v1481 = vrot.slane %v912, 1
    %v1482 = vrot.slane %v914, 2
    %v1483 = vor.u32 %v1481, %v1482
    %v1484 = vshrl.u32 %v566, 16
    %v1486 = vrot.slane %v1484, 1
    %v1487 = vrot.slane %v918, 2
    %v1488 = vor.u32 %v1486, %v1487
    %v1489 = vsel %vm1223, %v1483, %v1488
    %v1490 = vrot.slane %v922, 1
    %v1491 = vrot.slane %v924, 2
    %v1492 = vor.u32 %v1490, %v1491
    %v1493 = vshrl.u32 %v567, 16
    %v1495 = vrot.slane %v1493, 1
    %v1496 = vrot.slane %v928, 2
    %v1497 = vor.u32 %v1495, %v1496
    %v1498 = vsel %vm1223, %v1492, %v1497
    %v1499 = vrot.slane %v932, 1
    %v1500 = vrot.slane %v934, 2
    %v1501 = vor.u32 %v1499, %v1500
    %v1502 = vshrl.u32 %v568, 16
    %v1504 = vrot.slane %v1502, 1
    %v1505 = vrot.slane %v938, 2
    %v1506 = vor.u32 %v1504, %v1505
    %v1507 = vsel %vm1223, %v1501, %v1506
    %v1508 = vrot.slane %v942, 1
    %v1509 = vrot.slane %v944, 2
    %v1510 = vor.u32 %v1508, %v1509
    %v1511 = vshrl.u32 %v569, 16
    %v1513 = vrot.slane %v1511, 1
    %v1514 = vrot.slane %v948, 2
    %v1515 = vor.u32 %v1513, %v1514
    %v1516 = vsel %vm1223, %v1510, %v1515
    %v1517 = vrot.slane %v952, 1
    %v1518 = vrot.slane %v954, 2
    %v1519 = vor.u32 %v1517, %v1518
    %v1520 = vshrl.u32 %v570, 16
    %v1522 = vrot.slane %v1520, 1
    %v1523 = vrot.slane %v958, 2
    %v1524 = vor.u32 %v1522, %v1523
    %v1525 = vsel %vm1223, %v1519, %v1524
    %v1526 = vrot.slane %v962, 1
    %v1527 = vrot.slane %v964, 2
    %v1528 = vor.u32 %v1526, %v1527
    %v1529 = vshrl.u32 %v571, 16
    %v1531 = vrot.slane %v1529, 1
    %v1532 = vrot.slane %v968, 2
    %v1533 = vor.u32 %v1531, %v1532
    %v1534 = vsel %vm1223, %v1528, %v1533
    %v1535 = vrot.slane %v972, 1
    %v1536 = vrot.slane %v974, 2
    %v1537 = vor.u32 %v1535, %v1536
    %v1538 = vshrl.u32 %v572, 16
    %v1540 = vrot.slane %v1538, 1
    %v1541 = vrot.slane %v978, 2
    %v1542 = vor.u32 %v1540, %v1541
    %v1543 = vsel %vm1223, %v1537, %v1542
    %1544 = vrot.lane.b32.xlu0 %v1408, 13
    %v1545 = vpop.permute.xlu0 %1544
    %1546 = vrot.lane.b32.xlu0 %v1417, 13
    %v1547 = vpop.permute.xlu0 %1546
    %1548 = vrot.lane.b32.xlu0 %v1426, 13
    %v1549 = vpop.permute.xlu0 %1548
    %1550 = vrot.lane.b32.xlu0 %v1435, 13
    %v1551 = vpop.permute.xlu0 %1550
    %1552 = vrot.lane.b32.xlu0 %v1444, 13
    %v1553 = vpop.permute.xlu0 %1552
    %1554 = vrot.lane.b32.xlu0 %v1453, 13
    %v1555 = vpop.permute.xlu0 %1554
    %1556 = vrot.lane.b32.xlu0 %v1462, 13
    %v1557 = vpop.permute.xlu0 %1556
    %1558 = vrot.lane.b32.xlu0 %v1471, 13
    %v1559 = vpop.permute.xlu0 %1558
    %1560 = vrot.lane.b32.xlu0 %v1480, 13
    %v1561 = vpop.permute.xlu0 %1560
    %1562 = vrot.lane.b32.xlu0 %v1489, 13
    %v1563 = vpop.permute.xlu0 %1562
    %1564 = vrot.lane.b32.xlu0 %v1498, 13
    %v1565 = vpop.permute.xlu0 %1564
    %1566 = vrot.lane.b32.xlu0 %v1507, 13
    %v1567 = vpop.permute.xlu0 %1566
    %1568 = vrot.lane.b32.xlu0 %v1516, 13
    %v1569 = vpop.permute.xlu0 %1568
    %1570 = vrot.lane.b32.xlu0 %v1525, 13
    %v1571 = vpop.permute.xlu0 %1570
    %1572 = vrot.lane.b32.xlu0 %v1534, 13
    %v1573 = vpop.permute.xlu0 %1572
    %1574 = vrot.lane.b32.xlu0 %v1543, 13
    %v1575 = vpop.permute.xlu0 %1574
    %vm1576 = vcmask 1045504
    %v1577 = vrot.slane %v414, 2
    %v1578 = vrot.slane %v461, 2
    %v1579 = vsel %vm1576, %v1577, %v1578
    %v1580 = vrot.slane %v416, 2
    %v1581 = vrot.slane %v462, 2
    %v1582 = vsel %vm1576, %v1580, %v1581
    %v1583 = vrot.slane %v418, 2
    %v1584 = vrot.slane %v463, 2
    %v1585 = vsel %vm1576, %v1583, %v1584
    %v1586 = vrot.slane %v420, 2
    %v1587 = vrot.slane %v464, 2
    %v1588 = vsel %vm1576, %v1586, %v1587
    %v1589 = vrot.slane %v422, 2
    %v1590 = vrot.slane %v465, 2
    %v1591 = vsel %vm1576, %v1589, %v1590
    %v1592 = vrot.slane %v424, 2
    %v1593 = vrot.slane %v466, 2
    %v1594 = vsel %vm1576, %v1592, %v1593
    %v1595 = vrot.slane %v426, 2
    %v1596 = vrot.slane %v467, 2
    %v1597 = vsel %vm1576, %v1595, %v1596
    %v1598 = vrot.slane %v428, 2
    %v1599 = vrot.slane %v468, 2
    %v1600 = vsel %vm1576, %v1598, %v1599
    %v1601 = vrot.slane %v430, 2
    %v1602 = vrot.slane %v469, 2
    %v1603 = vsel %vm1576, %v1601, %v1602
    %v1604 = vrot.slane %v432, 2
    %v1605 = vrot.slane %v470, 2
    %v1606 = vsel %vm1576, %v1604, %v1605
    %v1607 = vrot.slane %v434, 2
    %v1608 = vrot.slane %v471, 2
    %v1609 = vsel %vm1576, %v1607, %v1608
    %v1610 = vrot.slane %v436, 2
    %v1611 = vrot.slane %v472, 2
    %v1612 = vsel %vm1576, %v1610, %v1611
    %v1613 = vrot.slane %v438, 2
    %v1614 = vrot.slane %v473, 2
    %v1615 = vsel %vm1576, %v1613, %v1614
    %v1616 = vrot.slane %v440, 2
    %v1617 = vrot.slane %v474, 2
    %v1618 = vsel %vm1576, %v1616, %v1617
    %v1619 = vrot.slane %v442, 2
    %v1620 = vrot.slane %v475, 2
    %v1621 = vsel %vm1576, %v1619, %v1620
    %v1622 = vrot.slane %v444, 2
    %v1623 = vrot.slane %v476, 2
    %v1624 = vsel %vm1576, %v1622, %v1623
    %1625 = vrot.lane.b32.xlu0 %v1579, 16
    %v1626 = vpop.permute.xlu0 %1625
    %1627 = vrot.lane.b32.xlu0 %v1582, 16
    %v1628 = vpop.permute.xlu0 %1627
    %1629 = vrot.lane.b32.xlu0 %v1585, 16
    %v1630 = vpop.permute.xlu0 %1629
    %1631 = vrot.lane.b32.xlu0 %v1588, 16
    %v1632 = vpop.permute.xlu0 %1631
    %1633 = vrot.lane.b32.xlu0 %v1591, 16
    %v1634 = vpop.permute.xlu0 %1633
    %1635 = vrot.lane.b32.xlu0 %v1594, 16
    %v1636 = vpop.permute.xlu0 %1635
    %1637 = vrot.lane.b32.xlu0 %v1597, 16
    %v1638 = vpop.permute.xlu0 %1637
    %1639 = vrot.lane.b32.xlu0 %v1600, 16
    %v1640 = vpop.permute.xlu0 %1639
    %1641 = vrot.lane.b32.xlu0 %v1603, 16
    %v1642 = vpop.permute.xlu0 %1641
    %1643 = vrot.lane.b32.xlu0 %v1606, 16
    %v1644 = vpop.permute.xlu0 %1643
    %1645 = vrot.lane.b32.xlu0 %v1609, 16
    %v1646 = vpop.permute.xlu0 %1645
    %1647 = vrot.lane.b32.xlu0 %v1612, 16
    %v1648 = vpop.permute.xlu0 %1647
    %1649 = vrot.lane.b32.xlu0 %v1615, 16
    %v1650 = vpop.permute.xlu0 %1649
    %1651 = vrot.lane.b32.xlu0 %v1618, 16
    %v1652 = vpop.permute.xlu0 %1651
    %1653 = vrot.lane.b32.xlu0 %v1621, 16
    %v1654 = vpop.permute.xlu0 %1653
    %1655 = vrot.lane.b32.xlu0 %v1624, 16
    %v1656 = vpop.permute.xlu0 %1655
    %v1657 = vrot.slane %v510, 2
    %v1658 = vrot.slane %v557, 2
    %v1659 = vsel %vm1576, %v1657, %v1658
    %v1660 = vrot.slane %v512, 2
    %v1661 = vrot.slane %v558, 2
    %v1662 = vsel %vm1576, %v1660, %v1661
    %v1663 = vrot.slane %v514, 2
    %v1664 = vrot.slane %v559, 2
    %v1665 = vsel %vm1576, %v1663, %v1664
    %v1666 = vrot.slane %v516, 2
    %v1667 = vrot.slane %v560, 2
    %v1668 = vsel %vm1576, %v1666, %v1667
    %v1669 = vrot.slane %v518, 2
    %v1670 = vrot.slane %v561, 2
    %v1671 = vsel %vm1576, %v1669, %v1670
    %v1672 = vrot.slane %v520, 2
    %v1673 = vrot.slane %v562, 2
    %v1674 = vsel %vm1576, %v1672, %v1673
    %v1675 = vrot.slane %v522, 2
    %v1676 = vrot.slane %v563, 2
    %v1677 = vsel %vm1576, %v1675, %v1676
    %v1678 = vrot.slane %v524, 2
    %v1679 = vrot.slane %v564, 2
    %v1680 = vsel %vm1576, %v1678, %v1679
    %v1681 = vrot.slane %v526, 2
    %v1682 = vrot.slane %v565, 2
    %v1683 = vsel %vm1576, %v1681, %v1682
    %v1684 = vrot.slane %v528, 2
    %v1685 = vrot.slane %v566, 2
    %v1686 = vsel %vm1576, %v1684, %v1685
    %v1687 = vrot.slane %v530, 2
    %v1688 = vrot.slane %v567, 2
    %v1689 = vsel %vm1576, %v1687, %v1688
    %v1690 = vrot.slane %v532, 2
    %v1691 = vrot.slane %v568, 2
    %v1692 = vsel %vm1576, %v1690, %v1691
    %v1693 = vrot.slane %v534, 2
    %v1694 = vrot.slane %v569, 2
    %v1695 = vsel %vm1576, %v1693, %v1694
    %v1696 = vrot.slane %v536, 2
    %v1697 = vrot.slane %v570, 2
    %v1698 = vsel %vm1576, %v1696, %v1697
    %v1699 = vrot.slane %v538, 2
    %v1700 = vrot.slane %v571, 2
    %v1701 = vsel %vm1576, %v1699, %v1700
    %v1702 = vrot.slane %v540, 2
    %v1703 = vrot.slane %v572, 2
    %v1704 = vsel %vm1576, %v1702, %v1703
    %1705 = vrot.lane.b32.xlu0 %v1659, 17
    %v1706 = vpop.permute.xlu0 %1705
    %1707 = vrot.lane.b32.xlu0 %v1662, 17
    %v1708 = vpop.permute.xlu0 %1707
    %1709 = vrot.lane.b32.xlu0 %v1665, 17
    %v1710 = vpop.permute.xlu0 %1709
    %1711 = vrot.lane.b32.xlu0 %v1668, 17
    %v1712 = vpop.permute.xlu0 %1711
    %1713 = vrot.lane.b32.xlu0 %v1671, 17
    %v1714 = vpop.permute.xlu0 %1713
    %1715 = vrot.lane.b32.xlu0 %v1674, 17
    %v1716 = vpop.permute.xlu0 %1715
    %1717 = vrot.lane.b32.xlu0 %v1677, 17
    %v1718 = vpop.permute.xlu0 %1717
    %1719 = vrot.lane.b32.xlu0 %v1680, 17
    %v1720 = vpop.permute.xlu0 %1719
    %1721 = vrot.lane.b32.xlu0 %v1683, 17
    %v1722 = vpop.permute.xlu0 %1721
    %1723 = vrot.lane.b32.xlu0 %v1686, 17
    %v1724 = vpop.permute.xlu0 %1723
    %1725 = vrot.lane.b32.xlu0 %v1689, 17
    %v1726 = vpop.permute.xlu0 %1725
    %1727 = vrot.lane.b32.xlu0 %v1692, 17
    %v1728 = vpop.permute.xlu0 %1727
    %1729 = vrot.lane.b32.xlu0 %v1695, 17
    %v1730 = vpop.permute.xlu0 %1729
    %1731 = vrot.lane.b32.xlu0 %v1698, 17
    %v1732 = vpop.permute.xlu0 %1731
    %1733 = vrot.lane.b32.xlu0 %v1701, 17
    %v1734 = vpop.permute.xlu0 %1733
    %1735 = vrot.lane.b32.xlu0 %v1704, 17
    %v1736 = vpop.permute.xlu0 %1735
    %vm1737 = vsmask.f32 5376
    %v1738 = vrot.slane %v630, 2
    %v1739 = vrot.slane %v632, 3
    %v1740 = vor.u32 %v1738, %v1739
    %v1741 = vrot.slane %v1227, 2
    %v1742 = vrot.slane %v636, 3
    %v1743 = vor.u32 %v1741, %v1742
    %v1744 = vsel %vm1737, %v1740, %v1743
    %v1745 = vrot.slane %v640, 2
    %v1746 = vrot.slane %v642, 3
    %v1747 = vor.u32 %v1745, %v1746
    %v1748 = vrot.slane %v1236, 2
    %v1749 = vrot.slane %v646, 3
    %v1750 = vor.u32 %v1748, %v1749
    %v1751 = vsel %vm1737, %v1747, %v1750
    %v1752 = vrot.slane %v650, 2
    %v1753 = vrot.slane %v652, 3
    %v1754 = vor.u32 %v1752, %v1753
    %v1755 = vrot.slane %v1245, 2
    %v1756 = vrot.slane %v656, 3
    %v1757 = vor.u32 %v1755, %v1756
    %v1758 = vsel %vm1737, %v1754, %v1757
    %v1759 = vrot.slane %v660, 2
    %v1760 = vrot.slane %v662, 3
    %v1761 = vor.u32 %v1759, %v1760
    %v1762 = vrot.slane %v1254, 2
    %v1763 = vrot.slane %v666, 3
    %v1764 = vor.u32 %v1762, %v1763
    %v1765 = vsel %vm1737, %v1761, %v1764
    %v1766 = vrot.slane %v670, 2
    %v1767 = vrot.slane %v672, 3
    %v1768 = vor.u32 %v1766, %v1767
    %v1769 = vrot.slane %v1263, 2
    %v1770 = vrot.slane %v676, 3
    %v1771 = vor.u32 %v1769, %v1770
    %v1772 = vsel %vm1737, %v1768, %v1771
    %v1773 = vrot.slane %v680, 2
    %v1774 = vrot.slane %v682, 3
    %v1775 = vor.u32 %v1773, %v1774
    %v1776 = vrot.slane %v1272, 2
    %v1777 = vrot.slane %v686, 3
    %v1778 = vor.u32 %v1776, %v1777
    %v1779 = vsel %vm1737, %v1775, %v1778
    %v1780 = vrot.slane %v690, 2
    %v1781 = vrot.slane %v692, 3
    %v1782 = vor.u32 %v1780, %v1781
    %v1783 = vrot.slane %v1281, 2
    %v1784 = vrot.slane %v696, 3
    %v1785 = vor.u32 %v1783, %v1784
    %v1786 = vsel %vm1737, %v1782, %v1785
    %v1787 = vrot.slane %v700, 2
    %v1788 = vrot.slane %v702, 3
    %v1789 = vor.u32 %v1787, %v1788
    %v1790 = vrot.slane %v1290, 2
    %v1791 = vrot.slane %v706, 3
    %v1792 = vor.u32 %v1790, %v1791
    %v1793 = vsel %vm1737, %v1789, %v1792
    %v1794 = vrot.slane %v710, 2
    %v1795 = vrot.slane %v712, 3
    %v1796 = vor.u32 %v1794, %v1795
    %v1797 = vrot.slane %v1299, 2
    %v1798 = vrot.slane %v716, 3
    %v1799 = vor.u32 %v1797, %v1798
    %v1800 = vsel %vm1737, %v1796, %v1799
    %v1801 = vrot.slane %v720, 2
    %v1802 = vrot.slane %v722, 3
    %v1803 = vor.u32 %v1801, %v1802
    %v1804 = vrot.slane %v1308, 2
    %v1805 = vrot.slane %v726, 3
    %v1806 = vor.u32 %v1804, %v1805
    %v1807 = vsel %vm1737, %v1803, %v1806
    %v1808 = vrot.slane %v730, 2
    %v1809 = vrot.slane %v732, 3
    %v1810 = vor.u32 %v1808, %v1809
    %v1811 = vrot.slane %v1317, 2
    %v1812 = vrot.slane %v736, 3
    %v1813 = vor.u32 %v1811, %v1812
    %v1814 = vsel %vm1737, %v1810, %v1813
    %v1815 = vrot.slane %v740, 2
    %v1816 = vrot.slane %v742, 3
    %v1817 = vor.u32 %v1815, %v1816
    %v1818 = vrot.slane %v1326, 2
    %v1819 = vrot.slane %v746, 3
    %v1820 = vor.u32 %v1818, %v1819
    %v1821 = vsel %vm1737, %v1817, %v1820
    %v1822 = vrot.slane %v750, 2
    %v1823 = vrot.slane %v752, 3
    %v1824 = vor.u32 %v1822, %v1823
    %v1825 = vrot.slane %v1335, 2
    %v1826 = vrot.slane %v756, 3
    %v1827 = vor.u32 %v1825, %v1826
    %v1828 = vsel %vm1737, %v1824, %v1827
    %v1829 = vrot.slane %v760, 2
    %v1830 = vrot.slane %v762, 3
    %v1831 = vor.u32 %v1829, %v1830
    %v1832 = vrot.slane %v1344, 2
    %v1833 = vrot.slane %v766, 3
    %v1834 = vor.u32 %v1832, %v1833
    %v1835 = vsel %vm1737, %v1831, %v1834
    %v1836 = vrot.slane %v770, 2
    %v1837 = vrot.slane %v772, 3
    %v1838 = vor.u32 %v1836, %v1837
    %v1839 = vrot.slane %v1353, 2
    %v1840 = vrot.slane %v776, 3
    %v1841 = vor.u32 %v1839, %v1840
    %v1842 = vsel %vm1737, %v1838, %v1841
    %v1843 = vrot.slane %v780, 2
    %v1844 = vrot.slane %v782, 3
    %v1845 = vor.u32 %v1843, %v1844
    %v1846 = vrot.slane %v1362, 2
    %v1847 = vrot.slane %v786, 3
    %v1848 = vor.u32 %v1846, %v1847
    %v1849 = vsel %vm1737, %v1845, %v1848
    %1850 = vrot.lane.b32.xlu0 %v1744, 20
    %v1851 = vpop.permute.xlu0 %1850
    %1852 = vrot.lane.b32.xlu0 %v1751, 20
    %v1853 = vpop.permute.xlu0 %1852
    %1854 = vrot.lane.b32.xlu0 %v1758, 20
    %v1855 = vpop.permute.xlu0 %1854
    %1856 = vrot.lane.b32.xlu0 %v1765, 20
    %v1857 = vpop.permute.xlu0 %1856
    %1858 = vrot.lane.b32.xlu0 %v1772, 20
    %v1859 = vpop.permute.xlu0 %1858
    %1860 = vrot.lane.b32.xlu0 %v1779, 20
    %v1861 = vpop.permute.xlu0 %1860
    %1862 = vrot.lane.b32.xlu0 %v1786, 20
    %v1863 = vpop.permute.xlu0 %1862
    %1864 = vrot.lane.b32.xlu0 %v1793, 20
    %v1865 = vpop.permute.xlu0 %1864
    %1866 = vrot.lane.b32.xlu0 %v1800, 20
    %v1867 = vpop.permute.xlu0 %1866
    %1868 = vrot.lane.b32.xlu0 %v1807, 20
    %v1869 = vpop.permute.xlu0 %1868
    %1870 = vrot.lane.b32.xlu0 %v1814, 20
    %v1871 = vpop.permute.xlu0 %1870
    %1872 = vrot.lane.b32.xlu0 %v1821, 20
    %v1873 = vpop.permute.xlu0 %1872
    %1874 = vrot.lane.b32.xlu0 %v1828, 20
    %v1875 = vpop.permute.xlu0 %1874
    %1876 = vrot.lane.b32.xlu0 %v1835, 20
    %v1877 = vpop.permute.xlu0 %1876
    %1878 = vrot.lane.b32.xlu0 %v1842, 20
    %v1879 = vpop.permute.xlu0 %1878
    %1880 = vrot.lane.b32.xlu0 %v1849, 20
    %v1881 = vpop.permute.xlu0 %1880
    %v1882 = vrot.slane %v822, 2
    %v1883 = vrot.slane %v824, 3
    %v1884 = vor.u32 %v1882, %v1883
    %v1885 = vrot.slane %v1403, 2
    %v1886 = vrot.slane %v828, 3
    %v1887 = vor.u32 %v1885, %v1886
    %v1888 = vsel %vm1737, %v1884, %v1887
    %v1889 = vrot.slane %v832, 2
    %v1890 = vrot.slane %v834, 3
    %v1891 = vor.u32 %v1889, %v1890
    %v1892 = vrot.slane %v1412, 2
    %v1893 = vrot.slane %v838, 3
    %v1894 = vor.u32 %v1892, %v1893
    %v1895 = vsel %vm1737, %v1891, %v1894
    %v1896 = vrot.slane %v842, 2
    %v1897 = vrot.slane %v844, 3
    %v1898 = vor.u32 %v1896, %v1897
    %v1899 = vrot.slane %v1421, 2
    %v1900 = vrot.slane %v848, 3
    %v1901 = vor.u32 %v1899, %v1900
    %v1902 = vsel %vm1737, %v1898, %v1901
    %v1903 = vrot.slane %v852, 2
    %v1904 = vrot.slane %v854, 3
    %v1905 = vor.u32 %v1903, %v1904
    %v1906 = vrot.slane %v1430, 2
    %v1907 = vrot.slane %v858, 3
    %v1908 = vor.u32 %v1906, %v1907
    %v1909 = vsel %vm1737, %v1905, %v1908
    %v1910 = vrot.slane %v862, 2
    %v1911 = vrot.slane %v864, 3
    %v1912 = vor.u32 %v1910, %v1911
    %v1913 = vrot.slane %v1439, 2
    %v1914 = vrot.slane %v868, 3
    %v1915 = vor.u32 %v1913, %v1914
    %v1916 = vsel %vm1737, %v1912, %v1915
    %v1917 = vrot.slane %v872, 2
    %v1918 = vrot.slane %v874, 3
    %v1919 = vor.u32 %v1917, %v1918
    %v1920 = vrot.slane %v1448, 2
    %v1921 = vrot.slane %v878, 3
    %v1922 = vor.u32 %v1920, %v1921
    %v1923 = vsel %vm1737, %v1919, %v1922
    %v1924 = vrot.slane %v882, 2
    %v1925 = vrot.slane %v884, 3
    %v1926 = vor.u32 %v1924, %v1925
    %v1927 = vrot.slane %v1457, 2
    %v1928 = vrot.slane %v888, 3
    %v1929 = vor.u32 %v1927, %v1928
    %v1930 = vsel %vm1737, %v1926, %v1929
    %v1931 = vrot.slane %v892, 2
    %v1932 = vrot.slane %v894, 3
    %v1933 = vor.u32 %v1931, %v1932
    %v1934 = vrot.slane %v1466, 2
    %v1935 = vrot.slane %v898, 3
    %v1936 = vor.u32 %v1934, %v1935
    %v1937 = vsel %vm1737, %v1933, %v1936
    %v1938 = vrot.slane %v902, 2
    %v1939 = vrot.slane %v904, 3
    %v1940 = vor.u32 %v1938, %v1939
    %v1941 = vrot.slane %v1475, 2
    %v1942 = vrot.slane %v908, 3
    %v1943 = vor.u32 %v1941, %v1942
    %v1944 = vsel %vm1737, %v1940, %v1943
    %v1945 = vrot.slane %v912, 2
    %v1946 = vrot.slane %v914, 3
    %v1947 = vor.u32 %v1945, %v1946
    %v1948 = vrot.slane %v1484, 2
    %v1949 = vrot.slane %v918, 3
    %v1950 = vor.u32 %v1948, %v1949
    %v1951 = vsel %vm1737, %v1947, %v1950
    %v1952 = vrot.slane %v922, 2
    %v1953 = vrot.slane %v924, 3
    %v1954 = vor.u32 %v1952, %v1953
    %v1955 = vrot.slane %v1493, 2
    %v1956 = vrot.slane %v928, 3
    %v1957 = vor.u32 %v1955, %v1956
    %v1958 = vsel %vm1737, %v1954, %v1957
    %v1959 = vrot.slane %v932, 2
    %v1960 = vrot.slane %v934, 3
    %v1961 = vor.u32 %v1959, %v1960
    %v1962 = vrot.slane %v1502, 2
    %v1963 = vrot.slane %v938, 3
    %v1964 = vor.u32 %v1962, %v1963
    %v1965 = vsel %vm1737, %v1961, %v1964
    %v1966 = vrot.slane %v942, 2
    %v1967 = vrot.slane %v944, 3
    %v1968 = vor.u32 %v1966, %v1967
    %v1969 = vrot.slane %v1511, 2
    %v1970 = vrot.slane %v948, 3
    %v1971 = vor.u32 %v1969, %v1970
    %v1972 = vsel %vm1737, %v1968, %v1971
    %v1973 = vrot.slane %v952, 2
    %v1974 = vrot.slane %v954, 3
    %v1975 = vor.u32 %v1973, %v1974
    %v1976 = vrot.slane %v1520, 2
    %v1977 = vrot.slane %v958, 3
    %v1978 = vor.u32 %v1976, %v1977
    %v1979 = vsel %vm1737, %v1975, %v1978
    %v1980 = vrot.slane %v962, 2
    %v1981 = vrot.slane %v964, 3
    %v1982 = vor.u32 %v1980, %v1981
    %v1983 = vrot.slane %v1529, 2
    %v1984 = vrot.slane %v968, 3
    %v1985 = vor.u32 %v1983, %v1984
    %v1986 = vsel %vm1737, %v1982, %v1985
    %v1987 = vrot.slane %v972, 2
    %v1988 = vrot.slane %v974, 3
    %v1989 = vor.u32 %v1987, %v1988
    %v1990 = vrot.slane %v1538, 2
    %v1991 = vrot.slane %v978, 3
    %v1992 = vor.u32 %v1990, %v1991
    %v1993 = vsel %vm1737, %v1989, %v1992
    %1994 = vrot.lane.b32.xlu0 %v1888, 21
    %v1995 = vpop.permute.xlu0 %1994
    %1996 = vrot.lane.b32.xlu0 %v1895, 21
    %v1997 = vpop.permute.xlu0 %1996
    %1998 = vrot.lane.b32.xlu0 %v1902, 21
    %v1999 = vpop.permute.xlu0 %1998
    %2000 = vrot.lane.b32.xlu0 %v1909, 21
    %v2001 = vpop.permute.xlu0 %2000
    %2002 = vrot.lane.b32.xlu0 %v1916, 21
    %v2003 = vpop.permute.xlu0 %2002
    %2004 = vrot.lane.b32.xlu0 %v1923, 21
    %v2005 = vpop.permute.xlu0 %2004
    %2006 = vrot.lane.b32.xlu0 %v1930, 21
    %v2007 = vpop.permute.xlu0 %2006
    %2008 = vrot.lane.b32.xlu0 %v1937, 21
    %v2009 = vpop.permute.xlu0 %2008
    %2010 = vrot.lane.b32.xlu0 %v1944, 21
    %v2011 = vpop.permute.xlu0 %2010
    %2012 = vrot.lane.b32.xlu0 %v1951, 21
    %v2013 = vpop.permute.xlu0 %2012
    %2014 = vrot.lane.b32.xlu0 %v1958, 21
    %v2015 = vpop.permute.xlu0 %2014
    %2016 = vrot.lane.b32.xlu0 %v1965, 21
    %v2017 = vpop.permute.xlu0 %2016
    %2018 = vrot.lane.b32.xlu0 %v1972, 21
    %v2019 = vpop.permute.xlu0 %2018
    %2020 = vrot.lane.b32.xlu0 %v1979, 21
    %v2021 = vpop.permute.xlu0 %2020
    %2022 = vrot.lane.b32.xlu0 %v1986, 21
    %v2023 = vpop.permute.xlu0 %2022
    %2024 = vrot.lane.b32.xlu0 %v1993, 21
    %v2025 = vpop.permute.xlu0 %2024
    %vm2026 = vcmask 1044480
    %v2027 = vrot.slane %v414, 3
    %v2028 = vrot.slane %v461, 3
    %v2029 = vsel %vm2026, %v2027, %v2028
    %v2030 = vrot.slane %v416, 3
    %v2031 = vrot.slane %v462, 3
    %v2032 = vsel %vm2026, %v2030, %v2031
    %v2033 = vrot.slane %v418, 3
    %v2034 = vrot.slane %v463, 3
    %v2035 = vsel %vm2026, %v2033, %v2034
    %v2036 = vrot.slane %v420, 3
    %v2037 = vrot.slane %v464, 3
    %v2038 = vsel %vm2026, %v2036, %v2037
    %v2039 = vrot.slane %v422, 3
    %v2040 = vrot.slane %v465, 3
    %v2041 = vsel %vm2026, %v2039, %v2040
    %v2042 = vrot.slane %v424, 3
    %v2043 = vrot.slane %v466, 3
    %v2044 = vsel %vm2026, %v2042, %v2043
    %v2045 = vrot.slane %v426, 3
    %v2046 = vrot.slane %v467, 3
    %v2047 = vsel %vm2026, %v2045, %v2046
    %v2048 = vrot.slane %v428, 3
    %v2049 = vrot.slane %v468, 3
    %v2050 = vsel %vm2026, %v2048, %v2049
    %v2051 = vrot.slane %v430, 3
    %v2052 = vrot.slane %v469, 3
    %v2053 = vsel %vm2026, %v2051, %v2052
    %v2054 = vrot.slane %v432, 3
    %v2055 = vrot.slane %v470, 3
    %v2056 = vsel %vm2026, %v2054, %v2055
    %v2057 = vrot.slane %v434, 3
    %v2058 = vrot.slane %v471, 3
    %v2059 = vsel %vm2026, %v2057, %v2058
    %v2060 = vrot.slane %v436, 3
    %v2061 = vrot.slane %v472, 3
    %v2062 = vsel %vm2026, %v2060, %v2061
    %v2063 = vrot.slane %v438, 3
    %v2064 = vrot.slane %v473, 3
    %v2065 = vsel %vm2026, %v2063, %v2064
    %v2066 = vrot.slane %v440, 3
    %v2067 = vrot.slane %v474, 3
    %v2068 = vsel %vm2026, %v2066, %v2067
    %v2069 = vrot.slane %v442, 3
    %v2070 = vrot.slane %v475, 3
    %v2071 = vsel %vm2026, %v2069, %v2070
    %v2072 = vrot.slane %v444, 3
    %v2073 = vrot.slane %v476, 3
    %v2074 = vsel %vm2026, %v2072, %v2073
    %2075 = vrot.lane.b32.xlu0 %v2029, 24
    %v2076 = vpop.permute.xlu0 %2075
    %2077 = vrot.lane.b32.xlu0 %v2032, 24
    %v2078 = vpop.permute.xlu0 %2077
    %2079 = vrot.lane.b32.xlu0 %v2035, 24
    %v2080 = vpop.permute.xlu0 %2079
    %2081 = vrot.lane.b32.xlu0 %v2038, 24
    %v2082 = vpop.permute.xlu0 %2081
    %2083 = vrot.lane.b32.xlu0 %v2041, 24
    %v2084 = vpop.permute.xlu0 %2083
    %2085 = vrot.lane.b32.xlu0 %v2044, 24
    %v2086 = vpop.permute.xlu0 %2085
    %2087 = vrot.lane.b32.xlu0 %v2047, 24
    %v2088 = vpop.permute.xlu0 %2087
    %2089 = vrot.lane.b32.xlu0 %v2050, 24
    %v2090 = vpop.permute.xlu0 %2089
    %2091 = vrot.lane.b32.xlu0 %v2053, 24
    %v2092 = vpop.permute.xlu0 %2091
    %2093 = vrot.lane.b32.xlu0 %v2056, 24
    %v2094 = vpop.permute.xlu0 %2093
    %2095 = vrot.lane.b32.xlu0 %v2059, 24
    %v2096 = vpop.permute.xlu0 %2095
    %2097 = vrot.lane.b32.xlu0 %v2062, 24
    %v2098 = vpop.permute.xlu0 %2097
    %2099 = vrot.lane.b32.xlu0 %v2065, 24
    %v2100 = vpop.permute.xlu0 %2099
    %2101 = vrot.lane.b32.xlu0 %v2068, 24
    %v2102 = vpop.permute.xlu0 %2101
    %2103 = vrot.lane.b32.xlu0 %v2071, 24
    %v2104 = vpop.permute.xlu0 %2103
    %2105 = vrot.lane.b32.xlu0 %v2074, 24
    %v2106 = vpop.permute.xlu0 %2105
    %v2107 = vrot.slane %v510, 3
    %v2108 = vrot.slane %v557, 3
    %v2109 = vsel %vm2026, %v2107, %v2108
    %v2110 = vrot.slane %v512, 3
    %v2111 = vrot.slane %v558, 3
    %v2112 = vsel %vm2026, %v2110, %v2111
    %v2113 = vrot.slane %v514, 3
    %v2114 = vrot.slane %v559, 3
    %v2115 = vsel %vm2026, %v2113, %v2114
    %v2116 = vrot.slane %v516, 3
    %v2117 = vrot.slane %v560, 3
    %v2118 = vsel %vm2026, %v2116, %v2117
    %v2119 = vrot.slane %v518, 3
    %v2120 = vrot.slane %v561, 3
    %v2121 = vsel %vm2026, %v2119, %v2120
    %v2122 = vrot.slane %v520, 3
    %v2123 = vrot.slane %v562, 3
    %v2124 = vsel %vm2026, %v2122, %v2123
    %v2125 = vrot.slane %v522, 3
    %v2126 = vrot.slane %v563, 3
    %v2127 = vsel %vm2026, %v2125, %v2126
    %v2128 = vrot.slane %v524, 3
    %v2129 = vrot.slane %v564, 3
    %v2130 = vsel %vm2026, %v2128, %v2129
    %v2131 = vrot.slane %v526, 3
    %v2132 = vrot.slane %v565, 3
    %v2133 = vsel %vm2026, %v2131, %v2132
    %v2134 = vrot.slane %v528, 3
    %v2135 = vrot.slane %v566, 3
    %v2136 = vsel %vm2026, %v2134, %v2135
    %v2137 = vrot.slane %v530, 3
    %v2138 = vrot.slane %v567, 3
    %v2139 = vsel %vm2026, %v2137, %v2138
    %v2140 = vrot.slane %v532, 3
    %v2141 = vrot.slane %v568, 3
    %v2142 = vsel %vm2026, %v2140, %v2141
    %v2143 = vrot.slane %v534, 3
    %v2144 = vrot.slane %v569, 3
    %v2145 = vsel %vm2026, %v2143, %v2144
    %v2146 = vrot.slane %v536, 3
    %v2147 = vrot.slane %v570, 3
    %v2148 = vsel %vm2026, %v2146, %v2147
    %v2149 = vrot.slane %v538, 3
    %v2150 = vrot.slane %v571, 3
    %v2151 = vsel %vm2026, %v2149, %v2150
    %v2152 = vrot.slane %v540, 3
    %v2153 = vrot.slane %v572, 3
    %v2154 = vsel %vm2026, %v2152, %v2153
    %2155 = vrot.lane.b32.xlu0 %v2109, 25
    %v2156 = vpop.permute.xlu0 %2155
    %2157 = vrot.lane.b32.xlu0 %v2112, 25
    %v2158 = vpop.permute.xlu0 %2157
    %2159 = vrot.lane.b32.xlu0 %v2115, 25
    %v2160 = vpop.permute.xlu0 %2159
    %2161 = vrot.lane.b32.xlu0 %v2118, 25
    %v2162 = vpop.permute.xlu0 %2161
    %2163 = vrot.lane.b32.xlu0 %v2121, 25
    %v2164 = vpop.permute.xlu0 %2163
    %2165 = vrot.lane.b32.xlu0 %v2124, 25
    %v2166 = vpop.permute.xlu0 %2165
    %2167 = vrot.lane.b32.xlu0 %v2127, 25
    %v2168 = vpop.permute.xlu0 %2167
    %2169 = vrot.lane.b32.xlu0 %v2130, 25
    %v2170 = vpop.permute.xlu0 %2169
    %2171 = vrot.lane.b32.xlu0 %v2133, 25
    %v2172 = vpop.permute.xlu0 %2171
    %2173 = vrot.lane.b32.xlu0 %v2136, 25
    %v2174 = vpop.permute.xlu0 %2173
    %2175 = vrot.lane.b32.xlu0 %v2139, 25
    %v2176 = vpop.permute.xlu0 %2175
    %2177 = vrot.lane.b32.xlu0 %v2142, 25
    %v2178 = vpop.permute.xlu0 %2177
    %2179 = vrot.lane.b32.xlu0 %v2145, 25
    %v2180 = vpop.permute.xlu0 %2179
    %2181 = vrot.lane.b32.xlu0 %v2148, 25
    %v2182 = vpop.permute.xlu0 %2181
    %2183 = vrot.lane.b32.xlu0 %v2151, 25
    %v2184 = vpop.permute.xlu0 %2183
    %2185 = vrot.lane.b32.xlu0 %v2154, 25
    %v2186 = vpop.permute.xlu0 %2185
    %vm2187 = vsmask.f32 4352
    %v2188 = vrot.slane %v630, 3
    %v2189 = vrot.slane %v632, 4
    %v2190 = vor.u32 %v2188, %v2189
    %v2191 = vrot.slane %v1227, 3
    %v2192 = vrot.slane %v636, 4
    %v2193 = vor.u32 %v2191, %v2192
    %v2194 = vsel %vm2187, %v2190, %v2193
    %v2195 = vrot.slane %v640, 3
    %v2196 = vrot.slane %v642, 4
    %v2197 = vor.u32 %v2195, %v2196
    %v2198 = vrot.slane %v1236, 3
    %v2199 = vrot.slane %v646, 4
    %v2200 = vor.u32 %v2198, %v2199
    %v2201 = vsel %vm2187, %v2197, %v2200
    %v2202 = vrot.slane %v650, 3
    %v2203 = vrot.slane %v652, 4
    %v2204 = vor.u32 %v2202, %v2203
    %v2205 = vrot.slane %v1245, 3
    %v2206 = vrot.slane %v656, 4
    %v2207 = vor.u32 %v2205, %v2206
    %v2208 = vsel %vm2187, %v2204, %v2207
    %v2209 = vrot.slane %v660, 3
    %v2210 = vrot.slane %v662, 4
    %v2211 = vor.u32 %v2209, %v2210
    %v2212 = vrot.slane %v1254, 3
    %v2213 = vrot.slane %v666, 4
    %v2214 = vor.u32 %v2212, %v2213
    %v2215 = vsel %vm2187, %v2211, %v2214
    %v2216 = vrot.slane %v670, 3
    %v2217 = vrot.slane %v672, 4
    %v2218 = vor.u32 %v2216, %v2217
    %v2219 = vrot.slane %v1263, 3
    %v2220 = vrot.slane %v676, 4
    %v2221 = vor.u32 %v2219, %v2220
    %v2222 = vsel %vm2187, %v2218, %v2221
    %v2223 = vrot.slane %v680, 3
    %v2224 = vrot.slane %v682, 4
    %v2225 = vor.u32 %v2223, %v2224
    %v2226 = vrot.slane %v1272, 3
    %v2227 = vrot.slane %v686, 4
    %v2228 = vor.u32 %v2226, %v2227
    %v2229 = vsel %vm2187, %v2225, %v2228
    %v2230 = vrot.slane %v690, 3
    %v2231 = vrot.slane %v692, 4
    %v2232 = vor.u32 %v2230, %v2231
    %v2233 = vrot.slane %v1281, 3
    %v2234 = vrot.slane %v696, 4
    %v2235 = vor.u32 %v2233, %v2234
    %v2236 = vsel %vm2187, %v2232, %v2235
    %v2237 = vrot.slane %v700, 3
    %v2238 = vrot.slane %v702, 4
    %v2239 = vor.u32 %v2237, %v2238
    %v2240 = vrot.slane %v1290, 3
    %v2241 = vrot.slane %v706, 4
    %v2242 = vor.u32 %v2240, %v2241
    %v2243 = vsel %vm2187, %v2239, %v2242
    %v2244 = vrot.slane %v710, 3
    %v2245 = vrot.slane %v712, 4
    %v2246 = vor.u32 %v2244, %v2245
    %v2247 = vrot.slane %v1299, 3
    %v2248 = vrot.slane %v716, 4
    %v2249 = vor.u32 %v2247, %v2248
    %v2250 = vsel %vm2187, %v2246, %v2249
    %v2251 = vrot.slane %v720, 3
    %v2252 = vrot.slane %v722, 4
    %v2253 = vor.u32 %v2251, %v2252
    %v2254 = vrot.slane %v1308, 3
    %v2255 = vrot.slane %v726, 4
    %v2256 = vor.u32 %v2254, %v2255
    %v2257 = vsel %vm2187, %v2253, %v2256
    %v2258 = vrot.slane %v730, 3
    %v2259 = vrot.slane %v732, 4
    %v2260 = vor.u32 %v2258, %v2259
    %v2261 = vrot.slane %v1317, 3
    %v2262 = vrot.slane %v736, 4
    %v2263 = vor.u32 %v2261, %v2262
    %v2264 = vsel %vm2187, %v2260, %v2263
    %v2265 = vrot.slane %v740, 3
    %v2266 = vrot.slane %v742, 4
    %v2267 = vor.u32 %v2265, %v2266
    %v2268 = vrot.slane %v1326, 3
    %v2269 = vrot.slane %v746, 4
    %v2270 = vor.u32 %v2268, %v2269
    %v2271 = vsel %vm2187, %v2267, %v2270
    %v2272 = vrot.slane %v750, 3
    %v2273 = vrot.slane %v752, 4
    %v2274 = vor.u32 %v2272, %v2273
    %v2275 = vrot.slane %v1335, 3
    %v2276 = vrot.slane %v756, 4
    %v2277 = vor.u32 %v2275, %v2276
    %v2278 = vsel %vm2187, %v2274, %v2277
    %v2279 = vrot.slane %v760, 3
    %v2280 = vrot.slane %v762, 4
    %v2281 = vor.u32 %v2279, %v2280
    %v2282 = vrot.slane %v1344, 3
    %v2283 = vrot.slane %v766, 4
    %v2284 = vor.u32 %v2282, %v2283
    %v2285 = vsel %vm2187, %v2281, %v2284
    %v2286 = vrot.slane %v770, 3
    %v2287 = vrot.slane %v772, 4
    %v2288 = vor.u32 %v2286, %v2287
    %v2289 = vrot.slane %v1353, 3
    %v2290 = vrot.slane %v776, 4
    %v2291 = vor.u32 %v2289, %v2290
    %v2292 = vsel %vm2187, %v2288, %v2291
    %v2293 = vrot.slane %v780, 3
    %v2294 = vrot.slane %v782, 4
    %v2295 = vor.u32 %v2293, %v2294
    %v2296 = vrot.slane %v1362, 3
    %v2297 = vrot.slane %v786, 4
    %v2298 = vor.u32 %v2296, %v2297
    %v2299 = vsel %vm2187, %v2295, %v2298
    %2300 = vrot.lane.b32.xlu0 %v2194, 28
    %v2301 = vpop.permute.xlu0 %2300
    %2302 = vrot.lane.b32.xlu0 %v2201, 28
    %v2303 = vpop.permute.xlu0 %2302
    %2304 = vrot.lane.b32.xlu0 %v2208, 28
    %v2305 = vpop.permute.xlu0 %2304
    %2306 = vrot.lane.b32.xlu0 %v2215, 28
    %v2307 = vpop.permute.xlu0 %2306
    %2308 = vrot.lane.b32.xlu0 %v2222, 28
    %v2309 = vpop.permute.xlu0 %2308
    %2310 = vrot.lane.b32.xlu0 %v2229, 28
    %v2311 = vpop.permute.xlu0 %2310
    %2312 = vrot.lane.b32.xlu0 %v2236, 28
    %v2313 = vpop.permute.xlu0 %2312
    %2314 = vrot.lane.b32.xlu0 %v2243, 28
    %v2315 = vpop.permute.xlu0 %2314
    %2316 = vrot.lane.b32.xlu0 %v2250, 28
    %v2317 = vpop.permute.xlu0 %2316
    %2318 = vrot.lane.b32.xlu0 %v2257, 28
    %v2319 = vpop.permute.xlu0 %2318
    %2320 = vrot.lane.b32.xlu0 %v2264, 28
    %v2321 = vpop.permute.xlu0 %2320
    %2322 = vrot.lane.b32.xlu0 %v2271, 28
    %v2323 = vpop.permute.xlu0 %2322
    %2324 = vrot.lane.b32.xlu0 %v2278, 28
    %v2325 = vpop.permute.xlu0 %2324
    %2326 = vrot.lane.b32.xlu0 %v2285, 28
    %v2327 = vpop.permute.xlu0 %2326
    %2328 = vrot.lane.b32.xlu0 %v2292, 28
    %v2329 = vpop.permute.xlu0 %2328
    %2330 = vrot.lane.b32.xlu0 %v2299, 28
    %v2331 = vpop.permute.xlu0 %2330
    %v2332 = vrot.slane %v822, 3
    %v2333 = vrot.slane %v824, 4
    %v2334 = vor.u32 %v2332, %v2333
    %v2335 = vrot.slane %v1403, 3
    %v2336 = vrot.slane %v828, 4
    %v2337 = vor.u32 %v2335, %v2336
    %v2338 = vsel %vm2187, %v2334, %v2337
    %v2339 = vrot.slane %v832, 3
    %v2340 = vrot.slane %v834, 4
    %v2341 = vor.u32 %v2339, %v2340
    %v2342 = vrot.slane %v1412, 3
    %v2343 = vrot.slane %v838, 4
    %v2344 = vor.u32 %v2342, %v2343
    %v2345 = vsel %vm2187, %v2341, %v2344
    %v2346 = vrot.slane %v842, 3
    %v2347 = vrot.slane %v844, 4
    %v2348 = vor.u32 %v2346, %v2347
    %v2349 = vrot.slane %v1421, 3
    %v2350 = vrot.slane %v848, 4
    %v2351 = vor.u32 %v2349, %v2350
    %v2352 = vsel %vm2187, %v2348, %v2351
    %v2353 = vrot.slane %v852, 3
    %v2354 = vrot.slane %v854, 4
    %v2355 = vor.u32 %v2353, %v2354
    %v2356 = vrot.slane %v1430, 3
    %v2357 = vrot.slane %v858, 4
    %v2358 = vor.u32 %v2356, %v2357
    %v2359 = vsel %vm2187, %v2355, %v2358
    %v2360 = vrot.slane %v862, 3
    %v2361 = vrot.slane %v864, 4
    %v2362 = vor.u32 %v2360, %v2361
    %v2363 = vrot.slane %v1439, 3
    %v2364 = vrot.slane %v868, 4
    %v2365 = vor.u32 %v2363, %v2364
    %v2366 = vsel %vm2187, %v2362, %v2365
    %v2367 = vrot.slane %v872, 3
    %v2368 = vrot.slane %v874, 4
    %v2369 = vor.u32 %v2367, %v2368
    %v2370 = vrot.slane %v1448, 3
    %v2371 = vrot.slane %v878, 4
    %v2372 = vor.u32 %v2370, %v2371
    %v2373 = vsel %vm2187, %v2369, %v2372
    %v2374 = vrot.slane %v882, 3
    %v2375 = vrot.slane %v884, 4
    %v2376 = vor.u32 %v2374, %v2375
    %v2377 = vrot.slane %v1457, 3
    %v2378 = vrot.slane %v888, 4
    %v2379 = vor.u32 %v2377, %v2378
    %v2380 = vsel %vm2187, %v2376, %v2379
    %v2381 = vrot.slane %v892, 3
    %v2382 = vrot.slane %v894, 4
    %v2383 = vor.u32 %v2381, %v2382
    %v2384 = vrot.slane %v1466, 3
    %v2385 = vrot.slane %v898, 4
    %v2386 = vor.u32 %v2384, %v2385
    %v2387 = vsel %vm2187, %v2383, %v2386
    %v2388 = vrot.slane %v902, 3
    %v2389 = vrot.slane %v904, 4
    %v2390 = vor.u32 %v2388, %v2389
    %v2391 = vrot.slane %v1475, 3
    %v2392 = vrot.slane %v908, 4
    %v2393 = vor.u32 %v2391, %v2392
    %v2394 = vsel %vm2187, %v2390, %v2393
    %v2395 = vrot.slane %v912, 3
    %v2396 = vrot.slane %v914, 4
    %v2397 = vor.u32 %v2395, %v2396
    %v2398 = vrot.slane %v1484, 3
    %v2399 = vrot.slane %v918, 4
    %v2400 = vor.u32 %v2398, %v2399
    %v2401 = vsel %vm2187, %v2397, %v2400
    %v2402 = vrot.slane %v922, 3
    %v2403 = vrot.slane %v924, 4
    %v2404 = vor.u32 %v2402, %v2403
    %v2405 = vrot.slane %v1493, 3
    %v2406 = vrot.slane %v928, 4
    %v2407 = vor.u32 %v2405, %v2406
    %v2408 = vsel %vm2187, %v2404, %v2407
    %v2409 = vrot.slane %v932, 3
    %v2410 = vrot.slane %v934, 4
    %v2411 = vor.u32 %v2409, %v2410
    %v2412 = vrot.slane %v1502, 3
    %v2413 = vrot.slane %v938, 4
    %v2414 = vor.u32 %v2412, %v2413
    %v2415 = vsel %vm2187, %v2411, %v2414
    %v2416 = vrot.slane %v942, 3
    %v2417 = vrot.slane %v944, 4
    %v2418 = vor.u32 %v2416, %v2417
    %v2419 = vrot.slane %v1511, 3
    %v2420 = vrot.slane %v948, 4
    %v2421 = vor.u32 %v2419, %v2420
    %v2422 = vsel %vm2187, %v2418, %v2421
    %v2423 = vrot.slane %v952, 3
    %v2424 = vrot.slane %v954, 4
    %v2425 = vor.u32 %v2423, %v2424
    %v2426 = vrot.slane %v1520, 3
    %v2427 = vrot.slane %v958, 4
    %v2428 = vor.u32 %v2426, %v2427
    %v2429 = vsel %vm2187, %v2425, %v2428
    %v2430 = vrot.slane %v962, 3
    %v2431 = vrot.slane %v964, 4
    %v2432 = vor.u32 %v2430, %v2431
    %v2433 = vrot.slane %v1529, 3
    %v2434 = vrot.slane %v968, 4
    %v2435 = vor.u32 %v2433, %v2434
    %v2436 = vsel %vm2187, %v2432, %v2435
    %v2437 = vrot.slane %v972, 3
    %v2438 = vrot.slane %v974, 4
    %v2439 = vor.u32 %v2437, %v2438
    %v2440 = vrot.slane %v1538, 3
    %v2441 = vrot.slane %v978, 4
    %v2442 = vor.u32 %v2440, %v2441
    %v2443 = vsel %vm2187, %v2439, %v2442
    %2444 = vrot.lane.b32.xlu0 %v2338, 29
    %v2445 = vpop.permute.xlu0 %2444
    %2446 = vrot.lane.b32.xlu0 %v2345, 29
    %v2447 = vpop.permute.xlu0 %2446
    %2448 = vrot.lane.b32.xlu0 %v2352, 29
    %v2449 = vpop.permute.xlu0 %2448
    %2450 = vrot.lane.b32.xlu0 %v2359, 29
    %v2451 = vpop.permute.xlu0 %2450
    %2452 = vrot.lane.b32.xlu0 %v2366, 29
    %v2453 = vpop.permute.xlu0 %2452
    %2454 = vrot.lane.b32.xlu0 %v2373, 29
    %v2455 = vpop.permute.xlu0 %2454
    %2456 = vrot.lane.b32.xlu0 %v2380, 29
    %v2457 = vpop.permute.xlu0 %2456
    %2458 = vrot.lane.b32.xlu0 %v2387, 29
    %v2459 = vpop.permute.xlu0 %2458
    %2460 = vrot.lane.b32.xlu0 %v2394, 29
    %v2461 = vpop.permute.xlu0 %2460
    %2462 = vrot.lane.b32.xlu0 %v2401, 29
    %v2463 = vpop.permute.xlu0 %2462
    %2464 = vrot.lane.b32.xlu0 %v2408, 29
    %v2465 = vpop.permute.xlu0 %2464
    %2466 = vrot.lane.b32.xlu0 %v2415, 29
    %v2467 = vpop.permute.xlu0 %2466
    %2468 = vrot.lane.b32.xlu0 %v2422, 29
    %v2469 = vpop.permute.xlu0 %2468
    %2470 = vrot.lane.b32.xlu0 %v2429, 29
    %v2471 = vpop.permute.xlu0 %2470
    %2472 = vrot.lane.b32.xlu0 %v2436, 29
    %v2473 = vpop.permute.xlu0 %2472
    %2474 = vrot.lane.b32.xlu0 %v2443, 29
    %v2475 = vpop.permute.xlu0 %2474
    %vm2476 = vcmask 7168
    %v2478 = vsel %vm2476, %v414, %v598
    %v2480 = vsel %vm2476, %v416, %v600
    %v2482 = vsel %vm2476, %v418, %v602
    %v2484 = vsel %vm2476, %v420, %v604
    %v2486 = vsel %vm2476, %v422, %v606
    %v2488 = vsel %vm2476, %v424, %v608
    %v2490 = vsel %vm2476, %v426, %v610
    %v2492 = vsel %vm2476, %v428, %v612
    %v2494 = vsel %vm2476, %v430, %v614
    %v2496 = vsel %vm2476, %v432, %v616
    %v2498 = vsel %vm2476, %v434, %v618
    %v2500 = vsel %vm2476, %v436, %v620
    %v2502 = vsel %vm2476, %v438, %v622
    %v2504 = vsel %vm2476, %v440, %v624
    %v2506 = vsel %vm2476, %v442, %v626
    %v2508 = vsel %vm2476, %v444, %v628
    %vm2509 = vcmask 31744
    %v2511 = vsel %vm2509, %v2478, %v791
    %v2513 = vsel %vm2509, %v2480, %v793
    %v2515 = vsel %vm2509, %v2482, %v795
    %v2517 = vsel %vm2509, %v2484, %v797
    %v2519 = vsel %vm2509, %v2486, %v799
    %v2521 = vsel %vm2509, %v2488, %v801
    %v2523 = vsel %vm2509, %v2490, %v803
    %v2525 = vsel %vm2509, %v2492, %v805
    %v2527 = vsel %vm2509, %v2494, %v807
    %v2529 = vsel %vm2509, %v2496, %v809
    %v2531 = vsel %vm2509, %v2498, %v811
    %v2533 = vsel %vm2509, %v2500, %v813
    %v2535 = vsel %vm2509, %v2502, %v815
    %v2537 = vsel %vm2509, %v2504, %v817
    %v2539 = vsel %vm2509, %v2506, %v819
    %v2541 = vsel %vm2509, %v2508, %v821
    %vm2542 = vcmask 39936
    %v2544 = vsel %vm2542, %v2511, %v983
    %v2546 = vsel %vm2542, %v2513, %v985
    %v2548 = vsel %vm2542, %v2515, %v987
    %v2550 = vsel %vm2542, %v2517, %v989
    %v2552 = vsel %vm2542, %v2519, %v991
    %v2554 = vsel %vm2542, %v2521, %v993
    %v2556 = vsel %vm2542, %v2523, %v995
    %v2558 = vsel %vm2542, %v2525, %v997
    %v2560 = vsel %vm2542, %v2527, %v999
    %v2562 = vsel %vm2542, %v2529, %v1001
    %v2564 = vsel %vm2542, %v2531, %v1003
    %v2566 = vsel %vm2542, %v2533, %v1005
    %v2568 = vsel %vm2542, %v2535, %v1007
    %v2570 = vsel %vm2542, %v2537, %v1009
    %v2572 = vsel %vm2542, %v2539, %v1011
    %v2574 = vsel %vm2542, %v2541, %v1013
    %vm2575 = vcmask 64512
    %v2577 = vsel %vm2575, %v2544, %v1096
    %v2579 = vsel %vm2575, %v2546, %v1098
    %v2581 = vsel %vm2575, %v2548, %v1100
    %v2583 = vsel %vm2575, %v2550, %v1102
    %v2585 = vsel %vm2575, %v2552, %v1104
    %v2587 = vsel %vm2575, %v2554, %v1106
    %v2589 = vsel %vm2575, %v2556, %v1108
    %v2591 = vsel %vm2575, %v2558, %v1110
    %v2593 = vsel %vm2575, %v2560, %v1112
    %v2595 = vsel %vm2575, %v2562, %v1114
    %v2597 = vsel %vm2575, %v2564, %v1116
    %v2599 = vsel %vm2575, %v2566, %v1118
    %v2601 = vsel %vm2575, %v2568, %v1120
    %v2603 = vsel %vm2575, %v2570, %v1122
    %v2605 = vsel %vm2575, %v2572, %v1124
    %v2607 = vsel %vm2575, %v2574, %v1126
    %vm2608 = vcmask 72704
    %v2610 = vsel %vm2608, %v2577, %v1192
    %v2612 = vsel %vm2608, %v2579, %v1194
    %v2614 = vsel %vm2608, %v2581, %v1196
    %v2616 = vsel %vm2608, %v2583, %v1198
    %v2618 = vsel %vm2608, %v2585, %v1200
    %v2620 = vsel %vm2608, %v2587, %v1202
    %v2622 = vsel %vm2608, %v2589, %v1204
    %v2624 = vsel %vm2608, %v2591, %v1206
    %v2626 = vsel %vm2608, %v2593, %v1208
    %v2628 = vsel %vm2608, %v2595, %v1210
    %v2630 = vsel %vm2608, %v2597, %v1212
    %v2632 = vsel %vm2608, %v2599, %v1214
    %v2634 = vsel %vm2608, %v2601, %v1216
    %v2636 = vsel %vm2608, %v2603, %v1218
    %v2638 = vsel %vm2608, %v2605, %v1220
    %v2640 = vsel %vm2608, %v2607, %v1222
    %vm2641 = vcmask 97280
    %v2643 = vsel %vm2641, %v2610, %v1369
    %v2645 = vsel %vm2641, %v2612, %v1371
    %v2647 = vsel %vm2641, %v2614, %v1373
    %v2649 = vsel %vm2641, %v2616, %v1375
    %v2651 = vsel %vm2641, %v2618, %v1377
    %v2653 = vsel %vm2641, %v2620, %v1379
    %v2655 = vsel %vm2641, %v2622, %v1381
    %v2657 = vsel %vm2641, %v2624, %v1383
    %v2659 = vsel %vm2641, %v2626, %v1385
    %v2661 = vsel %vm2641, %v2628, %v1387
    %v2663 = vsel %vm2641, %v2630, %v1389
    %v2665 = vsel %vm2641, %v2632, %v1391
    %v2667 = vsel %vm2641, %v2634, %v1393
    %v2669 = vsel %vm2641, %v2636, %v1395
    %v2671 = vsel %vm2641, %v2638, %v1397
    %v2673 = vsel %vm2641, %v2640, %v1399
    %vm2674 = vcmask 105472
    %v2676 = vsel %vm2674, %v2643, %v1545
    %v2678 = vsel %vm2674, %v2645, %v1547
    %v2680 = vsel %vm2674, %v2647, %v1549
    %v2682 = vsel %vm2674, %v2649, %v1551
    %v2684 = vsel %vm2674, %v2651, %v1553
    %v2686 = vsel %vm2674, %v2653, %v1555
    %v2688 = vsel %vm2674, %v2655, %v1557
    %v2690 = vsel %vm2674, %v2657, %v1559
    %v2692 = vsel %vm2674, %v2659, %v1561
    %v2694 = vsel %vm2674, %v2661, %v1563
    %v2696 = vsel %vm2674, %v2663, %v1565
    %v2698 = vsel %vm2674, %v2665, %v1567
    %v2700 = vsel %vm2674, %v2667, %v1569
    %v2702 = vsel %vm2674, %v2669, %v1571
    %v2704 = vsel %vm2674, %v2671, %v1573
    %v2706 = vsel %vm2674, %v2673, %v1575
    %vm2707 = vcmask 130048
    %v2709 = vsel %vm2707, %v2676, %v1626
    %v2711 = vsel %vm2707, %v2678, %v1628
    %v2713 = vsel %vm2707, %v2680, %v1630
    %v2715 = vsel %vm2707, %v2682, %v1632
    %v2717 = vsel %vm2707, %v2684, %v1634
    %v2719 = vsel %vm2707, %v2686, %v1636
    %v2721 = vsel %vm2707, %v2688, %v1638
    %v2723 = vsel %vm2707, %v2690, %v1640
    %v2725 = vsel %vm2707, %v2692, %v1642
    %v2727 = vsel %vm2707, %v2694, %v1644
    %v2729 = vsel %vm2707, %v2696, %v1646
    %v2731 = vsel %vm2707, %v2698, %v1648
    %v2733 = vsel %vm2707, %v2700, %v1650
    %v2735 = vsel %vm2707, %v2702, %v1652
    %v2737 = vsel %vm2707, %v2704, %v1654
    %v2739 = vsel %vm2707, %v2706, %v1656
    %vm2740 = vcmask 138240
    %v2742 = vsel %vm2740, %v2709, %v1706
    %v2744 = vsel %vm2740, %v2711, %v1708
    %v2746 = vsel %vm2740, %v2713, %v1710
    %v2748 = vsel %vm2740, %v2715, %v1712
    %v2750 = vsel %vm2740, %v2717, %v1714
    %v2752 = vsel %vm2740, %v2719, %v1716
    %v2754 = vsel %vm2740, %v2721, %v1718
    %v2756 = vsel %vm2740, %v2723, %v1720
    %v2758 = vsel %vm2740, %v2725, %v1722
    %v2760 = vsel %vm2740, %v2727, %v1724
    %v2762 = vsel %vm2740, %v2729, %v1726
    %v2764 = vsel %vm2740, %v2731, %v1728
    %v2766 = vsel %vm2740, %v2733, %v1730
    %v2768 = vsel %vm2740, %v2735, %v1732
    %v2770 = vsel %vm2740, %v2737, %v1734
    %v2772 = vsel %vm2740, %v2739, %v1736
    %vm2773 = vcmask 162816
    %v2775 = vsel %vm2773, %v2742, %v1851
    %v2777 = vsel %vm2773, %v2744, %v1853
    %v2779 = vsel %vm2773, %v2746, %v1855
    %v2781 = vsel %vm2773, %v2748, %v1857
    %v2783 = vsel %vm2773, %v2750, %v1859
    %v2785 = vsel %vm2773, %v2752, %v1861
    %v2787 = vsel %vm2773, %v2754, %v1863
    %v2789 = vsel %vm2773, %v2756, %v1865
    %v2791 = vsel %vm2773, %v2758, %v1867
    %v2793 = vsel %vm2773, %v2760, %v1869
    %v2795 = vsel %vm2773, %v2762, %v1871
    %v2797 = vsel %vm2773, %v2764, %v1873
    %v2799 = vsel %vm2773, %v2766, %v1875
    %v2801 = vsel %vm2773, %v2768, %v1877
    %v2803 = vsel %vm2773, %v2770, %v1879
    %v2805 = vsel %vm2773, %v2772, %v1881
    %vm2806 = vcmask 171008
    %v2808 = vsel %vm2806, %v2775, %v1995
    %v2810 = vsel %vm2806, %v2777, %v1997
    %v2812 = vsel %vm2806, %v2779, %v1999
    %v2814 = vsel %vm2806, %v2781, %v2001
    %v2816 = vsel %vm2806, %v2783, %v2003
    %v2818 = vsel %vm2806, %v2785, %v2005
    %v2820 = vsel %vm2806, %v2787, %v2007
    %v2822 = vsel %vm2806, %v2789, %v2009
    %v2824 = vsel %vm2806, %v2791, %v2011
    %v2826 = vsel %vm2806, %v2793, %v2013
    %v2828 = vsel %vm2806, %v2795, %v2015
    %v2830 = vsel %vm2806, %v2797, %v2017
    %v2832 = vsel %vm2806, %v2799, %v2019
    %v2834 = vsel %vm2806, %v2801, %v2021
    %v2836 = vsel %vm2806, %v2803, %v2023
    %v2838 = vsel %vm2806, %v2805, %v2025
    %vm2839 = vcmask 195584
    %v2841 = vsel %vm2839, %v2808, %v2076
    %v2843 = vsel %vm2839, %v2810, %v2078
    %v2845 = vsel %vm2839, %v2812, %v2080
    %v2847 = vsel %vm2839, %v2814, %v2082
    %v2849 = vsel %vm2839, %v2816, %v2084
    %v2851 = vsel %vm2839, %v2818, %v2086
    %v2853 = vsel %vm2839, %v2820, %v2088
    %v2855 = vsel %vm2839, %v2822, %v2090
    %v2857 = vsel %vm2839, %v2824, %v2092
    %v2859 = vsel %vm2839, %v2826, %v2094
    %v2861 = vsel %vm2839, %v2828, %v2096
    %v2863 = vsel %vm2839, %v2830, %v2098
    %v2865 = vsel %vm2839, %v2832, %v2100
    %v2867 = vsel %vm2839, %v2834, %v2102
    %v2869 = vsel %vm2839, %v2836, %v2104
    %v2871 = vsel %vm2839, %v2838, %v2106
    %vm2872 = vcmask 203776
    %v2874 = vsel %vm2872, %v2841, %v2156
    %v2876 = vsel %vm2872, %v2843, %v2158
    %v2878 = vsel %vm2872, %v2845, %v2160
    %v2880 = vsel %vm2872, %v2847, %v2162
    %v2882 = vsel %vm2872, %v2849, %v2164
    %v2884 = vsel %vm2872, %v2851, %v2166
    %v2886 = vsel %vm2872, %v2853, %v2168
    %v2888 = vsel %vm2872, %v2855, %v2170
    %v2890 = vsel %vm2872, %v2857, %v2172
    %v2892 = vsel %vm2872, %v2859, %v2174
    %v2894 = vsel %vm2872, %v2861, %v2176
    %v2896 = vsel %vm2872, %v2863, %v2178
    %v2898 = vsel %vm2872, %v2865, %v2180
    %v2900 = vsel %vm2872, %v2867, %v2182
    %v2902 = vsel %vm2872, %v2869, %v2184
    %v2904 = vsel %vm2872, %v2871, %v2186
    %vm2905 = vcmask 228352
    %v2907 = vsel %vm2905, %v2874, %v2301
    %v2909 = vsel %vm2905, %v2876, %v2303
    %v2911 = vsel %vm2905, %v2878, %v2305
    %v2913 = vsel %vm2905, %v2880, %v2307
    %v2915 = vsel %vm2905, %v2882, %v2309
    %v2917 = vsel %vm2905, %v2884, %v2311
    %v2919 = vsel %vm2905, %v2886, %v2313
    %v2921 = vsel %vm2905, %v2888, %v2315
    %v2923 = vsel %vm2905, %v2890, %v2317
    %v2925 = vsel %vm2905, %v2892, %v2319
    %v2927 = vsel %vm2905, %v2894, %v2321
    %v2929 = vsel %vm2905, %v2896, %v2323
    %v2931 = vsel %vm2905, %v2898, %v2325
    %v2933 = vsel %vm2905, %v2900, %v2327
    %v2935 = vsel %vm2905, %v2902, %v2329
    %v2937 = vsel %vm2905, %v2904, %v2331
    %vm2938 = vcmask 236544
    %v2940 = vsel %vm2938, %v2907, %v2445
    %v2942 = vsel %vm2938, %v2909, %v2447
    %v2944 = vsel %vm2938, %v2911, %v2449
    %v2946 = vsel %vm2938, %v2913, %v2451
    %v2948 = vsel %vm2938, %v2915, %v2453
    %v2950 = vsel %vm2938, %v2917, %v2455
    %v2952 = vsel %vm2938, %v2919, %v2457
    %v2954 = vsel %vm2938, %v2921, %v2459
    %v2956 = vsel %vm2938, %v2923, %v2461
    %v2958 = vsel %vm2938, %v2925, %v2463
    %v2960 = vsel %vm2938, %v2927, %v2465
    %v2962 = vsel %vm2938, %v2929, %v2467
    %v2964 = vsel %vm2938, %v2931, %v2469
    %v2966 = vsel %vm2938, %v2933, %v2471
    %v2968 = vsel %vm2938, %v2935, %v2473
    %v2970 = vsel %vm2938, %v2937, %v2475
    %2971 = vrot.lane.b32.xlu0 %v557, 1
    %v2972 = vpop.permute.xlu0 %2971
    %2973 = vrot.lane.b32.xlu0 %v558, 1
    %v2974 = vpop.permute.xlu0 %2973
    %2975 = vrot.lane.b32.xlu0 %v559, 1
    %v2976 = vpop.permute.xlu0 %2975
    %2977 = vrot.lane.b32.xlu0 %v560, 1
    %v2978 = vpop.permute.xlu0 %2977
    %2979 = vrot.lane.b32.xlu0 %v561, 1
    %v2980 = vpop.permute.xlu0 %2979
    %2981 = vrot.lane.b32.xlu0 %v562, 1
    %v2982 = vpop.permute.xlu0 %2981
    %2983 = vrot.lane.b32.xlu0 %v563, 1
    %v2984 = vpop.permute.xlu0 %2983
    %2985 = vrot.lane.b32.xlu0 %v564, 1
    %v2986 = vpop.permute.xlu0 %2985
    %2987 = vrot.lane.b32.xlu0 %v565, 1
    %v2988 = vpop.permute.xlu0 %2987
    %2989 = vrot.lane.b32.xlu0 %v566, 1
    %v2990 = vpop.permute.xlu0 %2989
    %2991 = vrot.lane.b32.xlu0 %v567, 1
    %v2992 = vpop.permute.xlu0 %2991
    %2993 = vrot.lane.b32.xlu0 %v568, 1
    %v2994 = vpop.permute.xlu0 %2993
    %2995 = vrot.lane.b32.xlu0 %v569, 1
    %v2996 = vpop.permute.xlu0 %2995
    %2997 = vrot.lane.b32.xlu0 %v570, 1
    %v2998 = vpop.permute.xlu0 %2997
    %2999 = vrot.lane.b32.xlu0 %v571, 1
    %v3000 = vpop.permute.xlu0 %2999
    %3001 = vrot.lane.b32.xlu0 %v572, 1
    %v3002 = vpop.permute.xlu0 %3001
    %v3004 = vsel %vm2476, %v461, %v2972
    %v3006 = vsel %vm2476, %v462, %v2974
    %v3008 = vsel %vm2476, %v463, %v2976
    %v3010 = vsel %vm2476, %v464, %v2978
    %v3012 = vsel %vm2476, %v465, %v2980
    %v3014 = vsel %vm2476, %v466, %v2982
    %v3016 = vsel %vm2476, %v467, %v2984
    %v3018 = vsel %vm2476, %v468, %v2986
    %v3020 = vsel %vm2476, %v469, %v2988
    %v3022 = vsel %vm2476, %v470, %v2990
    %v3024 = vsel %vm2476, %v471, %v2992
    %v3026 = vsel %vm2476, %v472, %v2994
    %v3028 = vsel %vm2476, %v473, %v2996
    %v3030 = vsel %vm2476, %v474, %v2998
    %v3032 = vsel %vm2476, %v475, %v3000
    %v3034 = vsel %vm2476, %v476, %v3002
    %vm3067 = vcmask 1043456
    %v3068 = vrot.slane %v2478, 4
    %v3069 = vrot.slane %v3004, 4
    %v3070 = vsel %vm3067, %v3068, %v3069
    %v3071 = vrot.slane %v2480, 4
    %v3072 = vrot.slane %v3006, 4
    %v3073 = vsel %vm3067, %v3071, %v3072
    %v3074 = vrot.slane %v2482, 4
    %v3075 = vrot.slane %v3008, 4
    %v3076 = vsel %vm3067, %v3074, %v3075
    %v3077 = vrot.slane %v2484, 4
    %v3078 = vrot.slane %v3010, 4
    %v3079 = vsel %vm3067, %v3077, %v3078
    %v3080 = vrot.slane %v2486, 4
    %v3081 = vrot.slane %v3012, 4
    %v3082 = vsel %vm3067, %v3080, %v3081
    %v3083 = vrot.slane %v2488, 4
    %v3084 = vrot.slane %v3014, 4
    %v3085 = vsel %vm3067, %v3083, %v3084
    %v3086 = vrot.slane %v2490, 4
    %v3087 = vrot.slane %v3016, 4
    %v3088 = vsel %vm3067, %v3086, %v3087
    %v3089 = vrot.slane %v2492, 4
    %v3090 = vrot.slane %v3018, 4
    %v3091 = vsel %vm3067, %v3089, %v3090
    %v3092 = vrot.slane %v2494, 4
    %v3093 = vrot.slane %v3020, 4
    %v3094 = vsel %vm3067, %v3092, %v3093
    %v3095 = vrot.slane %v2496, 4
    %v3096 = vrot.slane %v3022, 4
    %v3097 = vsel %vm3067, %v3095, %v3096
    %v3098 = vrot.slane %v2498, 4
    %v3099 = vrot.slane %v3024, 4
    %v3100 = vsel %vm3067, %v3098, %v3099
    %v3101 = vrot.slane %v2500, 4
    %v3102 = vrot.slane %v3026, 4
    %v3103 = vsel %vm3067, %v3101, %v3102
    %v3104 = vrot.slane %v2502, 4
    %v3105 = vrot.slane %v3028, 4
    %v3106 = vsel %vm3067, %v3104, %v3105
    %v3107 = vrot.slane %v2504, 4
    %v3108 = vrot.slane %v3030, 4
    %v3109 = vsel %vm3067, %v3107, %v3108
    %v3110 = vrot.slane %v2506, 4
    %v3111 = vrot.slane %v3032, 4
    %v3112 = vsel %vm3067, %v3110, %v3111
    %v3113 = vrot.slane %v2508, 4
    %v3114 = vrot.slane %v3034, 4
    %v3115 = vsel %vm3067, %v3113, %v3114
    %3116 = vrot.lane.b32.xlu0 %v3070, 32
    %v3117 = vpop.permute.xlu0 %3116
    %3118 = vrot.lane.b32.xlu0 %v3073, 32
    %v3119 = vpop.permute.xlu0 %3118
    %3120 = vrot.lane.b32.xlu0 %v3076, 32
    %v3121 = vpop.permute.xlu0 %3120
    %3122 = vrot.lane.b32.xlu0 %v3079, 32
    %v3123 = vpop.permute.xlu0 %3122
    %3124 = vrot.lane.b32.xlu0 %v3082, 32
    %v3125 = vpop.permute.xlu0 %3124
    %3126 = vrot.lane.b32.xlu0 %v3085, 32
    %v3127 = vpop.permute.xlu0 %3126
    %3128 = vrot.lane.b32.xlu0 %v3088, 32
    %v3129 = vpop.permute.xlu0 %3128
    %3130 = vrot.lane.b32.xlu0 %v3091, 32
    %v3131 = vpop.permute.xlu0 %3130
    %3132 = vrot.lane.b32.xlu0 %v3094, 32
    %v3133 = vpop.permute.xlu0 %3132
    %3134 = vrot.lane.b32.xlu0 %v3097, 32
    %v3135 = vpop.permute.xlu0 %3134
    %3136 = vrot.lane.b32.xlu0 %v3100, 32
    %v3137 = vpop.permute.xlu0 %3136
    %3138 = vrot.lane.b32.xlu0 %v3103, 32
    %v3139 = vpop.permute.xlu0 %3138
    %3140 = vrot.lane.b32.xlu0 %v3106, 32
    %v3141 = vpop.permute.xlu0 %3140
    %3142 = vrot.lane.b32.xlu0 %v3109, 32
    %v3143 = vpop.permute.xlu0 %3142
    %3144 = vrot.lane.b32.xlu0 %v3112, 32
    %v3145 = vpop.permute.xlu0 %3144
    %3146 = vrot.lane.b32.xlu0 %v3115, 32
    %v3147 = vpop.permute.xlu0 %3146
    %vm3148 = vcmask 261120
    %v3150 = vsel %vm3148, %v2940, %v3117
    %v3152 = vsel %vm3148, %v2942, %v3119
    %v3154 = vsel %vm3148, %v2944, %v3121
    %v3156 = vsel %vm3148, %v2946, %v3123
    %v3158 = vsel %vm3148, %v2948, %v3125
    %v3160 = vsel %vm3148, %v2950, %v3127
    %v3162 = vsel %vm3148, %v2952, %v3129
    %v3164 = vsel %vm3148, %v2954, %v3131
    %v3166 = vsel %vm3148, %v2956, %v3133
    %v3168 = vsel %vm3148, %v2958, %v3135
    %v3170 = vsel %vm3148, %v2960, %v3137
    %v3172 = vsel %vm3148, %v2962, %v3139
    %v3174 = vsel %vm3148, %v2964, %v3141
    %v3176 = vsel %vm3148, %v2966, %v3143
    %v3178 = vsel %vm3148, %v2968, %v3145
    %v3180 = vsel %vm3148, %v2970, %v3147
    %v3181 = vld [vmem:[#allocation7] sm:$0xf]
    %v3182 = vld [vmem:[#allocation7 + $0x4] sm:$0xf]
    %v3183 = vld [vmem:[#allocation7 + $0x8] sm:$0xf]
    %v3184 = vld [vmem:[#allocation7 + $0xc] sm:$0xf]
    %v3185 = vld [vmem:[#allocation7 + $0x10] sm:$0x3]
    %3187 = vrot.lane.b32.xlu0 %v542, 1
    %v3188 = vpop.permute.xlu0 %3187
    %v3189 = vshrl.u32 %v446, 16
    %v3191 = vshll.u32 %v446, 16
    %v3193 = vrot.slane %v3191, 1
    %v3194 = vor.u32 %v3189, %v3193
    %v3195 = vshll.u32 %v477, 16
    %v3197 = vrot.slane %v3195, 1
    %v3198 = vsel %vm629, %v3194, %v3197
    %3199 = vrot.lane.b32.xlu0 %v3198, 4
    %v3200 = vpop.permute.xlu0 %3199
    %v3201 = vshrl.u32 %v542, 16
    %v3203 = vshll.u32 %v542, 16
    %v3205 = vrot.slane %v3203, 1
    %v3206 = vor.u32 %v3201, %v3205
    %v3207 = vshll.u32 %v573, 16
    %v3209 = vrot.slane %v3207, 1
    %v3210 = vsel %vm629, %v3206, %v3209
    %3211 = vrot.lane.b32.xlu0 %v3210, 5
    %v3212 = vpop.permute.xlu0 %3211
    %v3215 = vrot.slane %v446, 1
    %v3216 = vrot.slane %v477, 1
    %v3217 = vsel %vm1046, %v3215, %v3216
    %3218 = vrot.lane.b32.xlu0 %v3217, 8
    %v3219 = vpop.permute.xlu0 %3218
    %v3221 = vrot.slane %v542, 1
    %v3222 = vrot.slane %v573, 1
    %v3223 = vsel %vm1046, %v3221, %v3222
    %3224 = vrot.lane.b32.xlu0 %v3223, 9
    %v3225 = vpop.permute.xlu0 %3224
    %v3226 = vrot.slane %v3189, 1
    %v3227 = vrot.slane %v3191, 2
    %v3228 = vor.u32 %v3226, %v3227
    %v3229 = vshrl.u32 %v477, 16
    %v3231 = vrot.slane %v3229, 1
    %v3232 = vrot.slane %v3195, 2
    %v3233 = vor.u32 %v3231, %v3232
    %v3234 = vsel %vm1223, %v3228, %v3233
    %3235 = vrot.lane.b32.xlu0 %v3234, 12
    %v3236 = vpop.permute.xlu0 %3235
    %v3237 = vrot.slane %v3201, 1
    %v3238 = vrot.slane %v3203, 2
    %v3239 = vor.u32 %v3237, %v3238
    %v3240 = vshrl.u32 %v573, 16
    %v3242 = vrot.slane %v3240, 1
    %v3243 = vrot.slane %v3207, 2
    %v3244 = vor.u32 %v3242, %v3243
    %v3245 = vsel %vm1223, %v3239, %v3244
    %3246 = vrot.lane.b32.xlu0 %v3245, 13
    %v3247 = vpop.permute.xlu0 %3246
    %v3248 = vrot.slane %v446, 2
    %v3249 = vrot.slane %v477, 2
    %v3250 = vsel %vm1576, %v3248, %v3249
    %3251 = vrot.lane.b32.xlu0 %v3250, 16
    %v3252 = vpop.permute.xlu0 %3251
    %v3253 = vrot.slane %v542, 2
    %v3254 = vrot.slane %v573, 2
    %v3255 = vsel %vm1576, %v3253, %v3254
    %3256 = vrot.lane.b32.xlu0 %v3255, 17
    %v3257 = vpop.permute.xlu0 %3256
    %v3258 = vrot.slane %v3189, 2
    %v3259 = vrot.slane %v3191, 3
    %v3260 = vor.u32 %v3258, %v3259
    %v3261 = vrot.slane %v3229, 2
    %v3262 = vrot.slane %v3195, 3
    %v3263 = vor.u32 %v3261, %v3262
    %v3264 = vsel %vm1737, %v3260, %v3263
    %3265 = vrot.lane.b32.xlu0 %v3264, 20
    %v3266 = vpop.permute.xlu0 %3265
    %v3267 = vrot.slane %v3201, 2
    %v3268 = vrot.slane %v3203, 3
    %v3269 = vor.u32 %v3267, %v3268
    %v3270 = vrot.slane %v3240, 2
    %v3271 = vrot.slane %v3207, 3
    %v3272 = vor.u32 %v3270, %v3271
    %v3273 = vsel %vm1737, %v3269, %v3272
    %3274 = vrot.lane.b32.xlu0 %v3273, 21
    %v3275 = vpop.permute.xlu0 %3274
    %v3276 = vrot.slane %v446, 3
    %v3277 = vrot.slane %v477, 3
    %v3278 = vsel %vm2026, %v3276, %v3277
    %3279 = vrot.lane.b32.xlu0 %v3278, 24
    %v3280 = vpop.permute.xlu0 %3279
    %v3281 = vrot.slane %v542, 3
    %v3282 = vrot.slane %v573, 3
    %v3283 = vsel %vm2026, %v3281, %v3282
    %3284 = vrot.lane.b32.xlu0 %v3283, 25
    %v3285 = vpop.permute.xlu0 %3284
    %v3286 = vrot.slane %v3189, 3
    %v3287 = vrot.slane %v3191, 4
    %v3288 = vor.u32 %v3286, %v3287
    %v3289 = vrot.slane %v3229, 3
    %v3290 = vrot.slane %v3195, 4
    %v3291 = vor.u32 %v3289, %v3290
    %v3292 = vsel %vm2187, %v3288, %v3291
    %3293 = vrot.lane.b32.xlu0 %v3292, 28
    %v3294 = vpop.permute.xlu0 %3293
    %v3295 = vrot.slane %v3201, 3
    %v3296 = vrot.slane %v3203, 4
    %v3297 = vor.u32 %v3295, %v3296
    %v3298 = vrot.slane %v3240, 3
    %v3299 = vrot.slane %v3207, 4
    %v3300 = vor.u32 %v3298, %v3299
    %v3301 = vsel %vm2187, %v3297, %v3300
    %3302 = vrot.lane.b32.xlu0 %v3301, 29
    %v3303 = vpop.permute.xlu0 %3302
    %v3305 = vsel %vm2476, %v446, %v3188
    %v3307 = vsel %vm2509, %v3305, %v3200
    %v3309 = vsel %vm2542, %v3307, %v3212
    %v3311 = vsel %vm2575, %v3309, %v3219
    %v3313 = vsel %vm2608, %v3311, %v3225
    %v3315 = vsel %vm2641, %v3313, %v3236
    %v3317 = vsel %vm2674, %v3315, %v3247
    %v3319 = vsel %vm2707, %v3317, %v3252
    %v3321 = vsel %vm2740, %v3319, %v3257
    %v3323 = vsel %vm2773, %v3321, %v3266
    %v3325 = vsel %vm2806, %v3323, %v3275
    %v3327 = vsel %vm2839, %v3325, %v3280
    %v3329 = vsel %vm2872, %v3327, %v3285
    %v3331 = vsel %vm2905, %v3329, %v3294
    %v3333 = vsel %vm2938, %v3331, %v3303
    %3334 = vrot.lane.b32.xlu0 %v573, 1
    %v3335 = vpop.permute.xlu0 %3334
    %v3337 = vsel %vm2476, %v477, %v3335
    %v3340 = vrot.slane %v3305, 4
    %v3341 = vrot.slane %v3337, 4
    %v3342 = vsel %vm3067, %v3340, %v3341
    %3343 = vrot.lane.b32.xlu0 %v3342, 32
    %v3344 = vpop.permute.xlu0 %3343
    %v3346 = vsel %vm3148, %v3333, %v3344
    %s3347 = scalar_lea.vmem [#allocation7], 20
    %v3348 = vld [vmem:[%s3347] sm:$0xf]
    %v3349 = vld [vmem:[%s3347 + $0x4] sm:$0xf]
    %v3350 = vld [vmem:[%s3347 + $0x8] sm:$0xf]
    %v3351 = vld [vmem:[%s3347 + $0xc] sm:$0xf]
    %v3352 = vld [vmem:[%s3347 + $0x10] sm:$0x3]
    %v3358 = vunpack.c.l.b16 %v3348
    %v3359 = vunpack.c.l.b16 %v3349
    %v3360 = vunpack.c.l.b16 %v3350
    %v3361 = vunpack.c.l.b16 %v3351
    %v3362 = vunpack.c.l.b16 %v3352
    %v3363 = vpack.c.b16 %v3359, %v3358
    %v3364 = vpack.c.b16 %v3361, %v3360
    %v3365 = vpack.c.b16 %v3362, %v3362
    %vm3368 = vcmask 293888
    %v3369 = vsel %vm3368, %v3152, 0
    %v3371 = vsel %vm3368, %v3154, 0
    %v3373 = vsel %vm3368, %v3156, 0
    %v3375 = vsel %vm3368, %v3158, 0
    %v3377 = vsel %vm3368, %v3160, 0
    %v3379 = vsel %vm3368, %v3162, 0
    %v3381 = vsel %vm3368, %v3164, 0
    %v3383 = vsel %vm3368, %v3166, 0
    %v3385 = vsel %vm3368, %v3168, 0
    %v3387 = vsel %vm3368, %v3170, 0
    %v3389 = vsel %vm3368, %v3172, 0
    %v3391 = vsel %vm3368, %v3174, 0
    %v3393 = vsel %vm3368, %v3176, 0
    %v3395 = vsel %vm3368, %v3178, 0
    %v3397 = vsel %vm3368, %v3180, 0
    %v3399 = vsel %vm3368, %v3346, 0
    %v3402 = vsel %vm411, %v3365, 0
    %3404 = vmatprep.subr.bf16.mxu0 0
    %3405 = vmatpush1.bf16.msra.mxu0 %v3363
    %3406 = vmatprep.subr.bf16.mxu0 0
    %3407 = vmatpush1.bf16.msra.mxu0 %v3364
    %3408 = vmatprep.subr.bf16.mxu0 0
    %3409 = vmatpush1.bf16.msra.mxu0 %v3402
    %3410 = vmatprep.subr.bf16.mxu0 0
    %3411 = vmatpush1.bf16.msra.mxu0 0
    %3412 = vmatprep.subr.bf16.mxu0 0
    %3413 = vmatpush1.bf16.msra.mxu0 0
    %3414 = vmatprep.subr.bf16.mxu0 0
    %3415 = vmatpush1.bf16.msra.mxu0 0
    %3416 = vmatprep.subr.bf16.mxu0 0
    %3417 = vmatpush1.bf16.msra.mxu0 0
    %3418 = vmatprep.subr.bf16.mxu0 0
    %3419 = vmatpush1.bf16.msra.mxu0 0
    %3420 = vmatprep.subr.bf16.mxu0 0
    %3421 = vmatpush1.bf16.msra.mxu0 0
    %3422 = vmatprep.subr.bf16.mxu0 0
    %3423 = vmatpush1.bf16.msra.mxu0 0
    %3424 = vmatprep.subr.bf16.mxu0 0
    %3425 = vmatpush1.bf16.msra.mxu0 0
    %3426 = vmatprep.subr.bf16.mxu0 0
    %3427 = vmatpush1.bf16.msra.mxu0 0
    %3428 = vmatprep.subr.bf16.mxu0 0
    %3429 = vmatpush1.bf16.msra.mxu0 0
    %3430 = vmatprep.subr.bf16.mxu0 0
    %3431 = vmatpush1.bf16.msra.mxu0 0
    %3432 = vmatprep.subr.bf16.mxu0 0
    %3433 = vmatpush1.bf16.msra.mxu0 0
    %3434 = vmatprep.subr.bf16.mxu0 0
    %3435 = vmatpush1.bf16.msra.mxu0 0
    %3436 = vmatprep.mubr.bf16.mxu0 0
    %3437 = vmatmul.mubr.bf16.gmra.mrb[0].mxu0 %v3369
    %v3438 = vpop.f32.mrb[0].mxu0
    %v3439 = vadd.f32 0.0, %v3438
    %v3440 = vpop.f32.mrb[0].mxu0
    %v3441 = vpop.f32.mrb[0].mxu0
    %v3442 = vadd.f32 0.0, %v3441
    %v3443 = vpop.f32.mrb[0].mxu0
    %3444 = vmatprep.mubr.bf16.mxu0 0
    %3445 = vmatmul.mubr.bf16.gmra.mrb[0].mxu0 %v3371
    %v3446 = vpop.f32.mrb[0].mxu0
    %v3447 = vadd.f32 0.0, %v3446
    %v3448 = vpop.f32.mrb[0].mxu0
    %v3449 = vpop.f32.mrb[0].mxu0
    %v3450 = vadd.f32 0.0, %v3449
    %v3451 = vpop.f32.mrb[0].mxu0
    %3452 = vmatprep.mubr.bf16.mxu0 0
    %3453 = vmatmul.mubr.bf16.gmra.mrb[0].mxu0 %v3373
    %v3454 = vpop.f32.mrb[0].mxu0
    %v3455 = vadd.f32 0.0, %v3454
    %v3456 = vpop.f32.mrb[0].mxu0
    %v3457 = vpop.f32.mrb[0].mxu0
    %v3458 = vadd.f32 0.0, %v3457
    %v3459 = vpop.f32.mrb[0].mxu0
    %3460 = vmatprep.mubr.bf16.mxu0 0
    %3461 = vmatmul.mubr.bf16.gmra.mrb[0].mxu0 %v3375
    %v3462 = vpop.f32.mrb[0].mxu0
    %v3463 = vadd.f32 0.0, %v3462
    %v3464 = vpop.f32.mrb[0].mxu0
    %v3465 = vpop.f32.mrb[0].mxu0
    %v3466 = vadd.f32 0.0, %v3465
    %v3467 = vpop.f32.mrb[0].mxu0
    %3468 = vmatprep.mubr.bf16.mxu0 0
    %3469 = vmatmul.mubr.bf16.gmra.mrb[0].mxu0 %v3377
    %v3470 = vpop.f32.mrb[0].mxu0
    %v3471 = vadd.f32 0.0, %v3470
    %v3472 = vpop.f32.mrb[0].mxu0
    %v3473 = vpop.f32.mrb[0].mxu0
    %v3474 = vadd.f32 0.0, %v3473
    %v3475 = vpop.f32.mrb[0].mxu0
    %3476 = vmatprep.mubr.bf16.mxu0 0
    %3477 = vmatmul.mubr.bf16.gmra.mrb[0].mxu0 %v3379
    %v3478 = vpop.f32.mrb[0].mxu0
    %v3479 = vadd.f32 0.0, %v3478
    %v3480 = vpop.f32.mrb[0].mxu0
    %v3481 = vpop.f32.mrb[0].mxu0
    %v3482 = vadd.f32 0.0, %v3481
    %v3483 = vpop.f32.mrb[0].mxu0
    %3484 = vmatprep.mubr.bf16.mxu0 0
    %3485 = vmatmul.mubr.bf16.gmra.mrb[0].mxu0 %v3381
    %v3486 = vpop.f32.mrb[0].mxu0
    %v3487 = vadd.f32 0.0, %v3486
    %v3488 = vpop.f32.mrb[0].mxu0
    %v3489 = vpop.f32.mrb[0].mxu0
    %v3490 = vadd.f32 0.0, %v3489
    %v3491 = vpop.f32.mrb[0].mxu0
    %3492 = vmatprep.mubr.bf16.mxu0 0
    %3493 = vmatmul.mubr.bf16.gmra.mrb[0].mxu0 %v3383
    %v3494 = vpop.f32.mrb[0].mxu0
    %v3495 = vadd.f32 0.0, %v3494
    %v3496 = vpop.f32.mrb[0].mxu0
    %v3497 = vpop.f32.mrb[0].mxu0
    %v3498 = vadd.f32 0.0, %v3497
    %v3499 = vpop.f32.mrb[0].mxu0
    %3500 = vmatprep.mubr.bf16.mxu0 0
    %3501 = vmatmul.mubr.bf16.gmra.mrb[0].mxu0 %v3385
    %v3502 = vpop.f32.mrb[0].mxu0
    %v3503 = vadd.f32 0.0, %v3502
    %v3504 = vpop.f32.mrb[0].mxu0
    %v3505 = vpop.f32.mrb[0].mxu0
    %v3506 = vadd.f32 0.0, %v3505
    %v3507 = vpop.f32.mrb[0].mxu0
    %3508 = vmatprep.mubr.bf16.mxu0 0
    %3509 = vmatmul.mubr.bf16.gmra.mrb[0].mxu0 %v3387
    %v3510 = vpop.f32.mrb[0].mxu0
    %v3511 = vadd.f32 0.0, %v3510
    %v3512 = vpop.f32.mrb[0].mxu0
    %v3513 = vpop.f32.mrb[0].mxu0
    %v3514 = vadd.f32 0.0, %v3513
    %v3515 = vpop.f32.mrb[0].mxu0
    %3516 = vmatprep.mubr.bf16.mxu0 0
    %3517 = vmatmul.mubr.bf16.gmra.mrb[0].mxu0 %v3389
    %v3518 = vpop.f32.mrb[0].mxu0
    %v3519 = vadd.f32 0.0, %v3518
    %v3520 = vpop.f32.mrb[0].mxu0
    %v3521 = vpop.f32.mrb[0].mxu0
    %v3522 = vadd.f32 0.0, %v3521
    %v3523 = vpop.f32.mrb[0].mxu0
    %3524 = vmatprep.mubr.bf16.mxu0 0
    %3525 = vmatmul.mubr.bf16.gmra.mrb[0].mxu0 %v3391
    %v3526 = vpop.f32.mrb[0].mxu0
    %v3527 = vadd.f32 0.0, %v3526
    %v3528 = vpop.f32.mrb[0].mxu0
    %v3529 = vpop.f32.mrb[0].mxu0
    %v3530 = vadd.f32 0.0, %v3529
    %v3531 = vpop.f32.mrb[0].mxu0
    %3532 = vmatprep.mubr.bf16.mxu0 0
    %3533 = vmatmul.mubr.bf16.gmra.mrb[0].mxu0 %v3393
    %v3534 = vpop.f32.mrb[0].mxu0
    %v3535 = vadd.f32 0.0, %v3534
    %v3536 = vpop.f32.mrb[0].mxu0
    %v3537 = vpop.f32.mrb[0].mxu0
    %v3538 = vadd.f32 0.0, %v3537
    %v3539 = vpop.f32.mrb[0].mxu0
    %3540 = vmatprep.mubr.bf16.mxu0 0
    %3541 = vmatmul.mubr.bf16.gmra.mrb[0].mxu0 %v3395
    %v3542 = vpop.f32.mrb[0].mxu0
    %v3543 = vadd.f32 0.0, %v3542
    %v3544 = vpop.f32.mrb[0].mxu0
    %v3545 = vpop.f32.mrb[0].mxu0
    %v3546 = vadd.f32 0.0, %v3545
    %v3547 = vpop.f32.mrb[0].mxu0
    %3548 = vmatprep.mubr.bf16.mxu0 0
    %3549 = vmatmul.mubr.bf16.gmra.mrb[0].mxu0 %v3397
    %v3550 = vpop.f32.mrb[0].mxu0
    %v3551 = vadd.f32 0.0, %v3550
    %v3552 = vpop.f32.mrb[0].mxu0
    %v3553 = vpop.f32.mrb[0].mxu0
    %v3554 = vadd.f32 0.0, %v3553
    %v3555 = vpop.f32.mrb[0].mxu0
    %3556 = vmatprep.mubr.bf16.mxu0 0
    %3557 = vmatmul.mubr.bf16.gmra.mrb[0].mxu0 %v3399
    %v3558 = vpop.f32.mrb[0].mxu0
    %v3559 = vadd.f32 0.0, %v3558
    %v3560 = vpop.f32.mrb[0].mxu0
    %v3561 = vpop.f32.mrb[0].mxu0
    %v3562 = vadd.f32 0.0, %v3561
    %v3563 = vpop.f32.mrb[0].mxu0
    %3564 = vdwg.mxu0
    %v3570 = vunpack.c.l.b16 %v3181
    %v3571 = vunpack.c.l.b16 %v3182
    %v3572 = vunpack.c.l.b16 %v3183
    %v3573 = vunpack.c.l.b16 %v3184
    %v3574 = vunpack.c.l.b16 %v3185
    %v3575 = vpack.c.b16 %v3571, %v3570
    %v3576 = vpack.c.b16 %v3573, %v3572
    %v3577 = vpack.c.b16 %v3574, %v3574
    %v3580 = vsel %vm3368, %v3150, 0
    %v3583 = vsel %vm411, %v3577, 0
    %3585 = vmatprep.subr.bf16.mxu0 0
    %3586 = vmatpush1.bf16.msra.mxu0 %v3575
    %3587 = vmatprep.subr.bf16.mxu0 0
    %3588 = vmatpush1.bf16.msra.mxu0 %v3576
    %3589 = vmatprep.subr.bf16.mxu0 0
    %3590 = vmatpush1.bf16.msra.mxu0 %v3583
    %3591 = vmatprep.subr.bf16.mxu0 0
    %3592 = vmatpush1.bf16.msra.mxu0 0
    %3593 = vmatprep.subr.bf16.mxu0 0
    %3594 = vmatpush1.bf16.msra.mxu0 0
    %3595 = vmatprep.subr.bf16.mxu0 0
    %3596 = vmatpush1.bf16.msra.mxu0 0
    %3597 = vmatprep.subr.bf16.mxu0 0
    %3598 = vmatpush1.bf16.msra.mxu0 0
    %3599 = vmatprep.subr.bf16.mxu0 0
    %3600 = vmatpush1.bf16.msra.mxu0 0
    %3601 = vmatprep.subr.bf16.mxu0 0
    %3602 = vmatpush1.bf16.msra.mxu0 0
    %3603 = vmatprep.subr.bf16.mxu0 0
    %3604 = vmatpush1.bf16.msra.mxu0 0
    %3605 = vmatprep.subr.bf16.mxu0 0
    %3606 = vmatpush1.bf16.msra.mxu0 0
    %3607 = vmatprep.subr.bf16.mxu0 0
    %3608 = vmatpush1.bf16.msra.mxu0 0
    %3609 = vmatprep.subr.bf16.mxu0 0
    %3610 = vmatpush1.bf16.msra.mxu0 0
    %3611 = vmatprep.subr.bf16.mxu0 0
    %3612 = vmatpush1.bf16.msra.mxu0 0
    %3613 = vmatprep.subr.bf16.mxu0 0
    %3614 = vmatpush1.bf16.msra.mxu0 0
    %3615 = vmatprep.subr.bf16.mxu0 0
    %3616 = vmatpush1.bf16.msra.mxu0 0
    %3617 = vmatprep.mubr.bf16.mxu0 0
    %3618 = vmatmul.mubr.bf16.gmra.mrb[0].mxu0 %v3580
    %v3619 = vpop.f32.mrb[0].mxu0
    %v3620 = vadd.f32 %v3439, %v3619
    %v3621 = vpop.f32.mrb[0].mxu0
    %v3622 = vpop.f32.mrb[0].mxu0
    %v3623 = vadd.f32 %v3442, %v3622
    %v3624 = vpop.f32.mrb[0].mxu0
    %3625 = vmatprep.mubr.bf16.mxu0 0
    %3626 = vmatmul.mubr.bf16.gmra.mrb[0].mxu0 %v3369
    %v3627 = vpop.f32.mrb[0].mxu0
    %v3628 = vadd.f32 %v3447, %v3627
    %v3629 = vpop.f32.mrb[0].mxu0
    %v3630 = vpop.f32.mrb[0].mxu0
    %v3631 = vadd.f32 %v3450, %v3630
    %v3632 = vpop.f32.mrb[0].mxu0
    %3633 = vmatprep.mubr.bf16.mxu0 0
    %3634 = vmatmul.mubr.bf16.gmra.mrb[0].mxu0 %v3371
    %v3635 = vpop.f32.mrb[0].mxu0
    %v3636 = vadd.f32 %v3455, %v3635
    %v3637 = vpop.f32.mrb[0].mxu0
    %v3638 = vpop.f32.mrb[0].mxu0
    %v3639 = vadd.f32 %v3458, %v3638
    %v3640 = vpop.f32.mrb[0].mxu0
    %3641 = vmatprep.mubr.bf16.mxu0 0
    %3642 = vmatmul.mubr.bf16.gmra.mrb[0].mxu0 %v3373
    %v3643 = vpop.f32.mrb[0].mxu0
    %v3644 = vadd.f32 %v3463, %v3643
    %v3645 = vpop.f32.mrb[0].mxu0
    %v3646 = vpop.f32.mrb[0].mxu0
    %v3647 = vadd.f32 %v3466, %v3646
    %v3648 = vpop.f32.mrb[0].mxu0
    %3649 = vmatprep.mubr.bf16.mxu0 0
    %3650 = vmatmul.mubr.bf16.gmra.mrb[0].mxu0 %v3375
    %v3651 = vpop.f32.mrb[0].mxu0
    %v3652 = vadd.f32 %v3471, %v3651
    %v3653 = vpop.f32.mrb[0].mxu0
    %v3654 = vpop.f32.mrb[0].mxu0
    %v3655 = vadd.f32 %v3474, %v3654
    %v3656 = vpop.f32.mrb[0].mxu0
    %3657 = vmatprep.mubr.bf16.mxu0 0
    %3658 = vmatmul.mubr.bf16.gmra.mrb[0].mxu0 %v3377
    %v3659 = vpop.f32.mrb[0].mxu0
    %v3660 = vadd.f32 %v3479, %v3659
    %v3661 = vpop.f32.mrb[0].mxu0
    %v3662 = vpop.f32.mrb[0].mxu0
    %v3663 = vadd.f32 %v3482, %v3662
    %v3664 = vpop.f32.mrb[0].mxu0
    %3665 = vmatprep.mubr.bf16.mxu0 0
    %3666 = vmatmul.mubr.bf16.gmra.mrb[0].mxu0 %v3379
    %v3667 = vpop.f32.mrb[0].mxu0
    %v3668 = vadd.f32 %v3487, %v3667
    %v3669 = vpop.f32.mrb[0].mxu0
    %v3670 = vpop.f32.mrb[0].mxu0
    %v3671 = vadd.f32 %v3490, %v3670
    %v3672 = vpop.f32.mrb[0].mxu0
    %3673 = vmatprep.mubr.bf16.mxu0 0
    %3674 = vmatmul.mubr.bf16.gmra.mrb[0].mxu0 %v3381
    %v3675 = vpop.f32.mrb[0].mxu0
    %v3676 = vadd.f32 %v3495, %v3675
    %v3677 = vpop.f32.mrb[0].mxu0
    %v3678 = vpop.f32.mrb[0].mxu0
    %v3679 = vadd.f32 %v3498, %v3678
    %v3680 = vpop.f32.mrb[0].mxu0
    %3681 = vmatprep.mubr.bf16.mxu0 0
    %3682 = vmatmul.mubr.bf16.gmra.mrb[0].mxu0 %v3383
    %v3683 = vpop.f32.mrb[0].mxu0
    %v3684 = vadd.f32 %v3503, %v3683
    %v3685 = vpop.f32.mrb[0].mxu0
    %v3686 = vpop.f32.mrb[0].mxu0
    %v3687 = vadd.f32 %v3506, %v3686
    %v3688 = vpop.f32.mrb[0].mxu0
    %3689 = vmatprep.mubr.bf16.mxu0 0
    %3690 = vmatmul.mubr.bf16.gmra.mrb[0].mxu0 %v3385
    %v3691 = vpop.f32.mrb[0].mxu0
    %v3692 = vadd.f32 %v3511, %v3691
    %v3693 = vpop.f32.mrb[0].mxu0
    %v3694 = vpop.f32.mrb[0].mxu0
    %v3695 = vadd.f32 %v3514, %v3694
    %v3696 = vpop.f32.mrb[0].mxu0
    %3697 = vmatprep.mubr.bf16.mxu0 0
    %3698 = vmatmul.mubr.bf16.gmra.mrb[0].mxu0 %v3387
    %v3699 = vpop.f32.mrb[0].mxu0
    %v3700 = vadd.f32 %v3519, %v3699
    %v3701 = vpop.f32.mrb[0].mxu0
    %v3702 = vpop.f32.mrb[0].mxu0
    %v3703 = vadd.f32 %v3522, %v3702
    %v3704 = vpop.f32.mrb[0].mxu0
    %3705 = vmatprep.mubr.bf16.mxu0 0
    %3706 = vmatmul.mubr.bf16.gmra.mrb[0].mxu0 %v3389
    %v3707 = vpop.f32.mrb[0].mxu0
    %v3708 = vadd.f32 %v3527, %v3707
    %v3709 = vpop.f32.mrb[0].mxu0
    %v3710 = vpop.f32.mrb[0].mxu0
    %v3711 = vadd.f32 %v3530, %v3710
    %v3712 = vpop.f32.mrb[0].mxu0
    %3713 = vmatprep.mubr.bf16.mxu0 0
    %3714 = vmatmul.mubr.bf16.gmra.mrb[0].mxu0 %v3391
    %v3715 = vpop.f32.mrb[0].mxu0
    %v3716 = vadd.f32 %v3535, %v3715
    %v3717 = vpop.f32.mrb[0].mxu0
    %v3718 = vpop.f32.mrb[0].mxu0
    %v3719 = vadd.f32 %v3538, %v3718
    %v3720 = vpop.f32.mrb[0].mxu0
    %3721 = vmatprep.mubr.bf16.mxu0 0
    %3722 = vmatmul.mubr.bf16.gmra.mrb[0].mxu0 %v3393
    %v3723 = vpop.f32.mrb[0].mxu0
    %v3724 = vadd.f32 %v3543, %v3723
    %v3725 = vpop.f32.mrb[0].mxu0
    %v3726 = vpop.f32.mrb[0].mxu0
    %v3727 = vadd.f32 %v3546, %v3726
    %v3728 = vpop.f32.mrb[0].mxu0
    %3729 = vmatprep.mubr.bf16.mxu0 0
    %3730 = vmatmul.mubr.bf16.gmra.mrb[0].mxu0 %v3395
    %v3731 = vpop.f32.mrb[0].mxu0
    %v3732 = vadd.f32 %v3551, %v3731
    %v3733 = vpop.f32.mrb[0].mxu0
    %v3734 = vpop.f32.mrb[0].mxu0
    %v3735 = vadd.f32 %v3554, %v3734
    %v3736 = vpop.f32.mrb[0].mxu0
    %3737 = vmatprep.mubr.bf16.mxu0 0
    %3738 = vmatmul.mubr.bf16.gmra.mrb[0].mxu0 %v3397
    %v3739 = vpop.f32.mrb[0].mxu0
    %v3740 = vadd.f32 %v3559, %v3739
    %v3741 = vpop.f32.mrb[0].mxu0
    %v3742 = vpop.f32.mrb[0].mxu0
    %v3743 = vadd.f32 %v3562, %v3742
    %v3744 = vpop.f32.mrb[0].mxu0
    %3745 = vdwg.mxu0
    %3747 = vrot.lane.b32.xlu0 %v544, 1
    %v3748 = vpop.permute.xlu0 %3747
    %v3749 = vshrl.u32 %v448, 16
    %v3751 = vshll.u32 %v448, 16
    %v3753 = vrot.slane %v3751, 1
    %v3754 = vor.u32 %v3749, %v3753
    %v3755 = vshll.u32 %v478, 16
    %v3757 = vrot.slane %v3755, 1
    %v3758 = vsel %vm629, %v3754, %v3757
    %3759 = vrot.lane.b32.xlu0 %v3758, 4
    %v3760 = vpop.permute.xlu0 %3759
    %v3761 = vshrl.u32 %v544, 16
    %v3763 = vshll.u32 %v544, 16
    %v3765 = vrot.slane %v3763, 1
    %v3766 = vor.u32 %v3761, %v3765
    %v3767 = vshll.u32 %v574, 16
    %v3769 = vrot.slane %v3767, 1
    %v3770 = vsel %vm629, %v3766, %v3769
    %3771 = vrot.lane.b32.xlu0 %v3770, 5
    %v3772 = vpop.permute.xlu0 %3771
    %v3775 = vrot.slane %v448, 1
    %v3776 = vrot.slane %v478, 1
    %v3777 = vsel %vm1046, %v3775, %v3776
    %3778 = vrot.lane.b32.xlu0 %v3777, 8
    %v3779 = vpop.permute.xlu0 %3778
    %v3781 = vrot.slane %v544, 1
    %v3782 = vrot.slane %v574, 1
    %v3783 = vsel %vm1046, %v3781, %v3782
    %3784 = vrot.lane.b32.xlu0 %v3783, 9
    %v3785 = vpop.permute.xlu0 %3784
    %v3786 = vrot.slane %v3749, 1
    %v3787 = vrot.slane %v3751, 2
    %v3788 = vor.u32 %v3786, %v3787
    %v3789 = vshrl.u32 %v478, 16
    %v3791 = vrot.slane %v3789, 1
    %v3792 = vrot.slane %v3755, 2
    %v3793 = vor.u32 %v3791, %v3792
    %v3794 = vsel %vm1223, %v3788, %v3793
    %3795 = vrot.lane.b32.xlu0 %v3794, 12
    %v3796 = vpop.permute.xlu0 %3795
    %v3797 = vrot.slane %v3761, 1
    %v3798 = vrot.slane %v3763, 2
    %v3799 = vor.u32 %v3797, %v3798
    %v3800 = vshrl.u32 %v574, 16
    %v3802 = vrot.slane %v3800, 1
    %v3803 = vrot.slane %v3767, 2
    %v3804 = vor.u32 %v3802, %v3803
    %v3805 = vsel %vm1223, %v3799, %v3804
    %3806 = vrot.lane.b32.xlu0 %v3805, 13
    %v3807 = vpop.permute.xlu0 %3806
    %v3808 = vrot.slane %v448, 2
    %v3809 = vrot.slane %v478, 2
    %v3810 = vsel %vm1576, %v3808, %v3809
    %3811 = vrot.lane.b32.xlu0 %v3810, 16
    %v3812 = vpop.permute.xlu0 %3811
    %v3813 = vrot.slane %v544, 2
    %v3814 = vrot.slane %v574, 2
    %v3815 = vsel %vm1576, %v3813, %v3814
    %3816 = vrot.lane.b32.xlu0 %v3815, 17
    %v3817 = vpop.permute.xlu0 %3816
    %v3818 = vrot.slane %v3749, 2
    %v3819 = vrot.slane %v3751, 3
    %v3820 = vor.u32 %v3818, %v3819
    %v3821 = vrot.slane %v3789, 2
    %v3822 = vrot.slane %v3755, 3
    %v3823 = vor.u32 %v3821, %v3822
    %v3824 = vsel %vm1737, %v3820, %v3823
    %3825 = vrot.lane.b32.xlu0 %v3824, 20
    %v3826 = vpop.permute.xlu0 %3825
    %v3827 = vrot.slane %v3761, 2
    %v3828 = vrot.slane %v3763, 3
    %v3829 = vor.u32 %v3827, %v3828
    %v3830 = vrot.slane %v3800, 2
    %v3831 = vrot.slane %v3767, 3
    %v3832 = vor.u32 %v3830, %v3831
    %v3833 = vsel %vm1737, %v3829, %v3832
    %3834 = vrot.lane.b32.xlu0 %v3833, 21
    %v3835 = vpop.permute.xlu0 %3834
    %v3836 = vrot.slane %v448, 3
    %v3837 = vrot.slane %v478, 3
    %v3838 = vsel %vm2026, %v3836, %v3837
    %3839 = vrot.lane.b32.xlu0 %v3838, 24
    %v3840 = vpop.permute.xlu0 %3839
    %v3841 = vrot.slane %v544, 3
    %v3842 = vrot.slane %v574, 3
    %v3843 = vsel %vm2026, %v3841, %v3842
    %3844 = vrot.lane.b32.xlu0 %v3843, 25
    %v3845 = vpop.permute.xlu0 %3844
    %v3846 = vrot.slane %v3749, 3
    %v3847 = vrot.slane %v3751, 4
    %v3848 = vor.u32 %v3846, %v3847
    %v3849 = vrot.slane %v3789, 3
    %v3850 = vrot.slane %v3755, 4
    %v3851 = vor.u32 %v3849, %v3850
    %v3852 = vsel %vm2187, %v3848, %v3851
    %3853 = vrot.lane.b32.xlu0 %v3852, 28
    %v3854 = vpop.permute.xlu0 %3853
    %v3855 = vrot.slane %v3761, 3
    %v3856 = vrot.slane %v3763, 4
    %v3857 = vor.u32 %v3855, %v3856
    %v3858 = vrot.slane %v3800, 3
    %v3859 = vrot.slane %v3767, 4
    %v3860 = vor.u32 %v3858, %v3859
    %v3861 = vsel %vm2187, %v3857, %v3860
    %3862 = vrot.lane.b32.xlu0 %v3861, 29
    %v3863 = vpop.permute.xlu0 %3862
    %v3865 = vsel %vm2476, %v448, %v3748
    %v3867 = vsel %vm2509, %v3865, %v3760
    %v3869 = vsel %vm2542, %v3867, %v3772
    %v3871 = vsel %vm2575, %v3869, %v3779
    %v3873 = vsel %vm2608, %v3871, %v3785
    %v3875 = vsel %vm2641, %v3873, %v3796
    %v3877 = vsel %vm2674, %v3875, %v3807
    %v3879 = vsel %vm2707, %v3877, %v3812
    %v3881 = vsel %vm2740, %v3879, %v3817
    %v3883 = vsel %vm2773, %v3881, %v3826
    %v3885 = vsel %vm2806, %v3883, %v3835
    %v3887 = vsel %vm2839, %v3885, %v3840
    %v3889 = vsel %vm2872, %v3887, %v3845
    %v3891 = vsel %vm2905, %v3889, %v3854
    %v3893 = vsel %vm2938, %v3891, %v3863
    %3894 = vrot.lane.b32.xlu0 %v574, 1
    %v3895 = vpop.permute.xlu0 %3894
    %v3897 = vsel %vm2476, %v478, %v3895
    %v3900 = vrot.slane %v3865, 4
    %v3901 = vrot.slane %v3897, 4
    %v3902 = vsel %vm3067, %v3900, %v3901
    %3903 = vrot.lane.b32.xlu0 %v3902, 32
    %v3904 = vpop.permute.xlu0 %3903
    %v3906 = vsel %vm3148, %v3893, %v3904
    %s3907 = scalar_lea.vmem [#allocation7], 40
    %v3908 = vld [vmem:[%s3907] sm:$0xf]
    %v3909 = vld [vmem:[%s3907 + $0x4] sm:$0xf]
    %v3910 = vld [vmem:[%s3907 + $0x8] sm:$0xf]
    %v3911 = vld [vmem:[%s3907 + $0xc] sm:$0xf]
    %v3912 = vld [vmem:[%s3907 + $0x10] sm:$0x3]
    %v3918 = vunpack.c.l.b16 %v3908
    %v3919 = vunpack.c.l.b16 %v3909
    %v3920 = vunpack.c.l.b16 %v3910
    %v3921 = vunpack.c.l.b16 %v3911
    %v3922 = vunpack.c.l.b16 %v3912
    %v3923 = vpack.c.b16 %v3919, %v3918
    %v3924 = vpack.c.b16 %v3921, %v3920
    %v3925 = vpack.c.b16 %v3922, %v3922
    %v3928 = vsel %vm3368, %v3906, 0
    %v3931 = vsel %vm411, %v3925, 0
    %3933 = vmatprep.subr.bf16.mxu0 0
    %3934 = vmatpush1.bf16.msra.mxu0 %v3923
    %3935 = vmatprep.subr.bf16.mxu0 0
    %3936 = vmatpush1.bf16.msra.mxu0 %v3924
    %3937 = vmatprep.subr.bf16.mxu0 0
    %3938 = vmatpush1.bf16.msra.mxu0 %v3931
    %3939 = vmatprep.subr.bf16.mxu0 0
    %3940 = vmatpush1.bf16.msra.mxu0 0
    %3941 = vmatprep.subr.bf16.mxu0 0
    %3942 = vmatpush1.bf16.msra.mxu0 0
    %3943 = vmatprep.subr.bf16.mxu0 0
    %3944 = vmatpush1.bf16.msra.mxu0 0
    %3945 = vmatprep.subr.bf16.mxu0 0
    %3946 = vmatpush1.bf16.msra.mxu0 0
    %3947 = vmatprep.subr.bf16.mxu0 0
    %3948 = vmatpush1.bf16.msra.mxu0 0
    %3949 = vmatprep.subr.bf16.mxu0 0
    %3950 = vmatpush1.bf16.msra.mxu0 0
    %3951 = vmatprep.subr.bf16.mxu0 0
    %3952 = vmatpush1.bf16.msra.mxu0 0
    %3953 = vmatprep.subr.bf16.mxu0 0
    %3954 = vmatpush1.bf16.msra.mxu0 0
    %3955 = vmatprep.subr.bf16.mxu0 0
    %3956 = vmatpush1.bf16.msra.mxu0 0
    %3957 = vmatprep.subr.bf16.mxu0 0
    %3958 = vmatpush1.bf16.msra.mxu0 0
    %3959 = vmatprep.subr.bf16.mxu0 0
    %3960 = vmatpush1.bf16.msra.mxu0 0
    %3961 = vmatprep.subr.bf16.mxu0 0
    %3962 = vmatpush1.bf16.msra.mxu0 0
    %3963 = vmatprep.subr.bf16.mxu0 0
    %3964 = vmatpush1.bf16.msra.mxu0 0
    %3965 = vmatprep.mubr.bf16.mxu0 0
    %3966 = vmatmul.mubr.bf16.gmra.mrb[0].mxu0 %v3371
    %v3967 = vpop.f32.mrb[0].mxu0
    %v3968 = vadd.f32 0.0, %v3967
    %v3969 = vpop.f32.mrb[0].mxu0
    %v3970 = vpop.f32.mrb[0].mxu0
    %v3971 = vadd.f32 0.0, %v3970
    %v3972 = vpop.f32.mrb[0].mxu0
    %3973 = vmatprep.mubr.bf16.mxu0 0
    %3974 = vmatmul.mubr.bf16.gmra.mrb[0].mxu0 %v3373
    %v3975 = vpop.f32.mrb[0].mxu0
    %v3976 = vadd.f32 0.0, %v3975
    %v3977 = vpop.f32.mrb[0].mxu0
    %v3978 = vpop.f32.mrb[0].mxu0
    %v3979 = vadd.f32 0.0, %v3978
    %v3980 = vpop.f32.mrb[0].mxu0
    %3981 = vmatprep.mubr.bf16.mxu0 0
    %3982 = vmatmul.mubr.bf16.gmra.mrb[0].mxu0 %v3375
    %v3983 = vpop.f32.mrb[0].mxu0
    %v3984 = vadd.f32 0.0, %v3983
    %v3985 = vpop.f32.mrb[0].mxu0
    %v3986 = vpop.f32.mrb[0].mxu0
    %v3987 = vadd.f32 0.0, %v3986
    %v3988 = vpop.f32.mrb[0].mxu0
    %3989 = vmatprep.mubr.bf16.mxu0 0
    %3990 = vmatmul.mubr.bf16.gmra.mrb[0].mxu0 %v3377
    %v3991 = vpop.f32.mrb[0].mxu0
    %v3992 = vadd.f32 0.0, %v3991
    %v3993 = vpop.f32.mrb[0].mxu0
    %v3994 = vpop.f32.mrb[0].mxu0
    %v3995 = vadd.f32 0.0, %v3994
    %v3996 = vpop.f32.mrb[0].mxu0
    %3997 = vmatprep.mubr.bf16.mxu0 0
    %3998 = vmatmul.mubr.bf16.gmra.mrb[0].mxu0 %v3379
    %v3999 = vpop.f32.mrb[0].mxu0
    %v4000 = vadd.f32 0.0, %v3999
    %v4001 = vpop.f32.mrb[0].mxu0
    %v4002 = vpop.f32.mrb[0].mxu0
    %v4003 = vadd.f32 0.0, %v4002
    %v4004 = vpop.f32.mrb[0].mxu0
    %4005 = vmatprep.mubr.bf16.mxu0 0
    %4006 = vmatmul.mubr.bf16.gmra.mrb[0].mxu0 %v3381
    %v4007 = vpop.f32.mrb[0].mxu0
    %v4008 = vadd.f32 0.0, %v4007
    %v4009 = vpop.f32.mrb[0].mxu0
    %v4010 = vpop.f32.mrb[0].mxu0
    %v4011 = vadd.f32 0.0, %v4010
    %v4012 = vpop.f32.mrb[0].mxu0
    %4013 = vmatprep.mubr.bf16.mxu0 0
    %4014 = vmatmul.mubr.bf16.gmra.mrb[0].mxu0 %v3383
    %v4015 = vpop.f32.mrb[0].mxu0
    %v4016 = vadd.f32 0.0, %v4015
    %v4017 = vpop.f32.mrb[0].mxu0
    %v4018 = vpop.f32.mrb[0].mxu0
    %v4019 = vadd.f32 0.0, %v4018
    %v4020 = vpop.f32.mrb[0].mxu0
    %4021 = vmatprep.mubr.bf16.mxu0 0
    %4022 = vmatmul.mubr.bf16.gmra.mrb[0].mxu0 %v3385
    %v4023 = vpop.f32.mrb[0].mxu0
    %v4024 = vadd.f32 0.0, %v4023
    %v4025 = vpop.f32.mrb[0].mxu0
    %v4026 = vpop.f32.mrb[0].mxu0
    %v4027 = vadd.f32 0.0, %v4026
    %v4028 = vpop.f32.mrb[0].mxu0
    %4029 = vmatprep.mubr.bf16.mxu0 0
    %4030 = vmatmul.mubr.bf16.gmra.mrb[0].mxu0 %v3387
    %v4031 = vpop.f32.mrb[0].mxu0
    %v4032 = vadd.f32 0.0, %v4031
    %v4033 = vpop.f32.mrb[0].mxu0
    %v4034 = vpop.f32.mrb[0].mxu0
    %v4035 = vadd.f32 0.0, %v4034
    %v4036 = vpop.f32.mrb[0].mxu0
    %4037 = vmatprep.mubr.bf16.mxu0 0
    %4038 = vmatmul.mubr.bf16.gmra.mrb[0].mxu0 %v3389
    %v4039 = vpop.f32.mrb[0].mxu0
    %v4040 = vadd.f32 0.0, %v4039
    %v4041 = vpop.f32.mrb[0].mxu0
    %v4042 = vpop.f32.mrb[0].mxu0
    %v4043 = vadd.f32 0.0, %v4042
    %v4044 = vpop.f32.mrb[0].mxu0
    %4045 = vmatprep.mubr.bf16.mxu0 0
    %4046 = vmatmul.mubr.bf16.gmra.mrb[0].mxu0 %v3391
    %v4047 = vpop.f32.mrb[0].mxu0
    %v4048 = vadd.f32 0.0, %v4047
    %v4049 = vpop.f32.mrb[0].mxu0
    %v4050 = vpop.f32.mrb[0].mxu0
    %v4051 = vadd.f32 0.0, %v4050
    %v4052 = vpop.f32.mrb[0].mxu0
    %4053 = vmatprep.mubr.bf16.mxu0 0
    %4054 = vmatmul.mubr.bf16.gmra.mrb[0].mxu0 %v3393
    %v4055 = vpop.f32.mrb[0].mxu0
    %v4056 = vadd.f32 0.0, %v4055
    %v4057 = vpop.f32.mrb[0].mxu0
    %v4058 = vpop.f32.mrb[0].mxu0
    %v4059 = vadd.f32 0.0, %v4058
    %v4060 = vpop.f32.mrb[0].mxu0
    %4061 = vmatprep.mubr.bf16.mxu0 0
    %4062 = vmatmul.mubr.bf16.gmra.mrb[0].mxu0 %v3395
    %v4063 = vpop.f32.mrb[0].mxu0
    %v4064 = vadd.f32 0.0, %v4063
    %v4065 = vpop.f32.mrb[0].mxu0
    %v4066 = vpop.f32.mrb[0].mxu0
    %v4067 = vadd.f32 0.0, %v4066
    %v4068 = vpop.f32.mrb[0].mxu0
    %4069 = vmatprep.mubr.bf16.mxu0 0
    %4070 = vmatmul.mubr.bf16.gmra.mrb[0].mxu0 %v3397
    %v4071 = vpop.f32.mrb[0].mxu0
    %v4072 = vadd.f32 0.0, %v4071
    %v4073 = vpop.f32.mrb[0].mxu0
    %v4074 = vpop.f32.mrb[0].mxu0
    %v4075 = vadd.f32 0.0, %v4074
    %v4076 = vpop.f32.mrb[0].mxu0
    %4077 = vmatprep.mubr.bf16.mxu0 0
    %4078 = vmatmul.mubr.bf16.gmra.mrb[0].mxu0 %v3399
    %v4079 = vpop.f32.mrb[0].mxu0
    %v4080 = vadd.f32 0.0, %v4079
    %v4081 = vpop.f32.mrb[0].mxu0
    %v4082 = vpop.f32.mrb[0].mxu0
    %v4083 = vadd.f32 0.0, %v4082
    %v4084 = vpop.f32.mrb[0].mxu0
    %4085 = vmatprep.mubr.bf16.mxu0 0
    %4086 = vmatmul.mubr.bf16.gmra.mrb[0].mxu0 %v3928
    %v4087 = vpop.f32.mrb[0].mxu0
    %v4088 = vadd.f32 0.0, %v4087
    %v4089 = vpop.f32.mrb[0].mxu0
    %v4090 = vpop.f32.mrb[0].mxu0
    %v4091 = vadd.f32 0.0, %v4090
    %v4092 = vpop.f32.mrb[0].mxu0
    %4093 = vdwg.mxu0
    %v4094 = vadd.f32 %v3620, %v3968
    %v4095 = vadd.f32 %v3623, %v3971
    %v4096 = vadd.f32 %v3628, %v3976
    %v4097 = vadd.f32 %v3631, %v3979
    %v4098 = vadd.f32 %v3636, %v3984
    %v4099 = vadd.f32 %v3639, %v3987
    %v4100 = vadd.f32 %v3644, %v3992
    %v4101 = vadd.f32 %v3647, %v3995
    %v4102 = vadd.f32 %v3652, %v4000
    %v4103 = vadd.f32 %v3655, %v4003
    %v4104 = vadd.f32 %v3660, %v4008
    %v4105 = vadd.f32 %v3663, %v4011
    %v4106 = vadd.f32 %v3668, %v4016
    %v4107 = vadd.f32 %v3671, %v4019
    %v4108 = vadd.f32 %v3676, %v4024
    %v4109 = vadd.f32 %v3679, %v4027
    %v4110 = vadd.f32 %v3684, %v4032
    %v4111 = vadd.f32 %v3687, %v4035
    %v4112 = vadd.f32 %v3692, %v4040
    %v4113 = vadd.f32 %v3695, %v4043
    %v4114 = vadd.f32 %v3700, %v4048
    %v4115 = vadd.f32 %v3703, %v4051
    %v4116 = vadd.f32 %v3708, %v4056
    %v4117 = vadd.f32 %v3711, %v4059
    %v4118 = vadd.f32 %v3716, %v4064
    %v4119 = vadd.f32 %v3719, %v4067
    %v4120 = vadd.f32 %v3724, %v4072
    %v4121 = vadd.f32 %v3727, %v4075
    %v4122 = vadd.f32 %v3732, %v4080
    %v4123 = vadd.f32 %v3735, %v4083
    %v4124 = vadd.f32 %v3740, %v4088
    %v4125 = vadd.f32 %v3743, %v4091
    %4127 = vrot.lane.b32.xlu0 %v546, 1
    %v4128 = vpop.permute.xlu0 %4127
    %v4129 = vshrl.u32 %v450, 16
    %v4131 = vshll.u32 %v450, 16
    %v4133 = vrot.slane %v4131, 1
    %v4134 = vor.u32 %v4129, %v4133
    %v4135 = vshll.u32 %v479, 16
    %v4137 = vrot.slane %v4135, 1
    %v4138 = vsel %vm629, %v4134, %v4137
    %4139 = vrot.lane.b32.xlu0 %v4138, 4
    %v4140 = vpop.permute.xlu0 %4139
    %v4141 = vshrl.u32 %v546, 16
    %v4143 = vshll.u32 %v546, 16
    %v4145 = vrot.slane %v4143, 1
    %v4146 = vor.u32 %v4141, %v4145
    %v4147 = vshll.u32 %v575, 16
    %v4149 = vrot.slane %v4147, 1
    %v4150 = vsel %vm629, %v4146, %v4149
    %4151 = vrot.lane.b32.xlu0 %v4150, 5
    %v4152 = vpop.permute.xlu0 %4151
    %v4155 = vrot.slane %v450, 1
    %v4156 = vrot.slane %v479, 1
    %v4157 = vsel %vm1046, %v4155, %v4156
    %4158 = vrot.lane.b32.xlu0 %v4157, 8
    %v4159 = vpop.permute.xlu0 %4158
    %v4161 = vrot.slane %v546, 1
    %v4162 = vrot.slane %v575, 1
    %v4163 = vsel %vm1046, %v4161, %v4162
    %4164 = vrot.lane.b32.xlu0 %v4163, 9
    %v4165 = vpop.permute.xlu0 %4164
    %v4166 = vrot.slane %v4129, 1
    %v4167 = vrot.slane %v4131, 2
    %v4168 = vor.u32 %v4166, %v4167
    %v4169 = vshrl.u32 %v479, 16
    %v4171 = vrot.slane %v4169, 1
    %v4172 = vrot.slane %v4135, 2
    %v4173 = vor.u32 %v4171, %v4172
    %v4174 = vsel %vm1223, %v4168, %v4173
    %4175 = vrot.lane.b32.xlu0 %v4174, 12
    %v4176 = vpop.permute.xlu0 %4175
    %v4177 = vrot.slane %v4141, 1
    %v4178 = vrot.slane %v4143, 2
    %v4179 = vor.u32 %v4177, %v4178
    %v4180 = vshrl.u32 %v575, 16
    %v4182 = vrot.slane %v4180, 1
    %v4183 = vrot.slane %v4147, 2
    %v4184 = vor.u32 %v4182, %v4183
    %v4185 = vsel %vm1223, %v4179, %v4184
    %4186 = vrot.lane.b32.xlu0 %v4185, 13
    %v4187 = vpop.permute.xlu0 %4186
    %v4188 = vrot.slane %v450, 2
    %v4189 = vrot.slane %v479, 2
    %v4190 = vsel %vm1576, %v4188, %v4189
    %4191 = vrot.lane.b32.xlu0 %v4190, 16
    %v4192 = vpop.permute.xlu0 %4191
    %v4193 = vrot.slane %v546, 2
    %v4194 = vrot.slane %v575, 2
    %v4195 = vsel %vm1576, %v4193, %v4194
    %4196 = vrot.lane.b32.xlu0 %v4195, 17
    %v4197 = vpop.permute.xlu0 %4196
    %v4198 = vrot.slane %v4129, 2
    %v4199 = vrot.slane %v4131, 3
    %v4200 = vor.u32 %v4198, %v4199
    %v4201 = vrot.slane %v4169, 2
    %v4202 = vrot.slane %v4135, 3
    %v4203 = vor.u32 %v4201, %v4202
    %v4204 = vsel %vm1737, %v4200, %v4203
    %4205 = vrot.lane.b32.xlu0 %v4204, 20
    %v4206 = vpop.permute.xlu0 %4205
    %v4207 = vrot.slane %v4141, 2
    %v4208 = vrot.slane %v4143, 3
    %v4209 = vor.u32 %v4207, %v4208
    %v4210 = vrot.slane %v4180, 2
    %v4211 = vrot.slane %v4147, 3
    %v4212 = vor.u32 %v4210, %v4211
    %v4213 = vsel %vm1737, %v4209, %v4212
    %4214 = vrot.lane.b32.xlu0 %v4213, 21
    %v4215 = vpop.permute.xlu0 %4214
    %v4216 = vrot.slane %v450, 3
    %v4217 = vrot.slane %v479, 3
    %v4218 = vsel %vm2026, %v4216, %v4217
    %4219 = vrot.lane.b32.xlu0 %v4218, 24
    %v4220 = vpop.permute.xlu0 %4219
    %v4221 = vrot.slane %v546, 3
    %v4222 = vrot.slane %v575, 3
    %v4223 = vsel %vm2026, %v4221, %v4222
    %4224 = vrot.lane.b32.xlu0 %v4223, 25
    %v4225 = vpop.permute.xlu0 %4224
    %v4226 = vrot.slane %v4129, 3
    %v4227 = vrot.slane %v4131, 4
    %v4228 = vor.u32 %v4226, %v4227
    %v4229 = vrot.slane %v4169, 3
    %v4230 = vrot.slane %v4135, 4
    %v4231 = vor.u32 %v4229, %v4230
    %v4232 = vsel %vm2187, %v4228, %v4231
    %4233 = vrot.lane.b32.xlu0 %v4232, 28
    %v4234 = vpop.permute.xlu0 %4233
    %v4235 = vrot.slane %v4141, 3
    %v4236 = vrot.slane %v4143, 4
    %v4237 = vor.u32 %v4235, %v4236
    %v4238 = vrot.slane %v4180, 3
    %v4239 = vrot.slane %v4147, 4
    %v4240 = vor.u32 %v4238, %v4239
    %v4241 = vsel %vm2187, %v4237, %v4240
    %4242 = vrot.lane.b32.xlu0 %v4241, 29
    %v4243 = vpop.permute.xlu0 %4242
    %v4245 = vsel %vm2476, %v450, %v4128
    %v4247 = vsel %vm2509, %v4245, %v4140
    %v4249 = vsel %vm2542, %v4247, %v4152
    %v4251 = vsel %vm2575, %v4249, %v4159
    %v4253 = vsel %vm2608, %v4251, %v4165
    %v4255 = vsel %vm2641, %v4253, %v4176
    %v4257 = vsel %vm2674, %v4255, %v4187
    %v4259 = vsel %vm2707, %v4257, %v4192
    %v4261 = vsel %vm2740, %v4259, %v4197
    %v4263 = vsel %vm2773, %v4261, %v4206
    %v4265 = vsel %vm2806, %v4263, %v4215
    %v4267 = vsel %vm2839, %v4265, %v4220
    %v4269 = vsel %vm2872, %v4267, %v4225
    %v4271 = vsel %vm2905, %v4269, %v4234
    %v4273 = vsel %vm2938, %v4271, %v4243
    %4274 = vrot.lane.b32.xlu0 %v575, 1
    %v4275 = vpop.permute.xlu0 %4274
    %v4277 = vsel %vm2476, %v479, %v4275
    %v4280 = vrot.slane %v4245, 4
    %v4281 = vrot.slane %v4277, 4
    %v4282 = vsel %vm3067, %v4280, %v4281
    %4283 = vrot.lane.b32.xlu0 %v4282, 32
    %v4284 = vpop.permute.xlu0 %4283
    %v4286 = vsel %vm3148, %v4273, %v4284
    %s4287 = scalar_lea.vmem [#allocation7], 60
    %v4288 = vld [vmem:[%s4287] sm:$0xf]
    %v4289 = vld [vmem:[%s4287 + $0x4] sm:$0xf]
    %v4290 = vld [vmem:[%s4287 + $0x8] sm:$0xf]
    %v4291 = vld [vmem:[%s4287 + $0xc] sm:$0xf]
    %v4292 = vld [vmem:[%s4287 + $0x10] sm:$0x3]
    %v4298 = vunpack.c.l.b16 %v4288
    %v4299 = vunpack.c.l.b16 %v4289
    %v4300 = vunpack.c.l.b16 %v4290
    %v4301 = vunpack.c.l.b16 %v4291
    %v4302 = vunpack.c.l.b16 %v4292
    %v4303 = vpack.c.b16 %v4299, %v4298
    %v4304 = vpack.c.b16 %v4301, %v4300
    %v4305 = vpack.c.b16 %v4302, %v4302
    %v4308 = vsel %vm3368, %v4286, 0
    %v4311 = vsel %vm411, %v4305, 0
    %4313 = vmatprep.subr.bf16.mxu0 0
    %4314 = vmatpush1.bf16.msra.mxu0 %v4303
    %4315 = vmatprep.subr.bf16.mxu0 0
    %4316 = vmatpush1.bf16.msra.mxu0 %v4304
    %4317 = vmatprep.subr.bf16.mxu0 0
    %4318 = vmatpush1.bf16.msra.mxu0 %v4311
    %4319 = vmatprep.subr.bf16.mxu0 0
    %4320 = vmatpush1.bf16.msra.mxu0 0
    %4321 = vmatprep.subr.bf16.mxu0 0
    %4322 = vmatpush1.bf16.msra.mxu0 0
    %4323 = vmatprep.subr.bf16.mxu0 0
    %4324 = vmatpush1.bf16.msra.mxu0 0
    %4325 = vmatprep.subr.bf16.mxu0 0
    %4326 = vmatpush1.bf16.msra.mxu0 0
    %4327 = vmatprep.subr.bf16.mxu0 0
    %4328 = vmatpush1.bf16.msra.mxu0 0
    %4329 = vmatprep.subr.bf16.mxu0 0
    %4330 = vmatpush1.bf16.msra.mxu0 0
    %4331 = vmatprep.subr.bf16.mxu0 0
    %4332 = vmatpush1.bf16.msra.mxu0 0
    %4333 = vmatprep.subr.bf16.mxu0 0
    %4334 = vmatpush1.bf16.msra.mxu0 0
    %4335 = vmatprep.subr.bf16.mxu0 0
    %4336 = vmatpush1.bf16.msra.mxu0 0
    %4337 = vmatprep.subr.bf16.mxu0 0
    %4338 = vmatpush1.bf16.msra.mxu0 0
    %4339 = vmatprep.subr.bf16.mxu0 0
    %4340 = vmatpush1.bf16.msra.mxu0 0
    %4341 = vmatprep.subr.bf16.mxu0 0
    %4342 = vmatpush1.bf16.msra.mxu0 0
    %4343 = vmatprep.subr.bf16.mxu0 0
    %4344 = vmatpush1.bf16.msra.mxu0 0
    %4345 = vmatprep.mubr.bf16.mxu0 0
    %4346 = vmatmul.mubr.bf16.gmra.mrb[0].mxu0 %v3373
    %v4347 = vpop.f32.mrb[0].mxu0
    %v4348 = vadd.f32 0.0, %v4347
    %v4349 = vpop.f32.mrb[0].mxu0
    %v4350 = vpop.f32.mrb[0].mxu0
    %v4351 = vadd.f32 0.0, %v4350
    %v4352 = vpop.f32.mrb[0].mxu0
    %4353 = vmatprep.mubr.bf16.mxu0 0
    %4354 = vmatmul.mubr.bf16.gmra.mrb[0].mxu0 %v3375
    %v4355 = vpop.f32.mrb[0].mxu0
    %v4356 = vadd.f32 0.0, %v4355
    %v4357 = vpop.f32.mrb[0].mxu0
    %v4358 = vpop.f32.mrb[0].mxu0
    %v4359 = vadd.f32 0.0, %v4358
    %v4360 = vpop.f32.mrb[0].mxu0
    %4361 = vmatprep.mubr.bf16.mxu0 0
    %4362 = vmatmul.mubr.bf16.gmra.mrb[0].mxu0 %v3377
    %v4363 = vpop.f32.mrb[0].mxu0
    %v4364 = vadd.f32 0.0, %v4363
    %v4365 = vpop.f32.mrb[0].mxu0
    %v4366 = vpop.f32.mrb[0].mxu0
    %v4367 = vadd.f32 0.0, %v4366
    %v4368 = vpop.f32.mrb[0].mxu0
    %4369 = vmatprep.mubr.bf16.mxu0 0
    %4370 = vmatmul.mubr.bf16.gmra.mrb[0].mxu0 %v3379
    %v4371 = vpop.f32.mrb[0].mxu0
    %v4372 = vadd.f32 0.0, %v4371
    %v4373 = vpop.f32.mrb[0].mxu0
    %v4374 = vpop.f32.mrb[0].mxu0
    %v4375 = vadd.f32 0.0, %v4374
    %v4376 = vpop.f32.mrb[0].mxu0
    %4377 = vmatprep.mubr.bf16.mxu0 0
    %4378 = vmatmul.mubr.bf16.gmra.mrb[0].mxu0 %v3381
    %v4379 = vpop.f32.mrb[0].mxu0
    %v4380 = vadd.f32 0.0, %v4379
    %v4381 = vpop.f32.mrb[0].mxu0
    %v4382 = vpop.f32.mrb[0].mxu0
    %v4383 = vadd.f32 0.0, %v4382
    %v4384 = vpop.f32.mrb[0].mxu0
    %4385 = vmatprep.mubr.bf16.mxu0 0
    %4386 = vmatmul.mubr.bf16.gmra.mrb[0].mxu0 %v3383
    %v4387 = vpop.f32.mrb[0].mxu0
    %v4388 = vadd.f32 0.0, %v4387
    %v4389 = vpop.f32.mrb[0].mxu0
    %v4390 = vpop.f32.mrb[0].mxu0
    %v4391 = vadd.f32 0.0, %v4390
    %v4392 = vpop.f32.mrb[0].mxu0
    %4393 = vmatprep.mubr.bf16.mxu0 0
    %4394 = vmatmul.mubr.bf16.gmra.mrb[0].mxu0 %v3385
    %v4395 = vpop.f32.mrb[0].mxu0
    %v4396 = vadd.f32 0.0, %v4395
    %v4397 = vpop.f32.mrb[0].mxu0
    %v4398 = vpop.f32.mrb[0].mxu0
    %v4399 = vadd.f32 0.0, %v4398
    %v4400 = vpop.f32.mrb[0].mxu0
    %4401 = vmatprep.mubr.bf16.mxu0 0
    %4402 = vmatmul.mubr.bf16.gmra.mrb[0].mxu0 %v3387
    %v4403 = vpop.f32.mrb[0].mxu0
    %v4404 = vadd.f32 0.0, %v4403
    %v4405 = vpop.f32.mrb[0].mxu0
    %v4406 = vpop.f32.mrb[0].mxu0
    %v4407 = vadd.f32 0.0, %v4406
    %v4408 = vpop.f32.mrb[0].mxu0
    %4409 = vmatprep.mubr.bf16.mxu0 0
    %4410 = vmatmul.mubr.bf16.gmra.mrb[0].mxu0 %v3389
    %v4411 = vpop.f32.mrb[0].mxu0
    %v4412 = vadd.f32 0.0, %v4411
    %v4413 = vpop.f32.mrb[0].mxu0
    %v4414 = vpop.f32.mrb[0].mxu0
    %v4415 = vadd.f32 0.0, %v4414
    %v4416 = vpop.f32.mrb[0].mxu0
    %4417 = vmatprep.mubr.bf16.mxu0 0
    %4418 = vmatmul.mubr.bf16.gmra.mrb[0].mxu0 %v3391
    %v4419 = vpop.f32.mrb[0].mxu0
    %v4420 = vadd.f32 0.0, %v4419
    %v4421 = vpop.f32.mrb[0].mxu0
    %v4422 = vpop.f32.mrb[0].mxu0
    %v4423 = vadd.f32 0.0, %v4422
    %v4424 = vpop.f32.mrb[0].mxu0
    %4425 = vmatprep.mubr.bf16.mxu0 0
    %4426 = vmatmul.mubr.bf16.gmra.mrb[0].mxu0 %v3393
    %v4427 = vpop.f32.mrb[0].mxu0
    %v4428 = vadd.f32 0.0, %v4427
    %v4429 = vpop.f32.mrb[0].mxu0
    %v4430 = vpop.f32.mrb[0].mxu0
    %v4431 = vadd.f32 0.0, %v4430
    %v4432 = vpop.f32.mrb[0].mxu0
    %4433 = vmatprep.mubr.bf16.mxu0 0
    %4434 = vmatmul.mubr.bf16.gmra.mrb[0].mxu0 %v3395
    %v4435 = vpop.f32.mrb[0].mxu0
    %v4436 = vadd.f32 0.0, %v4435
    %v4437 = vpop.f32.mrb[0].mxu0
    %v4438 = vpop.f32.mrb[0].mxu0
    %v4439 = vadd.f32 0.0, %v4438
    %v4440 = vpop.f32.mrb[0].mxu0
    %4441 = vmatprep.mubr.bf16.mxu0 0
    %4442 = vmatmul.mubr.bf16.gmra.mrb[0].mxu0 %v3397
    %v4443 = vpop.f32.mrb[0].mxu0
    %v4444 = vadd.f32 0.0, %v4443
    %v4445 = vpop.f32.mrb[0].mxu0
    %v4446 = vpop.f32.mrb[0].mxu0
    %v4447 = vadd.f32 0.0, %v4446
    %v4448 = vpop.f32.mrb[0].mxu0
    %4449 = vmatprep.mubr.bf16.mxu0 0
    %4450 = vmatmul.mubr.bf16.gmra.mrb[0].mxu0 %v3399
    %v4451 = vpop.f32.mrb[0].mxu0
    %v4452 = vadd.f32 0.0, %v4451
    %v4453 = vpop.f32.mrb[0].mxu0
    %v4454 = vpop.f32.mrb[0].mxu0
    %v4455 = vadd.f32 0.0, %v4454
    %v4456 = vpop.f32.mrb[0].mxu0
    %4457 = vmatprep.mubr.bf16.mxu0 0
    %4458 = vmatmul.mubr.bf16.gmra.mrb[0].mxu0 %v3928
    %v4459 = vpop.f32.mrb[0].mxu0
    %v4460 = vadd.f32 0.0, %v4459
    %v4461 = vpop.f32.mrb[0].mxu0
    %v4462 = vpop.f32.mrb[0].mxu0
    %v4463 = vadd.f32 0.0, %v4462
    %v4464 = vpop.f32.mrb[0].mxu0
    %4465 = vmatprep.mubr.bf16.mxu0 0
    %4466 = vmatmul.mubr.bf16.gmra.mrb[0].mxu0 %v4308
    %v4467 = vpop.f32.mrb[0].mxu0
    %v4468 = vadd.f32 0.0, %v4467
    %v4469 = vpop.f32.mrb[0].mxu0
    %v4470 = vpop.f32.mrb[0].mxu0
    %v4471 = vadd.f32 0.0, %v4470
    %v4472 = vpop.f32.mrb[0].mxu0
    %4473 = vdwg.mxu0
    %v4474 = vadd.f32 %v4094, %v4348
    %v4475 = vadd.f32 %v4095, %v4351
    %v4476 = vadd.f32 %v4096, %v4356
    %v4477 = vadd.f32 %v4097, %v4359
    %v4478 = vadd.f32 %v4098, %v4364
    %v4479 = vadd.f32 %v4099, %v4367
    %v4480 = vadd.f32 %v4100, %v4372
    %v4481 = vadd.f32 %v4101, %v4375
    %v4482 = vadd.f32 %v4102, %v4380
    %v4483 = vadd.f32 %v4103, %v4383
    %v4484 = vadd.f32 %v4104, %v4388
    %v4485 = vadd.f32 %v4105, %v4391
    %v4486 = vadd.f32 %v4106, %v4396
    %v4487 = vadd.f32 %v4107, %v4399
    %v4488 = vadd.f32 %v4108, %v4404
    %v4489 = vadd.f32 %v4109, %v4407
    %v4490 = vadd.f32 %v4110, %v4412
    %v4491 = vadd.f32 %v4111, %v4415
    %v4492 = vadd.f32 %v4112, %v4420
    %v4493 = vadd.f32 %v4113, %v4423
    %v4494 = vadd.f32 %v4114, %v4428
    %v4495 = vadd.f32 %v4115, %v4431
    %v4496 = vadd.f32 %v4116, %v4436
    %v4497 = vadd.f32 %v4117, %v4439
    %v4498 = vadd.f32 %v4118, %v4444
    %v4499 = vadd.f32 %v4119, %v4447
    %v4500 = vadd.f32 %v4120, %v4452
    %v4501 = vadd.f32 %v4121, %v4455
    %v4502 = vadd.f32 %v4122, %v4460
    %v4503 = vadd.f32 %v4123, %v4463
    %v4504 = vadd.f32 %v4124, %v4468
    %v4505 = vadd.f32 %v4125, %v4471
    %4507 = vrot.lane.b32.xlu0 %v548, 1
    %v4508 = vpop.permute.xlu0 %4507
    %v4509 = vshrl.u32 %v452, 16
    %v4511 = vshll.u32 %v452, 16
    %v4513 = vrot.slane %v4511, 1
    %v4514 = vor.u32 %v4509, %v4513
    %v4515 = vshll.u32 %v480, 16
    %v4517 = vrot.slane %v4515, 1
    %v4518 = vsel %vm629, %v4514, %v4517
    %4519 = vrot.lane.b32.xlu0 %v4518, 4
    %v4520 = vpop.permute.xlu0 %4519
    %v4521 = vshrl.u32 %v548, 16
    %v4523 = vshll.u32 %v548, 16
    %v4525 = vrot.slane %v4523, 1
    %v4526 = vor.u32 %v4521, %v4525
    %v4527 = vshll.u32 %v576, 16
    %v4529 = vrot.slane %v4527, 1
    %v4530 = vsel %vm629, %v4526, %v4529
    %4531 = vrot.lane.b32.xlu0 %v4530, 5
    %v4532 = vpop.permute.xlu0 %4531
    %v4535 = vrot.slane %v452, 1
    %v4536 = vrot.slane %v480, 1
    %v4537 = vsel %vm1046, %v4535, %v4536
    %4538 = vrot.lane.b32.xlu0 %v4537, 8
    %v4539 = vpop.permute.xlu0 %4538
    %v4541 = vrot.slane %v548, 1
    %v4542 = vrot.slane %v576, 1
    %v4543 = vsel %vm1046, %v4541, %v4542
    %4544 = vrot.lane.b32.xlu0 %v4543, 9
    %v4545 = vpop.permute.xlu0 %4544
    %v4546 = vrot.slane %v4509, 1
    %v4547 = vrot.slane %v4511, 2
    %v4548 = vor.u32 %v4546, %v4547
    %v4549 = vshrl.u32 %v480, 16
    %v4551 = vrot.slane %v4549, 1
    %v4552 = vrot.slane %v4515, 2
    %v4553 = vor.u32 %v4551, %v4552
    %v4554 = vsel %vm1223, %v4548, %v4553
    %4555 = vrot.lane.b32.xlu0 %v4554, 12
    %v4556 = vpop.permute.xlu0 %4555
    %v4557 = vrot.slane %v4521, 1
    %v4558 = vrot.slane %v4523, 2
    %v4559 = vor.u32 %v4557, %v4558
    %v4560 = vshrl.u32 %v576, 16
    %v4562 = vrot.slane %v4560, 1
    %v4563 = vrot.slane %v4527, 2
    %v4564 = vor.u32 %v4562, %v4563
    %v4565 = vsel %vm1223, %v4559, %v4564
    %4566 = vrot.lane.b32.xlu0 %v4565, 13
    %v4567 = vpop.permute.xlu0 %4566
    %v4568 = vrot.slane %v452, 2
    %v4569 = vrot.slane %v480, 2
    %v4570 = vsel %vm1576, %v4568, %v4569
    %4571 = vrot.lane.b32.xlu0 %v4570, 16
    %v4572 = vpop.permute.xlu0 %4571
    %v4573 = vrot.slane %v548, 2
    %v4574 = vrot.slane %v576, 2
    %v4575 = vsel %vm1576, %v4573, %v4574
    %4576 = vrot.lane.b32.xlu0 %v4575, 17
    %v4577 = vpop.permute.xlu0 %4576
    %v4578 = vrot.slane %v4509, 2
    %v4579 = vrot.slane %v4511, 3
    %v4580 = vor.u32 %v4578, %v4579
    %v4581 = vrot.slane %v4549, 2
    %v4582 = vrot.slane %v4515, 3
    %v4583 = vor.u32 %v4581, %v4582
    %v4584 = vsel %vm1737, %v4580, %v4583
    %4585 = vrot.lane.b32.xlu0 %v4584, 20
    %v4586 = vpop.permute.xlu0 %4585
    %v4587 = vrot.slane %v4521, 2
    %v4588 = vrot.slane %v4523, 3
    %v4589 = vor.u32 %v4587, %v4588
    %v4590 = vrot.slane %v4560, 2
    %v4591 = vrot.slane %v4527, 3
    %v4592 = vor.u32 %v4590, %v4591
    %v4593 = vsel %vm1737, %v4589, %v4592
    %4594 = vrot.lane.b32.xlu0 %v4593, 21
    %v4595 = vpop.permute.xlu0 %4594
    %v4596 = vrot.slane %v452, 3
    %v4597 = vrot.slane %v480, 3
    %v4598 = vsel %vm2026, %v4596, %v4597
    %4599 = vrot.lane.b32.xlu0 %v4598, 24
    %v4600 = vpop.permute.xlu0 %4599
    %v4601 = vrot.slane %v548, 3
    %v4602 = vrot.slane %v576, 3
    %v4603 = vsel %vm2026, %v4601, %v4602
    %4604 = vrot.lane.b32.xlu0 %v4603, 25
    %v4605 = vpop.permute.xlu0 %4604
    %v4606 = vrot.slane %v4509, 3
    %v4607 = vrot.slane %v4511, 4
    %v4608 = vor.u32 %v4606, %v4607
    %v4609 = vrot.slane %v4549, 3
    %v4610 = vrot.slane %v4515, 4
    %v4611 = vor.u32 %v4609, %v4610
    %v4612 = vsel %vm2187, %v4608, %v4611
    %4613 = vrot.lane.b32.xlu0 %v4612, 28
    %v4614 = vpop.permute.xlu0 %4613
    %v4615 = vrot.slane %v4521, 3
    %v4616 = vrot.slane %v4523, 4
    %v4617 = vor.u32 %v4615, %v4616
    %v4618 = vrot.slane %v4560, 3
    %v4619 = vrot.slane %v4527, 4
    %v4620 = vor.u32 %v4618, %v4619
    %v4621 = vsel %vm2187, %v4617, %v4620
    %4622 = vrot.lane.b32.xlu0 %v4621, 29
    %v4623 = vpop.permute.xlu0 %4622
    %v4625 = vsel %vm2476, %v452, %v4508
    %v4627 = vsel %vm2509, %v4625, %v4520
    %v4629 = vsel %vm2542, %v4627, %v4532
    %v4631 = vsel %vm2575, %v4629, %v4539
    %v4633 = vsel %vm2608, %v4631, %v4545
    %v4635 = vsel %vm2641, %v4633, %v4556
    %v4637 = vsel %vm2674, %v4635, %v4567
    %v4639 = vsel %vm2707, %v4637, %v4572
    %v4641 = vsel %vm2740, %v4639, %v4577
    %v4643 = vsel %vm2773, %v4641, %v4586
    %v4645 = vsel %vm2806, %v4643, %v4595
    %v4647 = vsel %vm2839, %v4645, %v4600
    %v4649 = vsel %vm2872, %v4647, %v4605
    %v4651 = vsel %vm2905, %v4649, %v4614
    %v4653 = vsel %vm2938, %v4651, %v4623
    %4654 = vrot.lane.b32.xlu0 %v576, 1
    %v4655 = vpop.permute.xlu0 %4654
    %v4657 = vsel %vm2476, %v480, %v4655
    %v4660 = vrot.slane %v4625, 4
    %v4661 = vrot.slane %v4657, 4
    %v4662 = vsel %vm3067, %v4660, %v4661
    %4663 = vrot.lane.b32.xlu0 %v4662, 32
    %v4664 = vpop.permute.xlu0 %4663
    %v4666 = vsel %vm3148, %v4653, %v4664
    %s4667 = scalar_lea.vmem [#allocation7], 80
    %v4668 = vld [vmem:[%s4667] sm:$0xf]
    %v4669 = vld [vmem:[%s4667 + $0x4] sm:$0xf]
    %v4670 = vld [vmem:[%s4667 + $0x8] sm:$0xf]
    %v4671 = vld [vmem:[%s4667 + $0xc] sm:$0xf]
    %v4672 = vld [vmem:[%s4667 + $0x10] sm:$0x3]
    %v4678 = vunpack.c.l.b16 %v4668
    %v4679 = vunpack.c.l.b16 %v4669
    %v4680 = vunpack.c.l.b16 %v4670
    %v4681 = vunpack.c.l.b16 %v4671
    %v4682 = vunpack.c.l.b16 %v4672
    %v4683 = vpack.c.b16 %v4679, %v4678
    %v4684 = vpack.c.b16 %v4681, %v4680
    %v4685 = vpack.c.b16 %v4682, %v4682
    %v4688 = vsel %vm3368, %v4666, 0
    %v4691 = vsel %vm411, %v4685, 0
    %4693 = vmatprep.subr.bf16.mxu0 0
    %4694 = vmatpush1.bf16.msra.mxu0 %v4683
    %4695 = vmatprep.subr.bf16.mxu0 0
    %4696 = vmatpush1.bf16.msra.mxu0 %v4684
    %4697 = vmatprep.subr.bf16.mxu0 0
    %4698 = vmatpush1.bf16.msra.mxu0 %v4691
    %4699 = vmatprep.subr.bf16.mxu0 0
    %4700 = vmatpush1.bf16.msra.mxu0 0
    %4701 = vmatprep.subr.bf16.mxu0 0
    %4702 = vmatpush1.bf16.msra.mxu0 0
    %4703 = vmatprep.subr.bf16.mxu0 0
    %4704 = vmatpush1.bf16.msra.mxu0 0
    %4705 = vmatprep.subr.bf16.mxu0 0
    %4706 = vmatpush1.bf16.msra.mxu0 0
    %4707 = vmatprep.subr.bf16.mxu0 0
    %4708 = vmatpush1.bf16.msra.mxu0 0
    %4709 = vmatprep.subr.bf16.mxu0 0
    %4710 = vmatpush1.bf16.msra.mxu0 0
    %4711 = vmatprep.subr.bf16.mxu0 0
    %4712 = vmatpush1.bf16.msra.mxu0 0
    %4713 = vmatprep.subr.bf16.mxu0 0
    %4714 = vmatpush1.bf16.msra.mxu0 0
    %4715 = vmatprep.subr.bf16.mxu0 0
    %4716 = vmatpush1.bf16.msra.mxu0 0
    %4717 = vmatprep.subr.bf16.mxu0 0
    %4718 = vmatpush1.bf16.msra.mxu0 0
    %4719 = vmatprep.subr.bf16.mxu0 0
    %4720 = vmatpush1.bf16.msra.mxu0 0
    %4721 = vmatprep.subr.bf16.mxu0 0
    %4722 = vmatpush1.bf16.msra.mxu0 0
    %4723 = vmatprep.subr.bf16.mxu0 0
    %4724 = vmatpush1.bf16.msra.mxu0 0
    %4725 = vmatprep.mubr.bf16.mxu0 0
    %4726 = vmatmul.mubr.bf16.gmra.mrb[0].mxu0 %v3375
    %v4727 = vpop.f32.mrb[0].mxu0
    %v4728 = vadd.f32 0.0, %v4727
    %v4729 = vpop.f32.mrb[0].mxu0
    %v4730 = vpop.f32.mrb[0].mxu0
    %v4731 = vadd.f32 0.0, %v4730
    %v4732 = vpop.f32.mrb[0].mxu0
    %4733 = vmatprep.mubr.bf16.mxu0 0
    %4734 = vmatmul.mubr.bf16.gmra.mrb[0].mxu0 %v3377
    %v4735 = vpop.f32.mrb[0].mxu0
    %v4736 = vadd.f32 0.0, %v4735
    %v4737 = vpop.f32.mrb[0].mxu0
    %v4738 = vpop.f32.mrb[0].mxu0
    %v4739 = vadd.f32 0.0, %v4738
    %v4740 = vpop.f32.mrb[0].mxu0
    %4741 = vmatprep.mubr.bf16.mxu0 0
    %4742 = vmatmul.mubr.bf16.gmra.mrb[0].mxu0 %v3379
    %v4743 = vpop.f32.mrb[0].mxu0
    %v4744 = vadd.f32 0.0, %v4743
    %v4745 = vpop.f32.mrb[0].mxu0
    %v4746 = vpop.f32.mrb[0].mxu0
    %v4747 = vadd.f32 0.0, %v4746
    %v4748 = vpop.f32.mrb[0].mxu0
    %4749 = vmatprep.mubr.bf16.mxu0 0
    %4750 = vmatmul.mubr.bf16.gmra.mrb[0].mxu0 %v3381
    %v4751 = vpop.f32.mrb[0].mxu0
    %v4752 = vadd.f32 0.0, %v4751
    %v4753 = vpop.f32.mrb[0].mxu0
    %v4754 = vpop.f32.mrb[0].mxu0
    %v4755 = vadd.f32 0.0, %v4754
    %v4756 = vpop.f32.mrb[0].mxu0
    %4757 = vmatprep.mubr.bf16.mxu0 0
    %4758 = vmatmul.mubr.bf16.gmra.mrb[0].mxu0 %v3383
    %v4759 = vpop.f32.mrb[0].mxu0
    %v4760 = vadd.f32 0.0, %v4759
    %v4761 = vpop.f32.mrb[0].mxu0
    %v4762 = vpop.f32.mrb[0].mxu0
    %v4763 = vadd.f32 0.0, %v4762
    %v4764 = vpop.f32.mrb[0].mxu0
    %4765 = vmatprep.mubr.bf16.mxu0 0
    %4766 = vmatmul.mubr.bf16.gmra.mrb[0].mxu0 %v3385
    %v4767 = vpop.f32.mrb[0].mxu0
    %v4768 = vadd.f32 0.0, %v4767
    %v4769 = vpop.f32.mrb[0].mxu0
    %v4770 = vpop.f32.mrb[0].mxu0
    %v4771 = vadd.f32 0.0, %v4770
    %v4772 = vpop.f32.mrb[0].mxu0
    %4773 = vmatprep.mubr.bf16.mxu0 0
    %4774 = vmatmul.mubr.bf16.gmra.mrb[0].mxu0 %v3387
    %v4775 = vpop.f32.mrb[0].mxu0
    %v4776 = vadd.f32 0.0, %v4775
    %v4777 = vpop.f32.mrb[0].mxu0
    %v4778 = vpop.f32.mrb[0].mxu0
    %v4779 = vadd.f32 0.0, %v4778
    %v4780 = vpop.f32.mrb[0].mxu0
    %4781 = vmatprep.mubr.bf16.mxu0 0
    %4782 = vmatmul.mubr.bf16.gmra.mrb[0].mxu0 %v3389
    %v4783 = vpop.f32.mrb[0].mxu0
    %v4784 = vadd.f32 0.0, %v4783
    %v4785 = vpop.f32.mrb[0].mxu0
    %v4786 = vpop.f32.mrb[0].mxu0
    %v4787 = vadd.f32 0.0, %v4786
    %v4788 = vpop.f32.mrb[0].mxu0
    %4789 = vmatprep.mubr.bf16.mxu0 0
    %4790 = vmatmul.mubr.bf16.gmra.mrb[0].mxu0 %v3391
    %v4791 = vpop.f32.mrb[0].mxu0
    %v4792 = vadd.f32 0.0, %v4791
    %v4793 = vpop.f32.mrb[0].mxu0
    %v4794 = vpop.f32.mrb[0].mxu0
    %v4795 = vadd.f32 0.0, %v4794
    %v4796 = vpop.f32.mrb[0].mxu0
    %4797 = vmatprep.mubr.bf16.mxu0 0
    %4798 = vmatmul.mubr.bf16.gmra.mrb[0].mxu0 %v3393
    %v4799 = vpop.f32.mrb[0].mxu0
    %v4800 = vadd.f32 0.0, %v4799
    %v4801 = vpop.f32.mrb[0].mxu0
    %v4802 = vpop.f32.mrb[0].mxu0
    %v4803 = vadd.f32 0.0, %v4802
    %v4804 = vpop.f32.mrb[0].mxu0
    %4805 = vmatprep.mubr.bf16.mxu0 0
    %4806 = vmatmul.mubr.bf16.gmra.mrb[0].mxu0 %v3395
    %v4807 = vpop.f32.mrb[0].mxu0
    %v4808 = vadd.f32 0.0, %v4807
    %v4809 = vpop.f32.mrb[0].mxu0
    %v4810 = vpop.f32.mrb[0].mxu0
    %v4811 = vadd.f32 0.0, %v4810
    %v4812 = vpop.f32.mrb[0].mxu0
    %4813 = vmatprep.mubr.bf16.mxu0 0
    %4814 = vmatmul.mubr.bf16.gmra.mrb[0].mxu0 %v3397
    %v4815 = vpop.f32.mrb[0].mxu0
    %v4816 = vadd.f32 0.0, %v4815
    %v4817 = vpop.f32.mrb[0].mxu0
    %v4818 = vpop.f32.mrb[0].mxu0
    %v4819 = vadd.f32 0.0, %v4818
    %v4820 = vpop.f32.mrb[0].mxu0
    %4821 = vmatprep.mubr.bf16.mxu0 0
    %4822 = vmatmul.mubr.bf16.gmra.mrb[0].mxu0 %v3399
    %v4823 = vpop.f32.mrb[0].mxu0
    %v4824 = vadd.f32 0.0, %v4823
    %v4825 = vpop.f32.mrb[0].mxu0
    %v4826 = vpop.f32.mrb[0].mxu0
    %v4827 = vadd.f32 0.0, %v4826
    %v4828 = vpop.f32.mrb[0].mxu0
    %4829 = vmatprep.mubr.bf16.mxu0 0
    %4830 = vmatmul.mubr.bf16.gmra.mrb[0].mxu0 %v3928
    %v4831 = vpop.f32.mrb[0].mxu0
    %v4832 = vadd.f32 0.0, %v4831
    %v4833 = vpop.f32.mrb[0].mxu0
    %v4834 = vpop.f32.mrb[0].mxu0
    %v4835 = vadd.f32 0.0, %v4834
    %v4836 = vpop.f32.mrb[0].mxu0
    %4837 = vmatprep.mubr.bf16.mxu0 0
    %4838 = vmatmul.mubr.bf16.gmra.mrb[0].mxu0 %v4308
    %v4839 = vpop.f32.mrb[0].mxu0
    %v4840 = vadd.f32 0.0, %v4839
    %v4841 = vpop.f32.mrb[0].mxu0
    %v4842 = vpop.f32.mrb[0].mxu0
    %v4843 = vadd.f32 0.0, %v4842
    %v4844 = vpop.f32.mrb[0].mxu0
    %4845 = vmatprep.mubr.bf16.mxu0 0
    %4846 = vmatmul.mubr.bf16.gmra.mrb[0].mxu0 %v4688
    %v4847 = vpop.f32.mrb[0].mxu0
    %v4848 = vadd.f32 0.0, %v4847
    %v4849 = vpop.f32.mrb[0].mxu0
    %v4850 = vpop.f32.mrb[0].mxu0
    %v4851 = vadd.f32 0.0, %v4850
    %v4852 = vpop.f32.mrb[0].mxu0
    %4853 = vdwg.mxu0
    %v4854 = vadd.f32 %v4474, %v4728
    %v4855 = vadd.f32 %v4475, %v4731
    %v4856 = vadd.f32 %v4476, %v4736
    %v4857 = vadd.f32 %v4477, %v4739
    %v4858 = vadd.f32 %v4478, %v4744
    %v4859 = vadd.f32 %v4479, %v4747
    %v4860 = vadd.f32 %v4480, %v4752
    %v4861 = vadd.f32 %v4481, %v4755
    %v4862 = vadd.f32 %v4482, %v4760
    %v4863 = vadd.f32 %v4483, %v4763
    %v4864 = vadd.f32 %v4484, %v4768
    %v4865 = vadd.f32 %v4485, %v4771
    %v4866 = vadd.f32 %v4486, %v4776
    %v4867 = vadd.f32 %v4487, %v4779
    %v4868 = vadd.f32 %v4488, %v4784
    %v4869 = vadd.f32 %v4489, %v4787
    %v4870 = vadd.f32 %v4490, %v4792
    %v4871 = vadd.f32 %v4491, %v4795
    %v4872 = vadd.f32 %v4492, %v4800
    %v4873 = vadd.f32 %v4493, %v4803
    %v4874 = vadd.f32 %v4494, %v4808
    %v4875 = vadd.f32 %v4495, %v4811
    %v4876 = vadd.f32 %v4496, %v4816
    %v4877 = vadd.f32 %v4497, %v4819
    %v4878 = vadd.f32 %v4498, %v4824
    %v4879 = vadd.f32 %v4499, %v4827
    %v4880 = vadd.f32 %v4500, %v4832
    %v4881 = vadd.f32 %v4501, %v4835
    %v4882 = vadd.f32 %v4502, %v4840
    %v4883 = vadd.f32 %v4503, %v4843
    %v4884 = vadd.f32 %v4504, %v4848
    %v4885 = vadd.f32 %v4505, %v4851
    %4887 = vrot.lane.b32.xlu0 %v550, 1
    %v4888 = vpop.permute.xlu0 %4887
    %v4889 = vshrl.u32 %v454, 16
    %v4891 = vshll.u32 %v454, 16
    %v4893 = vrot.slane %v4891, 1
    %v4894 = vor.u32 %v4889, %v4893
    %v4895 = vshll.u32 %v481, 16
    %v4897 = vrot.slane %v4895, 1
    %v4898 = vsel %vm629, %v4894, %v4897
    %4899 = vrot.lane.b32.xlu0 %v4898, 4
    %v4900 = vpop.permute.xlu0 %4899
    %v4901 = vshrl.u32 %v550, 16
    %v4903 = vshll.u32 %v550, 16
    %v4905 = vrot.slane %v4903, 1
    %v4906 = vor.u32 %v4901, %v4905
    %v4907 = vshll.u32 %v577, 16
    %v4909 = vrot.slane %v4907, 1
    %v4910 = vsel %vm629, %v4906, %v4909
    %4911 = vrot.lane.b32.xlu0 %v4910, 5
    %v4912 = vpop.permute.xlu0 %4911
    %v4915 = vrot.slane %v454, 1
    %v4916 = vrot.slane %v481, 1
    %v4917 = vsel %vm1046, %v4915, %v4916
    %4918 = vrot.lane.b32.xlu0 %v4917, 8
    %v4919 = vpop.permute.xlu0 %4918
    %v4921 = vrot.slane %v550, 1
    %v4922 = vrot.slane %v577, 1
    %v4923 = vsel %vm1046, %v4921, %v4922
    %4924 = vrot.lane.b32.xlu0 %v4923, 9
    %v4925 = vpop.permute.xlu0 %4924
    %v4926 = vrot.slane %v4889, 1
    %v4927 = vrot.slane %v4891, 2
    %v4928 = vor.u32 %v4926, %v4927
    %v4929 = vshrl.u32 %v481, 16
    %v4931 = vrot.slane %v4929, 1
    %v4932 = vrot.slane %v4895, 2
    %v4933 = vor.u32 %v4931, %v4932
    %v4934 = vsel %vm1223, %v4928, %v4933
    %4935 = vrot.lane.b32.xlu0 %v4934, 12
    %v4936 = vpop.permute.xlu0 %4935
    %v4937 = vrot.slane %v4901, 1
    %v4938 = vrot.slane %v4903, 2
    %v4939 = vor.u32 %v4937, %v4938
    %v4940 = vshrl.u32 %v577, 16
    %v4942 = vrot.slane %v4940, 1
    %v4943 = vrot.slane %v4907, 2
    %v4944 = vor.u32 %v4942, %v4943
    %v4945 = vsel %vm1223, %v4939, %v4944
    %4946 = vrot.lane.b32.xlu0 %v4945, 13
    %v4947 = vpop.permute.xlu0 %4946
    %v4948 = vrot.slane %v454, 2
    %v4949 = vrot.slane %v481, 2
    %v4950 = vsel %vm1576, %v4948, %v4949
    %4951 = vrot.lane.b32.xlu0 %v4950, 16
    %v4952 = vpop.permute.xlu0 %4951
    %v4953 = vrot.slane %v550, 2
    %v4954 = vrot.slane %v577, 2
    %v4955 = vsel %vm1576, %v4953, %v4954
    %4956 = vrot.lane.b32.xlu0 %v4955, 17
    %v4957 = vpop.permute.xlu0 %4956
    %v4958 = vrot.slane %v4889, 2
    %v4959 = vrot.slane %v4891, 3
    %v4960 = vor.u32 %v4958, %v4959
    %v4961 = vrot.slane %v4929, 2
    %v4962 = vrot.slane %v4895, 3
    %v4963 = vor.u32 %v4961, %v4962
    %v4964 = vsel %vm1737, %v4960, %v4963
    %4965 = vrot.lane.b32.xlu0 %v4964, 20
    %v4966 = vpop.permute.xlu0 %4965
    %v4967 = vrot.slane %v4901, 2
    %v4968 = vrot.slane %v4903, 3
    %v4969 = vor.u32 %v4967, %v4968
    %v4970 = vrot.slane %v4940, 2
    %v4971 = vrot.slane %v4907, 3
    %v4972 = vor.u32 %v4970, %v4971
    %v4973 = vsel %vm1737, %v4969, %v4972
    %4974 = vrot.lane.b32.xlu0 %v4973, 21
    %v4975 = vpop.permute.xlu0 %4974
    %v4976 = vrot.slane %v454, 3
    %v4977 = vrot.slane %v481, 3
    %v4978 = vsel %vm2026, %v4976, %v4977
    %4979 = vrot.lane.b32.xlu0 %v4978, 24
    %v4980 = vpop.permute.xlu0 %4979
    %v4981 = vrot.slane %v550, 3
    %v4982 = vrot.slane %v577, 3
    %v4983 = vsel %vm2026, %v4981, %v4982
    %4984 = vrot.lane.b32.xlu0 %v4983, 25
    %v4985 = vpop.permute.xlu0 %4984
    %v4986 = vrot.slane %v4889, 3
    %v4987 = vrot.slane %v4891, 4
    %v4988 = vor.u32 %v4986, %v4987
    %v4989 = vrot.slane %v4929, 3
    %v4990 = vrot.slane %v4895, 4
    %v4991 = vor.u32 %v4989, %v4990
    %v4992 = vsel %vm2187, %v4988, %v4991
    %4993 = vrot.lane.b32.xlu0 %v4992, 28
    %v4994 = vpop.permute.xlu0 %4993
    %v4995 = vrot.slane %v4901, 3
    %v4996 = vrot.slane %v4903, 4
    %v4997 = vor.u32 %v4995, %v4996
    %v4998 = vrot.slane %v4940, 3
    %v4999 = vrot.slane %v4907, 4
    %v5000 = vor.u32 %v4998, %v4999
    %v5001 = vsel %vm2187, %v4997, %v5000
    %5002 = vrot.lane.b32.xlu0 %v5001, 29
    %v5003 = vpop.permute.xlu0 %5002
    %v5005 = vsel %vm2476, %v454, %v4888
    %v5007 = vsel %vm2509, %v5005, %v4900
    %v5009 = vsel %vm2542, %v5007, %v4912
    %v5011 = vsel %vm2575, %v5009, %v4919
    %v5013 = vsel %vm2608, %v5011, %v4925
    %v5015 = vsel %vm2641, %v5013, %v4936
    %v5017 = vsel %vm2674, %v5015, %v4947
    %v5019 = vsel %vm2707, %v5017, %v4952
    %v5021 = vsel %vm2740, %v5019, %v4957
    %v5023 = vsel %vm2773, %v5021, %v4966
    %v5025 = vsel %vm2806, %v5023, %v4975
    %v5027 = vsel %vm2839, %v5025, %v4980
    %v5029 = vsel %vm2872, %v5027, %v4985
    %v5031 = vsel %vm2905, %v5029, %v4994
    %v5033 = vsel %vm2938, %v5031, %v5003
    %5034 = vrot.lane.b32.xlu0 %v577, 1
    %v5035 = vpop.permute.xlu0 %5034
    %v5037 = vsel %vm2476, %v481, %v5035
    %v5040 = vrot.slane %v5005, 4
    %v5041 = vrot.slane %v5037, 4
    %v5042 = vsel %vm3067, %v5040, %v5041
    %5043 = vrot.lane.b32.xlu0 %v5042, 32
    %v5044 = vpop.permute.xlu0 %5043
    %v5046 = vsel %vm3148, %v5033, %v5044
    %s5047 = scalar_lea.vmem [#allocation7], 100
    %v5048 = vld [vmem:[%s5047] sm:$0xf]
    %v5049 = vld [vmem:[%s5047 + $0x4] sm:$0xf]
    %v5050 = vld [vmem:[%s5047 + $0x8] sm:$0xf]
    %v5051 = vld [vmem:[%s5047 + $0xc] sm:$0xf]
    %v5052 = vld [vmem:[%s5047 + $0x10] sm:$0x3]
    %v5058 = vunpack.c.l.b16 %v5048
    %v5059 = vunpack.c.l.b16 %v5049
    %v5060 = vunpack.c.l.b16 %v5050
    %v5061 = vunpack.c.l.b16 %v5051
    %v5062 = vunpack.c.l.b16 %v5052
    %v5063 = vpack.c.b16 %v5059, %v5058
    %v5064 = vpack.c.b16 %v5061, %v5060
    %v5065 = vpack.c.b16 %v5062, %v5062
    %v5068 = vsel %vm3368, %v5046, 0
    %v5071 = vsel %vm411, %v5065, 0
    %5073 = vmatprep.subr.bf16.mxu0 0
    %5074 = vmatpush1.bf16.msra.mxu0 %v5063
    %5075 = vmatprep.subr.bf16.mxu0 0
    %5076 = vmatpush1.bf16.msra.mxu0 %v5064
    %5077 = vmatprep.subr.bf16.mxu0 0
    %5078 = vmatpush1.bf16.msra.mxu0 %v5071
    %5079 = vmatprep.subr.bf16.mxu0 0
    %5080 = vmatpush1.bf16.msra.mxu0 0
    %5081 = vmatprep.subr.bf16.mxu0 0
    %5082 = vmatpush1.bf16.msra.mxu0 0
    %5083 = vmatprep.subr.bf16.mxu0 0
    %5084 = vmatpush1.bf16.msra.mxu0 0
    %5085 = vmatprep.subr.bf16.mxu0 0
    %5086 = vmatpush1.bf16.msra.mxu0 0
    %5087 = vmatprep.subr.bf16.mxu0 0
    %5088 = vmatpush1.bf16.msra.mxu0 0
    %5089 = vmatprep.subr.bf16.mxu0 0
    %5090 = vmatpush1.bf16.msra.mxu0 0
    %5091 = vmatprep.subr.bf16.mxu0 0
    %5092 = vmatpush1.bf16.msra.mxu0 0
    %5093 = vmatprep.subr.bf16.mxu0 0
    %5094 = vmatpush1.bf16.msra.mxu0 0
    %5095 = vmatprep.subr.bf16.mxu0 0
    %5096 = vmatpush1.bf16.msra.mxu0 0
    %5097 = vmatprep.subr.bf16.mxu0 0
    %5098 = vmatpush1.bf16.msra.mxu0 0
    %5099 = vmatprep.subr.bf16.mxu0 0
    %5100 = vmatpush1.bf16.msra.mxu0 0
    %5101 = vmatprep.subr.bf16.mxu0 0
    %5102 = vmatpush1.bf16.msra.mxu0 0
    %5103 = vmatprep.subr.bf16.mxu0 0
    %5104 = vmatpush1.bf16.msra.mxu0 0
    %5105 = vmatprep.mubr.bf16.mxu0 0
    %5106 = vmatmul.mubr.bf16.gmra.mrb[0].mxu0 %v3377
    %v5107 = vpop.f32.mrb[0].mxu0
    %v5108 = vadd.f32 0.0, %v5107
    %v5109 = vpop.f32.mrb[0].mxu0
    %v5110 = vpop.f32.mrb[0].mxu0
    %v5111 = vadd.f32 0.0, %v5110
    %v5112 = vpop.f32.mrb[0].mxu0
    %5113 = vmatprep.mubr.bf16.mxu0 0
    %5114 = vmatmul.mubr.bf16.gmra.mrb[0].mxu0 %v3379
    %v5115 = vpop.f32.mrb[0].mxu0
    %v5116 = vadd.f32 0.0, %v5115
    %v5117 = vpop.f32.mrb[0].mxu0
    %v5118 = vpop.f32.mrb[0].mxu0
    %v5119 = vadd.f32 0.0, %v5118
    %v5120 = vpop.f32.mrb[0].mxu0
    %5121 = vmatprep.mubr.bf16.mxu0 0
    %5122 = vmatmul.mubr.bf16.gmra.mrb[0].mxu0 %v3381
    %v5123 = vpop.f32.mrb[0].mxu0
    %v5124 = vadd.f32 0.0, %v5123
    %v5125 = vpop.f32.mrb[0].mxu0
    %v5126 = vpop.f32.mrb[0].mxu0
    %v5127 = vadd.f32 0.0, %v5126
    %v5128 = vpop.f32.mrb[0].mxu0
    %5129 = vmatprep.mubr.bf16.mxu0 0
    %5130 = vmatmul.mubr.bf16.gmra.mrb[0].mxu0 %v3383
    %v5131 = vpop.f32.mrb[0].mxu0
    %v5132 = vadd.f32 0.0, %v5131
    %v5133 = vpop.f32.mrb[0].mxu0
    %v5134 = vpop.f32.mrb[0].mxu0
    %v5135 = vadd.f32 0.0, %v5134
    %v5136 = vpop.f32.mrb[0].mxu0
    %5137 = vmatprep.mubr.bf16.mxu0 0
    %5138 = vmatmul.mubr.bf16.gmra.mrb[0].mxu0 %v3385
    %v5139 = vpop.f32.mrb[0].mxu0
    %v5140 = vadd.f32 0.0, %v5139
    %v5141 = vpop.f32.mrb[0].mxu0
    %v5142 = vpop.f32.mrb[0].mxu0
    %v5143 = vadd.f32 0.0, %v5142
    %v5144 = vpop.f32.mrb[0].mxu0
    %5145 = vmatprep.mubr.bf16.mxu0 0
    %5146 = vmatmul.mubr.bf16.gmra.mrb[0].mxu0 %v3387
    %v5147 = vpop.f32.mrb[0].mxu0
    %v5148 = vadd.f32 0.0, %v5147
    %v5149 = vpop.f32.mrb[0].mxu0
    %v5150 = vpop.f32.mrb[0].mxu0
    %v5151 = vadd.f32 0.0, %v5150
    %v5152 = vpop.f32.mrb[0].mxu0
    %5153 = vmatprep.mubr.bf16.mxu0 0
    %5154 = vmatmul.mubr.bf16.gmra.mrb[0].mxu0 %v3389
    %v5155 = vpop.f32.mrb[0].mxu0
    %v5156 = vadd.f32 0.0, %v5155
    %v5157 = vpop.f32.mrb[0].mxu0
    %v5158 = vpop.f32.mrb[0].mxu0
    %v5159 = vadd.f32 0.0, %v5158
    %v5160 = vpop.f32.mrb[0].mxu0
    %5161 = vmatprep.mubr.bf16.mxu0 0
    %5162 = vmatmul.mubr.bf16.gmra.mrb[0].mxu0 %v3391
    %v5163 = vpop.f32.mrb[0].mxu0
    %v5164 = vadd.f32 0.0, %v5163
    %v5165 = vpop.f32.mrb[0].mxu0
    %v5166 = vpop.f32.mrb[0].mxu0
    %v5167 = vadd.f32 0.0, %v5166
    %v5168 = vpop.f32.mrb[0].mxu0
    %5169 = vmatprep.mubr.bf16.mxu0 0
    %5170 = vmatmul.mubr.bf16.gmra.mrb[0].mxu0 %v3393
    %v5171 = vpop.f32.mrb[0].mxu0
    %v5172 = vadd.f32 0.0, %v5171
    %v5173 = vpop.f32.mrb[0].mxu0
    %v5174 = vpop.f32.mrb[0].mxu0
    %v5175 = vadd.f32 0.0, %v5174
    %v5176 = vpop.f32.mrb[0].mxu0
    %5177 = vmatprep.mubr.bf16.mxu0 0
    %5178 = vmatmul.mubr.bf16.gmra.mrb[0].mxu0 %v3395
    %v5179 = vpop.f32.mrb[0].mxu0
    %v5180 = vadd.f32 0.0, %v5179
    %v5181 = vpop.f32.mrb[0].mxu0
    %v5182 = vpop.f32.mrb[0].mxu0
    %v5183 = vadd.f32 0.0, %v5182
    %v5184 = vpop.f32.mrb[0].mxu0
    %5185 = vmatprep.mubr.bf16.mxu0 0
    %5186 = vmatmul.mubr.bf16.gmra.mrb[0].mxu0 %v3397
    %v5187 = vpop.f32.mrb[0].mxu0
    %v5188 = vadd.f32 0.0, %v5187
    %v5189 = vpop.f32.mrb[0].mxu0
    %v5190 = vpop.f32.mrb[0].mxu0
    %v5191 = vadd.f32 0.0, %v5190
    %v5192 = vpop.f32.mrb[0].mxu0
    %5193 = vmatprep.mubr.bf16.mxu0 0
    %5194 = vmatmul.mubr.bf16.gmra.mrb[0].mxu0 %v3399
    %v5195 = vpop.f32.mrb[0].mxu0
    %v5196 = vadd.f32 0.0, %v5195
    %v5197 = vpop.f32.mrb[0].mxu0
    %v5198 = vpop.f32.mrb[0].mxu0
    %v5199 = vadd.f32 0.0, %v5198
    %v5200 = vpop.f32.mrb[0].mxu0
    %5201 = vmatprep.mubr.bf16.mxu0 0
    %5202 = vmatmul.mubr.bf16.gmra.mrb[0].mxu0 %v3928
    %v5203 = vpop.f32.mrb[0].mxu0
    %v5204 = vadd.f32 0.0, %v5203
    %v5205 = vpop.f32.mrb[0].mxu0
    %v5206 = vpop.f32.mrb[0].mxu0
    %v5207 = vadd.f32 0.0, %v5206
    %v5208 = vpop.f32.mrb[0].mxu0
    %5209 = vmatprep.mubr.bf16.mxu0 0
    %5210 = vmatmul.mubr.bf16.gmra.mrb[0].mxu0 %v4308
    %v5211 = vpop.f32.mrb[0].mxu0
    %v5212 = vadd.f32 0.0, %v5211
    %v5213 = vpop.f32.mrb[0].mxu0
    %v5214 = vpop.f32.mrb[0].mxu0
    %v5215 = vadd.f32 0.0, %v5214
    %v5216 = vpop.f32.mrb[0].mxu0
    %5217 = vmatprep.mubr.bf16.mxu0 0
    %5218 = vmatmul.mubr.bf16.gmra.mrb[0].mxu0 %v4688
    %v5219 = vpop.f32.mrb[0].mxu0
    %v5220 = vadd.f32 0.0, %v5219
    %v5221 = vpop.f32.mrb[0].mxu0
    %v5222 = vpop.f32.mrb[0].mxu0
    %v5223 = vadd.f32 0.0, %v5222
    %v5224 = vpop.f32.mrb[0].mxu0
    %5225 = vmatprep.mubr.bf16.mxu0 0
    %5226 = vmatmul.mubr.bf16.gmra.mrb[0].mxu0 %v5068
    %v5227 = vpop.f32.mrb[0].mxu0
    %v5228 = vadd.f32 0.0, %v5227
    %v5229 = vpop.f32.mrb[0].mxu0
    %v5230 = vpop.f32.mrb[0].mxu0
    %v5231 = vadd.f32 0.0, %v5230
    %v5232 = vpop.f32.mrb[0].mxu0
    %5233 = vdwg.mxu0
    %v5234 = vadd.f32 %v4854, %v5108
    %v5235 = vadd.f32 %v4855, %v5111
    %v5236 = vadd.f32 %v4856, %v5116
    %v5237 = vadd.f32 %v4857, %v5119
    %v5238 = vadd.f32 %v4858, %v5124
    %v5239 = vadd.f32 %v4859, %v5127
    %v5240 = vadd.f32 %v4860, %v5132
    %v5241 = vadd.f32 %v4861, %v5135
    %v5242 = vadd.f32 %v4862, %v5140
    %v5243 = vadd.f32 %v4863, %v5143
    %v5244 = vadd.f32 %v4864, %v5148
    %v5245 = vadd.f32 %v4865, %v5151
    %v5246 = vadd.f32 %v4866, %v5156
    %v5247 = vadd.f32 %v4867, %v5159
    %v5248 = vadd.f32 %v4868, %v5164
    %v5249 = vadd.f32 %v4869, %v5167
    %v5250 = vadd.f32 %v4870, %v5172
    %v5251 = vadd.f32 %v4871, %v5175
    %v5252 = vadd.f32 %v4872, %v5180
    %v5253 = vadd.f32 %v4873, %v5183
    %v5254 = vadd.f32 %v4874, %v5188
    %v5255 = vadd.f32 %v4875, %v5191
    %v5256 = vadd.f32 %v4876, %v5196
    %v5257 = vadd.f32 %v4877, %v5199
    %v5258 = vadd.f32 %v4878, %v5204
    %v5259 = vadd.f32 %v4879, %v5207
    %v5260 = vadd.f32 %v4880, %v5212
    %v5261 = vadd.f32 %v4881, %v5215
    %v5262 = vadd.f32 %v4882, %v5220
    %v5263 = vadd.f32 %v4883, %v5223
    %v5264 = vadd.f32 %v4884, %v5228
    %v5265 = vadd.f32 %v4885, %v5231
    %5267 = vrot.lane.b32.xlu0 %v552, 1
    %v5268 = vpop.permute.xlu0 %5267
    %v5269 = vshrl.u32 %v456, 16
    %v5271 = vshll.u32 %v456, 16
    %v5273 = vrot.slane %v5271, 1
    %v5274 = vor.u32 %v5269, %v5273
    %v5275 = vshll.u32 %v482, 16
    %v5277 = vrot.slane %v5275, 1
    %v5278 = vsel %vm629, %v5274, %v5277
    %5279 = vrot.lane.b32.xlu0 %v5278, 4
    %v5280 = vpop.permute.xlu0 %5279
    %v5281 = vshrl.u32 %v552, 16
    %v5283 = vshll.u32 %v552, 16
    %v5285 = vrot.slane %v5283, 1
    %v5286 = vor.u32 %v5281, %v5285
    %v5287 = vshll.u32 %v578, 16
    %v5289 = vrot.slane %v5287, 1
    %v5290 = vsel %vm629, %v5286, %v5289
    %5291 = vrot.lane.b32.xlu0 %v5290, 5
    %v5292 = vpop.permute.xlu0 %5291
    %v5295 = vrot.slane %v456, 1
    %v5296 = vrot.slane %v482, 1
    %v5297 = vsel %vm1046, %v5295, %v5296
    %5298 = vrot.lane.b32.xlu0 %v5297, 8
    %v5299 = vpop.permute.xlu0 %5298
    %v5301 = vrot.slane %v552, 1
    %v5302 = vrot.slane %v578, 1
    %v5303 = vsel %vm1046, %v5301, %v5302
    %5304 = vrot.lane.b32.xlu0 %v5303, 9
    %v5305 = vpop.permute.xlu0 %5304
    %v5306 = vrot.slane %v5269, 1
    %v5307 = vrot.slane %v5271, 2
    %v5308 = vor.u32 %v5306, %v5307
    %v5309 = vshrl.u32 %v482, 16
    %v5311 = vrot.slane %v5309, 1
    %v5312 = vrot.slane %v5275, 2
    %v5313 = vor.u32 %v5311, %v5312
    %v5314 = vsel %vm1223, %v5308, %v5313
    %5315 = vrot.lane.b32.xlu0 %v5314, 12
    %v5316 = vpop.permute.xlu0 %5315
    %v5317 = vrot.slane %v5281, 1
    %v5318 = vrot.slane %v5283, 2
    %v5319 = vor.u32 %v5317, %v5318
    %v5320 = vshrl.u32 %v578, 16
    %v5322 = vrot.slane %v5320, 1
    %v5323 = vrot.slane %v5287, 2
    %v5324 = vor.u32 %v5322, %v5323
    %v5325 = vsel %vm1223, %v5319, %v5324
    %5326 = vrot.lane.b32.xlu0 %v5325, 13
    %v5327 = vpop.permute.xlu0 %5326
    %v5328 = vrot.slane %v456, 2
    %v5329 = vrot.slane %v482, 2
    %v5330 = vsel %vm1576, %v5328, %v5329
    %5331 = vrot.lane.b32.xlu0 %v5330, 16
    %v5332 = vpop.permute.xlu0 %5331
    %v5333 = vrot.slane %v552, 2
    %v5334 = vrot.slane %v578, 2
    %v5335 = vsel %vm1576, %v5333, %v5334
    %5336 = vrot.lane.b32.xlu0 %v5335, 17
    %v5337 = vpop.permute.xlu0 %5336
    %v5338 = vrot.slane %v5269, 2
    %v5339 = vrot.slane %v5271, 3
    %v5340 = vor.u32 %v5338, %v5339
    %v5341 = vrot.slane %v5309, 2
    %v5342 = vrot.slane %v5275, 3
    %v5343 = vor.u32 %v5341, %v5342
    %v5344 = vsel %vm1737, %v5340, %v5343
    %5345 = vrot.lane.b32.xlu0 %v5344, 20
    %v5346 = vpop.permute.xlu0 %5345
    %v5347 = vrot.slane %v5281, 2
    %v5348 = vrot.slane %v5283, 3
    %v5349 = vor.u32 %v5347, %v5348
    %v5350 = vrot.slane %v5320, 2
    %v5351 = vrot.slane %v5287, 3
    %v5352 = vor.u32 %v5350, %v5351
    %v5353 = vsel %vm1737, %v5349, %v5352
    %5354 = vrot.lane.b32.xlu0 %v5353, 21
    %v5355 = vpop.permute.xlu0 %5354
    %v5356 = vrot.slane %v456, 3
    %v5357 = vrot.slane %v482, 3
    %v5358 = vsel %vm2026, %v5356, %v5357
    %5359 = vrot.lane.b32.xlu0 %v5358, 24
    %v5360 = vpop.permute.xlu0 %5359
    %v5361 = vrot.slane %v552, 3
    %v5362 = vrot.slane %v578, 3
    %v5363 = vsel %vm2026, %v5361, %v5362
    %5364 = vrot.lane.b32.xlu0 %v5363, 25
    %v5365 = vpop.permute.xlu0 %5364
    %v5366 = vrot.slane %v5269, 3
    %v5367 = vrot.slane %v5271, 4
    %v5368 = vor.u32 %v5366, %v5367
    %v5369 = vrot.slane %v5309, 3
    %v5370 = vrot.slane %v5275, 4
    %v5371 = vor.u32 %v5369, %v5370
    %v5372 = vsel %vm2187, %v5368, %v5371
    %5373 = vrot.lane.b32.xlu0 %v5372, 28
    %v5374 = vpop.permute.xlu0 %5373
    %v5375 = vrot.slane %v5281, 3
    %v5376 = vrot.slane %v5283, 4
    %v5377 = vor.u32 %v5375, %v5376
    %v5378 = vrot.slane %v5320, 3
    %v5379 = vrot.slane %v5287, 4
    %v5380 = vor.u32 %v5378, %v5379
    %v5381 = vsel %vm2187, %v5377, %v5380
    %5382 = vrot.lane.b32.xlu0 %v5381, 29
    %v5383 = vpop.permute.xlu0 %5382
    %v5385 = vsel %vm2476, %v456, %v5268
    %v5387 = vsel %vm2509, %v5385, %v5280
    %v5389 = vsel %vm2542, %v5387, %v5292
    %v5391 = vsel %vm2575, %v5389, %v5299
    %v5393 = vsel %vm2608, %v5391, %v5305
    %v5395 = vsel %vm2641, %v5393, %v5316
    %v5397 = vsel %vm2674, %v5395, %v5327
    %v5399 = vsel %vm2707, %v5397, %v5332
    %v5401 = vsel %vm2740, %v5399, %v5337
    %v5403 = vsel %vm2773, %v5401, %v5346
    %v5405 = vsel %vm2806, %v5403, %v5355
    %v5407 = vsel %vm2839, %v5405, %v5360
    %v5409 = vsel %vm2872, %v5407, %v5365
    %v5411 = vsel %vm2905, %v5409, %v5374
    %v5413 = vsel %vm2938, %v5411, %v5383
    %5414 = vrot.lane.b32.xlu0 %v578, 1
    %v5415 = vpop.permute.xlu0 %5414
    %v5417 = vsel %vm2476, %v482, %v5415
    %v5420 = vrot.slane %v5385, 4
    %v5421 = vrot.slane %v5417, 4
    %v5422 = vsel %vm3067, %v5420, %v5421
    %5423 = vrot.lane.b32.xlu0 %v5422, 32
    %v5424 = vpop.permute.xlu0 %5423
    %v5426 = vsel %vm3148, %v5413, %v5424
    %s5427 = scalar_lea.vmem [#allocation7], 120
    %v5428 = vld [vmem:[%s5427] sm:$0xf]
    %v5429 = vld [vmem:[%s5427 + $0x4] sm:$0xf]
    %v5430 = vld [vmem:[%s5427 + $0x8] sm:$0xf]
    %v5431 = vld [vmem:[%s5427 + $0xc] sm:$0xf]
    %v5432 = vld [vmem:[%s5427 + $0x10] sm:$0x3]
    %v5438 = vunpack.c.l.b16 %v5428
    %v5439 = vunpack.c.l.b16 %v5429
    %v5440 = vunpack.c.l.b16 %v5430
    %v5441 = vunpack.c.l.b16 %v5431
    %v5442 = vunpack.c.l.b16 %v5432
    %v5443 = vpack.c.b16 %v5439, %v5438
    %v5444 = vpack.c.b16 %v5441, %v5440
    %v5445 = vpack.c.b16 %v5442, %v5442
    %v5448 = vsel %vm3368, %v5426, 0
    %v5451 = vsel %vm411, %v5445, 0
    %5453 = vmatprep.subr.bf16.mxu0 0
    %5454 = vmatpush1.bf16.msra.mxu0 %v5443
    %5455 = vmatprep.subr.bf16.mxu0 0
    %5456 = vmatpush1.bf16.msra.mxu0 %v5444
    %5457 = vmatprep.subr.bf16.mxu0 0
    %5458 = vmatpush1.bf16.msra.mxu0 %v5451
    %5459 = vmatprep.subr.bf16.mxu0 0
    %5460 = vmatpush1.bf16.msra.mxu0 0
    %5461 = vmatprep.subr.bf16.mxu0 0
    %5462 = vmatpush1.bf16.msra.mxu0 0
    %5463 = vmatprep.subr.bf16.mxu0 0
    %5464 = vmatpush1.bf16.msra.mxu0 0
    %5465 = vmatprep.subr.bf16.mxu0 0
    %5466 = vmatpush1.bf16.msra.mxu0 0
    %5467 = vmatprep.subr.bf16.mxu0 0
    %5468 = vmatpush1.bf16.msra.mxu0 0
    %5469 = vmatprep.subr.bf16.mxu0 0
    %5470 = vmatpush1.bf16.msra.mxu0 0
    %5471 = vmatprep.subr.bf16.mxu0 0
    %5472 = vmatpush1.bf16.msra.mxu0 0
    %5473 = vmatprep.subr.bf16.mxu0 0
    %5474 = vmatpush1.bf16.msra.mxu0 0
    %5475 = vmatprep.subr.bf16.mxu0 0
    %5476 = vmatpush1.bf16.msra.mxu0 0
    %5477 = vmatprep.subr.bf16.mxu0 0
    %5478 = vmatpush1.bf16.msra.mxu0 0
    %5479 = vmatprep.subr.bf16.mxu0 0
    %5480 = vmatpush1.bf16.msra.mxu0 0
    %5481 = vmatprep.subr.bf16.mxu0 0
    %5482 = vmatpush1.bf16.msra.mxu0 0
    %5483 = vmatprep.subr.bf16.mxu0 0
    %5484 = vmatpush1.bf16.msra.mxu0 0
    %5485 = vmatprep.mubr.bf16.mxu0 0
    %5486 = vmatmul.mubr.bf16.gmra.mrb[0].mxu0 %v3379
    %v5487 = vpop.f32.mrb[0].mxu0
    %v5488 = vadd.f32 0.0, %v5487
    %v5489 = vpop.f32.mrb[0].mxu0
    %v5490 = vpop.f32.mrb[0].mxu0
    %v5491 = vadd.f32 0.0, %v5490
    %v5492 = vpop.f32.mrb[0].mxu0
    %5493 = vmatprep.mubr.bf16.mxu0 0
    %5494 = vmatmul.mubr.bf16.gmra.mrb[0].mxu0 %v3381
    %v5495 = vpop.f32.mrb[0].mxu0
    %v5496 = vadd.f32 0.0, %v5495
    %v5497 = vpop.f32.mrb[0].mxu0
    %v5498 = vpop.f32.mrb[0].mxu0
    %v5499 = vadd.f32 0.0, %v5498
    %v5500 = vpop.f32.mrb[0].mxu0
    %5501 = vmatprep.mubr.bf16.mxu0 0
    %5502 = vmatmul.mubr.bf16.gmra.mrb[0].mxu0 %v3383
    %v5503 = vpop.f32.mrb[0].mxu0
    %v5504 = vadd.f32 0.0, %v5503
    %v5505 = vpop.f32.mrb[0].mxu0
    %v5506 = vpop.f32.mrb[0].mxu0
    %v5507 = vadd.f32 0.0, %v5506
    %v5508 = vpop.f32.mrb[0].mxu0
    %5509 = vmatprep.mubr.bf16.mxu0 0
    %5510 = vmatmul.mubr.bf16.gmra.mrb[0].mxu0 %v3385
    %v5511 = vpop.f32.mrb[0].mxu0
    %v5512 = vadd.f32 0.0, %v5511
    %v5513 = vpop.f32.mrb[0].mxu0
    %v5514 = vpop.f32.mrb[0].mxu0
    %v5515 = vadd.f32 0.0, %v5514
    %v5516 = vpop.f32.mrb[0].mxu0
    %5517 = vmatprep.mubr.bf16.mxu0 0
    %5518 = vmatmul.mubr.bf16.gmra.mrb[0].mxu0 %v3387
    %v5519 = vpop.f32.mrb[0].mxu0
    %v5520 = vadd.f32 0.0, %v5519
    %v5521 = vpop.f32.mrb[0].mxu0
    %v5522 = vpop.f32.mrb[0].mxu0
    %v5523 = vadd.f32 0.0, %v5522
    %v5524 = vpop.f32.mrb[0].mxu0
    %5525 = vmatprep.mubr.bf16.mxu0 0
    %5526 = vmatmul.mubr.bf16.gmra.mrb[0].mxu0 %v3389
    %v5527 = vpop.f32.mrb[0].mxu0
    %v5528 = vadd.f32 0.0, %v5527
    %v5529 = vpop.f32.mrb[0].mxu0
    %v5530 = vpop.f32.mrb[0].mxu0
    %v5531 = vadd.f32 0.0, %v5530
    %v5532 = vpop.f32.mrb[0].mxu0
    %5533 = vmatprep.mubr.bf16.mxu0 0
    %5534 = vmatmul.mubr.bf16.gmra.mrb[0].mxu0 %v3391
    %v5535 = vpop.f32.mrb[0].mxu0
    %v5536 = vadd.f32 0.0, %v5535
    %v5537 = vpop.f32.mrb[0].mxu0
    %v5538 = vpop.f32.mrb[0].mxu0
    %v5539 = vadd.f32 0.0, %v5538
    %v5540 = vpop.f32.mrb[0].mxu0
    %5541 = vmatprep.mubr.bf16.mxu0 0
    %5542 = vmatmul.mubr.bf16.gmra.mrb[0].mxu0 %v3393
    %v5543 = vpop.f32.mrb[0].mxu0
    %v5544 = vadd.f32 0.0, %v5543
    %v5545 = vpop.f32.mrb[0].mxu0
    %v5546 = vpop.f32.mrb[0].mxu0
    %v5547 = vadd.f32 0.0, %v5546
    %v5548 = vpop.f32.mrb[0].mxu0
    %5549 = vmatprep.mubr.bf16.mxu0 0
    %5550 = vmatmul.mubr.bf16.gmra.mrb[0].mxu0 %v3395
    %v5551 = vpop.f32.mrb[0].mxu0
    %v5552 = vadd.f32 0.0, %v5551
    %v5553 = vpop.f32.mrb[0].mxu0
    %v5554 = vpop.f32.mrb[0].mxu0
    %v5555 = vadd.f32 0.0, %v5554
    %v5556 = vpop.f32.mrb[0].mxu0
    %5557 = vmatprep.mubr.bf16.mxu0 0
    %5558 = vmatmul.mubr.bf16.gmra.mrb[0].mxu0 %v3397
    %v5559 = vpop.f32.mrb[0].mxu0
    %v5560 = vadd.f32 0.0, %v5559
    %v5561 = vpop.f32.mrb[0].mxu0
    %v5562 = vpop.f32.mrb[0].mxu0
    %v5563 = vadd.f32 0.0, %v5562
    %v5564 = vpop.f32.mrb[0].mxu0
    %5565 = vmatprep.mubr.bf16.mxu0 0
    %5566 = vmatmul.mubr.bf16.gmra.mrb[0].mxu0 %v3399
    %v5567 = vpop.f32.mrb[0].mxu0
    %v5568 = vadd.f32 0.0, %v5567
    %v5569 = vpop.f32.mrb[0].mxu0
    %v5570 = vpop.f32.mrb[0].mxu0
    %v5571 = vadd.f32 0.0, %v5570
    %v5572 = vpop.f32.mrb[0].mxu0
    %5573 = vmatprep.mubr.bf16.mxu0 0
    %5574 = vmatmul.mubr.bf16.gmra.mrb[0].mxu0 %v3928
    %v5575 = vpop.f32.mrb[0].mxu0
    %v5576 = vadd.f32 0.0, %v5575
    %v5577 = vpop.f32.mrb[0].mxu0
    %v5578 = vpop.f32.mrb[0].mxu0
    %v5579 = vadd.f32 0.0, %v5578
    %v5580 = vpop.f32.mrb[0].mxu0
    %5581 = vmatprep.mubr.bf16.mxu0 0
    %5582 = vmatmul.mubr.bf16.gmra.mrb[0].mxu0 %v4308
    %v5583 = vpop.f32.mrb[0].mxu0
    %v5584 = vadd.f32 0.0, %v5583
    %v5585 = vpop.f32.mrb[0].mxu0
    %v5586 = vpop.f32.mrb[0].mxu0
    %v5587 = vadd.f32 0.0, %v5586
    %v5588 = vpop.f32.mrb[0].mxu0
    %5589 = vmatprep.mubr.bf16.mxu0 0
    %5590 = vmatmul.mubr.bf16.gmra.mrb[0].mxu0 %v4688
    %v5591 = vpop.f32.mrb[0].mxu0
    %v5592 = vadd.f32 0.0, %v5591
    %v5593 = vpop.f32.mrb[0].mxu0
    %v5594 = vpop.f32.mrb[0].mxu0
    %v5595 = vadd.f32 0.0, %v5594
    %v5596 = vpop.f32.mrb[0].mxu0
    %5597 = vmatprep.mubr.bf16.mxu0 0
    %5598 = vmatmul.mubr.bf16.gmra.mrb[0].mxu0 %v5068
    %v5599 = vpop.f32.mrb[0].mxu0
    %v5600 = vadd.f32 0.0, %v5599
    %v5601 = vpop.f32.mrb[0].mxu0
    %v5602 = vpop.f32.mrb[0].mxu0
    %v5603 = vadd.f32 0.0, %v5602
    %v5604 = vpop.f32.mrb[0].mxu0
    %5605 = vmatprep.mubr.bf16.mxu0 0
    %5606 = vmatmul.mubr.bf16.gmra.mrb[0].mxu0 %v5448
    %v5607 = vpop.f32.mrb[0].mxu0
    %v5608 = vadd.f32 0.0, %v5607
    %v5609 = vpop.f32.mrb[0].mxu0
    %v5610 = vpop.f32.mrb[0].mxu0
    %v5611 = vadd.f32 0.0, %v5610
    %v5612 = vpop.f32.mrb[0].mxu0
    %5613 = vdwg.mxu0
    %v5614 = vadd.f32 %v5234, %v5488
    %v5615 = vadd.f32 %v5235, %v5491
    %v5616 = vadd.f32 %v5236, %v5496
    %v5617 = vadd.f32 %v5237, %v5499
    %v5618 = vadd.f32 %v5238, %v5504
    %v5619 = vadd.f32 %v5239, %v5507
    %v5620 = vadd.f32 %v5240, %v5512
    %v5621 = vadd.f32 %v5241, %v5515
    %v5622 = vadd.f32 %v5242, %v5520
    %v5623 = vadd.f32 %v5243, %v5523
    %v5624 = vadd.f32 %v5244, %v5528
    %v5625 = vadd.f32 %v5245, %v5531
    %v5626 = vadd.f32 %v5246, %v5536
    %v5627 = vadd.f32 %v5247, %v5539
    %v5628 = vadd.f32 %v5248, %v5544
    %v5629 = vadd.f32 %v5249, %v5547
    %v5630 = vadd.f32 %v5250, %v5552
    %v5631 = vadd.f32 %v5251, %v5555
    %v5632 = vadd.f32 %v5252, %v5560
    %v5633 = vadd.f32 %v5253, %v5563
    %v5634 = vadd.f32 %v5254, %v5568
    %v5635 = vadd.f32 %v5255, %v5571
    %v5636 = vadd.f32 %v5256, %v5576
    %v5637 = vadd.f32 %v5257, %v5579
    %v5638 = vadd.f32 %v5258, %v5584
    %v5639 = vadd.f32 %v5259, %v5587
    %v5640 = vadd.f32 %v5260, %v5592
    %v5641 = vadd.f32 %v5261, %v5595
    %v5642 = vadd.f32 %v5262, %v5600
    %v5643 = vadd.f32 %v5263, %v5603
    %v5644 = vadd.f32 %v5264, %v5608
    %v5645 = vadd.f32 %v5265, %v5611
    %5647 = vrot.lane.b32.xlu0 %v554, 1
    %v5648 = vpop.permute.xlu0 %5647
    %v5649 = vshrl.u32 %v458, 16
    %v5651 = vshll.u32 %v458, 16
    %v5653 = vrot.slane %v5651, 1
    %v5654 = vor.u32 %v5649, %v5653
    %v5655 = vshll.u32 %v483, 16
    %v5657 = vrot.slane %v5655, 1
    %v5658 = vsel %vm629, %v5654, %v5657
    %5659 = vrot.lane.b32.xlu0 %v5658, 4
    %v5660 = vpop.permute.xlu0 %5659
    %v5661 = vshrl.u32 %v554, 16
    %v5663 = vshll.u32 %v554, 16
    %v5665 = vrot.slane %v5663, 1
    %v5666 = vor.u32 %v5661, %v5665
    %v5667 = vshll.u32 %v579, 16
    %v5669 = vrot.slane %v5667, 1
    %v5670 = vsel %vm629, %v5666, %v5669
    %5671 = vrot.lane.b32.xlu0 %v5670, 5
    %v5672 = vpop.permute.xlu0 %5671
    %v5675 = vrot.slane %v458, 1
    %v5676 = vrot.slane %v483, 1
    %v5677 = vsel %vm1046, %v5675, %v5676
    %5678 = vrot.lane.b32.xlu0 %v5677, 8
    %v5679 = vpop.permute.xlu0 %5678
    %v5681 = vrot.slane %v554, 1
    %v5682 = vrot.slane %v579, 1
    %v5683 = vsel %vm1046, %v5681, %v5682
    %5684 = vrot.lane.b32.xlu0 %v5683, 9
    %v5685 = vpop.permute.xlu0 %5684
    %v5686 = vrot.slane %v5649, 1
    %v5687 = vrot.slane %v5651, 2
    %v5688 = vor.u32 %v5686, %v5687
    %v5689 = vshrl.u32 %v483, 16
    %v5691 = vrot.slane %v5689, 1
    %v5692 = vrot.slane %v5655, 2
    %v5693 = vor.u32 %v5691, %v5692
    %v5694 = vsel %vm1223, %v5688, %v5693
    %5695 = vrot.lane.b32.xlu0 %v5694, 12
    %v5696 = vpop.permute.xlu0 %5695
    %v5697 = vrot.slane %v5661, 1
    %v5698 = vrot.slane %v5663, 2
    %v5699 = vor.u32 %v5697, %v5698
    %v5700 = vshrl.u32 %v579, 16
    %v5702 = vrot.slane %v5700, 1
    %v5703 = vrot.slane %v5667, 2
    %v5704 = vor.u32 %v5702, %v5703
    %v5705 = vsel %vm1223, %v5699, %v5704
    %5706 = vrot.lane.b32.xlu0 %v5705, 13
    %v5707 = vpop.permute.xlu0 %5706
    %v5708 = vrot.slane %v458, 2
    %v5709 = vrot.slane %v483, 2
    %v5710 = vsel %vm1576, %v5708, %v5709
    %5711 = vrot.lane.b32.xlu0 %v5710, 16
    %v5712 = vpop.permute.xlu0 %5711
    %v5713 = vrot.slane %v554, 2
    %v5714 = vrot.slane %v579, 2
    %v5715 = vsel %vm1576, %v5713, %v5714
    %5716 = vrot.lane.b32.xlu0 %v5715, 17
    %v5717 = vpop.permute.xlu0 %5716
    %v5718 = vrot.slane %v5649, 2
    %v5719 = vrot.slane %v5651, 3
    %v5720 = vor.u32 %v5718, %v5719
    %v5721 = vrot.slane %v5689, 2
    %v5722 = vrot.slane %v5655, 3
    %v5723 = vor.u32 %v5721, %v5722
    %v5724 = vsel %vm1737, %v5720, %v5723
    %5725 = vrot.lane.b32.xlu0 %v5724, 20
    %v5726 = vpop.permute.xlu0 %5725
    %v5727 = vrot.slane %v5661, 2
    %v5728 = vrot.slane %v5663, 3
    %v5729 = vor.u32 %v5727, %v5728
    %v5730 = vrot.slane %v5700, 2
    %v5731 = vrot.slane %v5667, 3
    %v5732 = vor.u32 %v5730, %v5731
    %v5733 = vsel %vm1737, %v5729, %v5732
    %5734 = vrot.lane.b32.xlu0 %v5733, 21
    %v5735 = vpop.permute.xlu0 %5734
    %v5736 = vrot.slane %v458, 3
    %v5737 = vrot.slane %v483, 3
    %v5738 = vsel %vm2026, %v5736, %v5737
    %5739 = vrot.lane.b32.xlu0 %v5738, 24
    %v5740 = vpop.permute.xlu0 %5739
    %v5741 = vrot.slane %v554, 3
    %v5742 = vrot.slane %v579, 3
    %v5743 = vsel %vm2026, %v5741, %v5742
    %5744 = vrot.lane.b32.xlu0 %v5743, 25
    %v5745 = vpop.permute.xlu0 %5744
    %v5746 = vrot.slane %v5649, 3
    %v5747 = vrot.slane %v5651, 4
    %v5748 = vor.u32 %v5746, %v5747
    %v5749 = vrot.slane %v5689, 3
    %v5750 = vrot.slane %v5655, 4
    %v5751 = vor.u32 %v5749, %v5750
    %v5752 = vsel %vm2187, %v5748, %v5751
    %5753 = vrot.lane.b32.xlu0 %v5752, 28
    %v5754 = vpop.permute.xlu0 %5753
    %v5755 = vrot.slane %v5661, 3
    %v5756 = vrot.slane %v5663, 4
    %v5757 = vor.u32 %v5755, %v5756
    %v5758 = vrot.slane %v5700, 3
    %v5759 = vrot.slane %v5667, 4
    %v5760 = vor.u32 %v5758, %v5759
    %v5761 = vsel %vm2187, %v5757, %v5760
    %5762 = vrot.lane.b32.xlu0 %v5761, 29
    %v5763 = vpop.permute.xlu0 %5762
    %v5765 = vsel %vm2476, %v458, %v5648
    %v5767 = vsel %vm2509, %v5765, %v5660
    %v5769 = vsel %vm2542, %v5767, %v5672
    %v5771 = vsel %vm2575, %v5769, %v5679
    %v5773 = vsel %vm2608, %v5771, %v5685
    %v5775 = vsel %vm2641, %v5773, %v5696
    %v5777 = vsel %vm2674, %v5775, %v5707
    %v5779 = vsel %vm2707, %v5777, %v5712
    %v5781 = vsel %vm2740, %v5779, %v5717
    %v5783 = vsel %vm2773, %v5781, %v5726
    %v5785 = vsel %vm2806, %v5783, %v5735
    %v5787 = vsel %vm2839, %v5785, %v5740
    %v5789 = vsel %vm2872, %v5787, %v5745
    %v5791 = vsel %vm2905, %v5789, %v5754
    %v5793 = vsel %vm2938, %v5791, %v5763
    %5794 = vrot.lane.b32.xlu0 %v579, 1
    %v5795 = vpop.permute.xlu0 %5794
    %v5797 = vsel %vm2476, %v483, %v5795
    %v5800 = vrot.slane %v5765, 4
    %v5801 = vrot.slane %v5797, 4
    %v5802 = vsel %vm3067, %v5800, %v5801
    %5803 = vrot.lane.b32.xlu0 %v5802, 32
    %v5804 = vpop.permute.xlu0 %5803
    %v5806 = vsel %vm3148, %v5793, %v5804
    %s5807 = scalar_lea.vmem [#allocation7], 140
    %v5808 = vld [vmem:[%s5807] sm:$0xf]
    %v5809 = vld [vmem:[%s5807 + $0x4] sm:$0xf]
    %v5810 = vld [vmem:[%s5807 + $0x8] sm:$0xf]
    %v5811 = vld [vmem:[%s5807 + $0xc] sm:$0xf]
    %v5812 = vld [vmem:[%s5807 + $0x10] sm:$0x3]
    %v5818 = vunpack.c.l.b16 %v5808
    %v5819 = vunpack.c.l.b16 %v5809
    %v5820 = vunpack.c.l.b16 %v5810
    %v5821 = vunpack.c.l.b16 %v5811
    %v5822 = vunpack.c.l.b16 %v5812
    %v5823 = vpack.c.b16 %v5819, %v5818
    %v5824 = vpack.c.b16 %v5821, %v5820
    %v5825 = vpack.c.b16 %v5822, %v5822
    %v5828 = vsel %vm3368, %v5806, 0
    %v5831 = vsel %vm411, %v5825, 0
    %5833 = vmatprep.subr.bf16.mxu0 0
    %5834 = vmatpush1.bf16.msra.mxu0 %v5823
    %5835 = vmatprep.subr.bf16.mxu0 0
    %5836 = vmatpush1.bf16.msra.mxu0 %v5824
    %5837 = vmatprep.subr.bf16.mxu0 0
    %5838 = vmatpush1.bf16.msra.mxu0 %v5831
    %5839 = vmatprep.subr.bf16.mxu0 0
    %5840 = vmatpush1.bf16.msra.mxu0 0
    %5841 = vmatprep.subr.bf16.mxu0 0
    %5842 = vmatpush1.bf16.msra.mxu0 0
    %5843 = vmatprep.subr.bf16.mxu0 0
    %5844 = vmatpush1.bf16.msra.mxu0 0
    %5845 = vmatprep.subr.bf16.mxu0 0
    %5846 = vmatpush1.bf16.msra.mxu0 0
    %5847 = vmatprep.subr.bf16.mxu0 0
    %5848 = vmatpush1.bf16.msra.mxu0 0
    %5849 = vmatprep.subr.bf16.mxu0 0
    %5850 = vmatpush1.bf16.msra.mxu0 0
    %5851 = vmatprep.subr.bf16.mxu0 0
    %5852 = vmatpush1.bf16.msra.mxu0 0
    %5853 = vmatprep.subr.bf16.mxu0 0
    %5854 = vmatpush1.bf16.msra.mxu0 0
    %5855 = vmatprep.subr.bf16.mxu0 0
    %5856 = vmatpush1.bf16.msra.mxu0 0
    %5857 = vmatprep.subr.bf16.mxu0 0
    %5858 = vmatpush1.bf16.msra.mxu0 0
    %5859 = vmatprep.subr.bf16.mxu0 0
    %5860 = vmatpush1.bf16.msra.mxu0 0
    %5861 = vmatprep.subr.bf16.mxu0 0
    %5862 = vmatpush1.bf16.msra.mxu0 0
    %5863 = vmatprep.subr.bf16.mxu0 0
    %5864 = vmatpush1.bf16.msra.mxu0 0
    %5865 = vmatprep.mubr.bf16.mxu0 0
    %5866 = vmatmul.mubr.bf16.gmra.mrb[0].mxu0 %v3381
    %v5867 = vpop.f32.mrb[0].mxu0
    %v5868 = vadd.f32 0.0, %v5867
    %v5869 = vpop.f32.mrb[0].mxu0
    %v5870 = vpop.f32.mrb[0].mxu0
    %v5871 = vadd.f32 0.0, %v5870
    %v5872 = vpop.f32.mrb[0].mxu0
    %5873 = vmatprep.mubr.bf16.mxu0 0
    %5874 = vmatmul.mubr.bf16.gmra.mrb[0].mxu0 %v3383
    %v5875 = vpop.f32.mrb[0].mxu0
    %v5876 = vadd.f32 0.0, %v5875
    %v5877 = vpop.f32.mrb[0].mxu0
    %v5878 = vpop.f32.mrb[0].mxu0
    %v5879 = vadd.f32 0.0, %v5878
    %v5880 = vpop.f32.mrb[0].mxu0
    %5881 = vmatprep.mubr.bf16.mxu0 0
    %5882 = vmatmul.mubr.bf16.gmra.mrb[0].mxu0 %v3385
    %v5883 = vpop.f32.mrb[0].mxu0
    %v5884 = vadd.f32 0.0, %v5883
    %v5885 = vpop.f32.mrb[0].mxu0
    %v5886 = vpop.f32.mrb[0].mxu0
    %v5887 = vadd.f32 0.0, %v5886
    %v5888 = vpop.f32.mrb[0].mxu0
    %5889 = vmatprep.mubr.bf16.mxu0 0
    %5890 = vmatmul.mubr.bf16.gmra.mrb[0].mxu0 %v3387
    %v5891 = vpop.f32.mrb[0].mxu0
    %v5892 = vadd.f32 0.0, %v5891
    %v5893 = vpop.f32.mrb[0].mxu0
    %v5894 = vpop.f32.mrb[0].mxu0
    %v5895 = vadd.f32 0.0, %v5894
    %v5896 = vpop.f32.mrb[0].mxu0
    %5897 = vmatprep.mubr.bf16.mxu0 0
    %5898 = vmatmul.mubr.bf16.gmra.mrb[0].mxu0 %v3389
    %v5899 = vpop.f32.mrb[0].mxu0
    %v5900 = vadd.f32 0.0, %v5899
    %v5901 = vpop.f32.mrb[0].mxu0
    %v5902 = vpop.f32.mrb[0].mxu0
    %v5903 = vadd.f32 0.0, %v5902
    %v5904 = vpop.f32.mrb[0].mxu0
    %5905 = vmatprep.mubr.bf16.mxu0 0
    %5906 = vmatmul.mubr.bf16.gmra.mrb[0].mxu0 %v3391
    %v5907 = vpop.f32.mrb[0].mxu0
    %v5908 = vadd.f32 0.0, %v5907
    %v5909 = vpop.f32.mrb[0].mxu0
    %v5910 = vpop.f32.mrb[0].mxu0
    %v5911 = vadd.f32 0.0, %v5910
    %v5912 = vpop.f32.mrb[0].mxu0
    %5913 = vmatprep.mubr.bf16.mxu0 0
    %5914 = vmatmul.mubr.bf16.gmra.mrb[0].mxu0 %v3393
    %v5915 = vpop.f32.mrb[0].mxu0
    %v5916 = vadd.f32 0.0, %v5915
    %v5917 = vpop.f32.mrb[0].mxu0
    %v5918 = vpop.f32.mrb[0].mxu0
    %v5919 = vadd.f32 0.0, %v5918
    %v5920 = vpop.f32.mrb[0].mxu0
    %5921 = vmatprep.mubr.bf16.mxu0 0
    %5922 = vmatmul.mubr.bf16.gmra.mrb[0].mxu0 %v3395
    %v5923 = vpop.f32.mrb[0].mxu0
    %v5924 = vadd.f32 0.0, %v5923
    %v5925 = vpop.f32.mrb[0].mxu0
    %v5926 = vpop.f32.mrb[0].mxu0
    %v5927 = vadd.f32 0.0, %v5926
    %v5928 = vpop.f32.mrb[0].mxu0
    %5929 = vmatprep.mubr.bf16.mxu0 0
    %5930 = vmatmul.mubr.bf16.gmra.mrb[0].mxu0 %v3397
    %v5931 = vpop.f32.mrb[0].mxu0
    %v5932 = vadd.f32 0.0, %v5931
    %v5933 = vpop.f32.mrb[0].mxu0
    %v5934 = vpop.f32.mrb[0].mxu0
    %v5935 = vadd.f32 0.0, %v5934
    %v5936 = vpop.f32.mrb[0].mxu0
    %5937 = vmatprep.mubr.bf16.mxu0 0
    %5938 = vmatmul.mubr.bf16.gmra.mrb[0].mxu0 %v3399
    %v5939 = vpop.f32.mrb[0].mxu0
    %v5940 = vadd.f32 0.0, %v5939
    %v5941 = vpop.f32.mrb[0].mxu0
    %v5942 = vpop.f32.mrb[0].mxu0
    %v5943 = vadd.f32 0.0, %v5942
    %v5944 = vpop.f32.mrb[0].mxu0
    %5945 = vmatprep.mubr.bf16.mxu0 0
    %5946 = vmatmul.mubr.bf16.gmra.mrb[0].mxu0 %v3928
    %v5947 = vpop.f32.mrb[0].mxu0
    %v5948 = vadd.f32 0.0, %v5947
    %v5949 = vpop.f32.mrb[0].mxu0
    %v5950 = vpop.f32.mrb[0].mxu0
    %v5951 = vadd.f32 0.0, %v5950
    %v5952 = vpop.f32.mrb[0].mxu0
    %5953 = vmatprep.mubr.bf16.mxu0 0
    %5954 = vmatmul.mubr.bf16.gmra.mrb[0].mxu0 %v4308
    %v5955 = vpop.f32.mrb[0].mxu0
    %v5956 = vadd.f32 0.0, %v5955
    %v5957 = vpop.f32.mrb[0].mxu0
    %v5958 = vpop.f32.mrb[0].mxu0
    %v5959 = vadd.f32 0.0, %v5958
    %v5960 = vpop.f32.mrb[0].mxu0
    %5961 = vmatprep.mubr.bf16.mxu0 0
    %5962 = vmatmul.mubr.bf16.gmra.mrb[0].mxu0 %v4688
    %v5963 = vpop.f32.mrb[0].mxu0
    %v5964 = vadd.f32 0.0, %v5963
    %v5965 = vpop.f32.mrb[0].mxu0
    %v5966 = vpop.f32.mrb[0].mxu0
    %v5967 = vadd.f32 0.0, %v5966
    %v5968 = vpop.f32.mrb[0].mxu0
    %5969 = vmatprep.mubr.bf16.mxu0 0
    %5970 = vmatmul.mubr.bf16.gmra.mrb[0].mxu0 %v5068
    %v5971 = vpop.f32.mrb[0].mxu0
    %v5972 = vadd.f32 0.0, %v5971
    %v5973 = vpop.f32.mrb[0].mxu0
    %v5974 = vpop.f32.mrb[0].mxu0
    %v5975 = vadd.f32 0.0, %v5974
    %v5976 = vpop.f32.mrb[0].mxu0
    %5977 = vmatprep.mubr.bf16.mxu0 0
    %5978 = vmatmul.mubr.bf16.gmra.mrb[0].mxu0 %v5448
    %v5979 = vpop.f32.mrb[0].mxu0
    %v5980 = vadd.f32 0.0, %v5979
    %v5981 = vpop.f32.mrb[0].mxu0
    %v5982 = vpop.f32.mrb[0].mxu0
    %v5983 = vadd.f32 0.0, %v5982
    %v5984 = vpop.f32.mrb[0].mxu0
    %5985 = vmatprep.mubr.bf16.mxu0 0
    %5986 = vmatmul.mubr.bf16.gmra.mrb[0].mxu0 %v5828
    %v5987 = vpop.f32.mrb[0].mxu0
    %v5988 = vadd.f32 0.0, %v5987
    %v5989 = vpop.f32.mrb[0].mxu0
    %v5990 = vpop.f32.mrb[0].mxu0
    %v5991 = vadd.f32 0.0, %v5990
    %v5992 = vpop.f32.mrb[0].mxu0
    %5993 = vdwg.mxu0
    %v5994 = vadd.f32 %v5614, %v5868
    %v5995 = vadd.f32 %v5615, %v5871
    %v5996 = vadd.f32 %v5616, %v5876
    %v5997 = vadd.f32 %v5617, %v5879
    %v5998 = vadd.f32 %v5618, %v5884
    %v5999 = vadd.f32 %v5619, %v5887
    %v6000 = vadd.f32 %v5620, %v5892
    %v6001 = vadd.f32 %v5621, %v5895
    %v6002 = vadd.f32 %v5622, %v5900
    %v6003 = vadd.f32 %v5623, %v5903
    %v6004 = vadd.f32 %v5624, %v5908
    %v6005 = vadd.f32 %v5625, %v5911
    %v6006 = vadd.f32 %v5626, %v5916
    %v6007 = vadd.f32 %v5627, %v5919
    %v6008 = vadd.f32 %v5628, %v5924
    %v6009 = vadd.f32 %v5629, %v5927
    %v6010 = vadd.f32 %v5630, %v5932
    %v6011 = vadd.f32 %v5631, %v5935
    %v6012 = vadd.f32 %v5632, %v5940
    %v6013 = vadd.f32 %v5633, %v5943
    %v6014 = vadd.f32 %v5634, %v5948
    %v6015 = vadd.f32 %v5635, %v5951
    %v6016 = vadd.f32 %v5636, %v5956
    %v6017 = vadd.f32 %v5637, %v5959
    %v6018 = vadd.f32 %v5638, %v5964
    %v6019 = vadd.f32 %v5639, %v5967
    %v6020 = vadd.f32 %v5640, %v5972
    %v6021 = vadd.f32 %v5641, %v5975
    %v6022 = vadd.f32 %v5642, %v5980
    %v6023 = vadd.f32 %v5643, %v5983
    %v6024 = vadd.f32 %v5644, %v5988
    %v6025 = vadd.f32 %v5645, %v5991
    %6027 = vrot.lane.b32.xlu0 %v556, 1
    %v6028 = vpop.permute.xlu0 %6027
    %v6029 = vshrl.u32 %v460, 16
    %v6031 = vshll.u32 %v460, 16
    %v6033 = vrot.slane %v6031, 1
    %v6034 = vor.u32 %v6029, %v6033
    %v6035 = vshll.u32 %v484, 16
    %v6037 = vrot.slane %v6035, 1
    %v6038 = vsel %vm629, %v6034, %v6037
    %6039 = vrot.lane.b32.xlu0 %v6038, 4
    %v6040 = vpop.permute.xlu0 %6039
    %v6041 = vshrl.u32 %v556, 16
    %v6043 = vshll.u32 %v556, 16
    %v6045 = vrot.slane %v6043, 1
    %v6046 = vor.u32 %v6041, %v6045
    %v6047 = vshll.u32 %v580, 16
    %v6049 = vrot.slane %v6047, 1
    %v6050 = vsel %vm629, %v6046, %v6049
    %6051 = vrot.lane.b32.xlu0 %v6050, 5
    %v6052 = vpop.permute.xlu0 %6051
    %v6055 = vrot.slane %v460, 1
    %v6056 = vrot.slane %v484, 1
    %v6057 = vsel %vm1046, %v6055, %v6056
    %6058 = vrot.lane.b32.xlu0 %v6057, 8
    %v6059 = vpop.permute.xlu0 %6058
    %v6061 = vrot.slane %v556, 1
    %v6062 = vrot.slane %v580, 1
    %v6063 = vsel %vm1046, %v6061, %v6062
    %6064 = vrot.lane.b32.xlu0 %v6063, 9
    %v6065 = vpop.permute.xlu0 %6064
    %v6066 = vrot.slane %v6029, 1
    %v6067 = vrot.slane %v6031, 2
    %v6068 = vor.u32 %v6066, %v6067
    %v6069 = vshrl.u32 %v484, 16
    %v6071 = vrot.slane %v6069, 1
    %v6072 = vrot.slane %v6035, 2
    %v6073 = vor.u32 %v6071, %v6072
    %v6074 = vsel %vm1223, %v6068, %v6073
    %6075 = vrot.lane.b32.xlu0 %v6074, 12
    %v6076 = vpop.permute.xlu0 %6075
    %v6077 = vrot.slane %v6041, 1
    %v6078 = vrot.slane %v6043, 2
    %v6079 = vor.u32 %v6077, %v6078
    %v6080 = vshrl.u32 %v580, 16
    %v6082 = vrot.slane %v6080, 1
    %v6083 = vrot.slane %v6047, 2
    %v6084 = vor.u32 %v6082, %v6083
    %v6085 = vsel %vm1223, %v6079, %v6084
    %6086 = vrot.lane.b32.xlu0 %v6085, 13
    %v6087 = vpop.permute.xlu0 %6086
    %v6088 = vrot.slane %v460, 2
    %v6089 = vrot.slane %v484, 2
    %v6090 = vsel %vm1576, %v6088, %v6089
    %6091 = vrot.lane.b32.xlu0 %v6090, 16
    %v6092 = vpop.permute.xlu0 %6091
    %v6093 = vrot.slane %v556, 2
    %v6094 = vrot.slane %v580, 2
    %v6095 = vsel %vm1576, %v6093, %v6094
    %6096 = vrot.lane.b32.xlu0 %v6095, 17
    %v6097 = vpop.permute.xlu0 %6096
    %v6098 = vrot.slane %v6029, 2
    %v6099 = vrot.slane %v6031, 3
    %v6100 = vor.u32 %v6098, %v6099
    %v6101 = vrot.slane %v6069, 2
    %v6102 = vrot.slane %v6035, 3
    %v6103 = vor.u32 %v6101, %v6102
    %v6104 = vsel %vm1737, %v6100, %v6103
    %6105 = vrot.lane.b32.xlu0 %v6104, 20
    %v6106 = vpop.permute.xlu0 %6105
    %v6107 = vrot.slane %v6041, 2
    %v6108 = vrot.slane %v6043, 3
    %v6109 = vor.u32 %v6107, %v6108
    %v6110 = vrot.slane %v6080, 2
    %v6111 = vrot.slane %v6047, 3
    %v6112 = vor.u32 %v6110, %v6111
    %v6113 = vsel %vm1737, %v6109, %v6112
    %6114 = vrot.lane.b32.xlu0 %v6113, 21
    %v6115 = vpop.permute.xlu0 %6114
    %v6116 = vrot.slane %v460, 3
    %v6117 = vrot.slane %v484, 3
    %v6118 = vsel %vm2026, %v6116, %v6117
    %6119 = vrot.lane.b32.xlu0 %v6118, 24
    %v6120 = vpop.permute.xlu0 %6119
    %v6121 = vrot.slane %v556, 3
    %v6122 = vrot.slane %v580, 3
    %v6123 = vsel %vm2026, %v6121, %v6122
    %6124 = vrot.lane.b32.xlu0 %v6123, 25
    %v6125 = vpop.permute.xlu0 %6124
    %v6126 = vrot.slane %v6029, 3
    %v6127 = vrot.slane %v6031, 4
    %v6128 = vor.u32 %v6126, %v6127
    %v6129 = vrot.slane %v6069, 3
    %v6130 = vrot.slane %v6035, 4
    %v6131 = vor.u32 %v6129, %v6130
    %v6132 = vsel %vm2187, %v6128, %v6131
    %6133 = vrot.lane.b32.xlu0 %v6132, 28
    %v6134 = vpop.permute.xlu0 %6133
    %v6135 = vrot.slane %v6041, 3
    %v6136 = vrot.slane %v6043, 4
    %v6137 = vor.u32 %v6135, %v6136
    %v6138 = vrot.slane %v6080, 3
    %v6139 = vrot.slane %v6047, 4
    %v6140 = vor.u32 %v6138, %v6139
    %v6141 = vsel %vm2187, %v6137, %v6140
    %6142 = vrot.lane.b32.xlu0 %v6141, 29
    %v6143 = vpop.permute.xlu0 %6142
    %v6145 = vsel %vm2476, %v460, %v6028
    %v6147 = vsel %vm2509, %v6145, %v6040
    %v6149 = vsel %vm2542, %v6147, %v6052
    %v6151 = vsel %vm2575, %v6149, %v6059
    %v6153 = vsel %vm2608, %v6151, %v6065
    %v6155 = vsel %vm2641, %v6153, %v6076
    %v6157 = vsel %vm2674, %v6155, %v6087
    %v6159 = vsel %vm2707, %v6157, %v6092
    %v6161 = vsel %vm2740, %v6159, %v6097
    %v6163 = vsel %vm2773, %v6161, %v6106
    %v6165 = vsel %vm2806, %v6163, %v6115
    %v6167 = vsel %vm2839, %v6165, %v6120
    %v6169 = vsel %vm2872, %v6167, %v6125
    %v6171 = vsel %vm2905, %v6169, %v6134
    %v6173 = vsel %vm2938, %v6171, %v6143
    %6174 = vrot.lane.b32.xlu0 %v580, 1
    %v6175 = vpop.permute.xlu0 %6174
    %v6177 = vsel %vm2476, %v484, %v6175
    %v6180 = vrot.slane %v6145, 4
    %v6181 = vrot.slane %v6177, 4
    %v6182 = vsel %vm3067, %v6180, %v6181
    %6183 = vrot.lane.b32.xlu0 %v6182, 32
    %v6184 = vpop.permute.xlu0 %6183
    %v6186 = vsel %vm3148, %v6173, %v6184
    %s6187 = scalar_lea.vmem [#allocation7], 160
    %v6188 = vld [vmem:[%s6187] sm:$0xf]
    %v6189 = vld [vmem:[%s6187 + $0x4] sm:$0xf]
    %v6190 = vld [vmem:[%s6187 + $0x8] sm:$0xf]
    %v6191 = vld [vmem:[%s6187 + $0xc] sm:$0xf]
    %v6192 = vld [vmem:[%s6187 + $0x10] sm:$0x3]
    %v6198 = vunpack.c.l.b16 %v6188
    %v6199 = vunpack.c.l.b16 %v6189
    %v6200 = vunpack.c.l.b16 %v6190
    %v6201 = vunpack.c.l.b16 %v6191
    %v6202 = vunpack.c.l.b16 %v6192
    %v6203 = vpack.c.b16 %v6199, %v6198
    %v6204 = vpack.c.b16 %v6201, %v6200
    %v6205 = vpack.c.b16 %v6202, %v6202
    %v6208 = vsel %vm3368, %v6186, 0
    %v6211 = vsel %vm411, %v6205, 0
    %6213 = vmatprep.subr.bf16.mxu0 0
    %6214 = vmatpush1.bf16.msra.mxu0 %v6203
    %6215 = vmatprep.subr.bf16.mxu0 0
    %6216 = vmatpush1.bf16.msra.mxu0 %v6204
    %6217 = vmatprep.subr.bf16.mxu0 0
    %6218 = vmatpush1.bf16.msra.mxu0 %v6211
    %6219 = vmatprep.subr.bf16.mxu0 0
    %6220 = vmatpush1.bf16.msra.mxu0 0
    %6221 = vmatprep.subr.bf16.mxu0 0
    %6222 = vmatpush1.bf16.msra.mxu0 0
    %6223 = vmatprep.subr.bf16.mxu0 0
    %6224 = vmatpush1.bf16.msra.mxu0 0
    %6225 = vmatprep.subr.bf16.mxu0 0
    %6226 = vmatpush1.bf16.msra.mxu0 0
    %6227 = vmatprep.subr.bf16.mxu0 0
    %6228 = vmatpush1.bf16.msra.mxu0 0
    %6229 = vmatprep.subr.bf16.mxu0 0
    %6230 = vmatpush1.bf16.msra.mxu0 0
    %6231 = vmatprep.subr.bf16.mxu0 0
    %6232 = vmatpush1.bf16.msra.mxu0 0
    %6233 = vmatprep.subr.bf16.mxu0 0
    %6234 = vmatpush1.bf16.msra.mxu0 0
    %6235 = vmatprep.subr.bf16.mxu0 0
    %6236 = vmatpush1.bf16.msra.mxu0 0
    %6237 = vmatprep.subr.bf16.mxu0 0
    %6238 = vmatpush1.bf16.msra.mxu0 0
    %6239 = vmatprep.subr.bf16.mxu0 0
    %6240 = vmatpush1.bf16.msra.mxu0 0
    %6241 = vmatprep.subr.bf16.mxu0 0
    %6242 = vmatpush1.bf16.msra.mxu0 0
    %6243 = vmatprep.subr.bf16.mxu0 0
    %6244 = vmatpush1.bf16.msra.mxu0 0
    %6245 = vmatprep.mubr.bf16.mxu0 0
    %6246 = vmatmul.mubr.bf16.gmra.mrb[0].mxu0 %v3383
    %v6247 = vpop.f32.mrb[0].mxu0
    %v6248 = vadd.f32 0.0, %v6247
    %v6249 = vpop.f32.mrb[0].mxu0
    %v6250 = vpop.f32.mrb[0].mxu0
    %v6251 = vadd.f32 0.0, %v6250
    %v6252 = vpop.f32.mrb[0].mxu0
    %6253 = vmatprep.mubr.bf16.mxu0 0
    %6254 = vmatmul.mubr.bf16.gmra.mrb[0].mxu0 %v3385
    %v6255 = vpop.f32.mrb[0].mxu0
    %v6256 = vadd.f32 0.0, %v6255
    %v6257 = vpop.f32.mrb[0].mxu0
    %v6258 = vpop.f32.mrb[0].mxu0
    %v6259 = vadd.f32 0.0, %v6258
    %v6260 = vpop.f32.mrb[0].mxu0
    %6261 = vmatprep.mubr.bf16.mxu0 0
    %6262 = vmatmul.mubr.bf16.gmra.mrb[0].mxu0 %v3387
    %v6263 = vpop.f32.mrb[0].mxu0
    %v6264 = vadd.f32 0.0, %v6263
    %v6265 = vpop.f32.mrb[0].mxu0
    %v6266 = vpop.f32.mrb[0].mxu0
    %v6267 = vadd.f32 0.0, %v6266
    %v6268 = vpop.f32.mrb[0].mxu0
    %6269 = vmatprep.mubr.bf16.mxu0 0
    %6270 = vmatmul.mubr.bf16.gmra.mrb[0].mxu0 %v3389
    %v6271 = vpop.f32.mrb[0].mxu0
    %v6272 = vadd.f32 0.0, %v6271
    %v6273 = vpop.f32.mrb[0].mxu0
    %v6274 = vpop.f32.mrb[0].mxu0
    %v6275 = vadd.f32 0.0, %v6274
    %v6276 = vpop.f32.mrb[0].mxu0
    %6277 = vmatprep.mubr.bf16.mxu0 0
    %6278 = vmatmul.mubr.bf16.gmra.mrb[0].mxu0 %v3391
    %v6279 = vpop.f32.mrb[0].mxu0
    %v6280 = vadd.f32 0.0, %v6279
    %v6281 = vpop.f32.mrb[0].mxu0
    %v6282 = vpop.f32.mrb[0].mxu0
    %v6283 = vadd.f32 0.0, %v6282
    %v6284 = vpop.f32.mrb[0].mxu0
    %6285 = vmatprep.mubr.bf16.mxu0 0
    %6286 = vmatmul.mubr.bf16.gmra.mrb[0].mxu0 %v3393
    %v6287 = vpop.f32.mrb[0].mxu0
    %v6288 = vadd.f32 0.0, %v6287
    %v6289 = vpop.f32.mrb[0].mxu0
    %v6290 = vpop.f32.mrb[0].mxu0
    %v6291 = vadd.f32 0.0, %v6290
    %v6292 = vpop.f32.mrb[0].mxu0
    %6293 = vmatprep.mubr.bf16.mxu0 0
    %6294 = vmatmul.mubr.bf16.gmra.mrb[0].mxu0 %v3395
    %v6295 = vpop.f32.mrb[0].mxu0
    %v6296 = vadd.f32 0.0, %v6295
    %v6297 = vpop.f32.mrb[0].mxu0
    %v6298 = vpop.f32.mrb[0].mxu0
    %v6299 = vadd.f32 0.0, %v6298
    %v6300 = vpop.f32.mrb[0].mxu0
    %6301 = vmatprep.mubr.bf16.mxu0 0
    %6302 = vmatmul.mubr.bf16.gmra.mrb[0].mxu0 %v3397
    %v6303 = vpop.f32.mrb[0].mxu0
    %v6304 = vadd.f32 0.0, %v6303
    %v6305 = vpop.f32.mrb[0].mxu0
    %v6306 = vpop.f32.mrb[0].mxu0
    %v6307 = vadd.f32 0.0, %v6306
    %v6308 = vpop.f32.mrb[0].mxu0
    %6309 = vmatprep.mubr.bf16.mxu0 0
    %6310 = vmatmul.mubr.bf16.gmra.mrb[0].mxu0 %v3399
    %v6311 = vpop.f32.mrb[0].mxu0
    %v6312 = vadd.f32 0.0, %v6311
    %v6313 = vpop.f32.mrb[0].mxu0
    %v6314 = vpop.f32.mrb[0].mxu0
    %v6315 = vadd.f32 0.0, %v6314
    %v6316 = vpop.f32.mrb[0].mxu0
    %6317 = vmatprep.mubr.bf16.mxu0 0
    %6318 = vmatmul.mubr.bf16.gmra.mrb[0].mxu0 %v3928
    %v6319 = vpop.f32.mrb[0].mxu0
    %v6320 = vadd.f32 0.0, %v6319
    %v6321 = vpop.f32.mrb[0].mxu0
    %v6322 = vpop.f32.mrb[0].mxu0
    %v6323 = vadd.f32 0.0, %v6322
    %v6324 = vpop.f32.mrb[0].mxu0
    %6325 = vmatprep.mubr.bf16.mxu0 0
    %6326 = vmatmul.mubr.bf16.gmra.mrb[0].mxu0 %v4308
    %v6327 = vpop.f32.mrb[0].mxu0
    %v6328 = vadd.f32 0.0, %v6327
    %v6329 = vpop.f32.mrb[0].mxu0
    %v6330 = vpop.f32.mrb[0].mxu0
    %v6331 = vadd.f32 0.0, %v6330
    %v6332 = vpop.f32.mrb[0].mxu0
    %6333 = vmatprep.mubr.bf16.mxu0 0
    %6334 = vmatmul.mubr.bf16.gmra.mrb[0].mxu0 %v4688
    %v6335 = vpop.f32.mrb[0].mxu0
    %v6336 = vadd.f32 0.0, %v6335
    %v6337 = vpop.f32.mrb[0].mxu0
    %v6338 = vpop.f32.mrb[0].mxu0
    %v6339 = vadd.f32 0.0, %v6338
    %v6340 = vpop.f32.mrb[0].mxu0
    %6341 = vmatprep.mubr.bf16.mxu0 0
    %6342 = vmatmul.mubr.bf16.gmra.mrb[0].mxu0 %v5068
    %v6343 = vpop.f32.mrb[0].mxu0
    %v6344 = vadd.f32 0.0, %v6343
    %v6345 = vpop.f32.mrb[0].mxu0
    %v6346 = vpop.f32.mrb[0].mxu0
    %v6347 = vadd.f32 0.0, %v6346
    %v6348 = vpop.f32.mrb[0].mxu0
    %6349 = vmatprep.mubr.bf16.mxu0 0
    %6350 = vmatmul.mubr.bf16.gmra.mrb[0].mxu0 %v5448
    %v6351 = vpop.f32.mrb[0].mxu0
    %v6352 = vadd.f32 0.0, %v6351
    %v6353 = vpop.f32.mrb[0].mxu0
    %v6354 = vpop.f32.mrb[0].mxu0
    %v6355 = vadd.f32 0.0, %v6354
    %v6356 = vpop.f32.mrb[0].mxu0
    %6357 = vmatprep.mubr.bf16.mxu0 0
    %6358 = vmatmul.mubr.bf16.gmra.mrb[0].mxu0 %v5828
    %v6359 = vpop.f32.mrb[0].mxu0
    %v6360 = vadd.f32 0.0, %v6359
    %v6361 = vpop.f32.mrb[0].mxu0
    %v6362 = vpop.f32.mrb[0].mxu0
    %v6363 = vadd.f32 0.0, %v6362
    %v6364 = vpop.f32.mrb[0].mxu0
    %6365 = vmatprep.mubr.bf16.mxu0 0
    %6366 = vmatmul.mubr.bf16.gmra.mrb[0].mxu0 %v6208
    %v6367 = vpop.f32.mrb[0].mxu0
    %v6368 = vadd.f32 0.0, %v6367
    %v6369 = vpop.f32.mrb[0].mxu0
    %v6370 = vpop.f32.mrb[0].mxu0
    %v6371 = vadd.f32 0.0, %v6370
    %v6372 = vpop.f32.mrb[0].mxu0
    %6373 = vdwg.mxu0
    %v6374 = vadd.f32 %v5994, %v6248
    %v6375 = vadd.f32 %v5995, %v6251
    %v6376 = vadd.f32 %v5996, %v6256
    %v6377 = vadd.f32 %v5997, %v6259
    %v6378 = vadd.f32 %v5998, %v6264
    %v6379 = vadd.f32 %v5999, %v6267
    %v6380 = vadd.f32 %v6000, %v6272
    %v6381 = vadd.f32 %v6001, %v6275
    %v6382 = vadd.f32 %v6002, %v6280
    %v6383 = vadd.f32 %v6003, %v6283
    %v6384 = vadd.f32 %v6004, %v6288
    %v6385 = vadd.f32 %v6005, %v6291
    %v6386 = vadd.f32 %v6006, %v6296
    %v6387 = vadd.f32 %v6007, %v6299
    %v6388 = vadd.f32 %v6008, %v6304
    %v6389 = vadd.f32 %v6009, %v6307
    %v6390 = vadd.f32 %v6010, %v6312
    %v6391 = vadd.f32 %v6011, %v6315
    %v6392 = vadd.f32 %v6012, %v6320
    %v6393 = vadd.f32 %v6013, %v6323
    %v6394 = vadd.f32 %v6014, %v6328
    %v6395 = vadd.f32 %v6015, %v6331
    %v6396 = vadd.f32 %v6016, %v6336
    %v6397 = vadd.f32 %v6017, %v6339
    %v6398 = vadd.f32 %v6018, %v6344
    %v6399 = vadd.f32 %v6019, %v6347
    %v6400 = vadd.f32 %v6020, %v6352
    %v6401 = vadd.f32 %v6021, %v6355
    %v6402 = vadd.f32 %v6022, %v6360
    %v6403 = vadd.f32 %v6023, %v6363
    %v6404 = vadd.f32 %v6024, %v6368
    %v6405 = vadd.f32 %v6025, %v6371
    %v6406 = vld [vmem:[#allocation8] sm:$0x1]
    %v6408 = vlaneseq
    %v6409 = vshrl.u32 %v6408, 7
    %v6410 = vsub.s32 0, %v6409
    %v6411 = vrot.slane %v6406, %v6410
    %v6413 = vadd.f32 %v6374, %v6411
    %v6414 = vadd.f32 %v6375, %v6411
    %v6415 = vadd.f32 %v6376, %v6411
    %v6416 = vadd.f32 %v6377, %v6411
    %v6417 = vadd.f32 %v6378, %v6411
    %v6418 = vadd.f32 %v6379, %v6411
    %v6419 = vadd.f32 %v6380, %v6411
    %v6420 = vadd.f32 %v6381, %v6411
    %v6421 = vadd.f32 %v6382, %v6411
    %v6422 = vadd.f32 %v6383, %v6411
    %v6423 = vadd.f32 %v6384, %v6411
    %v6424 = vadd.f32 %v6385, %v6411
    %v6425 = vadd.f32 %v6386, %v6411
    %v6426 = vadd.f32 %v6387, %v6411
    %v6427 = vadd.f32 %v6388, %v6411
    %v6428 = vadd.f32 %v6389, %v6411
    %v6429 = vadd.f32 %v6390, %v6411
    %v6430 = vadd.f32 %v6391, %v6411
    %v6431 = vadd.f32 %v6392, %v6411
    %v6432 = vadd.f32 %v6393, %v6411
    %v6433 = vadd.f32 %v6394, %v6411
    %v6434 = vadd.f32 %v6395, %v6411
    %v6435 = vadd.f32 %v6396, %v6411
    %v6436 = vadd.f32 %v6397, %v6411
    %v6437 = vadd.f32 %v6398, %v6411
    %v6438 = vadd.f32 %v6399, %v6411
    %v6439 = vadd.f32 %v6400, %v6411
    %v6440 = vadd.f32 %v6401, %v6411
    %v6441 = vadd.f32 %v6402, %v6411
    %v6442 = vadd.f32 %v6403, %v6411
    %v6443 = vadd.f32 %v6404, %v6411
    %v6444 = vadd.f32 %v6405, %v6411
    %v6445 = vpack.c.bf16 %v6414, %v6413
    %v6446 = vpack.c.bf16 %v6416, %v6415
    %v6447 = vpack.c.bf16 %v6418, %v6417
    %v6448 = vpack.c.bf16 %v6420, %v6419
    %v6449 = vpack.c.bf16 %v6422, %v6421
    %v6450 = vpack.c.bf16 %v6424, %v6423
    %v6451 = vpack.c.bf16 %v6426, %v6425
    %v6452 = vpack.c.bf16 %v6428, %v6427
    %v6453 = vpack.c.bf16 %v6430, %v6429
    %v6454 = vpack.c.bf16 %v6432, %v6431
    %v6455 = vpack.c.bf16 %v6434, %v6433
    %v6456 = vpack.c.bf16 %v6436, %v6435
    %v6457 = vpack.c.bf16 %v6438, %v6437
    %v6458 = vpack.c.bf16 %v6440, %v6439
    %v6459 = vpack.c.bf16 %v6442, %v6441
    %v6460 = vpack.c.bf16 %v6444, %v6443
    %v6477 = vunpack.c.l.b16 %v6445
    %v6478 = vunpack.c.h.b16 %v6445
    %v6479 = vunpack.c.l.b16 %v6446
    %v6480 = vunpack.c.h.b16 %v6446
    %v6481 = vunpack.c.l.b16 %v6447
    %v6482 = vunpack.c.h.b16 %v6447
    %v6483 = vunpack.c.l.b16 %v6448
    %v6484 = vunpack.c.h.b16 %v6448
    %v6485 = vunpack.c.l.b16 %v6449
    %v6486 = vunpack.c.h.b16 %v6449
    %v6487 = vunpack.c.l.b16 %v6450
    %v6488 = vunpack.c.h.b16 %v6450
    %v6489 = vunpack.c.l.b16 %v6451
    %v6490 = vunpack.c.h.b16 %v6451
    %v6491 = vunpack.c.l.b16 %v6452
    %v6492 = vunpack.c.h.b16 %v6452
    %v6493 = vunpack.c.l.b16 %v6453
    %v6494 = vunpack.c.h.b16 %v6453
    %v6495 = vunpack.c.l.b16 %v6454
    %v6496 = vunpack.c.h.b16 %v6454
    %v6497 = vunpack.c.l.b16 %v6455
    %v6498 = vunpack.c.h.b16 %v6455
    %v6499 = vunpack.c.l.b16 %v6456
    %v6500 = vunpack.c.h.b16 %v6456
    %v6501 = vunpack.c.l.b16 %v6457
    %v6502 = vunpack.c.h.b16 %v6457
    %v6503 = vunpack.c.l.b16 %v6458
    %v6504 = vunpack.c.h.b16 %v6458
    %v6505 = vunpack.c.l.b16 %v6459
    %v6506 = vunpack.c.h.b16 %v6459
    %v6507 = vunpack.c.l.b16 %v6460
    %v6508 = vunpack.c.h.b16 %v6460
    %v6509 = vpack.c.b16 %v6477, %v6477
    %v6510 = vpack.c.b16 %v6478, %v6478
    %v6511 = vpack.c.b16 %v6479, %v6479
    %v6512 = vpack.c.b16 %v6480, %v6480
    %v6513 = vpack.c.b16 %v6481, %v6481
    %v6514 = vpack.c.b16 %v6482, %v6482
    %v6515 = vpack.c.b16 %v6483, %v6483
    %v6516 = vpack.c.b16 %v6484, %v6484
    %v6517 = vpack.c.b16 %v6485, %v6485
    %v6518 = vpack.c.b16 %v6486, %v6486
    %v6519 = vpack.c.b16 %v6487, %v6487
    %v6520 = vpack.c.b16 %v6488, %v6488
    %v6521 = vpack.c.b16 %v6489, %v6489
    %v6522 = vpack.c.b16 %v6490, %v6490
    %v6523 = vpack.c.b16 %v6491, %v6491
    %v6524 = vpack.c.b16 %v6492, %v6492
    %v6525 = vpack.c.b16 %v6493, %v6493
    %v6526 = vpack.c.b16 %v6494, %v6494
    %v6527 = vpack.c.b16 %v6495, %v6495
    %v6528 = vpack.c.b16 %v6496, %v6496
    %v6529 = vpack.c.b16 %v6497, %v6497
    %v6530 = vpack.c.b16 %v6498, %v6498
    %v6531 = vpack.c.b16 %v6499, %v6499
    %v6532 = vpack.c.b16 %v6500, %v6500
    %v6533 = vpack.c.b16 %v6501, %v6501
    %v6534 = vpack.c.b16 %v6502, %v6502
    %v6535 = vpack.c.b16 %v6503, %v6503
    %v6536 = vpack.c.b16 %v6504, %v6504
    %v6537 = vpack.c.b16 %v6505, %v6505
    %v6538 = vpack.c.b16 %v6506, %v6506
    %v6539 = vpack.c.b16 %v6507, %v6507
    %v6540 = vpack.c.b16 %v6508, %v6508
    %vm6573 = vcmask 125952
    %6574 = vst.msk [vmem:[#allocation10] sm:$0xf] %vm6573, %v6509
    %6575 = vst.msk [vmem:[#allocation10 + $0x4] sm:$0xf] %vm6573, %v6510
    %6576 = vst.msk [vmem:[#allocation10 + $0x8] sm:$0xf] %vm6573, %v6511
    %6577 = vst.msk [vmem:[#allocation10 + $0xc] sm:$0xf] %vm6573, %v6512
    %6578 = vst.msk [vmem:[#allocation10 + $0x10] sm:$0xf] %vm6573, %v6513
    %6579 = vst.msk [vmem:[#allocation10 + $0x14] sm:$0xf] %vm6573, %v6514
    %6580 = vst.msk [vmem:[#allocation10 + $0x18] sm:$0xf] %vm6573, %v6515
    %6581 = vst.msk [vmem:[#allocation10 + $0x1c] sm:$0xf] %vm6573, %v6516
    %6582 = vst.msk [vmem:[#allocation10 + $0x20] sm:$0xf] %vm6573, %v6517
    %6583 = vst.msk [vmem:[#allocation10 + $0x24] sm:$0xf] %vm6573, %v6518
    %6584 = vst.msk [vmem:[#allocation10 + $0x28] sm:$0xf] %vm6573, %v6519
    %6585 = vst.msk [vmem:[#allocation10 + $0x2c] sm:$0xf] %vm6573, %v6520
    %6586 = vst.msk [vmem:[#allocation10 + $0x30] sm:$0xf] %vm6573, %v6521
    %6587 = vst.msk [vmem:[#allocation10 + $0x34] sm:$0xf] %vm6573, %v6522
    %6588 = vst.msk [vmem:[#allocation10 + $0x38] sm:$0xf] %vm6573, %v6523
    %6589 = vst.msk [vmem:[#allocation10 + $0x3c] sm:$0xf] %vm6573, %v6524
    %6590 = vst.msk [vmem:[#allocation10 + $0x40] sm:$0xf] %vm6573, %v6525
    %6591 = vst.msk [vmem:[#allocation10 + $0x44] sm:$0xf] %vm6573, %v6526
    %6592 = vst.msk [vmem:[#allocation10 + $0x48] sm:$0xf] %vm6573, %v6527
    %6593 = vst.msk [vmem:[#allocation10 + $0x4c] sm:$0xf] %vm6573, %v6528
    %6594 = vst.msk [vmem:[#allocation10 + $0x50] sm:$0xf] %vm6573, %v6529
    %6595 = vst.msk [vmem:[#allocation10 + $0x54] sm:$0xf] %vm6573, %v6530
    %6596 = vst.msk [vmem:[#allocation10 + $0x58] sm:$0xf] %vm6573, %v6531
    %6597 = vst.msk [vmem:[#allocation10 + $0x5c] sm:$0xf] %vm6573, %v6532
    %6598 = vst.msk [vmem:[#allocation10 + $0x60] sm:$0xf] %vm6573, %v6533
    %6599 = vst.msk [vmem:[#allocation10 + $0x64] sm:$0xf] %vm6573, %v6534
    %6600 = vst.msk [vmem:[#allocation10 + $0x68] sm:$0xf] %vm6573, %v6535
    %6601 = vst.msk [vmem:[#allocation10 + $0x6c] sm:$0xf] %vm6573, %v6536
    %6602 = vst.msk [vmem:[#allocation10 + $0x70] sm:$0xf] %vm6573, %v6537
    %6603 = vst.msk [vmem:[#allocation10 + $0x74] sm:$0xf] %vm6573, %v6538
    %6604 = vst.msk [vmem:[#allocation10 + $0x78] sm:$0xf] %vm6573, %v6539
    %6605 = vst.msk [vmem:[#allocation10 + $0x7c] sm:$0xf] %vm6573, %v6540
    // Predicated region
    $region34: #{tpu_custom_call.1} parent=1 // pred_check
      _
    $region35: #{tpu_custom_call.1} parent=1 // pred_check_branch
      %6607 = sbr.rel (0) target = $region37
    $region36: #{tpu_custom_call.1} parent=1 // pred_region
      %s6609 = ssub.s32 2048, 2048
      %6610 = vsyncadd [#allocation4], %s6609
      %s6611 = sshll.u32 [#allocation10], 4
      %s6612 = int_to_ptr.vmem [resolvable:$true] %s6611
      %6617 = dma.vmem_to_hbm [thread:$0]  %s6612, 2048, %s4, [#allocation4], 64, 64, 4
    $region37: #{tpu_custom_call.1} parent=1 // pred_fallthru
      _
    // Predicated region
    $region38: #{tpu_custom_call.1} parent=1 // pred_check
      _
    $region39: #{tpu_custom_call.1} parent=1 // pred_check_branch
      %6619 = sbr.rel (0) target = $region41
    $region40: #{tpu_custom_call.1} parent=1 // pred_region
      %6620 = dma.done [#allocation4], 2048
    $region41: #{tpu_custom_call.1} parent=1 // pred_fallthru
      _
    %6621 = vsyncpa [#allocation3], 1
    %6622 = vsyncpa [#allocation6], 1
    %6623 = vsyncpa [#allocation9], 1
    %6624 = vsyncpa [#allocation4], 1

</llo_original>
